<compile_context>
chip_gen: v7x
topology: tpu7x:2x2x1
jax: 0.10.0
libtpu: 0.0.40
codegen_flags: <defaults>
</compile_context>

<pallas_src>
import math
from collections import OrderedDict
from functools import partial

import jax
import jax.numpy as jnp
from jax import lax
from jax.experimental import pallas as pl
from jax.experimental.pallas import tpu as pltpu

BN_EPS = 1e-5  # nn.BatchNorm2d default eps


# ----------------------------------------------------------------------------
# Bilinear interpolation matrices (PyTorch align_corners=False convention)
# ----------------------------------------------------------------------------
def _bilinear_matrix_1d(in_size, out_size):
    if in_size == out_size:
        return jnp.eye(out_size, dtype=jnp.float32)
    scale = in_size / out_size
    out_idx = jnp.arange(out_size, dtype=jnp.float32)
    src = (out_idx + 0.5) * scale - 0.5
    src = jnp.maximum(src, 0.0)                       # PyTorch clamps negatives to 0
    i0 = jnp.clip(jnp.floor(src).astype(jnp.int32), 0, in_size - 1)
    i1 = jnp.minimum(i0 + 1, in_size - 1)
    w1 = src - i0.astype(jnp.float32)
    w0 = 1.0 - w1
    rows = jnp.arange(out_size)
    m = jnp.zeros((out_size, in_size), jnp.float32)
    m = m.at[rows, i0].add(w0)
    m = m.at[rows, i1].add(w1)
    return m


def bilinear_matrix_2d(in_hw, out_hw):
    """Combined 2-D resize matrix: R[(ho*Wo+wo),(hi*Wi+wi)] = Rh[ho,hi]*Rw[wo,wi]."""
    rh = _bilinear_matrix_1d(in_hw[0], out_hw[0])
    rw = _bilinear_matrix_1d(in_hw[1], out_hw[1])
    return jnp.kron(rh, rw)


# ----------------------------------------------------------------------------
# Pallas kernels
# ----------------------------------------------------------------------------
def _neck_kernel(dims,
                 x3_ref, x4_ref, x5_ref, wa_ref, sc_ref, sh_ref,
                 r4_ref, r5_ref, wf_ref, b_ref, o_ref,
                 pad3, pad4, pad5):
    """Per batch element: 3 fused adapters + bilinear resize to P3 + 1x1 conv."""
    (H3, W3), (H4, W4), (H5, W5), Cin, Cemb = dims

    def adapter(x, pad_ref, lvl, H, W):
        # In-kernel zero padding into a VMEM scratch (no HBM pad copies).
        pad_ref[...] = jnp.zeros(pad_ref.shape, jnp.float32)
        pad_ref[1:H + 1, 1:W + 1, :] = x
        # 3x3 conv as 9 accumulated (H*W, Cin) @ (Cin, Cemb) MXU matmuls.
        acc = jnp.zeros((H * W, Cemb), jnp.float32)
        for dh in range(3):
            for dw in range(3):
                tap = pad_ref[dh:dh + H, dw:dw + W, :].reshape(H * W, Cin)
                acc = acc + jnp.dot(tap, wa_ref[lvl * 9 + dh * 3 + dw],
                                    preferred_element_type=jnp.float32)
        # Folded BatchNorm (eval mode) + ReLU.
        return jnp.maximum(acc * sc_ref[lvl] + sh_ref[lvl], 0.0)

    a3 = adapter(x3_ref[0], pad3, 0, H3, W3)          # (H3*W3, Cemb)
    a4 = adapter(x4_ref[0], pad4, 1, H4, W4)          # (H4*W4, Cemb)
    a5 = adapter(x5_ref[0], pad5, 2, H5, W5)          # (H5*W5, Cemb)

    # Bilinear resize of P4/P5 to the P3 grid (combined interpolation matrices).
    a4r = jnp.dot(r4_ref[...], a4, preferred_element_type=jnp.float32)
    a5r = jnp.dot(r5_ref[...], a5, preferred_element_type=jnp.float32)

    # 1x1 conv over the channel concat == sum of per-level matmuls (+ bias).
    logits = (jnp.dot(a3, wf_ref[0], preferred_element_type=jnp.float32)
              + jnp.dot(a4r, wf_ref[1], preferred_element_type=jnp.float32)
              + jnp.dot(a5r, wf_ref[2], preferred_element_type=jnp.float32)
              + b_ref[...])
    o_ref[0] = logits                                 # (H3*W3, K)


def _upsample_kernel(r_ref, l_ref, o_ref):
    # out rows tile = Rout_tile (TM, HW_p3) @ logits_n (HW_p3, K)
    o_ref[0] = jnp.dot(r_ref[...], l_ref[0], preferred_element_type=jnp.float32)


# ----------------------------------------------------------------------------
# Forward pass (Pallas path)
# ----------------------------------------------------------------------------
def seg_head_forward(fpn_feats_nchw, params, levels, out_size):
    assert len(levels) == 3, "kernel is specialized for 3 FPN levels"
    Cemb = params["embedding_dim"]
    K = params["num_classes"]
    N, Cin = fpn_feats_nchw[levels[0]].shape[:2]

    # NCHW -> NHWC once at the module boundary (kernels are channels-last).
    xs = [jnp.transpose(fpn_feats_nchw[lvl], (0, 2, 3, 1)) for lvl in levels]
    (H3, W3), (H4, W4), (H5, W5) = [x.shape[1:3] for x in xs]
    Hout, Wout = out_size
    HW3 = H3 * W3

    # ---- fold / pack parameters for the fused kernel ------------------------
    WA, SC, SH, WF = [], [], [], []
    wf_full = params["final_w"][:, :, 0, 0]                       # (K, 3*Cemb)
    for l, ad in enumerate(params["adapters"]):
        # (Cemb, Cin, 3, 3) -> (kh, kw, Cin, Cemb) -> (9, Cin, Cemb)
        WA.append(jnp.transpose(ad["w"], (2, 3, 1, 0)).reshape(9, Cin, Cemb))
        scale = ad["gamma"] / jnp.sqrt(ad["var"] + BN_EPS)
        SC.append(scale[None, :])
        SH.append((ad["beta"] - ad["mean"] * scale)[None, :])
        WF.append(wf_full[:, l * Cemb:(l + 1) * Cemb].T)          # (Cemb, K)
    WA = jnp.concatenate(WA, axis=0)                              # (27, Cin, Cemb)
    SC = jnp.stack(SC)                                            # (3, 1, Cemb)
    SH = jnp.stack(SH)                                            # (3, 1, Cemb)
    WF = jnp.stack(WF)                                            # (3, Cemb, K)
    bias = params["final_b"][None, :]                             # (1, K)

    R4 = bilinear_matrix_2d((H4, W4), (H3, W3))                   # (HW3, H4*W4)
    R5 = bilinear_matrix_2d((H5, W5), (H3, W3))                   # (HW3, H5*W5)
    Rout = bilinear_matrix_2d((H3, W3), (Hout, Wout))             # (HWout, HW3)
    # TODO(synk): for production-scale output_target_size, factor Rout into
    # separable row/col resize matmuls instead of one dense (HWout, HW3) matrix.

    dims = ((H3, W3), (H4, W4), (H5, W5), Cin, Cemb)

    # -------- fused neck: adapters + resize-to-P3 + final 1x1 conv -----------
    logits = pl.pallas_call(
        partial(_neck_kernel, dims),
        out_shape=jax.ShapeDtypeStruct((N, HW3, K), jnp.float32),
        grid=(N,),
        in_specs=[
            pl.BlockSpec((1, H3, W3, Cin), lambda n: (n, 0, 0, 0)),
            pl.BlockSpec((1, H4, W4, Cin), lambda n: (n, 0, 0, 0)),
            pl.BlockSpec((1, H5, W5, Cin), lambda n: (n, 0, 0, 0)),
            pl.BlockSpec((27, Cin, Cemb), lambda n: (0, 0, 0)),
            pl.BlockSpec((3, 1, Cemb), lambda n: (0, 0, 0)),
            pl.BlockSpec((3, 1, Cemb), lambda n: (0, 0, 0)),
            pl.BlockSpec((HW3, H4 * W4), lambda n: (0, 0)),
            pl.BlockSpec((HW3, H5 * W5), lambda n: (0, 0)),
            pl.BlockSpec((3, Cemb, K), lambda n: (0, 0, 0)),
            pl.BlockSpec((1, K), lambda n: (0, 0)),
        ],
        out_specs=pl.BlockSpec((1, HW3, K), lambda n: (n, 0, 0)),
        scratch_shapes=[
            pltpu.VMEM((H3 + 2, W3 + 2, Cin), jnp.float32),
            pltpu.VMEM((H4 + 2, W4 + 2, Cin), jnp.float32),
            pltpu.VMEM((H5 + 2, W5 + 2, Cin), jnp.float32),
        ],
        compiler_params=pltpu.CompilerParams(dimension_semantics=("parallel",)),
    )(xs[0], xs[1], xs[2], WA, SC, SH, R4, R5, WF, bias)

    # -------- final bilinear upsample to output_target_size ------------------
    HWout = Hout * Wout
    TM = next((t for t in (512, 256, 128, 64, 32, 16, 8) if HWout % t == 0), HWout)
    out_flat = pl.pallas_call(
        _upsample_kernel,
        out_shape=jax.ShapeDtypeStruct((N, HWout, K), jnp.float32),
        grid=(N, HWout // TM),
        in_specs=[
            pl.BlockSpec((TM, HW3), lambda n, t: (t, 0)),
            pl.BlockSpec((1, HW3, K), lambda n, t: (n, 0, 0)),
        ],
        out_specs=pl.BlockSpec((1, TM, K), lambda n, t: (n, t, 0)),
        compiler_params=pltpu.CompilerParams(
            dimension_semantics=("parallel", "parallel")),
    )(Rout, logits)

    # NHWC -> NCHW at the boundary (PyTorch output convention).
    out = out_flat.reshape(N, Hout, Wout, K).transpose(0, 3, 1, 2)
    return {"segmentation": out}


# ----------------------------------------------------------------------------
# Pure-JAX reference (correctness check only)
# ----------------------------------------------------------------------------
def ref_seg_head_forward(fpn_feats_nchw, params, levels, out_size):
    HIGH = lax.Precision.HIGHEST
    adapted = []
    for lvl, ad in zip(levels, params["adapters"]):
        x = fpn_feats_nchw[lvl]
        y = lax.conv_general_dilated(
            x, ad["w"], (1, 1), ((1, 1), (1, 1)),
            dimension_numbers=("NCHW", "OIHW", "NCHW"), precision=HIGH)
        scale = ad["gamma"] / jnp.sqrt(ad["var"] + BN_EPS)
        shift = ad["beta"] - ad["mean"] * scale
        y = jnp.maximum(y * scale[None, :, None, None]
                        + shift[None, :, None, None], 0.0)
        adapted.append(y)

    H3, W3 = adapted[0].shape[-2:]

    def resize(y, out_hw):
        nb, c, h, w = y.shape
        r = bilinear_matrix_2d((h, w), out_hw)
        yf = y.reshape(nb, c, h * w)
        out = jnp.einsum("ncx,yx->ncy", yf, r, precision=HIGH)
        return out.reshape(nb, c, out_hw[0], out_hw[1])

    resized = [adapted[0]] + [resize(a, (H3, W3)) for a in adapted[1:]]
    cat = jnp.concatenate(resized, axis=1)                        # (N, 3*Cemb, H3, W3)
    wf = params["final_w"][:, :, 0, 0]                            # (K, 3*Cemb)
    logits = (jnp.einsum("nchw,kc->nkhw", cat, wf, precision=HIGH)
              + params["final_b"][None, :, None, None])
    return resize(logits, out_size)


# ----------------------------------------------------------------------------
# Synthetic parameters
# ----------------------------------------------------------------------------
def init_params(key, cin, num_classes, levels,
                min_embedding_dim=128, embedding_dim_ratio=0.5):
    cemb = max(min_embedding_dim, int(cin * embedding_dim_ratio))
    ks = iter(jax.random.split(key, 8 + 5 * len(levels)))
    adapters = []
    for _ in levels:
        w = jax.random.normal(next(ks), (cemb, cin, 3, 3), jnp.float32) / math.sqrt(9 * cin)
        gamma = 1.0 + 0.05 * jax.random.normal(next(ks), (cemb,), jnp.float32)
        beta = 0.05 * jax.random.normal(next(ks), (cemb,), jnp.float32)
        mean = 0.05 * jax.random.normal(next(ks), (cemb,), jnp.float32)
        var = jnp.abs(1.0 + 0.05 * jax.random.normal(next(ks), (cemb,), jnp.float32))
        adapters.append(dict(w=w, gamma=gamma, beta=beta, mean=mean, var=var))
    cin_final = cemb * len(levels)
    final_w = (jax.random.normal(next(ks), (num_classes, cin_final, 1, 1), jnp.float32)
               / math.sqrt(cin_final))
    final_b = 0.05 * jax.random.normal(next(ks), (num_classes,), jnp.float32)
    return dict(adapters=adapters, final_w=final_w, final_b=final_b,
                embedding_dim=cemb, num_classes=num_classes)


# ----------------------------------------------------------------------------
if __name__ == "__main__":
    key = jax.random.PRNGKey(0)
    levels = ["P3", "P4", "P5"]
    N, Cin, K = 2, 32, 8                      # batch, fpn_input_channels, num_classes
    spatial = {"P3": (16, 16), "P4": (8, 8), "P5": (4, 4)}
    out_size = (32, 48)                       # small stand-in for (480, 720)

    k_in, k_p = jax.random.split(key)
    in_keys = jax.random.split(k_in, len(levels))
    fpn_feats = OrderedDict()
    for kk, lvl in zip(in_keys, levels):
        h, w = spatial[lvl]
        fpn_feats[lvl] = jax.random.normal(kk, (N, Cin, h, w), jnp.float32)

    params = init_params(k_p, Cin, K, levels)   # embedding_dim -> 128 (lane-dense)

    # Pallas kernel path
    out = seg_head_forward(fpn_feats, params, levels, out_size)
    out = jax.block_until_ready(out)
    seg = out["segmentation"]

    # Pure-JAX reference path (same parameters)
    ref = jax.block_until_ready(ref_seg_head_forward(fpn_feats, params, levels, out_size))

    assert seg.shape == (N, K, out_size[0], out_size[1]), seg.shape
    err = float(jnp.max(jnp.abs(seg - ref)))
    assert jnp.allclose(seg, ref, atol=1e-3, rtol=1e-3), f"max abs err {err}"
    print("KERNEL_OK")
</pallas_src>

<mosaic_0001>
module attributes {stable_mosaic.version = 11 : i64} {
  func.func @_neck_kernel(%arg0: i32, %arg1: memref<1x16x16x32xf32, #tpu.memory_space<vmem>>, %arg2: memref<1x8x8x32xf32, #tpu.memory_space<vmem>>, %arg3: memref<1x4x4x32xf32, #tpu.memory_space<vmem>>, %arg4: memref<27x32x128xf32, #tpu.memory_space<vmem>>, %arg5: memref<3x1x128xf32, #tpu.memory_space<vmem>>, %arg6: memref<3x1x128xf32, #tpu.memory_space<vmem>>, %arg7: memref<256x64xf32, #tpu.memory_space<vmem>>, %arg8: memref<256x16xf32, #tpu.memory_space<vmem>>, %arg9: memref<3x128x8xf32, #tpu.memory_space<vmem>>, %arg10: memref<1x8xf32, #tpu.memory_space<vmem>>, %arg11: memref<1x256x8xf32, #tpu.memory_space<vmem>>, %arg12: memref<18x18x32xf32, #tpu.memory_space<vmem>>, %arg13: memref<10x10x32xf32, #tpu.memory_space<vmem>>, %arg14: memref<6x6x32xf32, #tpu.memory_space<vmem>>) attributes {dimension_semantics = [#tpu.dimension_semantics<parallel>], iteration_bounds = array<i64: 2>, scalar_prefetch = 0 : i64, scratch_operands = 3 : i64, tpu.core_type = #tpu.core_type<tc>, window_params = [{transform_indices = @transform_0, window_bounds = array<i64: 1, 16, 16, 32>}, {transform_indices = @transform_1, window_bounds = array<i64: 1, 8, 8, 32>}, {transform_indices = @transform_2, window_bounds = array<i64: 1, 4, 4, 32>}, {pipeline_mode = #tpu.pipeline_mode<synchronous>, transform_indices = @transform_3, window_bounds = array<i64: 27, 32, 128>}, {pipeline_mode = #tpu.pipeline_mode<synchronous>, transform_indices = @transform_4, window_bounds = array<i64: 3, 1, 128>}, {pipeline_mode = #tpu.pipeline_mode<synchronous>, transform_indices = @transform_5, window_bounds = array<i64: 3, 1, 128>}, {pipeline_mode = #tpu.pipeline_mode<synchronous>, transform_indices = @transform_6, window_bounds = array<i64: 256, 64>}, {pipeline_mode = #tpu.pipeline_mode<synchronous>, transform_indices = @transform_7, window_bounds = array<i64: 256, 16>}, {pipeline_mode = #tpu.pipeline_mode<synchronous>, transform_indices = @transform_8, window_bounds = array<i64: 3, 128, 8>}, {pipeline_mode = #tpu.pipeline_mode<synchronous>, transform_indices = @transform_9, window_bounds = array<i64: 1, 8>}, {transform_indices = @transform_10, window_bounds = array<i64: 1, 256, 8>}]} {
    %c0 = arith.constant 0 : index
    %c0_0 = arith.constant 0 : index
    %c0_1 = arith.constant 0 : index
    %c0_2 = arith.constant 0 : index
    %0 = vector.load %arg1[%c0, %c0_0, %c0_1, %c0_2] : memref<1x16x16x32xf32, #tpu.memory_space<vmem>>, vector<1x16x16x32xf32>
    %1 = vector.shape_cast %0 : vector<1x16x16x32xf32> to vector<16x16x32xf32>
    %cst = arith.constant 0.000000e+00 : f32
    %2 = vector.broadcast %cst : f32 to vector<18x18x32xf32>
    %c0_3 = arith.constant 0 : index
    %c0_4 = arith.constant 0 : index
    %c0_5 = arith.constant 0 : index
    %3 = vector.load %arg12[%c0_3, %c0_4, %c0_5] : memref<18x18x32xf32, #tpu.memory_space<vmem>>, vector<18x18x32xf32>
    tpu.vector_store %arg12[%c0_3, %c0_4, %c0_5], %2 {strides = array<i32>} : memref<18x18x32xf32, #tpu.memory_space<vmem>>, vector<18x18x32xf32>,
    %c1 = arith.constant 1 : index
    %c1_6 = arith.constant 1 : index
    %c0_7 = arith.constant 0 : index
    %4 = vector.load %arg12[%c1, %c1_6, %c0_7] : memref<18x18x32xf32, #tpu.memory_space<vmem>>, vector<16x16x32xf32>
    tpu.vector_store %arg12[%c1, %c1_6, %c0_7], %1 {strides = array<i32>} : memref<18x18x32xf32, #tpu.memory_space<vmem>>, vector<16x16x32xf32>,
    %cst_8 = arith.constant 0.000000e+00 : f32
    %5 = vector.broadcast %cst_8 : f32 to vector<256x128xf32>
    %c0_9 = arith.constant 0 : index
    %c0_10 = arith.constant 0 : index
    %c0_11 = arith.constant 0 : index
    %6 = vector.load %arg12[%c0_9, %c0_10, %c0_11] : memref<18x18x32xf32, #tpu.memory_space<vmem>>, vector<16x16x32xf32>
    %7 = vector.shape_cast %6 : vector<16x16x32xf32> to vector<256x32xf32>
    %c0_12 = arith.constant 0 : index
    %c0_13 = arith.constant 0 : index
    %c0_14 = arith.constant 0 : index
    %8 = vector.load %arg4[%c0_12, %c0_13, %c0_14] : memref<27x32x128xf32, #tpu.memory_space<vmem>>, vector<1x32x128xf32>
    %9 = vector.shape_cast %8 : vector<1x32x128xf32> to vector<32x128xf32>
    %cst_15 = arith.constant dense<0.000000e+00> : vector<256x128xf32>
    %10 = tpu.matmul %7, %9, %cst_15 {dimension_numbers = #tpu.dot_dimension_numbers<[1], [0], [0], [1], [0, 0, 1, 1], [], []>} : vector<256x32xf32>, vector<32x128xf32>, vector<256x128xf32> -> vector<256x128xf32>
    %11 = arith.addf %5, %10 : vector<256x128xf32>
    %c0_16 = arith.constant 0 : index
    %c1_17 = arith.constant 1 : index
    %c0_18 = arith.constant 0 : index
    %12 = vector.load %arg12[%c0_16, %c1_17, %c0_18] : memref<18x18x32xf32, #tpu.memory_space<vmem>>, vector<16x16x32xf32>
    %13 = vector.shape_cast %12 : vector<16x16x32xf32> to vector<256x32xf32>
    %c1_19 = arith.constant 1 : index
    %c0_20 = arith.constant 0 : index
    %c0_21 = arith.constant 0 : index
    %14 = vector.load %arg4[%c1_19, %c0_20, %c0_21] : memref<27x32x128xf32, #tpu.memory_space<vmem>>, vector<1x32x128xf32>
    %15 = vector.shape_cast %14 : vector<1x32x128xf32> to vector<32x128xf32>
    %cst_22 = arith.constant dense<0.000000e+00> : vector<256x128xf32>
    %16 = tpu.matmul %13, %15, %cst_22 {dimension_numbers = #tpu.dot_dimension_numbers<[1], [0], [0], [1], [0, 0, 1, 1], [], []>} : vector<256x32xf32>, vector<32x128xf32>, vector<256x128xf32> -> vector<256x128xf32>
    %17 = arith.addf %11, %16 : vector<256x128xf32>
    %c0_23 = arith.constant 0 : index
    %c2 = arith.constant 2 : index
    %c0_24 = arith.constant 0 : index
    %18 = vector.load %arg12[%c0_23, %c2, %c0_24] : memref<18x18x32xf32, #tpu.memory_space<vmem>>, vector<16x16x32xf32>
    %19 = vector.shape_cast %18 : vector<16x16x32xf32> to vector<256x32xf32>
    %c2_25 = arith.constant 2 : index
    %c0_26 = arith.constant 0 : index
    %c0_27 = arith.constant 0 : index
    %20 = vector.load %arg4[%c2_25, %c0_26, %c0_27] : memref<27x32x128xf32, #tpu.memory_space<vmem>>, vector<1x32x128xf32>
    %21 = vector.shape_cast %20 : vector<1x32x128xf32> to vector<32x128xf32>
    %cst_28 = arith.constant dense<0.000000e+00> : vector<256x128xf32>
    %22 = tpu.matmul %19, %21, %cst_28 {dimension_numbers = #tpu.dot_dimension_numbers<[1], [0], [0], [1], [0, 0, 1, 1], [], []>} : vector<256x32xf32>, vector<32x128xf32>, vector<256x128xf32> -> vector<256x128xf32>
    %23 = arith.addf %17, %22 : vector<256x128xf32>
    %c1_29 = arith.constant 1 : index
    %c0_30 = arith.constant 0 : index
    %c0_31 = arith.constant 0 : index
    %24 = vector.load %arg12[%c1_29, %c0_30, %c0_31] : memref<18x18x32xf32, #tpu.memory_space<vmem>>, vector<16x16x32xf32>
    %25 = vector.shape_cast %24 : vector<16x16x32xf32> to vector<256x32xf32>
    %c3 = arith.constant 3 : index
    %c0_32 = arith.constant 0 : index
    %c0_33 = arith.constant 0 : index
    %26 = vector.load %arg4[%c3, %c0_32, %c0_33] : memref<27x32x128xf32, #tpu.memory_space<vmem>>, vector<1x32x128xf32>
    %27 = vector.shape_cast %26 : vector<1x32x128xf32> to vector<32x128xf32>
    %cst_34 = arith.constant dense<0.000000e+00> : vector<256x128xf32>
    %28 = tpu.matmul %25, %27, %cst_34 {dimension_numbers = #tpu.dot_dimension_numbers<[1], [0], [0], [1], [0, 0, 1, 1], [], []>} : vector<256x32xf32>, vector<32x128xf32>, vector<256x128xf32> -> vector<256x128xf32>
    %29 = arith.addf %23, %28 : vector<256x128xf32>
    %c1_35 = arith.constant 1 : index
    %c1_36 = arith.constant 1 : index
    %c0_37 = arith.constant 0 : index
    %30 = vector.load %arg12[%c1_35, %c1_36, %c0_37] : memref<18x18x32xf32, #tpu.memory_space<vmem>>, vector<16x16x32xf32>
    %31 = vector.shape_cast %30 : vector<16x16x32xf32> to vector<256x32xf32>
    %c4 = arith.constant 4 : index
    %c0_38 = arith.constant 0 : index
    %c0_39 = arith.constant 0 : index
    %32 = vector.load %arg4[%c4, %c0_38, %c0_39] : memref<27x32x128xf32, #tpu.memory_space<vmem>>, vector<1x32x128xf32>
    %33 = vector.shape_cast %32 : vector<1x32x128xf32> to vector<32x128xf32>
    %cst_40 = arith.constant dense<0.000000e+00> : vector<256x128xf32>
    %34 = tpu.matmul %31, %33, %cst_40 {dimension_numbers = #tpu.dot_dimension_numbers<[1], [0], [0], [1], [0, 0, 1, 1], [], []>} : vector<256x32xf32>, vector<32x128xf32>, vector<256x128xf32> -> vector<256x128xf32>
    %35 = arith.addf %29, %34 : vector<256x128xf32>
    %c1_41 = arith.constant 1 : index
    %c2_42 = arith.constant 2 : index
    %c0_43 = arith.constant 0 : index
    %36 = vector.load %arg12[%c1_41, %c2_42, %c0_43] : memref<18x18x32xf32, #tpu.memory_space<vmem>>, vector<16x16x32xf32>
    %37 = vector.shape_cast %36 : vector<16x16x32xf32> to vector<256x32xf32>
    %c5 = arith.constant 5 : index
    %c0_44 = arith.constant 0 : index
    %c0_45 = arith.constant 0 : index
    %38 = vector.load %arg4[%c5, %c0_44, %c0_45] : memref<27x32x128xf32, #tpu.memory_space<vmem>>, vector<1x32x128xf32>
    %39 = vector.shape_cast %38 : vector<1x32x128xf32> to vector<32x128xf32>
    %cst_46 = arith.constant dense<0.000000e+00> : vector<256x128xf32>
    %40 = tpu.matmul %37, %39, %cst_46 {dimension_numbers = #tpu.dot_dimension_numbers<[1], [0], [0], [1], [0, 0, 1, 1], [], []>} : vector<256x32xf32>, vector<32x128xf32>, vector<256x128xf32> -> vector<256x128xf32>
    %41 = arith.addf %35, %40 : vector<256x128xf32>
    %c2_47 = arith.constant 2 : index
    %c0_48 = arith.constant 0 : index
    %c0_49 = arith.constant 0 : index
    %42 = vector.load %arg12[%c2_47, %c0_48, %c0_49] : memref<18x18x32xf32, #tpu.memory_space<vmem>>, vector<16x16x32xf32>
    %43 = vector.shape_cast %42 : vector<16x16x32xf32> to vector<256x32xf32>
    %c6 = arith.constant 6 : index
    %c0_50 = arith.constant 0 : index
    %c0_51 = arith.constant 0 : index
    %44 = vector.load %arg4[%c6, %c0_50, %c0_51] : memref<27x32x128xf32, #tpu.memory_space<vmem>>, vector<1x32x128xf32>
    %45 = vector.shape_cast %44 : vector<1x32x128xf32> to vector<32x128xf32>
    %cst_52 = arith.constant dense<0.000000e+00> : vector<256x128xf32>
    %46 = tpu.matmul %43, %45, %cst_52 {dimension_numbers = #tpu.dot_dimension_numbers<[1], [0], [0], [1], [0, 0, 1, 1], [], []>} : vector<256x32xf32>, vector<32x128xf32>, vector<256x128xf32> -> vector<256x128xf32>
    %47 = arith.addf %41, %46 : vector<256x128xf32>
    %c2_53 = arith.constant 2 : index
    %c1_54 = arith.constant 1 : index
    %c0_55 = arith.constant 0 : index
    %48 = vector.load %arg12[%c2_53, %c1_54, %c0_55] : memref<18x18x32xf32, #tpu.memory_space<vmem>>, vector<16x16x32xf32>
    %49 = vector.shape_cast %48 : vector<16x16x32xf32> to vector<256x32xf32>
    %c7 = arith.constant 7 : index
    %c0_56 = arith.constant 0 : index
    %c0_57 = arith.constant 0 : index
    %50 = vector.load %arg4[%c7, %c0_56, %c0_57] : memref<27x32x128xf32, #tpu.memory_space<vmem>>, vector<1x32x128xf32>
    %51 = vector.shape_cast %50 : vector<1x32x128xf32> to vector<32x128xf32>
    %cst_58 = arith.constant dense<0.000000e+00> : vector<256x128xf32>
    %52 = tpu.matmul %49, %51, %cst_58 {dimension_numbers = #tpu.dot_dimension_numbers<[1], [0], [0], [1], [0, 0, 1, 1], [], []>} : vector<256x32xf32>, vector<32x128xf32>, vector<256x128xf32> -> vector<256x128xf32>
    %53 = arith.addf %47, %52 : vector<256x128xf32>
    %c2_59 = arith.constant 2 : index
    %c2_60 = arith.constant 2 : index
    %c0_61 = arith.constant 0 : index
    %54 = vector.load %arg12[%c2_59, %c2_60, %c0_61] : memref<18x18x32xf32, #tpu.memory_space<vmem>>, vector<16x16x32xf32>
    %55 = vector.shape_cast %54 : vector<16x16x32xf32> to vector<256x32xf32>
    %c8 = arith.constant 8 : index
    %c0_62 = arith.constant 0 : index
    %c0_63 = arith.constant 0 : index
    %56 = vector.load %arg4[%c8, %c0_62, %c0_63] : memref<27x32x128xf32, #tpu.memory_space<vmem>>, vector<1x32x128xf32>
    %57 = vector.shape_cast %56 : vector<1x32x128xf32> to vector<32x128xf32>
    %cst_64 = arith.constant dense<0.000000e+00> : vector<256x128xf32>
    %58 = tpu.matmul %55, %57, %cst_64 {dimension_numbers = #tpu.dot_dimension_numbers<[1], [0], [0], [1], [0, 0, 1, 1], [], []>} : vector<256x32xf32>, vector<32x128xf32>, vector<256x128xf32> -> vector<256x128xf32>
    %59 = arith.addf %53, %58 : vector<256x128xf32>
    %c0_65 = arith.constant 0 : index
    %c0_66 = arith.constant 0 : index
    %c0_67 = arith.constant 0 : index
    %60 = vector.load %arg5[%c0_65, %c0_66, %c0_67] : memref<3x1x128xf32, #tpu.memory_space<vmem>>, vector<1x1x128xf32>
    %61 = vector.shape_cast %60 : vector<1x1x128xf32> to vector<1x128xf32>
    %62 = vector.broadcast %61 : vector<1x128xf32> to vector<256x128xf32>
    %63 = arith.mulf %59, %62 : vector<256x128xf32>
    %c0_68 = arith.constant 0 : index
    %c0_69 = arith.constant 0 : index
    %c0_70 = arith.constant 0 : index
    %64 = vector.load %arg6[%c0_68, %c0_69, %c0_70] : memref<3x1x128xf32, #tpu.memory_space<vmem>>, vector<1x1x128xf32>
    %65 = vector.shape_cast %64 : vector<1x1x128xf32> to vector<1x128xf32>
    %66 = vector.broadcast %65 : vector<1x128xf32> to vector<256x128xf32>
    %67 = arith.addf %63, %66 : vector<256x128xf32>
    %cst_71 = arith.constant 0.000000e+00 : f32
    %68 = vector.broadcast %cst_71 : f32 to vector<256x128xf32>
    %69 = arith.maximumf %67, %68 : vector<256x128xf32>
    %c0_72 = arith.constant 0 : index
    %c0_73 = arith.constant 0 : index
    %c0_74 = arith.constant 0 : index
    %c0_75 = arith.constant 0 : index
    %70 = vector.load %arg2[%c0_72, %c0_73, %c0_74, %c0_75] : memref<1x8x8x32xf32, #tpu.memory_space<vmem>>, vector<1x8x8x32xf32>
    %71 = vector.shape_cast %70 : vector<1x8x8x32xf32> to vector<8x8x32xf32>
    %cst_76 = arith.constant 0.000000e+00 : f32
    %72 = vector.broadcast %cst_76 : f32 to vector<10x10x32xf32>
    %c0_77 = arith.constant 0 : index
    %c0_78 = arith.constant 0 : index
    %c0_79 = arith.constant 0 : index
    %73 = vector.load %arg13[%c0_77, %c0_78, %c0_79] : memref<10x10x32xf32, #tpu.memory_space<vmem>>, vector<10x10x32xf32>
    tpu.vector_store %arg13[%c0_77, %c0_78, %c0_79], %72 {strides = array<i32>} : memref<10x10x32xf32, #tpu.memory_space<vmem>>, vector<10x10x32xf32>,
    %c1_80 = arith.constant 1 : index
    %c1_81 = arith.constant 1 : index
    %c0_82 = arith.constant 0 : index
    %74 = vector.load %arg13[%c1_80, %c1_81, %c0_82] : memref<10x10x32xf32, #tpu.memory_space<vmem>>, vector<8x8x32xf32>
    tpu.vector_store %arg13[%c1_80, %c1_81, %c0_82], %71 {strides = array<i32>} : memref<10x10x32xf32, #tpu.memory_space<vmem>>, vector<8x8x32xf32>,
    %cst_83 = arith.constant 0.000000e+00 : f32
    %75 = vector.broadcast %cst_83 : f32 to vector<64x128xf32>
    %c0_84 = arith.constant 0 : index
    %c0_85 = arith.constant 0 : index
    %c0_86 = arith.constant 0 : index
    %76 = vector.load %arg13[%c0_84, %c0_85, %c0_86] : memref<10x10x32xf32, #tpu.memory_space<vmem>>, vector<8x8x32xf32>
    %77 = vector.shape_cast %76 : vector<8x8x32xf32> to vector<64x32xf32>
    %c9 = arith.constant 9 : index
    %c0_87 = arith.constant 0 : index
    %c0_88 = arith.constant 0 : index
    %78 = vector.load %arg4[%c9, %c0_87, %c0_88] : memref<27x32x128xf32, #tpu.memory_space<vmem>>, vector<1x32x128xf32>
    %79 = vector.shape_cast %78 : vector<1x32x128xf32> to vector<32x128xf32>
    %cst_89 = arith.constant dense<0.000000e+00> : vector<64x128xf32>
    %80 = tpu.matmul %77, %79, %cst_89 {dimension_numbers = #tpu.dot_dimension_numbers<[1], [0], [0], [1], [0, 0, 1, 1], [], []>} : vector<64x32xf32>, vector<32x128xf32>, vector<64x128xf32> -> vector<64x128xf32>
    %81 = arith.addf %75, %80 : vector<64x128xf32>
    %c0_90 = arith.constant 0 : index
    %c1_91 = arith.constant 1 : index
    %c0_92 = arith.constant 0 : index
    %82 = vector.load %arg13[%c0_90, %c1_91, %c0_92] : memref<10x10x32xf32, #tpu.memory_space<vmem>>, vector<8x8x32xf32>
    %83 = vector.shape_cast %82 : vector<8x8x32xf32> to vector<64x32xf32>
    %c10 = arith.constant 10 : index
    %c0_93 = arith.constant 0 : index
    %c0_94 = arith.constant 0 : index
    %84 = vector.load %arg4[%c10, %c0_93, %c0_94] : memref<27x32x128xf32, #tpu.memory_space<vmem>>, vector<1x32x128xf32>
    %85 = vector.shape_cast %84 : vector<1x32x128xf32> to vector<32x128xf32>
    %cst_95 = arith.constant dense<0.000000e+00> : vector<64x128xf32>
    %86 = tpu.matmul %83, %85, %cst_95 {dimension_numbers = #tpu.dot_dimension_numbers<[1], [0], [0], [1], [0, 0, 1, 1], [], []>} : vector<64x32xf32>, vector<32x128xf32>, vector<64x128xf32> -> vector<64x128xf32>
    %87 = arith.addf %81, %86 : vector<64x128xf32>
    %c0_96 = arith.constant 0 : index
    %c2_97 = arith.constant 2 : index
    %c0_98 = arith.constant 0 : index
    %88 = vector.load %arg13[%c0_96, %c2_97, %c0_98] : memref<10x10x32xf32, #tpu.memory_space<vmem>>, vector<8x8x32xf32>
    %89 = vector.shape_cast %88 : vector<8x8x32xf32> to vector<64x32xf32>
    %c11 = arith.constant 11 : index
    %c0_99 = arith.constant 0 : index
    %c0_100 = arith.constant 0 : index
    %90 = vector.load %arg4[%c11, %c0_99, %c0_100] : memref<27x32x128xf32, #tpu.memory_space<vmem>>, vector<1x32x128xf32>
    %91 = vector.shape_cast %90 : vector<1x32x128xf32> to vector<32x128xf32>
    %cst_101 = arith.constant dense<0.000000e+00> : vector<64x128xf32>
    %92 = tpu.matmul %89, %91, %cst_101 {dimension_numbers = #tpu.dot_dimension_numbers<[1], [0], [0], [1], [0, 0, 1, 1], [], []>} : vector<64x32xf32>, vector<32x128xf32>, vector<64x128xf32> -> vector<64x128xf32>
    %93 = arith.addf %87, %92 : vector<64x128xf32>
    %c1_102 = arith.constant 1 : index
    %c0_103 = arith.constant 0 : index
    %c0_104 = arith.constant 0 : index
    %94 = vector.load %arg13[%c1_102, %c0_103, %c0_104] : memref<10x10x32xf32, #tpu.memory_space<vmem>>, vector<8x8x32xf32>
    %95 = vector.shape_cast %94 : vector<8x8x32xf32> to vector<64x32xf32>
    %c12 = arith.constant 12 : index
    %c0_105 = arith.constant 0 : index
    %c0_106 = arith.constant 0 : index
    %96 = vector.load %arg4[%c12, %c0_105, %c0_106] : memref<27x32x128xf32, #tpu.memory_space<vmem>>, vector<1x32x128xf32>
    %97 = vector.shape_cast %96 : vector<1x32x128xf32> to vector<32x128xf32>
    %cst_107 = arith.constant dense<0.000000e+00> : vector<64x128xf32>
    %98 = tpu.matmul %95, %97, %cst_107 {dimension_numbers = #tpu.dot_dimension_numbers<[1], [0], [0], [1], [0, 0, 1, 1], [], []>} : vector<64x32xf32>, vector<32x128xf32>, vector<64x128xf32> -> vector<64x128xf32>
    %99 = arith.addf %93, %98 : vector<64x128xf32>
    %c1_108 = arith.constant 1 : index
    %c1_109 = arith.constant 1 : index
    %c0_110 = arith.constant 0 : index
    %100 = vector.load %arg13[%c1_108, %c1_109, %c0_110] : memref<10x10x32xf32, #tpu.memory_space<vmem>>, vector<8x8x32xf32>
    %101 = vector.shape_cast %100 : vector<8x8x32xf32> to vector<64x32xf32>
    %c13 = arith.constant 13 : index
    %c0_111 = arith.constant 0 : index
    %c0_112 = arith.constant 0 : index
    %102 = vector.load %arg4[%c13, %c0_111, %c0_112] : memref<27x32x128xf32, #tpu.memory_space<vmem>>, vector<1x32x128xf32>
    %103 = vector.shape_cast %102 : vector<1x32x128xf32> to vector<32x128xf32>
    %cst_113 = arith.constant dense<0.000000e+00> : vector<64x128xf32>
    %104 = tpu.matmul %101, %103, %cst_113 {dimension_numbers = #tpu.dot_dimension_numbers<[1], [0], [0], [1], [0, 0, 1, 1], [], []>} : vector<64x32xf32>, vector<32x128xf32>, vector<64x128xf32> -> vector<64x128xf32>
    %105 = arith.addf %99, %104 : vector<64x128xf32>
    %c1_114 = arith.constant 1 : index
    %c2_115 = arith.constant 2 : index
    %c0_116 = arith.constant 0 : index
    %106 = vector.load %arg13[%c1_114, %c2_115, %c0_116] : memref<10x10x32xf32, #tpu.memory_space<vmem>>, vector<8x8x32xf32>
    %107 = vector.shape_cast %106 : vector<8x8x32xf32> to vector<64x32xf32>
    %c14 = arith.constant 14 : index
    %c0_117 = arith.constant 0 : index
    %c0_118 = arith.constant 0 : index
    %108 = vector.load %arg4[%c14, %c0_117, %c0_118] : memref<27x32x128xf32, #tpu.memory_space<vmem>>, vector<1x32x128xf32>
    %109 = vector.shape_cast %108 : vector<1x32x128xf32> to vector<32x128xf32>
    %cst_119 = arith.constant dense<0.000000e+00> : vector<64x128xf32>
    %110 = tpu.matmul %107, %109, %cst_119 {dimension_numbers = #tpu.dot_dimension_numbers<[1], [0], [0], [1], [0, 0, 1, 1], [], []>} : vector<64x32xf32>, vector<32x128xf32>, vector<64x128xf32> -> vector<64x128xf32>
    %111 = arith.addf %105, %110 : vector<64x128xf32>
    %c2_120 = arith.constant 2 : index
    %c0_121 = arith.constant 0 : index
    %c0_122 = arith.constant 0 : index
    %112 = vector.load %arg13[%c2_120, %c0_121, %c0_122] : memref<10x10x32xf32, #tpu.memory_space<vmem>>, vector<8x8x32xf32>
    %113 = vector.shape_cast %112 : vector<8x8x32xf32> to vector<64x32xf32>
    %c15 = arith.constant 15 : index
    %c0_123 = arith.constant 0 : index
    %c0_124 = arith.constant 0 : index
    %114 = vector.load %arg4[%c15, %c0_123, %c0_124] : memref<27x32x128xf32, #tpu.memory_space<vmem>>, vector<1x32x128xf32>
    %115 = vector.shape_cast %114 : vector<1x32x128xf32> to vector<32x128xf32>
    %cst_125 = arith.constant dense<0.000000e+00> : vector<64x128xf32>
    %116 = tpu.matmul %113, %115, %cst_125 {dimension_numbers = #tpu.dot_dimension_numbers<[1], [0], [0], [1], [0, 0, 1, 1], [], []>} : vector<64x32xf32>, vector<32x128xf32>, vector<64x128xf32> -> vector<64x128xf32>
    %117 = arith.addf %111, %116 : vector<64x128xf32>
    %c2_126 = arith.constant 2 : index
    %c1_127 = arith.constant 1 : index
    %c0_128 = arith.constant 0 : index
    %118 = vector.load %arg13[%c2_126, %c1_127, %c0_128] : memref<10x10x32xf32, #tpu.memory_space<vmem>>, vector<8x8x32xf32>
    %119 = vector.shape_cast %118 : vector<8x8x32xf32> to vector<64x32xf32>
    %c16 = arith.constant 16 : index
    %c0_129 = arith.constant 0 : index
    %c0_130 = arith.constant 0 : index
    %120 = vector.load %arg4[%c16, %c0_129, %c0_130] : memref<27x32x128xf32, #tpu.memory_space<vmem>>, vector<1x32x128xf32>
    %121 = vector.shape_cast %120 : vector<1x32x128xf32> to vector<32x128xf32>
    %cst_131 = arith.constant dense<0.000000e+00> : vector<64x128xf32>
    %122 = tpu.matmul %119, %121, %cst_131 {dimension_numbers = #tpu.dot_dimension_numbers<[1], [0], [0], [1], [0, 0, 1, 1], [], []>} : vector<64x32xf32>, vector<32x128xf32>, vector<64x128xf32> -> vector<64x128xf32>
    %123 = arith.addf %117, %122 : vector<64x128xf32>
    %c2_132 = arith.constant 2 : index
    %c2_133 = arith.constant 2 : index
    %c0_134 = arith.constant 0 : index
    %124 = vector.load %arg13[%c2_132, %c2_133, %c0_134] : memref<10x10x32xf32, #tpu.memory_space<vmem>>, vector<8x8x32xf32>
    %125 = vector.shape_cast %124 : vector<8x8x32xf32> to vector<64x32xf32>
    %c17 = arith.constant 17 : index
    %c0_135 = arith.constant 0 : index
    %c0_136 = arith.constant 0 : index
    %126 = vector.load %arg4[%c17, %c0_135, %c0_136] : memref<27x32x128xf32, #tpu.memory_space<vmem>>, vector<1x32x128xf32>
    %127 = vector.shape_cast %126 : vector<1x32x128xf32> to vector<32x128xf32>
    %cst_137 = arith.constant dense<0.000000e+00> : vector<64x128xf32>
    %128 = tpu.matmul %125, %127, %cst_137 {dimension_numbers = #tpu.dot_dimension_numbers<[1], [0], [0], [1], [0, 0, 1, 1], [], []>} : vector<64x32xf32>, vector<32x128xf32>, vector<64x128xf32> -> vector<64x128xf32>
    %129 = arith.addf %123, %128 : vector<64x128xf32>
    %c1_138 = arith.constant 1 : index
    %c0_139 = arith.constant 0 : index
    %c0_140 = arith.constant 0 : index
    %130 = vector.load %arg5[%c1_138, %c0_139, %c0_140] : memref<3x1x128xf32, #tpu.memory_space<vmem>>, vector<1x1x128xf32>
    %131 = vector.shape_cast %130 : vector<1x1x128xf32> to vector<1x128xf32>
    %132 = vector.broadcast %131 : vector<1x128xf32> to vector<64x128xf32>
    %133 = arith.mulf %129, %132 : vector<64x128xf32>
    %c1_141 = arith.constant 1 : index
    %c0_142 = arith.constant 0 : index
    %c0_143 = arith.constant 0 : index
    %134 = vector.load %arg6[%c1_141, %c0_142, %c0_143] : memref<3x1x128xf32, #tpu.memory_space<vmem>>, vector<1x1x128xf32>
    %135 = vector.shape_cast %134 : vector<1x1x128xf32> to vector<1x128xf32>
    %136 = vector.broadcast %135 : vector<1x128xf32> to vector<64x128xf32>
    %137 = arith.addf %133, %136 : vector<64x128xf32>
    %cst_144 = arith.constant 0.000000e+00 : f32
    %138 = vector.broadcast %cst_144 : f32 to vector<64x128xf32>
    %139 = arith.maximumf %137, %138 : vector<64x128xf32>
    %c0_145 = arith.constant 0 : index
    %c0_146 = arith.constant 0 : index
    %c0_147 = arith.constant 0 : index
    %c0_148 = arith.constant 0 : index
    %140 = vector.load %arg3[%c0_145, %c0_146, %c0_147, %c0_148] : memref<1x4x4x32xf32, #tpu.memory_space<vmem>>, vector<1x4x4x32xf32>
    %141 = vector.shape_cast %140 : vector<1x4x4x32xf32> to vector<4x4x32xf32>
    %cst_149 = arith.constant 0.000000e+00 : f32
    %142 = vector.broadcast %cst_149 : f32 to vector<6x6x32xf32>
    %c0_150 = arith.constant 0 : index
    %c0_151 = arith.constant 0 : index
    %c0_152 = arith.constant 0 : index
    %143 = vector.load %arg14[%c0_150, %c0_151, %c0_152] : memref<6x6x32xf32, #tpu.memory_space<vmem>>, vector<6x6x32xf32>
    tpu.vector_store %arg14[%c0_150, %c0_151, %c0_152], %142 {strides = array<i32>} : memref<6x6x32xf32, #tpu.memory_space<vmem>>, vector<6x6x32xf32>,
    %c1_153 = arith.constant 1 : index
    %c1_154 = arith.constant 1 : index
    %c0_155 = arith.constant 0 : index
    %144 = vector.load %arg14[%c1_153, %c1_154, %c0_155] : memref<6x6x32xf32, #tpu.memory_space<vmem>>, vector<4x4x32xf32>
    tpu.vector_store %arg14[%c1_153, %c1_154, %c0_155], %141 {strides = array<i32>} : memref<6x6x32xf32, #tpu.memory_space<vmem>>, vector<4x4x32xf32>,
    %cst_156 = arith.constant 0.000000e+00 : f32
    %145 = vector.broadcast %cst_156 : f32 to vector<16x128xf32>
    %c0_157 = arith.constant 0 : index
    %c0_158 = arith.constant 0 : index
    %c0_159 = arith.constant 0 : index
    %146 = vector.load %arg14[%c0_157, %c0_158, %c0_159] : memref<6x6x32xf32, #tpu.memory_space<vmem>>, vector<4x4x32xf32>
    %147 = vector.shape_cast %146 : vector<4x4x32xf32> to vector<16x32xf32>
    %c18 = arith.constant 18 : index
    %c0_160 = arith.constant 0 : index
    %c0_161 = arith.constant 0 : index
    %148 = vector.load %arg4[%c18, %c0_160, %c0_161] : memref<27x32x128xf32, #tpu.memory_space<vmem>>, vector<1x32x128xf32>
    %149 = vector.shape_cast %148 : vector<1x32x128xf32> to vector<32x128xf32>
    %cst_162 = arith.constant dense<0.000000e+00> : vector<16x128xf32>
    %150 = tpu.matmul %147, %149, %cst_162 {dimension_numbers = #tpu.dot_dimension_numbers<[1], [0], [0], [1], [0, 0, 1, 1], [], []>} : vector<16x32xf32>, vector<32x128xf32>, vector<16x128xf32> -> vector<16x128xf32>
    %151 = arith.addf %145, %150 : vector<16x128xf32>
    %c0_163 = arith.constant 0 : index
    %c1_164 = arith.constant 1 : index
    %c0_165 = arith.constant 0 : index
    %152 = vector.load %arg14[%c0_163, %c1_164, %c0_165] : memref<6x6x32xf32, #tpu.memory_space<vmem>>, vector<4x4x32xf32>
    %153 = vector.shape_cast %152 : vector<4x4x32xf32> to vector<16x32xf32>
    %c19 = arith.constant 19 : index
    %c0_166 = arith.constant 0 : index
    %c0_167 = arith.constant 0 : index
    %154 = vector.load %arg4[%c19, %c0_166, %c0_167] : memref<27x32x128xf32, #tpu.memory_space<vmem>>, vector<1x32x128xf32>
    %155 = vector.shape_cast %154 : vector<1x32x128xf32> to vector<32x128xf32>
    %cst_168 = arith.constant dense<0.000000e+00> : vector<16x128xf32>
    %156 = tpu.matmul %153, %155, %cst_168 {dimension_numbers = #tpu.dot_dimension_numbers<[1], [0], [0], [1], [0, 0, 1, 1], [], []>} : vector<16x32xf32>, vector<32x128xf32>, vector<16x128xf32> -> vector<16x128xf32>
    %157 = arith.addf %151, %156 : vector<16x128xf32>
    %c0_169 = arith.constant 0 : index
    %c2_170 = arith.constant 2 : index
    %c0_171 = arith.constant 0 : index
    %158 = vector.load %arg14[%c0_169, %c2_170, %c0_171] : memref<6x6x32xf32, #tpu.memory_space<vmem>>, vector<4x4x32xf32>
    %159 = vector.shape_cast %158 : vector<4x4x32xf32> to vector<16x32xf32>
    %c20 = arith.constant 20 : index
    %c0_172 = arith.constant 0 : index
    %c0_173 = arith.constant 0 : index
    %160 = vector.load %arg4[%c20, %c0_172, %c0_173] : memref<27x32x128xf32, #tpu.memory_space<vmem>>, vector<1x32x128xf32>
    %161 = vector.shape_cast %160 : vector<1x32x128xf32> to vector<32x128xf32>
    %cst_174 = arith.constant dense<0.000000e+00> : vector<16x128xf32>
    %162 = tpu.matmul %159, %161, %cst_174 {dimension_numbers = #tpu.dot_dimension_numbers<[1], [0], [0], [1], [0, 0, 1, 1], [], []>} : vector<16x32xf32>, vector<32x128xf32>, vector<16x128xf32> -> vector<16x128xf32>
    %163 = arith.addf %157, %162 : vector<16x128xf32>
    %c1_175 = arith.constant 1 : index
    %c0_176 = arith.constant 0 : index
    %c0_177 = arith.constant 0 : index
    %164 = vector.load %arg14[%c1_175, %c0_176, %c0_177] : memref<6x6x32xf32, #tpu.memory_space<vmem>>, vector<4x4x32xf32>
    %165 = vector.shape_cast %164 : vector<4x4x32xf32> to vector<16x32xf32>
    %c21 = arith.constant 21 : index
    %c0_178 = arith.constant 0 : index
    %c0_179 = arith.constant 0 : index
    %166 = vector.load %arg4[%c21, %c0_178, %c0_179] : memref<27x32x128xf32, #tpu.memory_space<vmem>>, vector<1x32x128xf32>
    %167 = vector.shape_cast %166 : vector<1x32x128xf32> to vector<32x128xf32>
    %cst_180 = arith.constant dense<0.000000e+00> : vector<16x128xf32>
    %168 = tpu.matmul %165, %167, %cst_180 {dimension_numbers = #tpu.dot_dimension_numbers<[1], [0], [0], [1], [0, 0, 1, 1], [], []>} : vector<16x32xf32>, vector<32x128xf32>, vector<16x128xf32> -> vector<16x128xf32>
    %169 = arith.addf %163, %168 : vector<16x128xf32>
    %c1_181 = arith.constant 1 : index
    %c1_182 = arith.constant 1 : index
    %c0_183 = arith.constant 0 : index
    %170 = vector.load %arg14[%c1_181, %c1_182, %c0_183] : memref<6x6x32xf32, #tpu.memory_space<vmem>>, vector<4x4x32xf32>
    %171 = vector.shape_cast %170 : vector<4x4x32xf32> to vector<16x32xf32>
    %c22 = arith.constant 22 : index
    %c0_184 = arith.constant 0 : index
    %c0_185 = arith.constant 0 : index
    %172 = vector.load %arg4[%c22, %c0_184, %c0_185] : memref<27x32x128xf32, #tpu.memory_space<vmem>>, vector<1x32x128xf32>
    %173 = vector.shape_cast %172 : vector<1x32x128xf32> to vector<32x128xf32>
    %cst_186 = arith.constant dense<0.000000e+00> : vector<16x128xf32>
    %174 = tpu.matmul %171, %173, %cst_186 {dimension_numbers = #tpu.dot_dimension_numbers<[1], [0], [0], [1], [0, 0, 1, 1], [], []>} : vector<16x32xf32>, vector<32x128xf32>, vector<16x128xf32> -> vector<16x128xf32>
    %175 = arith.addf %169, %174 : vector<16x128xf32>
    %c1_187 = arith.constant 1 : index
    %c2_188 = arith.constant 2 : index
    %c0_189 = arith.constant 0 : index
    %176 = vector.load %arg14[%c1_187, %c2_188, %c0_189] : memref<6x6x32xf32, #tpu.memory_space<vmem>>, vector<4x4x32xf32>
    %177 = vector.shape_cast %176 : vector<4x4x32xf32> to vector<16x32xf32>
    %c23 = arith.constant 23 : index
    %c0_190 = arith.constant 0 : index
    %c0_191 = arith.constant 0 : index
    %178 = vector.load %arg4[%c23, %c0_190, %c0_191] : memref<27x32x128xf32, #tpu.memory_space<vmem>>, vector<1x32x128xf32>
    %179 = vector.shape_cast %178 : vector<1x32x128xf32> to vector<32x128xf32>
    %cst_192 = arith.constant dense<0.000000e+00> : vector<16x128xf32>
    %180 = tpu.matmul %177, %179, %cst_192 {dimension_numbers = #tpu.dot_dimension_numbers<[1], [0], [0], [1], [0, 0, 1, 1], [], []>} : vector<16x32xf32>, vector<32x128xf32>, vector<16x128xf32> -> vector<16x128xf32>
    %181 = arith.addf %175, %180 : vector<16x128xf32>
    %c2_193 = arith.constant 2 : index
    %c0_194 = arith.constant 0 : index
    %c0_195 = arith.constant 0 : index
    %182 = vector.load %arg14[%c2_193, %c0_194, %c0_195] : memref<6x6x32xf32, #tpu.memory_space<vmem>>, vector<4x4x32xf32>
    %183 = vector.shape_cast %182 : vector<4x4x32xf32> to vector<16x32xf32>
    %c24 = arith.constant 24 : index
    %c0_196 = arith.constant 0 : index
    %c0_197 = arith.constant 0 : index
    %184 = vector.load %arg4[%c24, %c0_196, %c0_197] : memref<27x32x128xf32, #tpu.memory_space<vmem>>, vector<1x32x128xf32>
    %185 = vector.shape_cast %184 : vector<1x32x128xf32> to vector<32x128xf32>
    %cst_198 = arith.constant dense<0.000000e+00> : vector<16x128xf32>
    %186 = tpu.matmul %183, %185, %cst_198 {dimension_numbers = #tpu.dot_dimension_numbers<[1], [0], [0], [1], [0, 0, 1, 1], [], []>} : vector<16x32xf32>, vector<32x128xf32>, vector<16x128xf32> -> vector<16x128xf32>
    %187 = arith.addf %181, %186 : vector<16x128xf32>
    %c2_199 = arith.constant 2 : index
    %c1_200 = arith.constant 1 : index
    %c0_201 = arith.constant 0 : index
    %188 = vector.load %arg14[%c2_199, %c1_200, %c0_201] : memref<6x6x32xf32, #tpu.memory_space<vmem>>, vector<4x4x32xf32>
    %189 = vector.shape_cast %188 : vector<4x4x32xf32> to vector<16x32xf32>
    %c25 = arith.constant 25 : index
    %c0_202 = arith.constant 0 : index
    %c0_203 = arith.constant 0 : index
    %190 = vector.load %arg4[%c25, %c0_202, %c0_203] : memref<27x32x128xf32, #tpu.memory_space<vmem>>, vector<1x32x128xf32>
    %191 = vector.shape_cast %190 : vector<1x32x128xf32> to vector<32x128xf32>
    %cst_204 = arith.constant dense<0.000000e+00> : vector<16x128xf32>
    %192 = tpu.matmul %189, %191, %cst_204 {dimension_numbers = #tpu.dot_dimension_numbers<[1], [0], [0], [1], [0, 0, 1, 1], [], []>} : vector<16x32xf32>, vector<32x128xf32>, vector<16x128xf32> -> vector<16x128xf32>
    %193 = arith.addf %187, %192 : vector<16x128xf32>
    %c2_205 = arith.constant 2 : index
    %c2_206 = arith.constant 2 : index
    %c0_207 = arith.constant 0 : index
    %194 = vector.load %arg14[%c2_205, %c2_206, %c0_207] : memref<6x6x32xf32, #tpu.memory_space<vmem>>, vector<4x4x32xf32>
    %195 = vector.shape_cast %194 : vector<4x4x32xf32> to vector<16x32xf32>
    %c26 = arith.constant 26 : index
    %c0_208 = arith.constant 0 : index
    %c0_209 = arith.constant 0 : index
    %196 = vector.load %arg4[%c26, %c0_208, %c0_209] : memref<27x32x128xf32, #tpu.memory_space<vmem>>, vector<1x32x128xf32>
    %197 = vector.shape_cast %196 : vector<1x32x128xf32> to vector<32x128xf32>
    %cst_210 = arith.constant dense<0.000000e+00> : vector<16x128xf32>
    %198 = tpu.matmul %195, %197, %cst_210 {dimension_numbers = #tpu.dot_dimension_numbers<[1], [0], [0], [1], [0, 0, 1, 1], [], []>} : vector<16x32xf32>, vector<32x128xf32>, vector<16x128xf32> -> vector<16x128xf32>
    %199 = arith.addf %193, %198 : vector<16x128xf32>
    %c2_211 = arith.constant 2 : index
    %c0_212 = arith.constant 0 : index
    %c0_213 = arith.constant 0 : index
    %200 = vector.load %arg5[%c2_211, %c0_212, %c0_213] : memref<3x1x128xf32, #tpu.memory_space<vmem>>, vector<1x1x128xf32>
    %201 = vector.shape_cast %200 : vector<1x1x128xf32> to vector<1x128xf32>
    %202 = vector.broadcast %201 : vector<1x128xf32> to vector<16x128xf32>
    %203 = arith.mulf %199, %202 : vector<16x128xf32>
    %c2_214 = arith.constant 2 : index
    %c0_215 = arith.constant 0 : index
    %c0_216 = arith.constant 0 : index
    %204 = vector.load %arg6[%c2_214, %c0_215, %c0_216] : memref<3x1x128xf32, #tpu.memory_space<vmem>>, vector<1x1x128xf32>
    %205 = vector.shape_cast %204 : vector<1x1x128xf32> to vector<1x128xf32>
    %206 = vector.broadcast %205 : vector<1x128xf32> to vector<16x128xf32>
    %207 = arith.addf %203, %206 : vector<16x128xf32>
    %cst_217 = arith.constant 0.000000e+00 : f32
    %208 = vector.broadcast %cst_217 : f32 to vector<16x128xf32>
    %209 = arith.maximumf %207, %208 : vector<16x128xf32>
    %c0_218 = arith.constant 0 : index
    %c0_219 = arith.constant 0 : index
    %210 = vector.load %arg7[%c0_218, %c0_219] : memref<256x64xf32, #tpu.memory_space<vmem>>, vector<256x64xf32>
    %cst_220 = arith.constant dense<0.000000e+00> : vector<256x128xf32>
    %211 = tpu.matmul %210, %139, %cst_220 {dimension_numbers = #tpu.dot_dimension_numbers<[1], [0], [0], [1], [0, 0, 1, 1], [], []>} : vector<256x64xf32>, vector<64x128xf32>, vector<256x128xf32> -> vector<256x128xf32>
    %c0_221 = arith.constant 0 : index
    %c0_222 = arith.constant 0 : index
    %212 = vector.load %arg8[%c0_221, %c0_222] : memref<256x16xf32, #tpu.memory_space<vmem>>, vector<256x16xf32>
    %cst_223 = arith.constant dense<0.000000e+00> : vector<256x128xf32>
    %213 = tpu.matmul %212, %209, %cst_223 {dimension_numbers = #tpu.dot_dimension_numbers<[1], [0], [0], [1], [0, 0, 1, 1], [], []>} : vector<256x16xf32>, vector<16x128xf32>, vector<256x128xf32> -> vector<256x128xf32>
    %c0_224 = arith.constant 0 : index
    %c0_225 = arith.constant 0 : index
    %c0_226 = arith.constant 0 : index
    %214 = vector.load %arg9[%c0_224, %c0_225, %c0_226] : memref<3x128x8xf32, #tpu.memory_space<vmem>>, vector<1x128x8xf32>
    %215 = vector.shape_cast %214 : vector<1x128x8xf32> to vector<128x8xf32>
    %cst_227 = arith.constant dense<0.000000e+00> : vector<256x8xf32>
    %216 = tpu.matmul %69, %215, %cst_227 {dimension_numbers = #tpu.dot_dimension_numbers<[1], [0], [0], [1], [0, 0, 1, 1], [], []>} : vector<256x128xf32>, vector<128x8xf32>, vector<256x8xf32> -> vector<256x8xf32>
    %c1_228 = arith.constant 1 : index
    %c0_229 = arith.constant 0 : index
    %c0_230 = arith.constant 0 : index
    %217 = vector.load %arg9[%c1_228, %c0_229, %c0_230] : memref<3x128x8xf32, #tpu.memory_space<vmem>>, vector<1x128x8xf32>
    %218 = vector.shape_cast %217 : vector<1x128x8xf32> to vector<128x8xf32>
    %cst_231 = arith.constant dense<0.000000e+00> : vector<256x8xf32>
    %219 = tpu.matmul %211, %218, %cst_231 {dimension_numbers = #tpu.dot_dimension_numbers<[1], [0], [0], [1], [0, 0, 1, 1], [], []>} : vector<256x128xf32>, vector<128x8xf32>, vector<256x8xf32> -> vector<256x8xf32>
    %220 = arith.addf %216, %219 : vector<256x8xf32>
    %c2_232 = arith.constant 2 : index
    %c0_233 = arith.constant 0 : index
    %c0_234 = arith.constant 0 : index
    %221 = vector.load %arg9[%c2_232, %c0_233, %c0_234] : memref<3x128x8xf32, #tpu.memory_space<vmem>>, vector<1x128x8xf32>
    %222 = vector.shape_cast %221 : vector<1x128x8xf32> to vector<128x8xf32>
    %cst_235 = arith.constant dense<0.000000e+00> : vector<256x8xf32>
    %223 = tpu.matmul %213, %222, %cst_235 {dimension_numbers = #tpu.dot_dimension_numbers<[1], [0], [0], [1], [0, 0, 1, 1], [], []>} : vector<256x128xf32>, vector<128x8xf32>, vector<256x8xf32> -> vector<256x8xf32>
    %224 = arith.addf %220, %223 : vector<256x8xf32>
    %c0_236 = arith.constant 0 : index
    %c0_237 = arith.constant 0 : index
    %225 = vector.load %arg10[%c0_236, %c0_237] : memref<1x8xf32, #tpu.memory_space<vmem>>, vector<1x8xf32>
    %226 = vector.broadcast %225 : vector<1x8xf32> to vector<256x8xf32>
    %227 = arith.addf %224, %226 : vector<256x8xf32>
    %c0_238 = arith.constant 0 : index
    %c0_239 = arith.constant 0 : index
    %c0_240 = arith.constant 0 : index
    %228 = vector.load %arg11[%c0_238, %c0_239, %c0_240] : memref<1x256x8xf32, #tpu.memory_space<vmem>>, vector<1x256x8xf32>
    %229 = vector.shape_cast %228 : vector<1x256x8xf32> to vector<256x8xf32>
    %230 = vector.shape_cast %227 : vector<256x8xf32> to vector<1x256x8xf32>
    tpu.vector_store %arg11[%c0_238, %c0_239, %c0_240], %230 {strides = array<i32>} : memref<1x256x8xf32, #tpu.memory_space<vmem>>, vector<1x256x8xf32>,
    return
  }
  func.func @transform_0(%arg0: i32) -> (i32, i32, i32, i32) {
    %c0_i32 = arith.constant 0 : i32
    %c0_i32_0 = arith.constant 0 : i32
    %c0_i32_1 = arith.constant 0 : i32
    %c0_i32_2 = arith.constant 0 : i32
    return %arg0, %c0_i32, %c0_i32_0, %c0_i32_1 : i32, i32, i32, i32
  }
  func.func @transform_1(%arg0: i32) -> (i32, i32, i32, i32) {
    %c0_i32 = arith.constant 0 : i32
    %c0_i32_0 = arith.constant 0 : i32
    %c0_i32_1 = arith.constant 0 : i32
    %c0_i32_2 = arith.constant 0 : i32
    return %arg0, %c0_i32, %c0_i32_0, %c0_i32_1 : i32, i32, i32, i32
  }
  func.func @transform_2(%arg0: i32) -> (i32, i32, i32, i32) {
    %c0_i32 = arith.constant 0 : i32
    %c0_i32_0 = arith.constant 0 : i32
    %c0_i32_1 = arith.constant 0 : i32
    %c0_i32_2 = arith.constant 0 : i32
    return %arg0, %c0_i32, %c0_i32_0, %c0_i32_1 : i32, i32, i32, i32
  }
  func.func @transform_3(%arg0: i32) -> (i32, i32, i32) {
    %c0_i32 = arith.constant 0 : i32
    %c0_i32_0 = arith.constant 0 : i32
    %c0_i32_1 = arith.constant 0 : i32
    %c0_i32_2 = arith.constant 0 : i32
    return %c0_i32, %c0_i32_0, %c0_i32_1 : i32, i32, i32
  }
  func.func @transform_4(%arg0: i32) -> (i32, i32, i32) {
    %c0_i32 = arith.constant 0 : i32
    %c0_i32_0 = arith.constant 0 : i32
    %c0_i32_1 = arith.constant 0 : i32
    %c0_i32_2 = arith.constant 0 : i32
    return %c0_i32, %c0_i32_0, %c0_i32_1 : i32, i32, i32
  }
  func.func @transform_5(%arg0: i32) -> (i32, i32, i32) {
    %c0_i32 = arith.constant 0 : i32
    %c0_i32_0 = arith.constant 0 : i32
    %c0_i32_1 = arith.constant 0 : i32
    %c0_i32_2 = arith.constant 0 : i32
    return %c0_i32, %c0_i32_0, %c0_i32_1 : i32, i32, i32
  }
  func.func @transform_6(%arg0: i32) -> (i32, i32) {
    %c0_i32 = arith.constant 0 : i32
    %c0_i32_0 = arith.constant 0 : i32
    %c0_i32_1 = arith.constant 0 : i32
    return %c0_i32, %c0_i32_0 : i32, i32
  }
  func.func @transform_7(%arg0: i32) -> (i32, i32) {
    %c0_i32 = arith.constant 0 : i32
    %c0_i32_0 = arith.constant 0 : i32
    %c0_i32_1 = arith.constant 0 : i32
    return %c0_i32, %c0_i32_0 : i32, i32
  }
  func.func @transform_8(%arg0: i32) -> (i32, i32, i32) {
    %c0_i32 = arith.constant 0 : i32
    %c0_i32_0 = arith.constant 0 : i32
    %c0_i32_1 = arith.constant 0 : i32
    %c0_i32_2 = arith.constant 0 : i32
    return %c0_i32, %c0_i32_0, %c0_i32_1 : i32, i32, i32
  }
  func.func @transform_9(%arg0: i32) -> (i32, i32) {
    %c0_i32 = arith.constant 0 : i32
    %c0_i32_0 = arith.constant 0 : i32
    %c0_i32_1 = arith.constant 0 : i32
    return %c0_i32, %c0_i32_0 : i32, i32
  }
  func.func @transform_10(%arg0: i32) -> (i32, i32, i32) {
    %c0_i32 = arith.constant 0 : i32
    %c0_i32_0 = arith.constant 0 : i32
    %c0_i32_1 = arith.constant 0 : i32
    return %arg0, %c0_i32, %c0_i32_0 : i32, i32, i32
  }
}

</mosaic_0001>

<llo_original>
// kernel: tpu_custom_call.1
$region0: #{tpu_custom_call.1}
  #allocation0 [shape = 'u32[]', space=smem, size = 0x4, offset = 0x4, fixed_abs, tag = 'smem constant byte address 0x4 - core index']
  #allocation1 [shape = 'u32[144,128]{1,0:T(1,128)}', space=vmem, size = 0x12000, scoped, tag = 'internal scratch']
  #allocation2 [shape = 'f32[18,18,32]{2,1,0:T(8,128)}', space=vmem, size = 0x36000, scoped, tag = 'scratch operand']
  #allocation3 [shape = 'f32[10,10,32]{2,1,0:T(8,128)}', space=vmem, size = 0x14000, scoped, tag = 'scratch operand']
  #allocation4 [shape = 'f32[6,6,32]{2,1,0:T(8,128)}', space=vmem, size = 0x6000, scoped, tag = 'scratch operand']
  %s0 = inlined_call_operand.hbm [shape: f32[2,16,16,32], index: 0, kind: input, shape index: {}]
  %s1 = inlined_call_operand.vmem [shape: f32[2,8,8,32], index: 1, kind: input, shape index: {}]
  %s2 = inlined_call_operand.vmem [shape: f32[2,4,4,32], index: 2, kind: input, shape index: {}]
  %s3 = inlined_call_operand.vmem [shape: f32[27,32,128], index: 3, kind: input, shape index: {}]
  %s4 = inlined_call_operand.vmem [shape: f32[3,1,128], index: 4, kind: input, shape index: {}]
  %s5 = inlined_call_operand.vmem [shape: f32[3,1,128], index: 5, kind: input, shape index: {}]
  %s6 = inlined_call_operand.vmem [shape: f32[256,64], index: 6, kind: input, shape index: {}]
  %s7 = inlined_call_operand.vmem [shape: f32[256,16], index: 7, kind: input, shape index: {}]
  %s8 = inlined_call_operand.vmem [shape: f32[3,128,8], index: 8, kind: input, shape index: {}]
  %s9 = inlined_call_operand.vmem [shape: f32[1,8], index: 9, kind: input, shape index: {}]
  %s10 = inlined_call_operand.vmem [shape: f32[2,256,8], index: 10, kind: output, shape index: {}]
  %s11 = sld [smem:[#allocation0]]
  $region77: #{tpu_custom_call.1} parent=0
    _
  %s13 = ssub.s32 1, %s11
  %s14 = scalar_select 0, %s13, %s11
  $region1: #{tpu_custom_call.1} parent=0
    #allocation5 [shape = 'u8[262144]{0}', space=vmem, size = 0x40000, scoped, tag = 'input window, operand 0']
    #allocation6 [shape = 's32[2]{0}', space=sflag, size = 0x8, scoped, tag = 'scoped memory for tpu_custom_call.1']
    %15 = vsyncpa [#allocation6], 0
    %s16 = scalar_lea.sflag [#allocation6], 1
    %17 = vsyncpa %s16, 0
    loop: start=0, step=1, limit=4
    $region2: #{tpu_custom_call.1} parent=1 // loop_pre_header
      _
    $region3: #{tpu_custom_call.1} parent=1 // loop_header
      %s19 = sphi 0, %s23
      %p20 = scmp.ge.s32.totalorder %s19, 4
      %s29 = sphi 0, %s31
      %s32 = sphi 0, %s29
      %s33 = sphi 0, %s32
      %s49 = sphi 0, %s33
      %s55 = sphi 0, %s57
      %s58 = sphi 0, %s55
      %s59 = sphi 0, %s58
      %s75 = sphi 0, %s59
      %s81 = sphi 0, %s83
      %s84 = sphi 0, %s81
      %s85 = sphi 0, %s84
      %s101 = sphi 0, %s85
      %s105 = sphi 0, %s105
      %s107 = sphi 0, %s105
      %s108 = sphi 0, %s107
      %s122 = sphi 0, %s108
      %s126 = sphi 0, %s126
      %s128 = sphi 0, %s126
      %s129 = sphi 0, %s128
      %s143 = sphi 0, %s129
      %s147 = sphi 0, %s147
      %s149 = sphi 0, %s147
      %s150 = sphi 0, %s149
      %s164 = sphi 0, %s150
      %s168 = sphi 0, %s168
      %s170 = sphi 0, %s168
      %s171 = sphi 0, %s170
      %s185 = sphi 0, %s171
      %s189 = sphi 0, %s189
      %s191 = sphi 0, %s189
      %s192 = sphi 0, %s191
      %s206 = sphi 0, %s192
      %s210 = sphi 0, %s210
      %s212 = sphi 0, %s210
      %s213 = sphi 0, %s212
      %s227 = sphi 0, %s213
      %s231 = sphi 0, %s231
      %s233 = sphi 0, %s231
      %s234 = sphi 0, %s233
      %s248 = sphi 0, %s234
      %s254 = sphi 0, %s256
      %s257 = sphi 0, %s254
      %s258 = sphi 0, %s257
      %s274 = sphi 0, %s258
    $region4: #{tpu_custom_call.1} parent=1 // loop_header_branch
      %22 = sbr.rel (%p20) target = $region8
    $region5: #{tpu_custom_call.1} parent=1 // loop_body
      %s24 = ssub.s32 %s19, 1
      %s25 = ssub.s32 %s19, 2
      %s26 = sadd.s32 %s19, 1
      %s27 = ssub.s32 %s19, %s26
      %p28 = scmp.eq.s32.totalorder %s27, 0
      %s30 = sadd.s32 %s29, 1
      %s31 = scalar_select %p28, %s29, %s30
      %p34 = pneg %p28
      %p35 = scmp.eq.s32.totalorder %s19, 1
      %p36 = por %p34, %p35
      %p37 = scmp.ne.s32.totalorder %s29, %s32
      %p38 = scmp.eq.s32.totalorder %s19, 0
      %p39 = por %p37, %p38
      %p40 = scmp.ne.s32.totalorder %s29, %s32
      %p41 = scmp.eq.s32.totalorder %s24, 1
      %p42 = por %p40, %p41
      %p43 = scmp.ne.s32.totalorder %s32, %s33
      %p44 = scmp.eq.s32.totalorder %s24, 0
      %p45 = por %p43, %p44
      %p46 = scmp.ne.s32.totalorder %s32, %s33
      %p47 = scmp.eq.s32.totalorder %s25, 1
      %p48 = por %p46, %p47
      %p50 = scmp.ne.s32.totalorder %s33, %s49
      %p51 = scmp.eq.s32.totalorder %s25, 0
      %p52 = por %p50, %p51
      %s53 = ssub.s32 %s19, %s26
      %p54 = scmp.eq.s32.totalorder %s53, 0
      %s56 = sadd.s32 %s55, 1
      %s57 = scalar_select %p54, %s55, %s56
      %p60 = pneg %p54
      %p61 = scmp.eq.s32.totalorder %s19, 1
      %p62 = por %p60, %p61
      %p63 = scmp.ne.s32.totalorder %s55, %s58
      %p64 = scmp.eq.s32.totalorder %s19, 0
      %p65 = por %p63, %p64
      %p66 = scmp.ne.s32.totalorder %s55, %s58
      %p67 = scmp.eq.s32.totalorder %s24, 1
      %p68 = por %p66, %p67
      %p69 = scmp.ne.s32.totalorder %s58, %s59
      %p70 = scmp.eq.s32.totalorder %s24, 0
      %p71 = por %p69, %p70
      %p72 = scmp.ne.s32.totalorder %s58, %s59
      %p73 = scmp.eq.s32.totalorder %s25, 1
      %p74 = por %p72, %p73
      %p76 = scmp.ne.s32.totalorder %s59, %s75
      %p77 = scmp.eq.s32.totalorder %s25, 0
      %p78 = por %p76, %p77
      %s79 = ssub.s32 %s19, %s26
      %p80 = scmp.eq.s32.totalorder %s79, 0
      %s82 = sadd.s32 %s81, 1
      %s83 = scalar_select %p80, %s81, %s82
      %p86 = pneg %p80
      %p87 = scmp.eq.s32.totalorder %s19, 1
      %p88 = por %p86, %p87
      %p89 = scmp.ne.s32.totalorder %s81, %s84
      %p90 = scmp.eq.s32.totalorder %s19, 0
      %p91 = por %p89, %p90
      %p92 = scmp.ne.s32.totalorder %s81, %s84
      %p93 = scmp.eq.s32.totalorder %s24, 1
      %p94 = por %p92, %p93
      %p95 = scmp.ne.s32.totalorder %s84, %s85
      %p96 = scmp.eq.s32.totalorder %s24, 0
      %p97 = por %p95, %p96
      %p98 = scmp.ne.s32.totalorder %s84, %s85
      %p99 = scmp.eq.s32.totalorder %s25, 1
      %p100 = por %p98, %p99
      %p102 = scmp.ne.s32.totalorder %s85, %s101
      %p103 = scmp.eq.s32.totalorder %s25, 0
      %p104 = por %p102, %p103
      %s106 = sadd.s32 %s105, 1
      %p109 = scmp.eq.s32.totalorder %s19, 1
      %p110 = scmp.ne.s32.totalorder %s105, %s107
      %p111 = scmp.eq.s32.totalorder %s19, 0
      %p112 = por %p110, %p111
      %p113 = scmp.ne.s32.totalorder %s105, %s107
      %p114 = scmp.eq.s32.totalorder %s24, 1
      %p115 = por %p113, %p114
      %p116 = scmp.ne.s32.totalorder %s107, %s108
      %p117 = scmp.eq.s32.totalorder %s24, 0
      %p118 = por %p116, %p117
      %p119 = scmp.ne.s32.totalorder %s107, %s108
      %p120 = scmp.eq.s32.totalorder %s25, 1
      %p121 = por %p119, %p120
      %p123 = scmp.ne.s32.totalorder %s108, %s122
      %p124 = scmp.eq.s32.totalorder %s25, 0
      %p125 = por %p123, %p124
      %s127 = sadd.s32 %s126, 1
      %p130 = scmp.eq.s32.totalorder %s19, 1
      %p131 = scmp.ne.s32.totalorder %s126, %s128
      %p132 = scmp.eq.s32.totalorder %s19, 0
      %p133 = por %p131, %p132
      %p134 = scmp.ne.s32.totalorder %s126, %s128
      %p135 = scmp.eq.s32.totalorder %s24, 1
      %p136 = por %p134, %p135
      %p137 = scmp.ne.s32.totalorder %s128, %s129
      %p138 = scmp.eq.s32.totalorder %s24, 0
      %p139 = por %p137, %p138
      %p140 = scmp.ne.s32.totalorder %s128, %s129
      %p141 = scmp.eq.s32.totalorder %s25, 1
      %p142 = por %p140, %p141
      %p144 = scmp.ne.s32.totalorder %s129, %s143
      %p145 = scmp.eq.s32.totalorder %s25, 0
      %p146 = por %p144, %p145
      %s148 = sadd.s32 %s147, 1
      %p151 = scmp.eq.s32.totalorder %s19, 1
      %p152 = scmp.ne.s32.totalorder %s147, %s149
      %p153 = scmp.eq.s32.totalorder %s19, 0
      %p154 = por %p152, %p153
      %p155 = scmp.ne.s32.totalorder %s147, %s149
      %p156 = scmp.eq.s32.totalorder %s24, 1
      %p157 = por %p155, %p156
      %p158 = scmp.ne.s32.totalorder %s149, %s150
      %p159 = scmp.eq.s32.totalorder %s24, 0
      %p160 = por %p158, %p159
      %p161 = scmp.ne.s32.totalorder %s149, %s150
      %p162 = scmp.eq.s32.totalorder %s25, 1
      %p163 = por %p161, %p162
      %p165 = scmp.ne.s32.totalorder %s150, %s164
      %p166 = scmp.eq.s32.totalorder %s25, 0
      %p167 = por %p165, %p166
      %s169 = sadd.s32 %s168, 1
      %p172 = scmp.eq.s32.totalorder %s19, 1
      %p173 = scmp.ne.s32.totalorder %s168, %s170
      %p174 = scmp.eq.s32.totalorder %s19, 0
      %p175 = por %p173, %p174
      %p176 = scmp.ne.s32.totalorder %s168, %s170
      %p177 = scmp.eq.s32.totalorder %s24, 1
      %p178 = por %p176, %p177
      %p179 = scmp.ne.s32.totalorder %s170, %s171
      %p180 = scmp.eq.s32.totalorder %s24, 0
      %p181 = por %p179, %p180
      %p182 = scmp.ne.s32.totalorder %s170, %s171
      %p183 = scmp.eq.s32.totalorder %s25, 1
      %p184 = por %p182, %p183
      %p186 = scmp.ne.s32.totalorder %s171, %s185
      %p187 = scmp.eq.s32.totalorder %s25, 0
      %p188 = por %p186, %p187
      %s190 = sadd.s32 %s189, 1
      %p193 = scmp.eq.s32.totalorder %s19, 1
      %p194 = scmp.ne.s32.totalorder %s189, %s191
      %p195 = scmp.eq.s32.totalorder %s19, 0
      %p196 = por %p194, %p195
      %p197 = scmp.ne.s32.totalorder %s189, %s191
      %p198 = scmp.eq.s32.totalorder %s24, 1
      %p199 = por %p197, %p198
      %p200 = scmp.ne.s32.totalorder %s191, %s192
      %p201 = scmp.eq.s32.totalorder %s24, 0
      %p202 = por %p200, %p201
      %p203 = scmp.ne.s32.totalorder %s191, %s192
      %p204 = scmp.eq.s32.totalorder %s25, 1
      %p205 = por %p203, %p204
      %p207 = scmp.ne.s32.totalorder %s192, %s206
      %p208 = scmp.eq.s32.totalorder %s25, 0
      %p209 = por %p207, %p208
      %s211 = sadd.s32 %s210, 1
      %p214 = scmp.eq.s32.totalorder %s19, 1
      %p215 = scmp.ne.s32.totalorder %s210, %s212
      %p216 = scmp.eq.s32.totalorder %s19, 0
      %p217 = por %p215, %p216
      %p218 = scmp.ne.s32.totalorder %s210, %s212
      %p219 = scmp.eq.s32.totalorder %s24, 1
      %p220 = por %p218, %p219
      %p221 = scmp.ne.s32.totalorder %s212, %s213
      %p222 = scmp.eq.s32.totalorder %s24, 0
      %p223 = por %p221, %p222
      %p224 = scmp.ne.s32.totalorder %s212, %s213
      %p225 = scmp.eq.s32.totalorder %s25, 1
      %p226 = por %p224, %p225
      %p228 = scmp.ne.s32.totalorder %s213, %s227
      %p229 = scmp.eq.s32.totalorder %s25, 0
      %p230 = por %p228, %p229
      %s232 = sadd.s32 %s231, 1
      %p235 = scmp.eq.s32.totalorder %s19, 1
      %p236 = scmp.ne.s32.totalorder %s231, %s233
      %p237 = scmp.eq.s32.totalorder %s19, 0
      %p238 = por %p236, %p237
      %p239 = scmp.ne.s32.totalorder %s231, %s233
      %p240 = scmp.eq.s32.totalorder %s24, 1
      %p241 = por %p239, %p240
      %p242 = scmp.ne.s32.totalorder %s233, %s234
      %p243 = scmp.eq.s32.totalorder %s24, 0
      %p244 = por %p242, %p243
      %p245 = scmp.ne.s32.totalorder %s233, %s234
      %p246 = scmp.eq.s32.totalorder %s25, 1
      %p247 = por %p245, %p246
      %p249 = scmp.ne.s32.totalorder %s234, %s248
      %p250 = scmp.eq.s32.totalorder %s25, 0
      %p251 = por %p249, %p250
      %s252 = ssub.s32 %s19, %s26
      %p253 = scmp.eq.s32.totalorder %s252, 0
      %s255 = sadd.s32 %s254, 1
      %s256 = scalar_select %p253, %s254, %s255
      %p259 = pneg %p253
      %p260 = scmp.eq.s32.totalorder %s19, 1
      %p261 = por %p259, %p260
      %p262 = scmp.ne.s32.totalorder %s254, %s257
      %p263 = scmp.eq.s32.totalorder %s19, 0
      %p264 = por %p262, %p263
      %p265 = scmp.ne.s32.totalorder %s254, %s257
      %p266 = scmp.eq.s32.totalorder %s24, 1
      %p267 = por %p265, %p266
      %p268 = scmp.ne.s32.totalorder %s257, %s258
      %p269 = scmp.eq.s32.totalorder %s24, 0
      %p270 = por %p268, %p269
      %p271 = scmp.ne.s32.totalorder %s257, %s258
      %p272 = scmp.eq.s32.totalorder %s25, 1
      %p273 = por %p271, %p272
      %p275 = scmp.ne.s32.totalorder %s258, %s274
      %p276 = scmp.eq.s32.totalorder %s25, 0
      %p277 = por %p275, %p276
      %p278 = scmp.le.s32.totalorder 1, %s19
      %p279 = scmp.lt.s32.totalorder %s19, 3
      %p280 = pnand %p278, %p279
      %p281 = pneg %p280
      // Predicated region
      $region9: #{tpu_custom_call.1} parent=5 // pred_check
        _
      $region10: #{tpu_custom_call.1} parent=5 // pred_check_branch
        %283 = sbr.rel (%p280) target = $region12
      $region11: #{tpu_custom_call.1} parent=5 // pred_region
        %s284 = ssub.s32 %s19, 1
        // Predicated region
        $region13: #{tpu_custom_call.1} parent=11 // pred_check
          %p285 = pneg %p118
        $region14: #{tpu_custom_call.1} parent=11 // pred_check_branch
          %287 = sbr.rel (%p285) target = $region16
        $region15: #{tpu_custom_call.1} parent=11 // pred_region
          _
        $region16: #{tpu_custom_call.1} parent=11 // pred_fallthru
          _
        // Predicated region
        $region17: #{tpu_custom_call.1} parent=11 // pred_check
          %p288 = pneg %p139
        $region18: #{tpu_custom_call.1} parent=11 // pred_check_branch
          %290 = sbr.rel (%p288) target = $region20
        $region19: #{tpu_custom_call.1} parent=11 // pred_region
          _
        $region20: #{tpu_custom_call.1} parent=11 // pred_fallthru
          _
        // Predicated region
        $region21: #{tpu_custom_call.1} parent=11 // pred_check
          %p291 = pneg %p160
        $region22: #{tpu_custom_call.1} parent=11 // pred_check_branch
          %293 = sbr.rel (%p291) target = $region24
        $region23: #{tpu_custom_call.1} parent=11 // pred_region
          _
        $region24: #{tpu_custom_call.1} parent=11 // pred_fallthru
          _
        // Predicated region
        $region25: #{tpu_custom_call.1} parent=11 // pred_check
          %p294 = pneg %p181
        $region26: #{tpu_custom_call.1} parent=11 // pred_check_branch
          %296 = sbr.rel (%p294) target = $region28
        $region27: #{tpu_custom_call.1} parent=11 // pred_region
          _
        $region28: #{tpu_custom_call.1} parent=11 // pred_fallthru
          _
        // Predicated region
        $region29: #{tpu_custom_call.1} parent=11 // pred_check
          %p297 = pneg %p202
        $region30: #{tpu_custom_call.1} parent=11 // pred_check_branch
          %299 = sbr.rel (%p297) target = $region32
        $region31: #{tpu_custom_call.1} parent=11 // pred_region
          _
        $region32: #{tpu_custom_call.1} parent=11 // pred_fallthru
          _
        // Predicated region
        $region33: #{tpu_custom_call.1} parent=11 // pred_check
          %p300 = pneg %p223
        $region34: #{tpu_custom_call.1} parent=11 // pred_check_branch
          %302 = sbr.rel (%p300) target = $region36
        $region35: #{tpu_custom_call.1} parent=11 // pred_region
          _
        $region36: #{tpu_custom_call.1} parent=11 // pred_fallthru
          _
        // Predicated region
        $region37: #{tpu_custom_call.1} parent=11 // pred_check
          %p303 = pneg %p244
        $region38: #{tpu_custom_call.1} parent=11 // pred_check_branch
          %305 = sbr.rel (%p303) target = $region40
        $region39: #{tpu_custom_call.1} parent=11 // pred_region
          _
        $region40: #{tpu_custom_call.1} parent=11 // pred_fallthru
          _
      $region12: #{tpu_custom_call.1} parent=5 // pred_fallthru
        _
      %p306 = scmp.lt.s32.totalorder %s19, 2
      // Predicated region
      $region41: #{tpu_custom_call.1} parent=5 // pred_check
        %p307 = pneg %p306
      $region42: #{tpu_custom_call.1} parent=5 // pred_check_branch
        %309 = sbr.rel (%p307) target = $region44
      $region43: #{tpu_custom_call.1} parent=5 // pred_region
        // Predicated region
        $region45: #{tpu_custom_call.1} parent=43 // pred_check
          %p310 = pneg %p39
        $region46: #{tpu_custom_call.1} parent=43 // pred_check_branch
          %312 = sbr.rel (%p310) target = $region48
        $region47: #{tpu_custom_call.1} parent=43 // pred_region
          %s313 = sand.u32 %s29, 1
          %s314 = scalar_lea.sflag [#allocation6], %s313
          %s315 = sand.u32 %s29, 1
          %s316 = smul.addr %s315, 256
          %s317 = scalar_lea.vmem [#allocation5], %s316
          %s319 = ssub.s32 4096, 4096
          %320 = vsyncadd %s314, %s319
          %s321 = smul.addr %s19, 32
          %s322 = smul.addr %s321, 128
          %s323 = scalar_lea.hbm %s0, %s322
          %s324 = sshll.u32 %s317, 4
          %s325 = int_to_ptr.vmem [resolvable:$true] %s324
          %330 = dma.hbm_to_vmem [thread:$0]  %s323, 4096, %s325, %s314, 128, 128, 8
        $region48: #{tpu_custom_call.1} parent=43 // pred_fallthru
          _
        // Predicated region
        $region49: #{tpu_custom_call.1} parent=43 // pred_check
          %p331 = pneg %p65
        $region50: #{tpu_custom_call.1} parent=43 // pred_check_branch
          %333 = sbr.rel (%p331) target = $region52
        $region51: #{tpu_custom_call.1} parent=43 // pred_region
          %p334 = scmp.lt.s32.totalorder %s19, 1
          %s335 = scalar_select %p334, %s19, 1
          %s336 = smul.addr %s335, 8
          %s337 = smul.addr %s336, 8
          %s338 = scalar_lea.vmem %s1, %s337
        $region52: #{tpu_custom_call.1} parent=43 // pred_fallthru
          _
        // Predicated region
        $region53: #{tpu_custom_call.1} parent=43 // pred_check
          %p339 = pneg %p91
        $region54: #{tpu_custom_call.1} parent=43 // pred_check_branch
          %341 = sbr.rel (%p339) target = $region56
        $region55: #{tpu_custom_call.1} parent=43 // pred_region
          %p342 = scmp.lt.s32.totalorder %s19, 1
          %s343 = scalar_select %p342, %s19, 1
          %s344 = smul.addr %s343, 4
          %s345 = smul.addr %s344, 4
          %s346 = scalar_lea.vmem %s2, %s345
        $region56: #{tpu_custom_call.1} parent=43 // pred_fallthru
          _
      $region44: #{tpu_custom_call.1} parent=5 // pred_fallthru
        _
      %p347 = scmp.le.s32.totalorder 1, %s19
      %p348 = scmp.lt.s32.totalorder %s19, 3
      %p349 = pnand %p347, %p348
      %p350 = pneg %p349
      // Predicated region
      $region57: #{tpu_custom_call.1} parent=5 // pred_check
        _
      $region58: #{tpu_custom_call.1} parent=5 // pred_check_branch
        %352 = sbr.rel (%p349) target = $region60
      $region59: #{tpu_custom_call.1} parent=5 // pred_region
        %s353 = ssub.s32 %s19, 1
        %s354 = sand.u32 %s32, 1
        %s355 = scalar_lea.sflag [#allocation6], %s354
        %s356 = sand.u32 %s32, 1
        %s357 = smul.addr %s356, 256
        %s358 = scalar_lea.vmem [#allocation5], %s357
        // Predicated region
        $region61: #{tpu_custom_call.1} parent=59 // pred_check
          %p359 = pneg %p45
        $region62: #{tpu_custom_call.1} parent=59 // pred_check_branch
          %361 = sbr.rel (%p359) target = $region64
        $region63: #{tpu_custom_call.1} parent=59 // pred_region
          %362 = dma.done %s355, 4096
        $region64: #{tpu_custom_call.1} parent=59 // pred_fallthru
          _
        %s363 = sand.u32 %s32, 1
        %s364 = scalar_lea.sflag [#allocation6], %s363
        %s365 = sand.u32 %s32, 1
        %s366 = smul.addr %s365, 256
        %s367 = scalar_lea.vmem [#allocation5], %s366
        %p368 = pneg %p45
        %p369 = pneg %p42
        %p370 = scmp.lt.s32.totalorder %s24, 1
        %s371 = scalar_select %p370, %s24, 1
        %s372 = smul.addr %s371, 8
        %s373 = smul.addr %s372, 8
        %s374 = scalar_lea.vmem %s1, %s373
        %p375 = pneg %p71
        %p376 = pneg %p68
        %p377 = scmp.lt.s32.totalorder %s24, 1
        %s378 = scalar_select %p377, %s24, 1
        %s379 = smul.addr %s378, 4
        %s380 = smul.addr %s379, 4
        %s381 = scalar_lea.vmem %s2, %s380
        %p382 = pneg %p97
        %p383 = pneg %p94
        %p384 = pneg %p118
        %p385 = pneg %p115
        %p386 = pneg %p139
        %p387 = pneg %p136
        %p388 = pneg %p160
        %p389 = pneg %p157
        %p390 = pneg %p181
        %p391 = pneg %p178
        %p392 = pneg %p202
        %p393 = pneg %p199
        %p394 = pneg %p223
        %p395 = pneg %p220
        %p396 = pneg %p244
        %p397 = pneg %p241
        %p398 = pneg %p270
        %p399 = pneg %p267
        %p400 = scmp.lt.s32.totalorder %s24, 1
        %s401 = scalar_select %p400, %s24, 1
        %s402 = smul.addr %s401, 32
        %s403 = smul.addr %s402, 8
        %s404 = scalar_lea.vmem %s10, %s403
        %p405 = scmp.lt.s32.totalorder %s24, 1
        %s406 = scalar_select %p405, %s24, 1
        %s407 = smul.addr %s406, 8
        %s408 = smul.addr %s407, 8
        %s409 = scalar_lea.vmem %s1, %s408
        %p410 = scmp.lt.s32.totalorder %s24, 1
        %s411 = scalar_select %p410, %s24, 1
        %s412 = smul.addr %s411, 4
        %s413 = smul.addr %s412, 4
        %s414 = scalar_lea.vmem %s2, %s413
        %p415 = scmp.lt.s32.totalorder %s24, 1
        %s416 = scalar_select %p415, %s24, 1
        %s417 = smul.addr %s416, 32
        %s418 = smul.addr %s417, 8
        %s419 = scalar_lea.vmem %s10, %s418
        %v420 = vld [vmem:[%s358] sm:$0xff]
        %v421 = vld [vmem:[%s358 + $0x8] sm:$0xff]
        %v422 = vld [vmem:[%s358 + $0x10] sm:$0xff]
        %v423 = vld [vmem:[%s358 + $0x18] sm:$0xff]
        %v424 = vld [vmem:[%s358 + $0x20] sm:$0xff]
        %v425 = vld [vmem:[%s358 + $0x28] sm:$0xff]
        %v426 = vld [vmem:[%s358 + $0x30] sm:$0xff]
        %v427 = vld [vmem:[%s358 + $0x38] sm:$0xff]
        %v428 = vld [vmem:[%s358 + $0x40] sm:$0xff]
        %v429 = vld [vmem:[%s358 + $0x48] sm:$0xff]
        %v430 = vld [vmem:[%s358 + $0x50] sm:$0xff]
        %v431 = vld [vmem:[%s358 + $0x58] sm:$0xff]
        %v432 = vld [vmem:[%s358 + $0x60] sm:$0xff]
        %v433 = vld [vmem:[%s358 + $0x68] sm:$0xff]
        %v434 = vld [vmem:[%s358 + $0x70] sm:$0xff]
        %v435 = vld [vmem:[%s358 + $0x78] sm:$0xff]
        %v436 = vld [vmem:[%s358 + $0x80] sm:$0xff]
        %v437 = vld [vmem:[%s358 + $0x88] sm:$0xff]
        %v438 = vld [vmem:[%s358 + $0x90] sm:$0xff]
        %v439 = vld [vmem:[%s358 + $0x98] sm:$0xff]
        %v440 = vld [vmem:[%s358 + $0xa0] sm:$0xff]
        %v441 = vld [vmem:[%s358 + $0xa8] sm:$0xff]
        %v442 = vld [vmem:[%s358 + $0xb0] sm:$0xff]
        %v443 = vld [vmem:[%s358 + $0xb8] sm:$0xff]
        %v444 = vld [vmem:[%s358 + $0xc0] sm:$0xff]
        %v445 = vld [vmem:[%s358 + $0xc8] sm:$0xff]
        %v446 = vld [vmem:[%s358 + $0xd0] sm:$0xff]
        %v447 = vld [vmem:[%s358 + $0xd8] sm:$0xff]
        %v448 = vld [vmem:[%s358 + $0xe0] sm:$0xff]
        %v449 = vld [vmem:[%s358 + $0xe8] sm:$0xff]
        %v450 = vld [vmem:[%s358 + $0xf0] sm:$0xff]
        %v451 = vld [vmem:[%s358 + $0xf8] sm:$0xff]
        %vm452 = vcmask 261120
        %453 = vst.msk [vmem:[#allocation2] sm:$0xff] %vm452, 0.0
        %454 = vst.msk [vmem:[#allocation2 + $0x8] sm:$0xff] %vm452, 0.0
        %vm455 = vcmask 254976
        %456 = vst.msk [vmem:[#allocation2 + $0x10] sm:$0x3] %vm455, 0.0
        %457 = vst.msk [vmem:[#allocation2 + $0x18] sm:$0xff] %vm452, 0.0
        %458 = vst.msk [vmem:[#allocation2 + $0x20] sm:$0xff] %vm452, 0.0
        %459 = vst.msk [vmem:[#allocation2 + $0x28] sm:$0x3] %vm455, 0.0
        %460 = vst.msk [vmem:[#allocation2 + $0x30] sm:$0xff] %vm452, 0.0
        %461 = vst.msk [vmem:[#allocation2 + $0x38] sm:$0xff] %vm452, 0.0
        %462 = vst.msk [vmem:[#allocation2 + $0x40] sm:$0x3] %vm455, 0.0
        %463 = vst.msk [vmem:[#allocation2 + $0x48] sm:$0xff] %vm452, 0.0
        %464 = vst.msk [vmem:[#allocation2 + $0x50] sm:$0xff] %vm452, 0.0
        %465 = vst.msk [vmem:[#allocation2 + $0x58] sm:$0x3] %vm455, 0.0
        %466 = vst.msk [vmem:[#allocation2 + $0x60] sm:$0xff] %vm452, 0.0
        %467 = vst.msk [vmem:[#allocation2 + $0x68] sm:$0xff] %vm452, 0.0
        %468 = vst.msk [vmem:[#allocation2 + $0x70] sm:$0x3] %vm455, 0.0
        %469 = vst.msk [vmem:[#allocation2 + $0x78] sm:$0xff] %vm452, 0.0
        %470 = vst.msk [vmem:[#allocation2 + $0x80] sm:$0xff] %vm452, 0.0
        %471 = vst.msk [vmem:[#allocation2 + $0x88] sm:$0x3] %vm455, 0.0
        %472 = vst.msk [vmem:[#allocation2 + $0x90] sm:$0xff] %vm452, 0.0
        %473 = vst.msk [vmem:[#allocation2 + $0x98] sm:$0xff] %vm452, 0.0
        %474 = vst.msk [vmem:[#allocation2 + $0xa0] sm:$0x3] %vm455, 0.0
        %475 = vst.msk [vmem:[#allocation2 + $0xa8] sm:$0xff] %vm452, 0.0
        %476 = vst.msk [vmem:[#allocation2 + $0xb0] sm:$0xff] %vm452, 0.0
        %477 = vst.msk [vmem:[#allocation2 + $0xb8] sm:$0x3] %vm455, 0.0
        %478 = vst.msk [vmem:[#allocation2 + $0xc0] sm:$0xff] %vm452, 0.0
        %479 = vst.msk [vmem:[#allocation2 + $0xc8] sm:$0xff] %vm452, 0.0
        %480 = vst.msk [vmem:[#allocation2 + $0xd0] sm:$0x3] %vm455, 0.0
        %481 = vst.msk [vmem:[#allocation2 + $0xd8] sm:$0xff] %vm452, 0.0
        %482 = vst.msk [vmem:[#allocation2 + $0xe0] sm:$0xff] %vm452, 0.0
        %483 = vst.msk [vmem:[#allocation2 + $0xe8] sm:$0x3] %vm455, 0.0
        %484 = vst.msk [vmem:[#allocation2 + $0xf0] sm:$0xff] %vm452, 0.0
        %485 = vst.msk [vmem:[#allocation2 + $0xf8] sm:$0xff] %vm452, 0.0
        %486 = vst.msk [vmem:[#allocation2 + $0x100] sm:$0x3] %vm455, 0.0
        %487 = vst.msk [vmem:[#allocation2 + $0x108] sm:$0xff] %vm452, 0.0
        %488 = vst.msk [vmem:[#allocation2 + $0x110] sm:$0xff] %vm452, 0.0
        %489 = vst.msk [vmem:[#allocation2 + $0x118] sm:$0x3] %vm455, 0.0
        %490 = vst.msk [vmem:[#allocation2 + $0x120] sm:$0xff] %vm452, 0.0
        %491 = vst.msk [vmem:[#allocation2 + $0x128] sm:$0xff] %vm452, 0.0
        %492 = vst.msk [vmem:[#allocation2 + $0x130] sm:$0x3] %vm455, 0.0
        %493 = vst.msk [vmem:[#allocation2 + $0x138] sm:$0xff] %vm452, 0.0
        %494 = vst.msk [vmem:[#allocation2 + $0x140] sm:$0xff] %vm452, 0.0
        %495 = vst.msk [vmem:[#allocation2 + $0x148] sm:$0x3] %vm455, 0.0
        %496 = vst.msk [vmem:[#allocation2 + $0x150] sm:$0xff] %vm452, 0.0
        %497 = vst.msk [vmem:[#allocation2 + $0x158] sm:$0xff] %vm452, 0.0
        %498 = vst.msk [vmem:[#allocation2 + $0x160] sm:$0x3] %vm455, 0.0
        %499 = vst.msk [vmem:[#allocation2 + $0x168] sm:$0xff] %vm452, 0.0
        %500 = vst.msk [vmem:[#allocation2 + $0x170] sm:$0xff] %vm452, 0.0
        %501 = vst.msk [vmem:[#allocation2 + $0x178] sm:$0x3] %vm455, 0.0
        %502 = vst.msk [vmem:[#allocation2 + $0x180] sm:$0xff] %vm452, 0.0
        %503 = vst.msk [vmem:[#allocation2 + $0x188] sm:$0xff] %vm452, 0.0
        %504 = vst.msk [vmem:[#allocation2 + $0x190] sm:$0x3] %vm455, 0.0
        %505 = vst.msk [vmem:[#allocation2 + $0x198] sm:$0xff] %vm452, 0.0
        %506 = vst.msk [vmem:[#allocation2 + $0x1a0] sm:$0xff] %vm452, 0.0
        %507 = vst.msk [vmem:[#allocation2 + $0x1a8] sm:$0x3] %vm455, 0.0
        %s508 = scalar_lea.vmem [#allocation2], 24
        %509 = vst.msk [vmem:[%s508 + $0x1] sm:$0xff] %vm452, %v420
        %510 = vst.msk [vmem:[%s508 + $0x9] sm:$0xff] %vm452, %v421
        %511 = vst.msk [vmem:[%s508 + $0x19] sm:$0xff] %vm452, %v422
        %512 = vst.msk [vmem:[%s508 + $0x21] sm:$0xff] %vm452, %v423
        %513 = vst.msk [vmem:[%s508 + $0x31] sm:$0xff] %vm452, %v424
        %514 = vst.msk [vmem:[%s508 + $0x39] sm:$0xff] %vm452, %v425
        %515 = vst.msk [vmem:[%s508 + $0x49] sm:$0xff] %vm452, %v426
        %516 = vst.msk [vmem:[%s508 + $0x51] sm:$0xff] %vm452, %v427
        %517 = vst.msk [vmem:[%s508 + $0x61] sm:$0xff] %vm452, %v428
        %518 = vst.msk [vmem:[%s508 + $0x69] sm:$0xff] %vm452, %v429
        %519 = vst.msk [vmem:[%s508 + $0x79] sm:$0xff] %vm452, %v430
        %520 = vst.msk [vmem:[%s508 + $0x81] sm:$0xff] %vm452, %v431
        %521 = vst.msk [vmem:[%s508 + $0x91] sm:$0xff] %vm452, %v432
        %522 = vst.msk [vmem:[%s508 + $0x99] sm:$0xff] %vm452, %v433
        %523 = vst.msk [vmem:[%s508 + $0xa9] sm:$0xff] %vm452, %v434
        %524 = vst.msk [vmem:[%s508 + $0xb1] sm:$0xff] %vm452, %v435
        %525 = vst.msk [vmem:[%s508 + $0xc1] sm:$0xff] %vm452, %v436
        %526 = vst.msk [vmem:[%s508 + $0xc9] sm:$0xff] %vm452, %v437
        %527 = vst.msk [vmem:[%s508 + $0xd9] sm:$0xff] %vm452, %v438
        %528 = vst.msk [vmem:[%s508 + $0xe1] sm:$0xff] %vm452, %v439
        %529 = vst.msk [vmem:[%s508 + $0xf1] sm:$0xff] %vm452, %v440
        %530 = vst.msk [vmem:[%s508 + $0xf9] sm:$0xff] %vm452, %v441
        %531 = vst.msk [vmem:[%s508 + $0x109] sm:$0xff] %vm452, %v442
        %532 = vst.msk [vmem:[%s508 + $0x111] sm:$0xff] %vm452, %v443
        %533 = vst.msk [vmem:[%s508 + $0x121] sm:$0xff] %vm452, %v444
        %534 = vst.msk [vmem:[%s508 + $0x129] sm:$0xff] %vm452, %v445
        %535 = vst.msk [vmem:[%s508 + $0x139] sm:$0xff] %vm452, %v446
        %536 = vst.msk [vmem:[%s508 + $0x141] sm:$0xff] %vm452, %v447
        %537 = vst.msk [vmem:[%s508 + $0x151] sm:$0xff] %vm452, %v448
        %538 = vst.msk [vmem:[%s508 + $0x159] sm:$0xff] %vm452, %v449
        %539 = vst.msk [vmem:[%s508 + $0x169] sm:$0xff] %vm452, %v450
        %540 = vst.msk [vmem:[%s508 + $0x171] sm:$0xff] %vm452, %v451
        %v541 = vld [vmem:[#allocation2] sm:$0xff]
        %v542 = vld [vmem:[#allocation2 + $0x8] sm:$0xff]
        %v543 = vld [vmem:[#allocation2 + $0x18] sm:$0xff]
        %v544 = vld [vmem:[#allocation2 + $0x20] sm:$0xff]
        %v545 = vld [vmem:[#allocation2 + $0x30] sm:$0xff]
        %v546 = vld [vmem:[#allocation2 + $0x38] sm:$0xff]
        %v547 = vld [vmem:[#allocation2 + $0x48] sm:$0xff]
        %v548 = vld [vmem:[#allocation2 + $0x50] sm:$0xff]
        %v549 = vld [vmem:[#allocation2 + $0x60] sm:$0xff]
        %v550 = vld [vmem:[#allocation2 + $0x68] sm:$0xff]
        %v551 = vld [vmem:[#allocation2 + $0x78] sm:$0xff]
        %v552 = vld [vmem:[#allocation2 + $0x80] sm:$0xff]
        %v553 = vld [vmem:[#allocation2 + $0x90] sm:$0xff]
        %v554 = vld [vmem:[#allocation2 + $0x98] sm:$0xff]
        %v555 = vld [vmem:[#allocation2 + $0xa8] sm:$0xff]
        %v556 = vld [vmem:[#allocation2 + $0xb0] sm:$0xff]
        %v557 = vld [vmem:[#allocation2 + $0xc0] sm:$0xff]
        %v558 = vld [vmem:[#allocation2 + $0xc8] sm:$0xff]
        %v559 = vld [vmem:[#allocation2 + $0xd8] sm:$0xff]
        %v560 = vld [vmem:[#allocation2 + $0xe0] sm:$0xff]
        %v561 = vld [vmem:[#allocation2 + $0xf0] sm:$0xff]
        %v562 = vld [vmem:[#allocation2 + $0xf8] sm:$0xff]
        %v563 = vld [vmem:[#allocation2 + $0x108] sm:$0xff]
        %v564 = vld [vmem:[#allocation2 + $0x110] sm:$0xff]
        %v565 = vld [vmem:[#allocation2 + $0x120] sm:$0xff]
        %v566 = vld [vmem:[#allocation2 + $0x128] sm:$0xff]
        %v567 = vld [vmem:[#allocation2 + $0x138] sm:$0xff]
        %v568 = vld [vmem:[#allocation2 + $0x140] sm:$0xff]
        %v569 = vld [vmem:[#allocation2 + $0x150] sm:$0xff]
        %v570 = vld [vmem:[#allocation2 + $0x158] sm:$0xff]
        %v571 = vld [vmem:[#allocation2 + $0x168] sm:$0xff]
        %v572 = vld [vmem:[#allocation2 + $0x170] sm:$0xff]
        %v573 = vld [vmem:[%s3] sm:$0xff]
        %v574 = vld [vmem:[%s3 + $0x8] sm:$0xff]
        %v575 = vld [vmem:[%s3 + $0x10] sm:$0xff]
        %v576 = vld [vmem:[%s3 + $0x18] sm:$0xff]
        %v577 = vld [vmem:[#allocation2 + $0x1] sm:$0xff]
        %v578 = vld [vmem:[#allocation2 + $0x9] sm:$0xff]
        %v579 = vld [vmem:[#allocation2 + $0x19] sm:$0xff]
        %v580 = vld [vmem:[#allocation2 + $0x21] sm:$0xff]
        %v581 = vld [vmem:[#allocation2 + $0x31] sm:$0xff]
        %v582 = vld [vmem:[#allocation2 + $0x39] sm:$0xff]
        %v583 = vld [vmem:[#allocation2 + $0x49] sm:$0xff]
        %v584 = vld [vmem:[#allocation2 + $0x51] sm:$0xff]
        %v585 = vld [vmem:[#allocation2 + $0x61] sm:$0xff]
        %v586 = vld [vmem:[#allocation2 + $0x69] sm:$0xff]
        %v587 = vld [vmem:[#allocation2 + $0x79] sm:$0xff]
        %v588 = vld [vmem:[#allocation2 + $0x81] sm:$0xff]
        %v589 = vld [vmem:[#allocation2 + $0x91] sm:$0xff]
        %v590 = vld [vmem:[#allocation2 + $0x99] sm:$0xff]
        %v591 = vld [vmem:[#allocation2 + $0xa9] sm:$0xff]
        %v592 = vld [vmem:[#allocation2 + $0xb1] sm:$0xff]
        %v593 = vld [vmem:[#allocation2 + $0xc1] sm:$0xff]
        %v594 = vld [vmem:[#allocation2 + $0xc9] sm:$0xff]
        %v595 = vld [vmem:[#allocation2 + $0xd9] sm:$0xff]
        %v596 = vld [vmem:[#allocation2 + $0xe1] sm:$0xff]
        %v597 = vld [vmem:[#allocation2 + $0xf1] sm:$0xff]
        %v598 = vld [vmem:[#allocation2 + $0xf9] sm:$0xff]
        %v599 = vld [vmem:[#allocation2 + $0x109] sm:$0xff]
        %v600 = vld [vmem:[#allocation2 + $0x111] sm:$0xff]
        %v601 = vld [vmem:[#allocation2 + $0x121] sm:$0xff]
        %v602 = vld [vmem:[#allocation2 + $0x129] sm:$0xff]
        %v603 = vld [vmem:[#allocation2 + $0x139] sm:$0xff]
        %v604 = vld [vmem:[#allocation2 + $0x141] sm:$0xff]
        %v605 = vld [vmem:[#allocation2 + $0x151] sm:$0xff]
        %v606 = vld [vmem:[#allocation2 + $0x159] sm:$0xff]
        %v607 = vld [vmem:[#allocation2 + $0x169] sm:$0xff]
        %v608 = vld [vmem:[#allocation2 + $0x171] sm:$0xff]
        %s609 = scalar_lea.vmem %s3, 32
        %v610 = vld [vmem:[%s609] sm:$0xff]
        %v611 = vld [vmem:[%s609 + $0x8] sm:$0xff]
        %v612 = vld [vmem:[%s609 + $0x10] sm:$0xff]
        %v613 = vld [vmem:[%s609 + $0x18] sm:$0xff]
        %v615 = vsel %vm452, %v577, 0
        %v618 = vsel %vm452, %v578, 0
        %v621 = vsel %vm452, %v579, 0
        %v624 = vsel %vm452, %v580, 0
        %v627 = vsel %vm452, %v581, 0
        %v630 = vsel %vm452, %v582, 0
        %v633 = vsel %vm452, %v583, 0
        %v636 = vsel %vm452, %v584, 0
        %v639 = vsel %vm452, %v585, 0
        %v642 = vsel %vm452, %v586, 0
        %v645 = vsel %vm452, %v587, 0
        %v648 = vsel %vm452, %v588, 0
        %v651 = vsel %vm452, %v589, 0
        %v654 = vsel %vm452, %v590, 0
        %v657 = vsel %vm452, %v591, 0
        %v660 = vsel %vm452, %v592, 0
        %v663 = vsel %vm452, %v593, 0
        %v666 = vsel %vm452, %v594, 0
        %v669 = vsel %vm452, %v595, 0
        %v672 = vsel %vm452, %v596, 0
        %v675 = vsel %vm452, %v597, 0
        %v678 = vsel %vm452, %v598, 0
        %v681 = vsel %vm452, %v599, 0
        %v684 = vsel %vm452, %v600, 0
        %v687 = vsel %vm452, %v601, 0
        %v690 = vsel %vm452, %v602, 0
        %v693 = vsel %vm452, %v603, 0
        %v696 = vsel %vm452, %v604, 0
        %v699 = vsel %vm452, %v605, 0
        %v702 = vsel %vm452, %v606, 0
        %v705 = vsel %vm452, %v607, 0
        %v708 = vsel %vm452, %v608, 0
        %710 = vmatprep.subr.mxu0 0.0
        %711 = vmatpush1.msra.mxu0 %v610
        %712 = vmatprep.subr.mxu0 0.0
        %713 = vmatpush1.msra.mxu0 %v611
        %714 = vmatprep.subr.mxu0 0.0
        %715 = vmatpush1.msra.mxu0 %v612
        %716 = vmatprep.subr.mxu0 0.0
        %717 = vmatpush1.msra.mxu0 %v613
        %718 = vmatprep.subr.mxu0 0.0
        %719 = vmatpush1.msra.mxu0 0.0
        %720 = vmatprep.subr.mxu0 0.0
        %721 = vmatpush1.msra.mxu0 0.0
        %722 = vmatprep.subr.mxu0 0.0
        %723 = vmatpush1.msra.mxu0 0.0
        %724 = vmatprep.subr.mxu0 0.0
        %725 = vmatpush1.msra.mxu0 0.0
        %726 = vmatprep.subr.mxu0 0.0
        %727 = vmatpush1.msra.mxu0 0.0
        %728 = vmatprep.subr.mxu0 0.0
        %729 = vmatpush1.msra.mxu0 0.0
        %730 = vmatprep.subr.mxu0 0.0
        %731 = vmatpush1.msra.mxu0 0.0
        %732 = vmatprep.subr.mxu0 0.0
        %733 = vmatpush1.msra.mxu0 0.0
        %734 = vmatprep.subr.mxu0 0.0
        %735 = vmatpush1.msra.mxu0 0.0
        %736 = vmatprep.subr.mxu0 0.0
        %737 = vmatpush1.msra.mxu0 0.0
        %738 = vmatprep.subr.mxu0 0.0
        %739 = vmatpush1.msra.mxu0 0.0
        %740 = vmatprep.subr.mxu0 0.0
        %741 = vmatpush1.msra.mxu0 0.0
        %742 = vmatprep.subr.mxu0 0.0
        %743 = vmatpush1.msra.mxu0 0.0
        %744 = vmatprep.subr.mxu0 0.0
        %745 = vmatpush1.msra.mxu0 0.0
        %746 = vmatprep.subr.mxu0 0.0
        %747 = vmatpush1.msra.mxu0 0.0
        %748 = vmatprep.subr.mxu0 0.0
        %749 = vmatpush1.msra.mxu0 0.0
        %750 = vmatprep.subr.mxu0 0.0
        %751 = vmatpush1.msra.mxu0 0.0
        %752 = vmatprep.subr.mxu0 0.0
        %753 = vmatpush1.msra.mxu0 0.0
        %754 = vmatprep.subr.mxu0 0.0
        %755 = vmatpush1.msra.mxu0 0.0
        %756 = vmatprep.subr.mxu0 0.0
        %757 = vmatpush1.msra.mxu0 0.0
        %758 = vmatprep.subr.mxu0 0.0
        %759 = vmatpush1.msra.mxu0 0.0
        %760 = vmatprep.subr.mxu0 0.0
        %761 = vmatpush1.msra.mxu0 0.0
        %762 = vmatprep.subr.mxu0 0.0
        %763 = vmatpush1.msra.mxu0 0.0
        %764 = vmatprep.subr.mxu0 0.0
        %765 = vmatpush1.msra.mxu0 0.0
        %766 = vmatprep.subr.mxu0 0.0
        %767 = vmatpush1.msra.mxu0 0.0
        %768 = vmatprep.subr.mxu0 0.0
        %769 = vmatpush1.msra.mxu0 0.0
        %770 = vmatprep.subr.mxu0 0.0
        %771 = vmatpush1.msra.mxu0 0.0
        %772 = vmatprep.subr.mxu0 0.0
        %773 = vmatpush1.msra.mxu0 0.0
        %774 = vmatprep.mubr.f32.mxu0 0.0
        %775 = vmatmul.mubr.f32.gmra.mrb[0].mxu0 %v615
        %v776 = vpop.f32.mrb[0].mxu0
        %v777 = vadd.f32 0.0, %v776
        %v778 = vpop.f32.mrb[0].mxu0
        %779 = vmatprep.mubr.f32.mxu0 0.0
        %780 = vmatmul.mubr.f32.gmra.mrb[0].mxu0 %v618
        %v781 = vpop.f32.mrb[0].mxu0
        %v782 = vadd.f32 0.0, %v781
        %v783 = vpop.f32.mrb[0].mxu0
        %784 = vmatprep.mubr.f32.mxu0 0.0
        %785 = vmatmul.mubr.f32.gmra.mrb[0].mxu0 %v621
        %v786 = vpop.f32.mrb[0].mxu0
        %v787 = vadd.f32 0.0, %v786
        %v788 = vpop.f32.mrb[0].mxu0
        %789 = vmatprep.mubr.f32.mxu0 0.0
        %790 = vmatmul.mubr.f32.gmra.mrb[0].mxu0 %v624
        %v791 = vpop.f32.mrb[0].mxu0
        %v792 = vadd.f32 0.0, %v791
        %v793 = vpop.f32.mrb[0].mxu0
        %794 = vmatprep.mubr.f32.mxu0 0.0
        %795 = vmatmul.mubr.f32.gmra.mrb[0].mxu0 %v627
        %v796 = vpop.f32.mrb[0].mxu0
        %v797 = vadd.f32 0.0, %v796
        %v798 = vpop.f32.mrb[0].mxu0
        %799 = vmatprep.mubr.f32.mxu0 0.0
        %800 = vmatmul.mubr.f32.gmra.mrb[0].mxu0 %v630
        %v801 = vpop.f32.mrb[0].mxu0
        %v802 = vadd.f32 0.0, %v801
        %v803 = vpop.f32.mrb[0].mxu0
        %804 = vmatprep.mubr.f32.mxu0 0.0
        %805 = vmatmul.mubr.f32.gmra.mrb[0].mxu0 %v633
        %v806 = vpop.f32.mrb[0].mxu0
        %v807 = vadd.f32 0.0, %v806
        %v808 = vpop.f32.mrb[0].mxu0
        %809 = vmatprep.mubr.f32.mxu0 0.0
        %810 = vmatmul.mubr.f32.gmra.mrb[0].mxu0 %v636
        %v811 = vpop.f32.mrb[0].mxu0
        %v812 = vadd.f32 0.0, %v811
        %v813 = vpop.f32.mrb[0].mxu0
        %814 = vmatprep.mubr.f32.mxu0 0.0
        %815 = vmatmul.mubr.f32.gmra.mrb[0].mxu0 %v639
        %v816 = vpop.f32.mrb[0].mxu0
        %v817 = vadd.f32 0.0, %v816
        %v818 = vpop.f32.mrb[0].mxu0
        %819 = vmatprep.mubr.f32.mxu0 0.0
        %820 = vmatmul.mubr.f32.gmra.mrb[0].mxu0 %v642
        %v821 = vpop.f32.mrb[0].mxu0
        %v822 = vadd.f32 0.0, %v821
        %v823 = vpop.f32.mrb[0].mxu0
        %824 = vmatprep.mubr.f32.mxu0 0.0
        %825 = vmatmul.mubr.f32.gmra.mrb[0].mxu0 %v645
        %v826 = vpop.f32.mrb[0].mxu0
        %v827 = vadd.f32 0.0, %v826
        %v828 = vpop.f32.mrb[0].mxu0
        %829 = vmatprep.mubr.f32.mxu0 0.0
        %830 = vmatmul.mubr.f32.gmra.mrb[0].mxu0 %v648
        %v831 = vpop.f32.mrb[0].mxu0
        %v832 = vadd.f32 0.0, %v831
        %v833 = vpop.f32.mrb[0].mxu0
        %834 = vmatprep.mubr.f32.mxu0 0.0
        %835 = vmatmul.mubr.f32.gmra.mrb[0].mxu0 %v651
        %v836 = vpop.f32.mrb[0].mxu0
        %v837 = vadd.f32 0.0, %v836
        %v838 = vpop.f32.mrb[0].mxu0
        %839 = vmatprep.mubr.f32.mxu0 0.0
        %840 = vmatmul.mubr.f32.gmra.mrb[0].mxu0 %v654
        %v841 = vpop.f32.mrb[0].mxu0
        %v842 = vadd.f32 0.0, %v841
        %v843 = vpop.f32.mrb[0].mxu0
        %844 = vmatprep.mubr.f32.mxu0 0.0
        %845 = vmatmul.mubr.f32.gmra.mrb[0].mxu0 %v657
        %v846 = vpop.f32.mrb[0].mxu0
        %v847 = vadd.f32 0.0, %v846
        %v848 = vpop.f32.mrb[0].mxu0
        %849 = vmatprep.mubr.f32.mxu0 0.0
        %850 = vmatmul.mubr.f32.gmra.mrb[0].mxu0 %v660
        %v851 = vpop.f32.mrb[0].mxu0
        %v852 = vadd.f32 0.0, %v851
        %v853 = vpop.f32.mrb[0].mxu0
        %854 = vmatprep.mubr.f32.mxu0 0.0
        %855 = vmatmul.mubr.f32.gmra.mrb[0].mxu0 %v663
        %v856 = vpop.f32.mrb[0].mxu0
        %v857 = vadd.f32 0.0, %v856
        %v858 = vpop.f32.mrb[0].mxu0
        %859 = vmatprep.mubr.f32.mxu0 0.0
        %860 = vmatmul.mubr.f32.gmra.mrb[0].mxu0 %v666
        %v861 = vpop.f32.mrb[0].mxu0
        %v862 = vadd.f32 0.0, %v861
        %v863 = vpop.f32.mrb[0].mxu0
        %864 = vmatprep.mubr.f32.mxu0 0.0
        %865 = vmatmul.mubr.f32.gmra.mrb[0].mxu0 %v669
        %v866 = vpop.f32.mrb[0].mxu0
        %v867 = vadd.f32 0.0, %v866
        %v868 = vpop.f32.mrb[0].mxu0
        %869 = vmatprep.mubr.f32.mxu0 0.0
        %870 = vmatmul.mubr.f32.gmra.mrb[0].mxu0 %v672
        %v871 = vpop.f32.mrb[0].mxu0
        %v872 = vadd.f32 0.0, %v871
        %v873 = vpop.f32.mrb[0].mxu0
        %874 = vmatprep.mubr.f32.mxu0 0.0
        %875 = vmatmul.mubr.f32.gmra.mrb[0].mxu0 %v675
        %v876 = vpop.f32.mrb[0].mxu0
        %v877 = vadd.f32 0.0, %v876
        %v878 = vpop.f32.mrb[0].mxu0
        %879 = vmatprep.mubr.f32.mxu0 0.0
        %880 = vmatmul.mubr.f32.gmra.mrb[0].mxu0 %v678
        %v881 = vpop.f32.mrb[0].mxu0
        %v882 = vadd.f32 0.0, %v881
        %v883 = vpop.f32.mrb[0].mxu0
        %884 = vmatprep.mubr.f32.mxu0 0.0
        %885 = vmatmul.mubr.f32.gmra.mrb[0].mxu0 %v681
        %v886 = vpop.f32.mrb[0].mxu0
        %v887 = vadd.f32 0.0, %v886
        %v888 = vpop.f32.mrb[0].mxu0
        %889 = vmatprep.mubr.f32.mxu0 0.0
        %890 = vmatmul.mubr.f32.gmra.mrb[0].mxu0 %v684
        %v891 = vpop.f32.mrb[0].mxu0
        %v892 = vadd.f32 0.0, %v891
        %v893 = vpop.f32.mrb[0].mxu0
        %894 = vmatprep.mubr.f32.mxu0 0.0
        %895 = vmatmul.mubr.f32.gmra.mrb[0].mxu0 %v687
        %v896 = vpop.f32.mrb[0].mxu0
        %v897 = vadd.f32 0.0, %v896
        %v898 = vpop.f32.mrb[0].mxu0
        %899 = vmatprep.mubr.f32.mxu0 0.0
        %900 = vmatmul.mubr.f32.gmra.mrb[0].mxu0 %v690
        %v901 = vpop.f32.mrb[0].mxu0
        %v902 = vadd.f32 0.0, %v901
        %v903 = vpop.f32.mrb[0].mxu0
        %904 = vmatprep.mubr.f32.mxu0 0.0
        %905 = vmatmul.mubr.f32.gmra.mrb[0].mxu0 %v693
        %v906 = vpop.f32.mrb[0].mxu0
        %v907 = vadd.f32 0.0, %v906
        %v908 = vpop.f32.mrb[0].mxu0
        %909 = vmatprep.mubr.f32.mxu0 0.0
        %910 = vmatmul.mubr.f32.gmra.mrb[0].mxu0 %v696
        %v911 = vpop.f32.mrb[0].mxu0
        %v912 = vadd.f32 0.0, %v911
        %v913 = vpop.f32.mrb[0].mxu0
        %914 = vmatprep.mubr.f32.mxu0 0.0
        %915 = vmatmul.mubr.f32.gmra.mrb[0].mxu0 %v699
        %v916 = vpop.f32.mrb[0].mxu0
        %v917 = vadd.f32 0.0, %v916
        %v918 = vpop.f32.mrb[0].mxu0
        %919 = vmatprep.mubr.f32.mxu0 0.0
        %920 = vmatmul.mubr.f32.gmra.mrb[0].mxu0 %v702
        %v921 = vpop.f32.mrb[0].mxu0
        %v922 = vadd.f32 0.0, %v921
        %v923 = vpop.f32.mrb[0].mxu0
        %924 = vmatprep.mubr.f32.mxu0 0.0
        %925 = vmatmul.mubr.f32.gmra.mrb[0].mxu0 %v705
        %v926 = vpop.f32.mrb[0].mxu0
        %v927 = vadd.f32 0.0, %v926
        %v928 = vpop.f32.mrb[0].mxu0
        %929 = vmatprep.mubr.f32.mxu0 0.0
        %930 = vmatmul.mubr.f32.gmra.mrb[0].mxu0 %v708
        %v931 = vpop.f32.mrb[0].mxu0
        %v932 = vadd.f32 0.0, %v931
        %v933 = vpop.f32.mrb[0].mxu0
        %934 = vdwg.mxu0
        %v936 = vsel %vm452, %v541, 0
        %v939 = vsel %vm452, %v542, 0
        %v942 = vsel %vm452, %v543, 0
        %v945 = vsel %vm452, %v544, 0
        %v948 = vsel %vm452, %v545, 0
        %v951 = vsel %vm452, %v546, 0
        %v954 = vsel %vm452, %v547, 0
        %v957 = vsel %vm452, %v548, 0
        %v960 = vsel %vm452, %v549, 0
        %v963 = vsel %vm452, %v550, 0
        %v966 = vsel %vm452, %v551, 0
        %v969 = vsel %vm452, %v552, 0
        %v972 = vsel %vm452, %v553, 0
        %v975 = vsel %vm452, %v554, 0
        %v978 = vsel %vm452, %v555, 0
        %v981 = vsel %vm452, %v556, 0
        %v984 = vsel %vm452, %v557, 0
        %v987 = vsel %vm452, %v558, 0
        %v990 = vsel %vm452, %v559, 0
        %v993 = vsel %vm452, %v560, 0
        %v996 = vsel %vm452, %v561, 0
        %v999 = vsel %vm452, %v562, 0
        %v1002 = vsel %vm452, %v563, 0
        %v1005 = vsel %vm452, %v564, 0
        %v1008 = vsel %vm452, %v565, 0
        %v1011 = vsel %vm452, %v566, 0
        %v1014 = vsel %vm452, %v567, 0
        %v1017 = vsel %vm452, %v568, 0
        %v1020 = vsel %vm452, %v569, 0
        %v1023 = vsel %vm452, %v570, 0
        %v1026 = vsel %vm452, %v571, 0
        %v1029 = vsel %vm452, %v572, 0
        %1031 = vmatprep.subr.mxu0 0.0
        %1032 = vmatpush1.msra.mxu0 %v573
        %1033 = vmatprep.subr.mxu0 0.0
        %1034 = vmatpush1.msra.mxu0 %v574
        %1035 = vmatprep.subr.mxu0 0.0
        %1036 = vmatpush1.msra.mxu0 %v575
        %1037 = vmatprep.subr.mxu0 0.0
        %1038 = vmatpush1.msra.mxu0 %v576
        %1039 = vmatprep.subr.mxu0 0.0
        %1040 = vmatpush1.msra.mxu0 0.0
        %1041 = vmatprep.subr.mxu0 0.0
        %1042 = vmatpush1.msra.mxu0 0.0
        %1043 = vmatprep.subr.mxu0 0.0
        %1044 = vmatpush1.msra.mxu0 0.0
        %1045 = vmatprep.subr.mxu0 0.0
        %1046 = vmatpush1.msra.mxu0 0.0
        %1047 = vmatprep.subr.mxu0 0.0
        %1048 = vmatpush1.msra.mxu0 0.0
        %1049 = vmatprep.subr.mxu0 0.0
        %1050 = vmatpush1.msra.mxu0 0.0
        %1051 = vmatprep.subr.mxu0 0.0
        %1052 = vmatpush1.msra.mxu0 0.0
        %1053 = vmatprep.subr.mxu0 0.0
        %1054 = vmatpush1.msra.mxu0 0.0
        %1055 = vmatprep.subr.mxu0 0.0
        %1056 = vmatpush1.msra.mxu0 0.0
        %1057 = vmatprep.subr.mxu0 0.0
        %1058 = vmatpush1.msra.mxu0 0.0
        %1059 = vmatprep.subr.mxu0 0.0
        %1060 = vmatpush1.msra.mxu0 0.0
        %1061 = vmatprep.subr.mxu0 0.0
        %1062 = vmatpush1.msra.mxu0 0.0
        %1063 = vmatprep.subr.mxu0 0.0
        %1064 = vmatpush1.msra.mxu0 0.0
        %1065 = vmatprep.subr.mxu0 0.0
        %1066 = vmatpush1.msra.mxu0 0.0
        %1067 = vmatprep.subr.mxu0 0.0
        %1068 = vmatpush1.msra.mxu0 0.0
        %1069 = vmatprep.subr.mxu0 0.0
        %1070 = vmatpush1.msra.mxu0 0.0
        %1071 = vmatprep.subr.mxu0 0.0
        %1072 = vmatpush1.msra.mxu0 0.0
        %1073 = vmatprep.subr.mxu0 0.0
        %1074 = vmatpush1.msra.mxu0 0.0
        %1075 = vmatprep.subr.mxu0 0.0
        %1076 = vmatpush1.msra.mxu0 0.0
        %1077 = vmatprep.subr.mxu0 0.0
        %1078 = vmatpush1.msra.mxu0 0.0
        %1079 = vmatprep.subr.mxu0 0.0
        %1080 = vmatpush1.msra.mxu0 0.0
        %1081 = vmatprep.subr.mxu0 0.0
        %1082 = vmatpush1.msra.mxu0 0.0
        %1083 = vmatprep.subr.mxu0 0.0
        %1084 = vmatpush1.msra.mxu0 0.0
        %1085 = vmatprep.subr.mxu0 0.0
        %1086 = vmatpush1.msra.mxu0 0.0
        %1087 = vmatprep.subr.mxu0 0.0
        %1088 = vmatpush1.msra.mxu0 0.0
        %1089 = vmatprep.subr.mxu0 0.0
        %1090 = vmatpush1.msra.mxu0 0.0
        %1091 = vmatprep.subr.mxu0 0.0
        %1092 = vmatpush1.msra.mxu0 0.0
        %1093 = vmatprep.subr.mxu0 0.0
        %1094 = vmatpush1.msra.mxu0 0.0
        %1095 = vmatprep.mubr.f32.mxu0 0.0
        %1096 = vmatmul.mubr.f32.gmra.mrb[0].mxu0 %v936
        %v1097 = vpop.f32.mrb[0].mxu0
        %v1098 = vadd.f32 %v777, %v1097
        %v1099 = vpop.f32.mrb[0].mxu0
        %1100 = vmatprep.mubr.f32.mxu0 0.0
        %1101 = vmatmul.mubr.f32.gmra.mrb[0].mxu0 %v939
        %v1102 = vpop.f32.mrb[0].mxu0
        %v1103 = vadd.f32 %v782, %v1102
        %v1104 = vpop.f32.mrb[0].mxu0
        %1105 = vmatprep.mubr.f32.mxu0 0.0
        %1106 = vmatmul.mubr.f32.gmra.mrb[0].mxu0 %v942
        %v1107 = vpop.f32.mrb[0].mxu0
        %v1108 = vadd.f32 %v787, %v1107
        %v1109 = vpop.f32.mrb[0].mxu0
        %1110 = vmatprep.mubr.f32.mxu0 0.0
        %1111 = vmatmul.mubr.f32.gmra.mrb[0].mxu0 %v945
        %v1112 = vpop.f32.mrb[0].mxu0
        %v1113 = vadd.f32 %v792, %v1112
        %v1114 = vpop.f32.mrb[0].mxu0
        %1115 = vmatprep.mubr.f32.mxu0 0.0
        %1116 = vmatmul.mubr.f32.gmra.mrb[0].mxu0 %v948
        %v1117 = vpop.f32.mrb[0].mxu0
        %v1118 = vadd.f32 %v797, %v1117
        %v1119 = vpop.f32.mrb[0].mxu0
        %1120 = vmatprep.mubr.f32.mxu0 0.0
        %1121 = vmatmul.mubr.f32.gmra.mrb[0].mxu0 %v951
        %v1122 = vpop.f32.mrb[0].mxu0
        %v1123 = vadd.f32 %v802, %v1122
        %v1124 = vpop.f32.mrb[0].mxu0
        %1125 = vmatprep.mubr.f32.mxu0 0.0
        %1126 = vmatmul.mubr.f32.gmra.mrb[0].mxu0 %v954
        %v1127 = vpop.f32.mrb[0].mxu0
        %v1128 = vadd.f32 %v807, %v1127
        %v1129 = vpop.f32.mrb[0].mxu0
        %1130 = vmatprep.mubr.f32.mxu0 0.0
        %1131 = vmatmul.mubr.f32.gmra.mrb[0].mxu0 %v957
        %v1132 = vpop.f32.mrb[0].mxu0
        %v1133 = vadd.f32 %v812, %v1132
        %v1134 = vpop.f32.mrb[0].mxu0
        %1135 = vmatprep.mubr.f32.mxu0 0.0
        %1136 = vmatmul.mubr.f32.gmra.mrb[0].mxu0 %v960
        %v1137 = vpop.f32.mrb[0].mxu0
        %v1138 = vadd.f32 %v817, %v1137
        %v1139 = vpop.f32.mrb[0].mxu0
        %1140 = vmatprep.mubr.f32.mxu0 0.0
        %1141 = vmatmul.mubr.f32.gmra.mrb[0].mxu0 %v963
        %v1142 = vpop.f32.mrb[0].mxu0
        %v1143 = vadd.f32 %v822, %v1142
        %v1144 = vpop.f32.mrb[0].mxu0
        %1145 = vmatprep.mubr.f32.mxu0 0.0
        %1146 = vmatmul.mubr.f32.gmra.mrb[0].mxu0 %v966
        %v1147 = vpop.f32.mrb[0].mxu0
        %v1148 = vadd.f32 %v827, %v1147
        %v1149 = vpop.f32.mrb[0].mxu0
        %1150 = vmatprep.mubr.f32.mxu0 0.0
        %1151 = vmatmul.mubr.f32.gmra.mrb[0].mxu0 %v969
        %v1152 = vpop.f32.mrb[0].mxu0
        %v1153 = vadd.f32 %v832, %v1152
        %v1154 = vpop.f32.mrb[0].mxu0
        %1155 = vmatprep.mubr.f32.mxu0 0.0
        %1156 = vmatmul.mubr.f32.gmra.mrb[0].mxu0 %v972
        %v1157 = vpop.f32.mrb[0].mxu0
        %v1158 = vadd.f32 %v837, %v1157
        %v1159 = vpop.f32.mrb[0].mxu0
        %1160 = vmatprep.mubr.f32.mxu0 0.0
        %1161 = vmatmul.mubr.f32.gmra.mrb[0].mxu0 %v975
        %v1162 = vpop.f32.mrb[0].mxu0
        %v1163 = vadd.f32 %v842, %v1162
        %v1164 = vpop.f32.mrb[0].mxu0
        %1165 = vmatprep.mubr.f32.mxu0 0.0
        %1166 = vmatmul.mubr.f32.gmra.mrb[0].mxu0 %v978
        %v1167 = vpop.f32.mrb[0].mxu0
        %v1168 = vadd.f32 %v847, %v1167
        %v1169 = vpop.f32.mrb[0].mxu0
        %1170 = vmatprep.mubr.f32.mxu0 0.0
        %1171 = vmatmul.mubr.f32.gmra.mrb[0].mxu0 %v981
        %v1172 = vpop.f32.mrb[0].mxu0
        %v1173 = vadd.f32 %v852, %v1172
        %v1174 = vpop.f32.mrb[0].mxu0
        %1175 = vmatprep.mubr.f32.mxu0 0.0
        %1176 = vmatmul.mubr.f32.gmra.mrb[0].mxu0 %v984
        %v1177 = vpop.f32.mrb[0].mxu0
        %v1178 = vadd.f32 %v857, %v1177
        %v1179 = vpop.f32.mrb[0].mxu0
        %1180 = vmatprep.mubr.f32.mxu0 0.0
        %1181 = vmatmul.mubr.f32.gmra.mrb[0].mxu0 %v987
        %v1182 = vpop.f32.mrb[0].mxu0
        %v1183 = vadd.f32 %v862, %v1182
        %v1184 = vpop.f32.mrb[0].mxu0
        %1185 = vmatprep.mubr.f32.mxu0 0.0
        %1186 = vmatmul.mubr.f32.gmra.mrb[0].mxu0 %v990
        %v1187 = vpop.f32.mrb[0].mxu0
        %v1188 = vadd.f32 %v867, %v1187
        %v1189 = vpop.f32.mrb[0].mxu0
        %1190 = vmatprep.mubr.f32.mxu0 0.0
        %1191 = vmatmul.mubr.f32.gmra.mrb[0].mxu0 %v993
        %v1192 = vpop.f32.mrb[0].mxu0
        %v1193 = vadd.f32 %v872, %v1192
        %v1194 = vpop.f32.mrb[0].mxu0
        %1195 = vmatprep.mubr.f32.mxu0 0.0
        %1196 = vmatmul.mubr.f32.gmra.mrb[0].mxu0 %v996
        %v1197 = vpop.f32.mrb[0].mxu0
        %v1198 = vadd.f32 %v877, %v1197
        %v1199 = vpop.f32.mrb[0].mxu0
        %1200 = vmatprep.mubr.f32.mxu0 0.0
        %1201 = vmatmul.mubr.f32.gmra.mrb[0].mxu0 %v999
        %v1202 = vpop.f32.mrb[0].mxu0
        %v1203 = vadd.f32 %v882, %v1202
        %v1204 = vpop.f32.mrb[0].mxu0
        %1205 = vmatprep.mubr.f32.mxu0 0.0
        %1206 = vmatmul.mubr.f32.gmra.mrb[0].mxu0 %v1002
        %v1207 = vpop.f32.mrb[0].mxu0
        %v1208 = vadd.f32 %v887, %v1207
        %v1209 = vpop.f32.mrb[0].mxu0
        %1210 = vmatprep.mubr.f32.mxu0 0.0
        %1211 = vmatmul.mubr.f32.gmra.mrb[0].mxu0 %v1005
        %v1212 = vpop.f32.mrb[0].mxu0
        %v1213 = vadd.f32 %v892, %v1212
        %v1214 = vpop.f32.mrb[0].mxu0
        %1215 = vmatprep.mubr.f32.mxu0 0.0
        %1216 = vmatmul.mubr.f32.gmra.mrb[0].mxu0 %v1008
        %v1217 = vpop.f32.mrb[0].mxu0
        %v1218 = vadd.f32 %v897, %v1217
        %v1219 = vpop.f32.mrb[0].mxu0
        %1220 = vmatprep.mubr.f32.mxu0 0.0
        %1221 = vmatmul.mubr.f32.gmra.mrb[0].mxu0 %v1011
        %v1222 = vpop.f32.mrb[0].mxu0
        %v1223 = vadd.f32 %v902, %v1222
        %v1224 = vpop.f32.mrb[0].mxu0
        %1225 = vmatprep.mubr.f32.mxu0 0.0
        %1226 = vmatmul.mubr.f32.gmra.mrb[0].mxu0 %v1014
        %v1227 = vpop.f32.mrb[0].mxu0
        %v1228 = vadd.f32 %v907, %v1227
        %v1229 = vpop.f32.mrb[0].mxu0
        %1230 = vmatprep.mubr.f32.mxu0 0.0
        %1231 = vmatmul.mubr.f32.gmra.mrb[0].mxu0 %v1017
        %v1232 = vpop.f32.mrb[0].mxu0
        %v1233 = vadd.f32 %v912, %v1232
        %v1234 = vpop.f32.mrb[0].mxu0
        %1235 = vmatprep.mubr.f32.mxu0 0.0
        %1236 = vmatmul.mubr.f32.gmra.mrb[0].mxu0 %v1020
        %v1237 = vpop.f32.mrb[0].mxu0
        %v1238 = vadd.f32 %v917, %v1237
        %v1239 = vpop.f32.mrb[0].mxu0
        %1240 = vmatprep.mubr.f32.mxu0 0.0
        %1241 = vmatmul.mubr.f32.gmra.mrb[0].mxu0 %v1023
        %v1242 = vpop.f32.mrb[0].mxu0
        %v1243 = vadd.f32 %v922, %v1242
        %v1244 = vpop.f32.mrb[0].mxu0
        %1245 = vmatprep.mubr.f32.mxu0 0.0
        %1246 = vmatmul.mubr.f32.gmra.mrb[0].mxu0 %v1026
        %v1247 = vpop.f32.mrb[0].mxu0
        %v1248 = vadd.f32 %v927, %v1247
        %v1249 = vpop.f32.mrb[0].mxu0
        %1250 = vmatprep.mubr.f32.mxu0 0.0
        %1251 = vmatmul.mubr.f32.gmra.mrb[0].mxu0 %v1029
        %v1252 = vpop.f32.mrb[0].mxu0
        %v1253 = vadd.f32 %v932, %v1252
        %v1254 = vpop.f32.mrb[0].mxu0
        %1255 = vdwg.mxu0
        %v1256 = vld [vmem:[#allocation2 + $0x2] sm:$0xff]
        %v1257 = vld [vmem:[#allocation2 + $0xa] sm:$0xff]
        %v1258 = vld [vmem:[#allocation2 + $0x1a] sm:$0xff]
        %v1259 = vld [vmem:[#allocation2 + $0x22] sm:$0xff]
        %v1260 = vld [vmem:[#allocation2 + $0x32] sm:$0xff]
        %v1261 = vld [vmem:[#allocation2 + $0x3a] sm:$0xff]
        %v1262 = vld [vmem:[#allocation2 + $0x4a] sm:$0xff]
        %v1263 = vld [vmem:[#allocation2 + $0x52] sm:$0xff]
        %v1264 = vld [vmem:[#allocation2 + $0x62] sm:$0xff]
        %v1265 = vld [vmem:[#allocation2 + $0x6a] sm:$0xff]
        %v1266 = vld [vmem:[#allocation2 + $0x7a] sm:$0xff]
        %v1267 = vld [vmem:[#allocation2 + $0x82] sm:$0xff]
        %v1268 = vld [vmem:[#allocation2 + $0x92] sm:$0xff]
        %v1269 = vld [vmem:[#allocation2 + $0x9a] sm:$0xff]
        %v1270 = vld [vmem:[#allocation2 + $0xaa] sm:$0xff]
        %v1271 = vld [vmem:[#allocation2 + $0xb2] sm:$0xff]
        %v1272 = vld [vmem:[#allocation2 + $0xc2] sm:$0xff]
        %v1273 = vld [vmem:[#allocation2 + $0xca] sm:$0xff]
        %v1274 = vld [vmem:[#allocation2 + $0xda] sm:$0xff]
        %v1275 = vld [vmem:[#allocation2 + $0xe2] sm:$0xff]
        %v1276 = vld [vmem:[#allocation2 + $0xf2] sm:$0xff]
        %v1277 = vld [vmem:[#allocation2 + $0xfa] sm:$0xff]
        %v1278 = vld [vmem:[#allocation2 + $0x10a] sm:$0xff]
        %v1279 = vld [vmem:[#allocation2 + $0x112] sm:$0xff]
        %v1280 = vld [vmem:[#allocation2 + $0x122] sm:$0xff]
        %v1281 = vld [vmem:[#allocation2 + $0x12a] sm:$0xff]
        %v1282 = vld [vmem:[#allocation2 + $0x13a] sm:$0xff]
        %v1283 = vld [vmem:[#allocation2 + $0x142] sm:$0xff]
        %v1284 = vld [vmem:[#allocation2 + $0x152] sm:$0xff]
        %v1285 = vld [vmem:[#allocation2 + $0x15a] sm:$0xff]
        %v1286 = vld [vmem:[#allocation2 + $0x16a] sm:$0xff]
        %v1287 = vld [vmem:[#allocation2 + $0x172] sm:$0xff]
        %s1288 = scalar_lea.vmem %s3, 64
        %v1289 = vld [vmem:[%s1288] sm:$0xff]
        %v1290 = vld [vmem:[%s1288 + $0x8] sm:$0xff]
        %v1291 = vld [vmem:[%s1288 + $0x10] sm:$0xff]
        %v1292 = vld [vmem:[%s1288 + $0x18] sm:$0xff]
        %v1294 = vsel %vm452, %v1256, 0
        %v1297 = vsel %vm452, %v1257, 0
        %v1300 = vsel %vm452, %v1258, 0
        %v1303 = vsel %vm452, %v1259, 0
        %v1306 = vsel %vm452, %v1260, 0
        %v1309 = vsel %vm452, %v1261, 0
        %v1312 = vsel %vm452, %v1262, 0
        %v1315 = vsel %vm452, %v1263, 0
        %v1318 = vsel %vm452, %v1264, 0
        %v1321 = vsel %vm452, %v1265, 0
        %v1324 = vsel %vm452, %v1266, 0
        %v1327 = vsel %vm452, %v1267, 0
        %v1330 = vsel %vm452, %v1268, 0
        %v1333 = vsel %vm452, %v1269, 0
        %v1336 = vsel %vm452, %v1270, 0
        %v1339 = vsel %vm452, %v1271, 0
        %v1342 = vsel %vm452, %v1272, 0
        %v1345 = vsel %vm452, %v1273, 0
        %v1348 = vsel %vm452, %v1274, 0
        %v1351 = vsel %vm452, %v1275, 0
        %v1354 = vsel %vm452, %v1276, 0
        %v1357 = vsel %vm452, %v1277, 0
        %v1360 = vsel %vm452, %v1278, 0
        %v1363 = vsel %vm452, %v1279, 0
        %v1366 = vsel %vm452, %v1280, 0
        %v1369 = vsel %vm452, %v1281, 0
        %v1372 = vsel %vm452, %v1282, 0
        %v1375 = vsel %vm452, %v1283, 0
        %v1378 = vsel %vm452, %v1284, 0
        %v1381 = vsel %vm452, %v1285, 0
        %v1384 = vsel %vm452, %v1286, 0
        %v1387 = vsel %vm452, %v1287, 0
        %1389 = vmatprep.subr.mxu0 0.0
        %1390 = vmatpush1.msra.mxu0 %v1289
        %1391 = vmatprep.subr.mxu0 0.0
        %1392 = vmatpush1.msra.mxu0 %v1290
        %1393 = vmatprep.subr.mxu0 0.0
        %1394 = vmatpush1.msra.mxu0 %v1291
        %1395 = vmatprep.subr.mxu0 0.0
        %1396 = vmatpush1.msra.mxu0 %v1292
        %1397 = vmatprep.subr.mxu0 0.0
        %1398 = vmatpush1.msra.mxu0 0.0
        %1399 = vmatprep.subr.mxu0 0.0
        %1400 = vmatpush1.msra.mxu0 0.0
        %1401 = vmatprep.subr.mxu0 0.0
        %1402 = vmatpush1.msra.mxu0 0.0
        %1403 = vmatprep.subr.mxu0 0.0
        %1404 = vmatpush1.msra.mxu0 0.0
        %1405 = vmatprep.subr.mxu0 0.0
        %1406 = vmatpush1.msra.mxu0 0.0
        %1407 = vmatprep.subr.mxu0 0.0
        %1408 = vmatpush1.msra.mxu0 0.0
        %1409 = vmatprep.subr.mxu0 0.0
        %1410 = vmatpush1.msra.mxu0 0.0
        %1411 = vmatprep.subr.mxu0 0.0
        %1412 = vmatpush1.msra.mxu0 0.0
        %1413 = vmatprep.subr.mxu0 0.0
        %1414 = vmatpush1.msra.mxu0 0.0
        %1415 = vmatprep.subr.mxu0 0.0
        %1416 = vmatpush1.msra.mxu0 0.0
        %1417 = vmatprep.subr.mxu0 0.0
        %1418 = vmatpush1.msra.mxu0 0.0
        %1419 = vmatprep.subr.mxu0 0.0
        %1420 = vmatpush1.msra.mxu0 0.0
        %1421 = vmatprep.subr.mxu0 0.0
        %1422 = vmatpush1.msra.mxu0 0.0
        %1423 = vmatprep.subr.mxu0 0.0
        %1424 = vmatpush1.msra.mxu0 0.0
        %1425 = vmatprep.subr.mxu0 0.0
        %1426 = vmatpush1.msra.mxu0 0.0
        %1427 = vmatprep.subr.mxu0 0.0
        %1428 = vmatpush1.msra.mxu0 0.0
        %1429 = vmatprep.subr.mxu0 0.0
        %1430 = vmatpush1.msra.mxu0 0.0
        %1431 = vmatprep.subr.mxu0 0.0
        %1432 = vmatpush1.msra.mxu0 0.0
        %1433 = vmatprep.subr.mxu0 0.0
        %1434 = vmatpush1.msra.mxu0 0.0
        %1435 = vmatprep.subr.mxu0 0.0
        %1436 = vmatpush1.msra.mxu0 0.0
        %1437 = vmatprep.subr.mxu0 0.0
        %1438 = vmatpush1.msra.mxu0 0.0
        %1439 = vmatprep.subr.mxu0 0.0
        %1440 = vmatpush1.msra.mxu0 0.0
        %1441 = vmatprep.subr.mxu0 0.0
        %1442 = vmatpush1.msra.mxu0 0.0
        %1443 = vmatprep.subr.mxu0 0.0
        %1444 = vmatpush1.msra.mxu0 0.0
        %1445 = vmatprep.subr.mxu0 0.0
        %1446 = vmatpush1.msra.mxu0 0.0
        %1447 = vmatprep.subr.mxu0 0.0
        %1448 = vmatpush1.msra.mxu0 0.0
        %1449 = vmatprep.subr.mxu0 0.0
        %1450 = vmatpush1.msra.mxu0 0.0
        %1451 = vmatprep.subr.mxu0 0.0
        %1452 = vmatpush1.msra.mxu0 0.0
        %1453 = vmatprep.mubr.f32.mxu0 0.0
        %1454 = vmatmul.mubr.f32.gmra.mrb[0].mxu0 %v1294
        %v1455 = vpop.f32.mrb[0].mxu0
        %v1456 = vadd.f32 0.0, %v1455
        %v1457 = vpop.f32.mrb[0].mxu0
        %1458 = vmatprep.mubr.f32.mxu0 0.0
        %1459 = vmatmul.mubr.f32.gmra.mrb[0].mxu0 %v1297
        %v1460 = vpop.f32.mrb[0].mxu0
        %v1461 = vadd.f32 0.0, %v1460
        %v1462 = vpop.f32.mrb[0].mxu0
        %1463 = vmatprep.mubr.f32.mxu0 0.0
        %1464 = vmatmul.mubr.f32.gmra.mrb[0].mxu0 %v1300
        %v1465 = vpop.f32.mrb[0].mxu0
        %v1466 = vadd.f32 0.0, %v1465
        %v1467 = vpop.f32.mrb[0].mxu0
        %1468 = vmatprep.mubr.f32.mxu0 0.0
        %1469 = vmatmul.mubr.f32.gmra.mrb[0].mxu0 %v1303
        %v1470 = vpop.f32.mrb[0].mxu0
        %v1471 = vadd.f32 0.0, %v1470
        %v1472 = vpop.f32.mrb[0].mxu0
        %1473 = vmatprep.mubr.f32.mxu0 0.0
        %1474 = vmatmul.mubr.f32.gmra.mrb[0].mxu0 %v1306
        %v1475 = vpop.f32.mrb[0].mxu0
        %v1476 = vadd.f32 0.0, %v1475
        %v1477 = vpop.f32.mrb[0].mxu0
        %1478 = vmatprep.mubr.f32.mxu0 0.0
        %1479 = vmatmul.mubr.f32.gmra.mrb[0].mxu0 %v1309
        %v1480 = vpop.f32.mrb[0].mxu0
        %v1481 = vadd.f32 0.0, %v1480
        %v1482 = vpop.f32.mrb[0].mxu0
        %1483 = vmatprep.mubr.f32.mxu0 0.0
        %1484 = vmatmul.mubr.f32.gmra.mrb[0].mxu0 %v1312
        %v1485 = vpop.f32.mrb[0].mxu0
        %v1486 = vadd.f32 0.0, %v1485
        %v1487 = vpop.f32.mrb[0].mxu0
        %1488 = vmatprep.mubr.f32.mxu0 0.0
        %1489 = vmatmul.mubr.f32.gmra.mrb[0].mxu0 %v1315
        %v1490 = vpop.f32.mrb[0].mxu0
        %v1491 = vadd.f32 0.0, %v1490
        %v1492 = vpop.f32.mrb[0].mxu0
        %1493 = vmatprep.mubr.f32.mxu0 0.0
        %1494 = vmatmul.mubr.f32.gmra.mrb[0].mxu0 %v1318
        %v1495 = vpop.f32.mrb[0].mxu0
        %v1496 = vadd.f32 0.0, %v1495
        %v1497 = vpop.f32.mrb[0].mxu0
        %1498 = vmatprep.mubr.f32.mxu0 0.0
        %1499 = vmatmul.mubr.f32.gmra.mrb[0].mxu0 %v1321
        %v1500 = vpop.f32.mrb[0].mxu0
        %v1501 = vadd.f32 0.0, %v1500
        %v1502 = vpop.f32.mrb[0].mxu0
        %1503 = vmatprep.mubr.f32.mxu0 0.0
        %1504 = vmatmul.mubr.f32.gmra.mrb[0].mxu0 %v1324
        %v1505 = vpop.f32.mrb[0].mxu0
        %v1506 = vadd.f32 0.0, %v1505
        %v1507 = vpop.f32.mrb[0].mxu0
        %1508 = vmatprep.mubr.f32.mxu0 0.0
        %1509 = vmatmul.mubr.f32.gmra.mrb[0].mxu0 %v1327
        %v1510 = vpop.f32.mrb[0].mxu0
        %v1511 = vadd.f32 0.0, %v1510
        %v1512 = vpop.f32.mrb[0].mxu0
        %1513 = vmatprep.mubr.f32.mxu0 0.0
        %1514 = vmatmul.mubr.f32.gmra.mrb[0].mxu0 %v1330
        %v1515 = vpop.f32.mrb[0].mxu0
        %v1516 = vadd.f32 0.0, %v1515
        %v1517 = vpop.f32.mrb[0].mxu0
        %1518 = vmatprep.mubr.f32.mxu0 0.0
        %1519 = vmatmul.mubr.f32.gmra.mrb[0].mxu0 %v1333
        %v1520 = vpop.f32.mrb[0].mxu0
        %v1521 = vadd.f32 0.0, %v1520
        %v1522 = vpop.f32.mrb[0].mxu0
        %1523 = vmatprep.mubr.f32.mxu0 0.0
        %1524 = vmatmul.mubr.f32.gmra.mrb[0].mxu0 %v1336
        %v1525 = vpop.f32.mrb[0].mxu0
        %v1526 = vadd.f32 0.0, %v1525
        %v1527 = vpop.f32.mrb[0].mxu0
        %1528 = vmatprep.mubr.f32.mxu0 0.0
        %1529 = vmatmul.mubr.f32.gmra.mrb[0].mxu0 %v1339
        %v1530 = vpop.f32.mrb[0].mxu0
        %v1531 = vadd.f32 0.0, %v1530
        %v1532 = vpop.f32.mrb[0].mxu0
        %1533 = vmatprep.mubr.f32.mxu0 0.0
        %1534 = vmatmul.mubr.f32.gmra.mrb[0].mxu0 %v1342
        %v1535 = vpop.f32.mrb[0].mxu0
        %v1536 = vadd.f32 0.0, %v1535
        %v1537 = vpop.f32.mrb[0].mxu0
        %1538 = vmatprep.mubr.f32.mxu0 0.0
        %1539 = vmatmul.mubr.f32.gmra.mrb[0].mxu0 %v1345
        %v1540 = vpop.f32.mrb[0].mxu0
        %v1541 = vadd.f32 0.0, %v1540
        %v1542 = vpop.f32.mrb[0].mxu0
        %1543 = vmatprep.mubr.f32.mxu0 0.0
        %1544 = vmatmul.mubr.f32.gmra.mrb[0].mxu0 %v1348
        %v1545 = vpop.f32.mrb[0].mxu0
        %v1546 = vadd.f32 0.0, %v1545
        %v1547 = vpop.f32.mrb[0].mxu0
        %1548 = vmatprep.mubr.f32.mxu0 0.0
        %1549 = vmatmul.mubr.f32.gmra.mrb[0].mxu0 %v1351
        %v1550 = vpop.f32.mrb[0].mxu0
        %v1551 = vadd.f32 0.0, %v1550
        %v1552 = vpop.f32.mrb[0].mxu0
        %1553 = vmatprep.mubr.f32.mxu0 0.0
        %1554 = vmatmul.mubr.f32.gmra.mrb[0].mxu0 %v1354
        %v1555 = vpop.f32.mrb[0].mxu0
        %v1556 = vadd.f32 0.0, %v1555
        %v1557 = vpop.f32.mrb[0].mxu0
        %1558 = vmatprep.mubr.f32.mxu0 0.0
        %1559 = vmatmul.mubr.f32.gmra.mrb[0].mxu0 %v1357
        %v1560 = vpop.f32.mrb[0].mxu0
        %v1561 = vadd.f32 0.0, %v1560
        %v1562 = vpop.f32.mrb[0].mxu0
        %1563 = vmatprep.mubr.f32.mxu0 0.0
        %1564 = vmatmul.mubr.f32.gmra.mrb[0].mxu0 %v1360
        %v1565 = vpop.f32.mrb[0].mxu0
        %v1566 = vadd.f32 0.0, %v1565
        %v1567 = vpop.f32.mrb[0].mxu0
        %1568 = vmatprep.mubr.f32.mxu0 0.0
        %1569 = vmatmul.mubr.f32.gmra.mrb[0].mxu0 %v1363
        %v1570 = vpop.f32.mrb[0].mxu0
        %v1571 = vadd.f32 0.0, %v1570
        %v1572 = vpop.f32.mrb[0].mxu0
        %1573 = vmatprep.mubr.f32.mxu0 0.0
        %1574 = vmatmul.mubr.f32.gmra.mrb[0].mxu0 %v1366
        %v1575 = vpop.f32.mrb[0].mxu0
        %v1576 = vadd.f32 0.0, %v1575
        %v1577 = vpop.f32.mrb[0].mxu0
        %1578 = vmatprep.mubr.f32.mxu0 0.0
        %1579 = vmatmul.mubr.f32.gmra.mrb[0].mxu0 %v1369
        %v1580 = vpop.f32.mrb[0].mxu0
        %v1581 = vadd.f32 0.0, %v1580
        %v1582 = vpop.f32.mrb[0].mxu0
        %1583 = vmatprep.mubr.f32.mxu0 0.0
        %1584 = vmatmul.mubr.f32.gmra.mrb[0].mxu0 %v1372
        %v1585 = vpop.f32.mrb[0].mxu0
        %v1586 = vadd.f32 0.0, %v1585
        %v1587 = vpop.f32.mrb[0].mxu0
        %1588 = vmatprep.mubr.f32.mxu0 0.0
        %1589 = vmatmul.mubr.f32.gmra.mrb[0].mxu0 %v1375
        %v1590 = vpop.f32.mrb[0].mxu0
        %v1591 = vadd.f32 0.0, %v1590
        %v1592 = vpop.f32.mrb[0].mxu0
        %1593 = vmatprep.mubr.f32.mxu0 0.0
        %1594 = vmatmul.mubr.f32.gmra.mrb[0].mxu0 %v1378
        %v1595 = vpop.f32.mrb[0].mxu0
        %v1596 = vadd.f32 0.0, %v1595
        %v1597 = vpop.f32.mrb[0].mxu0
        %1598 = vmatprep.mubr.f32.mxu0 0.0
        %1599 = vmatmul.mubr.f32.gmra.mrb[0].mxu0 %v1381
        %v1600 = vpop.f32.mrb[0].mxu0
        %v1601 = vadd.f32 0.0, %v1600
        %v1602 = vpop.f32.mrb[0].mxu0
        %1603 = vmatprep.mubr.f32.mxu0 0.0
        %1604 = vmatmul.mubr.f32.gmra.mrb[0].mxu0 %v1384
        %v1605 = vpop.f32.mrb[0].mxu0
        %v1606 = vadd.f32 0.0, %v1605
        %v1607 = vpop.f32.mrb[0].mxu0
        %1608 = vmatprep.mubr.f32.mxu0 0.0
        %1609 = vmatmul.mubr.f32.gmra.mrb[0].mxu0 %v1387
        %v1610 = vpop.f32.mrb[0].mxu0
        %v1611 = vadd.f32 0.0, %v1610
        %v1612 = vpop.f32.mrb[0].mxu0
        %1613 = vdwg.mxu0
        %v1614 = vadd.f32 %v1098, %v1456
        %v1615 = vadd.f32 %v1103, %v1461
        %v1616 = vadd.f32 %v1108, %v1466
        %v1617 = vadd.f32 %v1113, %v1471
        %v1618 = vadd.f32 %v1118, %v1476
        %v1619 = vadd.f32 %v1123, %v1481
        %v1620 = vadd.f32 %v1128, %v1486
        %v1621 = vadd.f32 %v1133, %v1491
        %v1622 = vadd.f32 %v1138, %v1496
        %v1623 = vadd.f32 %v1143, %v1501
        %v1624 = vadd.f32 %v1148, %v1506
        %v1625 = vadd.f32 %v1153, %v1511
        %v1626 = vadd.f32 %v1158, %v1516
        %v1627 = vadd.f32 %v1163, %v1521
        %v1628 = vadd.f32 %v1168, %v1526
        %v1629 = vadd.f32 %v1173, %v1531
        %v1630 = vadd.f32 %v1178, %v1536
        %v1631 = vadd.f32 %v1183, %v1541
        %v1632 = vadd.f32 %v1188, %v1546
        %v1633 = vadd.f32 %v1193, %v1551
        %v1634 = vadd.f32 %v1198, %v1556
        %v1635 = vadd.f32 %v1203, %v1561
        %v1636 = vadd.f32 %v1208, %v1566
        %v1637 = vadd.f32 %v1213, %v1571
        %v1638 = vadd.f32 %v1218, %v1576
        %v1639 = vadd.f32 %v1223, %v1581
        %v1640 = vadd.f32 %v1228, %v1586
        %v1641 = vadd.f32 %v1233, %v1591
        %v1642 = vadd.f32 %v1238, %v1596
        %v1643 = vadd.f32 %v1243, %v1601
        %v1644 = vadd.f32 %v1248, %v1606
        %v1645 = vadd.f32 %v1253, %v1611
        %v1646 = vld [vmem:[%s508] sm:$0xff]
        %v1647 = vld [vmem:[%s508 + $0x8] sm:$0xff]
        %v1648 = vld [vmem:[%s508 + $0x18] sm:$0xff]
        %v1649 = vld [vmem:[%s508 + $0x20] sm:$0xff]
        %v1650 = vld [vmem:[%s508 + $0x30] sm:$0xff]
        %v1651 = vld [vmem:[%s508 + $0x38] sm:$0xff]
        %v1652 = vld [vmem:[%s508 + $0x48] sm:$0xff]
        %v1653 = vld [vmem:[%s508 + $0x50] sm:$0xff]
        %v1654 = vld [vmem:[%s508 + $0x60] sm:$0xff]
        %v1655 = vld [vmem:[%s508 + $0x68] sm:$0xff]
        %v1656 = vld [vmem:[%s508 + $0x78] sm:$0xff]
        %v1657 = vld [vmem:[%s508 + $0x80] sm:$0xff]
        %v1658 = vld [vmem:[%s508 + $0x90] sm:$0xff]
        %v1659 = vld [vmem:[%s508 + $0x98] sm:$0xff]
        %v1660 = vld [vmem:[%s508 + $0xa8] sm:$0xff]
        %v1661 = vld [vmem:[%s508 + $0xb0] sm:$0xff]
        %v1662 = vld [vmem:[%s508 + $0xc0] sm:$0xff]
        %v1663 = vld [vmem:[%s508 + $0xc8] sm:$0xff]
        %v1664 = vld [vmem:[%s508 + $0xd8] sm:$0xff]
        %v1665 = vld [vmem:[%s508 + $0xe0] sm:$0xff]
        %v1666 = vld [vmem:[%s508 + $0xf0] sm:$0xff]
        %v1667 = vld [vmem:[%s508 + $0xf8] sm:$0xff]
        %v1668 = vld [vmem:[%s508 + $0x108] sm:$0xff]
        %v1669 = vld [vmem:[%s508 + $0x110] sm:$0xff]
        %v1670 = vld [vmem:[%s508 + $0x120] sm:$0xff]
        %v1671 = vld [vmem:[%s508 + $0x128] sm:$0xff]
        %v1672 = vld [vmem:[%s508 + $0x138] sm:$0xff]
        %v1673 = vld [vmem:[%s508 + $0x140] sm:$0xff]
        %v1674 = vld [vmem:[%s508 + $0x150] sm:$0xff]
        %v1675 = vld [vmem:[%s508 + $0x158] sm:$0xff]
        %v1676 = vld [vmem:[%s508 + $0x168] sm:$0xff]
        %v1677 = vld [vmem:[%s508 + $0x170] sm:$0xff]
        %s1678 = scalar_lea.vmem %s3, 96
        %v1679 = vld [vmem:[%s1678] sm:$0xff]
        %v1680 = vld [vmem:[%s1678 + $0x8] sm:$0xff]
        %v1681 = vld [vmem:[%s1678 + $0x10] sm:$0xff]
        %v1682 = vld [vmem:[%s1678 + $0x18] sm:$0xff]
        %v1684 = vsel %vm452, %v1646, 0
        %v1687 = vsel %vm452, %v1647, 0
        %v1690 = vsel %vm452, %v1648, 0
        %v1693 = vsel %vm452, %v1649, 0
        %v1696 = vsel %vm452, %v1650, 0
        %v1699 = vsel %vm452, %v1651, 0
        %v1702 = vsel %vm452, %v1652, 0
        %v1705 = vsel %vm452, %v1653, 0
        %v1708 = vsel %vm452, %v1654, 0
        %v1711 = vsel %vm452, %v1655, 0
        %v1714 = vsel %vm452, %v1656, 0
        %v1717 = vsel %vm452, %v1657, 0
        %v1720 = vsel %vm452, %v1658, 0
        %v1723 = vsel %vm452, %v1659, 0
        %v1726 = vsel %vm452, %v1660, 0
        %v1729 = vsel %vm452, %v1661, 0
        %v1732 = vsel %vm452, %v1662, 0
        %v1735 = vsel %vm452, %v1663, 0
        %v1738 = vsel %vm452, %v1664, 0
        %v1741 = vsel %vm452, %v1665, 0
        %v1744 = vsel %vm452, %v1666, 0
        %v1747 = vsel %vm452, %v1667, 0
        %v1750 = vsel %vm452, %v1668, 0
        %v1753 = vsel %vm452, %v1669, 0
        %v1756 = vsel %vm452, %v1670, 0
        %v1759 = vsel %vm452, %v1671, 0
        %v1762 = vsel %vm452, %v1672, 0
        %v1765 = vsel %vm452, %v1673, 0
        %v1768 = vsel %vm452, %v1674, 0
        %v1771 = vsel %vm452, %v1675, 0
        %v1774 = vsel %vm452, %v1676, 0
        %v1777 = vsel %vm452, %v1677, 0
        %1779 = vmatprep.subr.mxu0 0.0
        %1780 = vmatpush1.msra.mxu0 %v1679
        %1781 = vmatprep.subr.mxu0 0.0
        %1782 = vmatpush1.msra.mxu0 %v1680
        %1783 = vmatprep.subr.mxu0 0.0
        %1784 = vmatpush1.msra.mxu0 %v1681
        %1785 = vmatprep.subr.mxu0 0.0
        %1786 = vmatpush1.msra.mxu0 %v1682
        %1787 = vmatprep.subr.mxu0 0.0
        %1788 = vmatpush1.msra.mxu0 0.0
        %1789 = vmatprep.subr.mxu0 0.0
        %1790 = vmatpush1.msra.mxu0 0.0
        %1791 = vmatprep.subr.mxu0 0.0
        %1792 = vmatpush1.msra.mxu0 0.0
        %1793 = vmatprep.subr.mxu0 0.0
        %1794 = vmatpush1.msra.mxu0 0.0
        %1795 = vmatprep.subr.mxu0 0.0
        %1796 = vmatpush1.msra.mxu0 0.0
        %1797 = vmatprep.subr.mxu0 0.0
        %1798 = vmatpush1.msra.mxu0 0.0
        %1799 = vmatprep.subr.mxu0 0.0
        %1800 = vmatpush1.msra.mxu0 0.0
        %1801 = vmatprep.subr.mxu0 0.0
        %1802 = vmatpush1.msra.mxu0 0.0
        %1803 = vmatprep.subr.mxu0 0.0
        %1804 = vmatpush1.msra.mxu0 0.0
        %1805 = vmatprep.subr.mxu0 0.0
        %1806 = vmatpush1.msra.mxu0 0.0
        %1807 = vmatprep.subr.mxu0 0.0
        %1808 = vmatpush1.msra.mxu0 0.0
        %1809 = vmatprep.subr.mxu0 0.0
        %1810 = vmatpush1.msra.mxu0 0.0
        %1811 = vmatprep.subr.mxu0 0.0
        %1812 = vmatpush1.msra.mxu0 0.0
        %1813 = vmatprep.subr.mxu0 0.0
        %1814 = vmatpush1.msra.mxu0 0.0
        %1815 = vmatprep.subr.mxu0 0.0
        %1816 = vmatpush1.msra.mxu0 0.0
        %1817 = vmatprep.subr.mxu0 0.0
        %1818 = vmatpush1.msra.mxu0 0.0
        %1819 = vmatprep.subr.mxu0 0.0
        %1820 = vmatpush1.msra.mxu0 0.0
        %1821 = vmatprep.subr.mxu0 0.0
        %1822 = vmatpush1.msra.mxu0 0.0
        %1823 = vmatprep.subr.mxu0 0.0
        %1824 = vmatpush1.msra.mxu0 0.0
        %1825 = vmatprep.subr.mxu0 0.0
        %1826 = vmatpush1.msra.mxu0 0.0
        %1827 = vmatprep.subr.mxu0 0.0
        %1828 = vmatpush1.msra.mxu0 0.0
        %1829 = vmatprep.subr.mxu0 0.0
        %1830 = vmatpush1.msra.mxu0 0.0
        %1831 = vmatprep.subr.mxu0 0.0
        %1832 = vmatpush1.msra.mxu0 0.0
        %1833 = vmatprep.subr.mxu0 0.0
        %1834 = vmatpush1.msra.mxu0 0.0
        %1835 = vmatprep.subr.mxu0 0.0
        %1836 = vmatpush1.msra.mxu0 0.0
        %1837 = vmatprep.subr.mxu0 0.0
        %1838 = vmatpush1.msra.mxu0 0.0
        %1839 = vmatprep.subr.mxu0 0.0
        %1840 = vmatpush1.msra.mxu0 0.0
        %1841 = vmatprep.subr.mxu0 0.0
        %1842 = vmatpush1.msra.mxu0 0.0
        %1843 = vmatprep.mubr.f32.mxu0 0.0
        %1844 = vmatmul.mubr.f32.gmra.mrb[0].mxu0 %v1684
        %v1845 = vpop.f32.mrb[0].mxu0
        %v1846 = vadd.f32 0.0, %v1845
        %v1847 = vpop.f32.mrb[0].mxu0
        %1848 = vmatprep.mubr.f32.mxu0 0.0
        %1849 = vmatmul.mubr.f32.gmra.mrb[0].mxu0 %v1687
        %v1850 = vpop.f32.mrb[0].mxu0
        %v1851 = vadd.f32 0.0, %v1850
        %v1852 = vpop.f32.mrb[0].mxu0
        %1853 = vmatprep.mubr.f32.mxu0 0.0
        %1854 = vmatmul.mubr.f32.gmra.mrb[0].mxu0 %v1690
        %v1855 = vpop.f32.mrb[0].mxu0
        %v1856 = vadd.f32 0.0, %v1855
        %v1857 = vpop.f32.mrb[0].mxu0
        %1858 = vmatprep.mubr.f32.mxu0 0.0
        %1859 = vmatmul.mubr.f32.gmra.mrb[0].mxu0 %v1693
        %v1860 = vpop.f32.mrb[0].mxu0
        %v1861 = vadd.f32 0.0, %v1860
        %v1862 = vpop.f32.mrb[0].mxu0
        %1863 = vmatprep.mubr.f32.mxu0 0.0
        %1864 = vmatmul.mubr.f32.gmra.mrb[0].mxu0 %v1696
        %v1865 = vpop.f32.mrb[0].mxu0
        %v1866 = vadd.f32 0.0, %v1865
        %v1867 = vpop.f32.mrb[0].mxu0
        %1868 = vmatprep.mubr.f32.mxu0 0.0
        %1869 = vmatmul.mubr.f32.gmra.mrb[0].mxu0 %v1699
        %v1870 = vpop.f32.mrb[0].mxu0
        %v1871 = vadd.f32 0.0, %v1870
        %v1872 = vpop.f32.mrb[0].mxu0
        %1873 = vmatprep.mubr.f32.mxu0 0.0
        %1874 = vmatmul.mubr.f32.gmra.mrb[0].mxu0 %v1702
        %v1875 = vpop.f32.mrb[0].mxu0
        %v1876 = vadd.f32 0.0, %v1875
        %v1877 = vpop.f32.mrb[0].mxu0
        %1878 = vmatprep.mubr.f32.mxu0 0.0
        %1879 = vmatmul.mubr.f32.gmra.mrb[0].mxu0 %v1705
        %v1880 = vpop.f32.mrb[0].mxu0
        %v1881 = vadd.f32 0.0, %v1880
        %v1882 = vpop.f32.mrb[0].mxu0
        %1883 = vmatprep.mubr.f32.mxu0 0.0
        %1884 = vmatmul.mubr.f32.gmra.mrb[0].mxu0 %v1708
        %v1885 = vpop.f32.mrb[0].mxu0
        %v1886 = vadd.f32 0.0, %v1885
        %v1887 = vpop.f32.mrb[0].mxu0
        %1888 = vmatprep.mubr.f32.mxu0 0.0
        %1889 = vmatmul.mubr.f32.gmra.mrb[0].mxu0 %v1711
        %v1890 = vpop.f32.mrb[0].mxu0
        %v1891 = vadd.f32 0.0, %v1890
        %v1892 = vpop.f32.mrb[0].mxu0
        %1893 = vmatprep.mubr.f32.mxu0 0.0
        %1894 = vmatmul.mubr.f32.gmra.mrb[0].mxu0 %v1714
        %v1895 = vpop.f32.mrb[0].mxu0
        %v1896 = vadd.f32 0.0, %v1895
        %v1897 = vpop.f32.mrb[0].mxu0
        %1898 = vmatprep.mubr.f32.mxu0 0.0
        %1899 = vmatmul.mubr.f32.gmra.mrb[0].mxu0 %v1717
        %v1900 = vpop.f32.mrb[0].mxu0
        %v1901 = vadd.f32 0.0, %v1900
        %v1902 = vpop.f32.mrb[0].mxu0
        %1903 = vmatprep.mubr.f32.mxu0 0.0
        %1904 = vmatmul.mubr.f32.gmra.mrb[0].mxu0 %v1720
        %v1905 = vpop.f32.mrb[0].mxu0
        %v1906 = vadd.f32 0.0, %v1905
        %v1907 = vpop.f32.mrb[0].mxu0
        %1908 = vmatprep.mubr.f32.mxu0 0.0
        %1909 = vmatmul.mubr.f32.gmra.mrb[0].mxu0 %v1723
        %v1910 = vpop.f32.mrb[0].mxu0
        %v1911 = vadd.f32 0.0, %v1910
        %v1912 = vpop.f32.mrb[0].mxu0
        %1913 = vmatprep.mubr.f32.mxu0 0.0
        %1914 = vmatmul.mubr.f32.gmra.mrb[0].mxu0 %v1726
        %v1915 = vpop.f32.mrb[0].mxu0
        %v1916 = vadd.f32 0.0, %v1915
        %v1917 = vpop.f32.mrb[0].mxu0
        %1918 = vmatprep.mubr.f32.mxu0 0.0
        %1919 = vmatmul.mubr.f32.gmra.mrb[0].mxu0 %v1729
        %v1920 = vpop.f32.mrb[0].mxu0
        %v1921 = vadd.f32 0.0, %v1920
        %v1922 = vpop.f32.mrb[0].mxu0
        %1923 = vmatprep.mubr.f32.mxu0 0.0
        %1924 = vmatmul.mubr.f32.gmra.mrb[0].mxu0 %v1732
        %v1925 = vpop.f32.mrb[0].mxu0
        %v1926 = vadd.f32 0.0, %v1925
        %v1927 = vpop.f32.mrb[0].mxu0
        %1928 = vmatprep.mubr.f32.mxu0 0.0
        %1929 = vmatmul.mubr.f32.gmra.mrb[0].mxu0 %v1735
        %v1930 = vpop.f32.mrb[0].mxu0
        %v1931 = vadd.f32 0.0, %v1930
        %v1932 = vpop.f32.mrb[0].mxu0
        %1933 = vmatprep.mubr.f32.mxu0 0.0
        %1934 = vmatmul.mubr.f32.gmra.mrb[0].mxu0 %v1738
        %v1935 = vpop.f32.mrb[0].mxu0
        %v1936 = vadd.f32 0.0, %v1935
        %v1937 = vpop.f32.mrb[0].mxu0
        %1938 = vmatprep.mubr.f32.mxu0 0.0
        %1939 = vmatmul.mubr.f32.gmra.mrb[0].mxu0 %v1741
        %v1940 = vpop.f32.mrb[0].mxu0
        %v1941 = vadd.f32 0.0, %v1940
        %v1942 = vpop.f32.mrb[0].mxu0
        %1943 = vmatprep.mubr.f32.mxu0 0.0
        %1944 = vmatmul.mubr.f32.gmra.mrb[0].mxu0 %v1744
        %v1945 = vpop.f32.mrb[0].mxu0
        %v1946 = vadd.f32 0.0, %v1945
        %v1947 = vpop.f32.mrb[0].mxu0
        %1948 = vmatprep.mubr.f32.mxu0 0.0
        %1949 = vmatmul.mubr.f32.gmra.mrb[0].mxu0 %v1747
        %v1950 = vpop.f32.mrb[0].mxu0
        %v1951 = vadd.f32 0.0, %v1950
        %v1952 = vpop.f32.mrb[0].mxu0
        %1953 = vmatprep.mubr.f32.mxu0 0.0
        %1954 = vmatmul.mubr.f32.gmra.mrb[0].mxu0 %v1750
        %v1955 = vpop.f32.mrb[0].mxu0
        %v1956 = vadd.f32 0.0, %v1955
        %v1957 = vpop.f32.mrb[0].mxu0
        %1958 = vmatprep.mubr.f32.mxu0 0.0
        %1959 = vmatmul.mubr.f32.gmra.mrb[0].mxu0 %v1753
        %v1960 = vpop.f32.mrb[0].mxu0
        %v1961 = vadd.f32 0.0, %v1960
        %v1962 = vpop.f32.mrb[0].mxu0
        %1963 = vmatprep.mubr.f32.mxu0 0.0
        %1964 = vmatmul.mubr.f32.gmra.mrb[0].mxu0 %v1756
        %v1965 = vpop.f32.mrb[0].mxu0
        %v1966 = vadd.f32 0.0, %v1965
        %v1967 = vpop.f32.mrb[0].mxu0
        %1968 = vmatprep.mubr.f32.mxu0 0.0
        %1969 = vmatmul.mubr.f32.gmra.mrb[0].mxu0 %v1759
        %v1970 = vpop.f32.mrb[0].mxu0
        %v1971 = vadd.f32 0.0, %v1970
        %v1972 = vpop.f32.mrb[0].mxu0
        %1973 = vmatprep.mubr.f32.mxu0 0.0
        %1974 = vmatmul.mubr.f32.gmra.mrb[0].mxu0 %v1762
        %v1975 = vpop.f32.mrb[0].mxu0
        %v1976 = vadd.f32 0.0, %v1975
        %v1977 = vpop.f32.mrb[0].mxu0
        %1978 = vmatprep.mubr.f32.mxu0 0.0
        %1979 = vmatmul.mubr.f32.gmra.mrb[0].mxu0 %v1765
        %v1980 = vpop.f32.mrb[0].mxu0
        %v1981 = vadd.f32 0.0, %v1980
        %v1982 = vpop.f32.mrb[0].mxu0
        %1983 = vmatprep.mubr.f32.mxu0 0.0
        %1984 = vmatmul.mubr.f32.gmra.mrb[0].mxu0 %v1768
        %v1985 = vpop.f32.mrb[0].mxu0
        %v1986 = vadd.f32 0.0, %v1985
        %v1987 = vpop.f32.mrb[0].mxu0
        %1988 = vmatprep.mubr.f32.mxu0 0.0
        %1989 = vmatmul.mubr.f32.gmra.mrb[0].mxu0 %v1771
        %v1990 = vpop.f32.mrb[0].mxu0
        %v1991 = vadd.f32 0.0, %v1990
        %v1992 = vpop.f32.mrb[0].mxu0
        %1993 = vmatprep.mubr.f32.mxu0 0.0
        %1994 = vmatmul.mubr.f32.gmra.mrb[0].mxu0 %v1774
        %v1995 = vpop.f32.mrb[0].mxu0
        %v1996 = vadd.f32 0.0, %v1995
        %v1997 = vpop.f32.mrb[0].mxu0
        %1998 = vmatprep.mubr.f32.mxu0 0.0
        %1999 = vmatmul.mubr.f32.gmra.mrb[0].mxu0 %v1777
        %v2000 = vpop.f32.mrb[0].mxu0
        %v2001 = vadd.f32 0.0, %v2000
        %v2002 = vpop.f32.mrb[0].mxu0
        %2003 = vdwg.mxu0
        %v2004 = vadd.f32 %v1614, %v1846
        %v2005 = vadd.f32 %v1615, %v1851
        %v2006 = vadd.f32 %v1616, %v1856
        %v2007 = vadd.f32 %v1617, %v1861
        %v2008 = vadd.f32 %v1618, %v1866
        %v2009 = vadd.f32 %v1619, %v1871
        %v2010 = vadd.f32 %v1620, %v1876
        %v2011 = vadd.f32 %v1621, %v1881
        %v2012 = vadd.f32 %v1622, %v1886
        %v2013 = vadd.f32 %v1623, %v1891
        %v2014 = vadd.f32 %v1624, %v1896
        %v2015 = vadd.f32 %v1625, %v1901
        %v2016 = vadd.f32 %v1626, %v1906
        %v2017 = vadd.f32 %v1627, %v1911
        %v2018 = vadd.f32 %v1628, %v1916
        %v2019 = vadd.f32 %v1629, %v1921
        %v2020 = vadd.f32 %v1630, %v1926
        %v2021 = vadd.f32 %v1631, %v1931
        %v2022 = vadd.f32 %v1632, %v1936
        %v2023 = vadd.f32 %v1633, %v1941
        %v2024 = vadd.f32 %v1634, %v1946
        %v2025 = vadd.f32 %v1635, %v1951
        %v2026 = vadd.f32 %v1636, %v1956
        %v2027 = vadd.f32 %v1637, %v1961
        %v2028 = vadd.f32 %v1638, %v1966
        %v2029 = vadd.f32 %v1639, %v1971
        %v2030 = vadd.f32 %v1640, %v1976
        %v2031 = vadd.f32 %v1641, %v1981
        %v2032 = vadd.f32 %v1642, %v1986
        %v2033 = vadd.f32 %v1643, %v1991
        %v2034 = vadd.f32 %v1644, %v1996
        %v2035 = vadd.f32 %v1645, %v2001
        %v2036 = vld [vmem:[%s508 + $0x1] sm:$0xff]
        %v2037 = vld [vmem:[%s508 + $0x9] sm:$0xff]
        %v2038 = vld [vmem:[%s508 + $0x19] sm:$0xff]
        %v2039 = vld [vmem:[%s508 + $0x21] sm:$0xff]
        %v2040 = vld [vmem:[%s508 + $0x31] sm:$0xff]
        %v2041 = vld [vmem:[%s508 + $0x39] sm:$0xff]
        %v2042 = vld [vmem:[%s508 + $0x49] sm:$0xff]
        %v2043 = vld [vmem:[%s508 + $0x51] sm:$0xff]
        %v2044 = vld [vmem:[%s508 + $0x61] sm:$0xff]
        %v2045 = vld [vmem:[%s508 + $0x69] sm:$0xff]
        %v2046 = vld [vmem:[%s508 + $0x79] sm:$0xff]
        %v2047 = vld [vmem:[%s508 + $0x81] sm:$0xff]
        %v2048 = vld [vmem:[%s508 + $0x91] sm:$0xff]
        %v2049 = vld [vmem:[%s508 + $0x99] sm:$0xff]
        %v2050 = vld [vmem:[%s508 + $0xa9] sm:$0xff]
        %v2051 = vld [vmem:[%s508 + $0xb1] sm:$0xff]
        %v2052 = vld [vmem:[%s508 + $0xc1] sm:$0xff]
        %v2053 = vld [vmem:[%s508 + $0xc9] sm:$0xff]
        %v2054 = vld [vmem:[%s508 + $0xd9] sm:$0xff]
        %v2055 = vld [vmem:[%s508 + $0xe1] sm:$0xff]
        %v2056 = vld [vmem:[%s508 + $0xf1] sm:$0xff]
        %v2057 = vld [vmem:[%s508 + $0xf9] sm:$0xff]
        %v2058 = vld [vmem:[%s508 + $0x109] sm:$0xff]
        %v2059 = vld [vmem:[%s508 + $0x111] sm:$0xff]
        %v2060 = vld [vmem:[%s508 + $0x121] sm:$0xff]
        %v2061 = vld [vmem:[%s508 + $0x129] sm:$0xff]
        %v2062 = vld [vmem:[%s508 + $0x139] sm:$0xff]
        %v2063 = vld [vmem:[%s508 + $0x141] sm:$0xff]
        %v2064 = vld [vmem:[%s508 + $0x151] sm:$0xff]
        %v2065 = vld [vmem:[%s508 + $0x159] sm:$0xff]
        %v2066 = vld [vmem:[%s508 + $0x169] sm:$0xff]
        %v2067 = vld [vmem:[%s508 + $0x171] sm:$0xff]
        %s2068 = scalar_lea.vmem %s3, 128
        %v2069 = vld [vmem:[%s2068] sm:$0xff]
        %v2070 = vld [vmem:[%s2068 + $0x8] sm:$0xff]
        %v2071 = vld [vmem:[%s2068 + $0x10] sm:$0xff]
        %v2072 = vld [vmem:[%s2068 + $0x18] sm:$0xff]
        %v2074 = vsel %vm452, %v2036, 0
        %v2077 = vsel %vm452, %v2037, 0
        %v2080 = vsel %vm452, %v2038, 0
        %v2083 = vsel %vm452, %v2039, 0
        %v2086 = vsel %vm452, %v2040, 0
        %v2089 = vsel %vm452, %v2041, 0
        %v2092 = vsel %vm452, %v2042, 0
        %v2095 = vsel %vm452, %v2043, 0
        %v2098 = vsel %vm452, %v2044, 0
        %v2101 = vsel %vm452, %v2045, 0
        %v2104 = vsel %vm452, %v2046, 0
        %v2107 = vsel %vm452, %v2047, 0
        %v2110 = vsel %vm452, %v2048, 0
        %v2113 = vsel %vm452, %v2049, 0
        %v2116 = vsel %vm452, %v2050, 0
        %v2119 = vsel %vm452, %v2051, 0
        %v2122 = vsel %vm452, %v2052, 0
        %v2125 = vsel %vm452, %v2053, 0
        %v2128 = vsel %vm452, %v2054, 0
        %v2131 = vsel %vm452, %v2055, 0
        %v2134 = vsel %vm452, %v2056, 0
        %v2137 = vsel %vm452, %v2057, 0
        %v2140 = vsel %vm452, %v2058, 0
        %v2143 = vsel %vm452, %v2059, 0
        %v2146 = vsel %vm452, %v2060, 0
        %v2149 = vsel %vm452, %v2061, 0
        %v2152 = vsel %vm452, %v2062, 0
        %v2155 = vsel %vm452, %v2063, 0
        %v2158 = vsel %vm452, %v2064, 0
        %v2161 = vsel %vm452, %v2065, 0
        %v2164 = vsel %vm452, %v2066, 0
        %v2167 = vsel %vm452, %v2067, 0
        %2169 = vmatprep.subr.mxu0 0.0
        %2170 = vmatpush1.msra.mxu0 %v2069
        %2171 = vmatprep.subr.mxu0 0.0
        %2172 = vmatpush1.msra.mxu0 %v2070
        %2173 = vmatprep.subr.mxu0 0.0
        %2174 = vmatpush1.msra.mxu0 %v2071
        %2175 = vmatprep.subr.mxu0 0.0
        %2176 = vmatpush1.msra.mxu0 %v2072
        %2177 = vmatprep.subr.mxu0 0.0
        %2178 = vmatpush1.msra.mxu0 0.0
        %2179 = vmatprep.subr.mxu0 0.0
        %2180 = vmatpush1.msra.mxu0 0.0
        %2181 = vmatprep.subr.mxu0 0.0
        %2182 = vmatpush1.msra.mxu0 0.0
        %2183 = vmatprep.subr.mxu0 0.0
        %2184 = vmatpush1.msra.mxu0 0.0
        %2185 = vmatprep.subr.mxu0 0.0
        %2186 = vmatpush1.msra.mxu0 0.0
        %2187 = vmatprep.subr.mxu0 0.0
        %2188 = vmatpush1.msra.mxu0 0.0
        %2189 = vmatprep.subr.mxu0 0.0
        %2190 = vmatpush1.msra.mxu0 0.0
        %2191 = vmatprep.subr.mxu0 0.0
        %2192 = vmatpush1.msra.mxu0 0.0
        %2193 = vmatprep.subr.mxu0 0.0
        %2194 = vmatpush1.msra.mxu0 0.0
        %2195 = vmatprep.subr.mxu0 0.0
        %2196 = vmatpush1.msra.mxu0 0.0
        %2197 = vmatprep.subr.mxu0 0.0
        %2198 = vmatpush1.msra.mxu0 0.0
        %2199 = vmatprep.subr.mxu0 0.0
        %2200 = vmatpush1.msra.mxu0 0.0
        %2201 = vmatprep.subr.mxu0 0.0
        %2202 = vmatpush1.msra.mxu0 0.0
        %2203 = vmatprep.subr.mxu0 0.0
        %2204 = vmatpush1.msra.mxu0 0.0
        %2205 = vmatprep.subr.mxu0 0.0
        %2206 = vmatpush1.msra.mxu0 0.0
        %2207 = vmatprep.subr.mxu0 0.0
        %2208 = vmatpush1.msra.mxu0 0.0
        %2209 = vmatprep.subr.mxu0 0.0
        %2210 = vmatpush1.msra.mxu0 0.0
        %2211 = vmatprep.subr.mxu0 0.0
        %2212 = vmatpush1.msra.mxu0 0.0
        %2213 = vmatprep.subr.mxu0 0.0
        %2214 = vmatpush1.msra.mxu0 0.0
        %2215 = vmatprep.subr.mxu0 0.0
        %2216 = vmatpush1.msra.mxu0 0.0
        %2217 = vmatprep.subr.mxu0 0.0
        %2218 = vmatpush1.msra.mxu0 0.0
        %2219 = vmatprep.subr.mxu0 0.0
        %2220 = vmatpush1.msra.mxu0 0.0
        %2221 = vmatprep.subr.mxu0 0.0
        %2222 = vmatpush1.msra.mxu0 0.0
        %2223 = vmatprep.subr.mxu0 0.0
        %2224 = vmatpush1.msra.mxu0 0.0
        %2225 = vmatprep.subr.mxu0 0.0
        %2226 = vmatpush1.msra.mxu0 0.0
        %2227 = vmatprep.subr.mxu0 0.0
        %2228 = vmatpush1.msra.mxu0 0.0
        %2229 = vmatprep.subr.mxu0 0.0
        %2230 = vmatpush1.msra.mxu0 0.0
        %2231 = vmatprep.subr.mxu0 0.0
        %2232 = vmatpush1.msra.mxu0 0.0
        %2233 = vmatprep.mubr.f32.mxu0 0.0
        %2234 = vmatmul.mubr.f32.gmra.mrb[0].mxu0 %v2074
        %v2235 = vpop.f32.mrb[0].mxu0
        %v2236 = vadd.f32 0.0, %v2235
        %v2237 = vpop.f32.mrb[0].mxu0
        %2238 = vmatprep.mubr.f32.mxu0 0.0
        %2239 = vmatmul.mubr.f32.gmra.mrb[0].mxu0 %v2077
        %v2240 = vpop.f32.mrb[0].mxu0
        %v2241 = vadd.f32 0.0, %v2240
        %v2242 = vpop.f32.mrb[0].mxu0
        %2243 = vmatprep.mubr.f32.mxu0 0.0
        %2244 = vmatmul.mubr.f32.gmra.mrb[0].mxu0 %v2080
        %v2245 = vpop.f32.mrb[0].mxu0
        %v2246 = vadd.f32 0.0, %v2245
        %v2247 = vpop.f32.mrb[0].mxu0
        %2248 = vmatprep.mubr.f32.mxu0 0.0
        %2249 = vmatmul.mubr.f32.gmra.mrb[0].mxu0 %v2083
        %v2250 = vpop.f32.mrb[0].mxu0
        %v2251 = vadd.f32 0.0, %v2250
        %v2252 = vpop.f32.mrb[0].mxu0
        %2253 = vmatprep.mubr.f32.mxu0 0.0
        %2254 = vmatmul.mubr.f32.gmra.mrb[0].mxu0 %v2086
        %v2255 = vpop.f32.mrb[0].mxu0
        %v2256 = vadd.f32 0.0, %v2255
        %v2257 = vpop.f32.mrb[0].mxu0
        %2258 = vmatprep.mubr.f32.mxu0 0.0
        %2259 = vmatmul.mubr.f32.gmra.mrb[0].mxu0 %v2089
        %v2260 = vpop.f32.mrb[0].mxu0
        %v2261 = vadd.f32 0.0, %v2260
        %v2262 = vpop.f32.mrb[0].mxu0
        %2263 = vmatprep.mubr.f32.mxu0 0.0
        %2264 = vmatmul.mubr.f32.gmra.mrb[0].mxu0 %v2092
        %v2265 = vpop.f32.mrb[0].mxu0
        %v2266 = vadd.f32 0.0, %v2265
        %v2267 = vpop.f32.mrb[0].mxu0
        %2268 = vmatprep.mubr.f32.mxu0 0.0
        %2269 = vmatmul.mubr.f32.gmra.mrb[0].mxu0 %v2095
        %v2270 = vpop.f32.mrb[0].mxu0
        %v2271 = vadd.f32 0.0, %v2270
        %v2272 = vpop.f32.mrb[0].mxu0
        %2273 = vmatprep.mubr.f32.mxu0 0.0
        %2274 = vmatmul.mubr.f32.gmra.mrb[0].mxu0 %v2098
        %v2275 = vpop.f32.mrb[0].mxu0
        %v2276 = vadd.f32 0.0, %v2275
        %v2277 = vpop.f32.mrb[0].mxu0
        %2278 = vmatprep.mubr.f32.mxu0 0.0
        %2279 = vmatmul.mubr.f32.gmra.mrb[0].mxu0 %v2101
        %v2280 = vpop.f32.mrb[0].mxu0
        %v2281 = vadd.f32 0.0, %v2280
        %v2282 = vpop.f32.mrb[0].mxu0
        %2283 = vmatprep.mubr.f32.mxu0 0.0
        %2284 = vmatmul.mubr.f32.gmra.mrb[0].mxu0 %v2104
        %v2285 = vpop.f32.mrb[0].mxu0
        %v2286 = vadd.f32 0.0, %v2285
        %v2287 = vpop.f32.mrb[0].mxu0
        %2288 = vmatprep.mubr.f32.mxu0 0.0
        %2289 = vmatmul.mubr.f32.gmra.mrb[0].mxu0 %v2107
        %v2290 = vpop.f32.mrb[0].mxu0
        %v2291 = vadd.f32 0.0, %v2290
        %v2292 = vpop.f32.mrb[0].mxu0
        %2293 = vmatprep.mubr.f32.mxu0 0.0
        %2294 = vmatmul.mubr.f32.gmra.mrb[0].mxu0 %v2110
        %v2295 = vpop.f32.mrb[0].mxu0
        %v2296 = vadd.f32 0.0, %v2295
        %v2297 = vpop.f32.mrb[0].mxu0
        %2298 = vmatprep.mubr.f32.mxu0 0.0
        %2299 = vmatmul.mubr.f32.gmra.mrb[0].mxu0 %v2113
        %v2300 = vpop.f32.mrb[0].mxu0
        %v2301 = vadd.f32 0.0, %v2300
        %v2302 = vpop.f32.mrb[0].mxu0
        %2303 = vmatprep.mubr.f32.mxu0 0.0
        %2304 = vmatmul.mubr.f32.gmra.mrb[0].mxu0 %v2116
        %v2305 = vpop.f32.mrb[0].mxu0
        %v2306 = vadd.f32 0.0, %v2305
        %v2307 = vpop.f32.mrb[0].mxu0
        %2308 = vmatprep.mubr.f32.mxu0 0.0
        %2309 = vmatmul.mubr.f32.gmra.mrb[0].mxu0 %v2119
        %v2310 = vpop.f32.mrb[0].mxu0
        %v2311 = vadd.f32 0.0, %v2310
        %v2312 = vpop.f32.mrb[0].mxu0
        %2313 = vmatprep.mubr.f32.mxu0 0.0
        %2314 = vmatmul.mubr.f32.gmra.mrb[0].mxu0 %v2122
        %v2315 = vpop.f32.mrb[0].mxu0
        %v2316 = vadd.f32 0.0, %v2315
        %v2317 = vpop.f32.mrb[0].mxu0
        %2318 = vmatprep.mubr.f32.mxu0 0.0
        %2319 = vmatmul.mubr.f32.gmra.mrb[0].mxu0 %v2125
        %v2320 = vpop.f32.mrb[0].mxu0
        %v2321 = vadd.f32 0.0, %v2320
        %v2322 = vpop.f32.mrb[0].mxu0
        %2323 = vmatprep.mubr.f32.mxu0 0.0
        %2324 = vmatmul.mubr.f32.gmra.mrb[0].mxu0 %v2128
        %v2325 = vpop.f32.mrb[0].mxu0
        %v2326 = vadd.f32 0.0, %v2325
        %v2327 = vpop.f32.mrb[0].mxu0
        %2328 = vmatprep.mubr.f32.mxu0 0.0
        %2329 = vmatmul.mubr.f32.gmra.mrb[0].mxu0 %v2131
        %v2330 = vpop.f32.mrb[0].mxu0
        %v2331 = vadd.f32 0.0, %v2330
        %v2332 = vpop.f32.mrb[0].mxu0
        %2333 = vmatprep.mubr.f32.mxu0 0.0
        %2334 = vmatmul.mubr.f32.gmra.mrb[0].mxu0 %v2134
        %v2335 = vpop.f32.mrb[0].mxu0
        %v2336 = vadd.f32 0.0, %v2335
        %v2337 = vpop.f32.mrb[0].mxu0
        %2338 = vmatprep.mubr.f32.mxu0 0.0
        %2339 = vmatmul.mubr.f32.gmra.mrb[0].mxu0 %v2137
        %v2340 = vpop.f32.mrb[0].mxu0
        %v2341 = vadd.f32 0.0, %v2340
        %v2342 = vpop.f32.mrb[0].mxu0
        %2343 = vmatprep.mubr.f32.mxu0 0.0
        %2344 = vmatmul.mubr.f32.gmra.mrb[0].mxu0 %v2140
        %v2345 = vpop.f32.mrb[0].mxu0
        %v2346 = vadd.f32 0.0, %v2345
        %v2347 = vpop.f32.mrb[0].mxu0
        %2348 = vmatprep.mubr.f32.mxu0 0.0
        %2349 = vmatmul.mubr.f32.gmra.mrb[0].mxu0 %v2143
        %v2350 = vpop.f32.mrb[0].mxu0
        %v2351 = vadd.f32 0.0, %v2350
        %v2352 = vpop.f32.mrb[0].mxu0
        %2353 = vmatprep.mubr.f32.mxu0 0.0
        %2354 = vmatmul.mubr.f32.gmra.mrb[0].mxu0 %v2146
        %v2355 = vpop.f32.mrb[0].mxu0
        %v2356 = vadd.f32 0.0, %v2355
        %v2357 = vpop.f32.mrb[0].mxu0
        %2358 = vmatprep.mubr.f32.mxu0 0.0
        %2359 = vmatmul.mubr.f32.gmra.mrb[0].mxu0 %v2149
        %v2360 = vpop.f32.mrb[0].mxu0
        %v2361 = vadd.f32 0.0, %v2360
        %v2362 = vpop.f32.mrb[0].mxu0
        %2363 = vmatprep.mubr.f32.mxu0 0.0
        %2364 = vmatmul.mubr.f32.gmra.mrb[0].mxu0 %v2152
        %v2365 = vpop.f32.mrb[0].mxu0
        %v2366 = vadd.f32 0.0, %v2365
        %v2367 = vpop.f32.mrb[0].mxu0
        %2368 = vmatprep.mubr.f32.mxu0 0.0
        %2369 = vmatmul.mubr.f32.gmra.mrb[0].mxu0 %v2155
        %v2370 = vpop.f32.mrb[0].mxu0
        %v2371 = vadd.f32 0.0, %v2370
        %v2372 = vpop.f32.mrb[0].mxu0
        %2373 = vmatprep.mubr.f32.mxu0 0.0
        %2374 = vmatmul.mubr.f32.gmra.mrb[0].mxu0 %v2158
        %v2375 = vpop.f32.mrb[0].mxu0
        %v2376 = vadd.f32 0.0, %v2375
        %v2377 = vpop.f32.mrb[0].mxu0
        %2378 = vmatprep.mubr.f32.mxu0 0.0
        %2379 = vmatmul.mubr.f32.gmra.mrb[0].mxu0 %v2161
        %v2380 = vpop.f32.mrb[0].mxu0
        %v2381 = vadd.f32 0.0, %v2380
        %v2382 = vpop.f32.mrb[0].mxu0
        %2383 = vmatprep.mubr.f32.mxu0 0.0
        %2384 = vmatmul.mubr.f32.gmra.mrb[0].mxu0 %v2164
        %v2385 = vpop.f32.mrb[0].mxu0
        %v2386 = vadd.f32 0.0, %v2385
        %v2387 = vpop.f32.mrb[0].mxu0
        %2388 = vmatprep.mubr.f32.mxu0 0.0
        %2389 = vmatmul.mubr.f32.gmra.mrb[0].mxu0 %v2167
        %v2390 = vpop.f32.mrb[0].mxu0
        %v2391 = vadd.f32 0.0, %v2390
        %v2392 = vpop.f32.mrb[0].mxu0
        %2393 = vdwg.mxu0
        %v2394 = vadd.f32 %v2004, %v2236
        %v2395 = vadd.f32 %v2005, %v2241
        %v2396 = vadd.f32 %v2006, %v2246
        %v2397 = vadd.f32 %v2007, %v2251
        %v2398 = vadd.f32 %v2008, %v2256
        %v2399 = vadd.f32 %v2009, %v2261
        %v2400 = vadd.f32 %v2010, %v2266
        %v2401 = vadd.f32 %v2011, %v2271
        %v2402 = vadd.f32 %v2012, %v2276
        %v2403 = vadd.f32 %v2013, %v2281
        %v2404 = vadd.f32 %v2014, %v2286
        %v2405 = vadd.f32 %v2015, %v2291
        %v2406 = vadd.f32 %v2016, %v2296
        %v2407 = vadd.f32 %v2017, %v2301
        %v2408 = vadd.f32 %v2018, %v2306
        %v2409 = vadd.f32 %v2019, %v2311
        %v2410 = vadd.f32 %v2020, %v2316
        %v2411 = vadd.f32 %v2021, %v2321
        %v2412 = vadd.f32 %v2022, %v2326
        %v2413 = vadd.f32 %v2023, %v2331
        %v2414 = vadd.f32 %v2024, %v2336
        %v2415 = vadd.f32 %v2025, %v2341
        %v2416 = vadd.f32 %v2026, %v2346
        %v2417 = vadd.f32 %v2027, %v2351
        %v2418 = vadd.f32 %v2028, %v2356
        %v2419 = vadd.f32 %v2029, %v2361
        %v2420 = vadd.f32 %v2030, %v2366
        %v2421 = vadd.f32 %v2031, %v2371
        %v2422 = vadd.f32 %v2032, %v2376
        %v2423 = vadd.f32 %v2033, %v2381
        %v2424 = vadd.f32 %v2034, %v2386
        %v2425 = vadd.f32 %v2035, %v2391
        %v2426 = vld [vmem:[%s508 + $0x2] sm:$0xff]
        %v2427 = vld [vmem:[%s508 + $0xa] sm:$0xff]
        %v2428 = vld [vmem:[%s508 + $0x1a] sm:$0xff]
        %v2429 = vld [vmem:[%s508 + $0x22] sm:$0xff]
        %v2430 = vld [vmem:[%s508 + $0x32] sm:$0xff]
        %v2431 = vld [vmem:[%s508 + $0x3a] sm:$0xff]
        %v2432 = vld [vmem:[%s508 + $0x4a] sm:$0xff]
        %v2433 = vld [vmem:[%s508 + $0x52] sm:$0xff]
        %v2434 = vld [vmem:[%s508 + $0x62] sm:$0xff]
        %v2435 = vld [vmem:[%s508 + $0x6a] sm:$0xff]
        %v2436 = vld [vmem:[%s508 + $0x7a] sm:$0xff]
        %v2437 = vld [vmem:[%s508 + $0x82] sm:$0xff]
        %v2438 = vld [vmem:[%s508 + $0x92] sm:$0xff]
        %v2439 = vld [vmem:[%s508 + $0x9a] sm:$0xff]
        %v2440 = vld [vmem:[%s508 + $0xaa] sm:$0xff]
        %v2441 = vld [vmem:[%s508 + $0xb2] sm:$0xff]
        %v2442 = vld [vmem:[%s508 + $0xc2] sm:$0xff]
        %v2443 = vld [vmem:[%s508 + $0xca] sm:$0xff]
        %v2444 = vld [vmem:[%s508 + $0xda] sm:$0xff]
        %v2445 = vld [vmem:[%s508 + $0xe2] sm:$0xff]
        %v2446 = vld [vmem:[%s508 + $0xf2] sm:$0xff]
        %v2447 = vld [vmem:[%s508 + $0xfa] sm:$0xff]
        %v2448 = vld [vmem:[%s508 + $0x10a] sm:$0xff]
        %v2449 = vld [vmem:[%s508 + $0x112] sm:$0xff]
        %v2450 = vld [vmem:[%s508 + $0x122] sm:$0xff]
        %v2451 = vld [vmem:[%s508 + $0x12a] sm:$0xff]
        %v2452 = vld [vmem:[%s508 + $0x13a] sm:$0xff]
        %v2453 = vld [vmem:[%s508 + $0x142] sm:$0xff]
        %v2454 = vld [vmem:[%s508 + $0x152] sm:$0xff]
        %v2455 = vld [vmem:[%s508 + $0x15a] sm:$0xff]
        %v2456 = vld [vmem:[%s508 + $0x16a] sm:$0xff]
        %v2457 = vld [vmem:[%s508 + $0x172] sm:$0xff]
        %s2458 = scalar_lea.vmem %s3, 160
        %v2459 = vld [vmem:[%s2458] sm:$0xff]
        %v2460 = vld [vmem:[%s2458 + $0x8] sm:$0xff]
        %v2461 = vld [vmem:[%s2458 + $0x10] sm:$0xff]
        %v2462 = vld [vmem:[%s2458 + $0x18] sm:$0xff]
        %v2464 = vsel %vm452, %v2426, 0
        %v2467 = vsel %vm452, %v2427, 0
        %v2470 = vsel %vm452, %v2428, 0
        %v2473 = vsel %vm452, %v2429, 0
        %v2476 = vsel %vm452, %v2430, 0
        %v2479 = vsel %vm452, %v2431, 0
        %v2482 = vsel %vm452, %v2432, 0
        %v2485 = vsel %vm452, %v2433, 0
        %v2488 = vsel %vm452, %v2434, 0
        %v2491 = vsel %vm452, %v2435, 0
        %v2494 = vsel %vm452, %v2436, 0
        %v2497 = vsel %vm452, %v2437, 0
        %v2500 = vsel %vm452, %v2438, 0
        %v2503 = vsel %vm452, %v2439, 0
        %v2506 = vsel %vm452, %v2440, 0
        %v2509 = vsel %vm452, %v2441, 0
        %v2512 = vsel %vm452, %v2442, 0
        %v2515 = vsel %vm452, %v2443, 0
        %v2518 = vsel %vm452, %v2444, 0
        %v2521 = vsel %vm452, %v2445, 0
        %v2524 = vsel %vm452, %v2446, 0
        %v2527 = vsel %vm452, %v2447, 0
        %v2530 = vsel %vm452, %v2448, 0
        %v2533 = vsel %vm452, %v2449, 0
        %v2536 = vsel %vm452, %v2450, 0
        %v2539 = vsel %vm452, %v2451, 0
        %v2542 = vsel %vm452, %v2452, 0
        %v2545 = vsel %vm452, %v2453, 0
        %v2548 = vsel %vm452, %v2454, 0
        %v2551 = vsel %vm452, %v2455, 0
        %v2554 = vsel %vm452, %v2456, 0
        %v2557 = vsel %vm452, %v2457, 0
        %2559 = vmatprep.subr.mxu0 0.0
        %2560 = vmatpush1.msra.mxu0 %v2459
        %2561 = vmatprep.subr.mxu0 0.0
        %2562 = vmatpush1.msra.mxu0 %v2460
        %2563 = vmatprep.subr.mxu0 0.0
        %2564 = vmatpush1.msra.mxu0 %v2461
        %2565 = vmatprep.subr.mxu0 0.0
        %2566 = vmatpush1.msra.mxu0 %v2462
        %2567 = vmatprep.subr.mxu0 0.0
        %2568 = vmatpush1.msra.mxu0 0.0
        %2569 = vmatprep.subr.mxu0 0.0
        %2570 = vmatpush1.msra.mxu0 0.0
        %2571 = vmatprep.subr.mxu0 0.0
        %2572 = vmatpush1.msra.mxu0 0.0
        %2573 = vmatprep.subr.mxu0 0.0
        %2574 = vmatpush1.msra.mxu0 0.0
        %2575 = vmatprep.subr.mxu0 0.0
        %2576 = vmatpush1.msra.mxu0 0.0
        %2577 = vmatprep.subr.mxu0 0.0
        %2578 = vmatpush1.msra.mxu0 0.0
        %2579 = vmatprep.subr.mxu0 0.0
        %2580 = vmatpush1.msra.mxu0 0.0
        %2581 = vmatprep.subr.mxu0 0.0
        %2582 = vmatpush1.msra.mxu0 0.0
        %2583 = vmatprep.subr.mxu0 0.0
        %2584 = vmatpush1.msra.mxu0 0.0
        %2585 = vmatprep.subr.mxu0 0.0
        %2586 = vmatpush1.msra.mxu0 0.0
        %2587 = vmatprep.subr.mxu0 0.0
        %2588 = vmatpush1.msra.mxu0 0.0
        %2589 = vmatprep.subr.mxu0 0.0
        %2590 = vmatpush1.msra.mxu0 0.0
        %2591 = vmatprep.subr.mxu0 0.0
        %2592 = vmatpush1.msra.mxu0 0.0
        %2593 = vmatprep.subr.mxu0 0.0
        %2594 = vmatpush1.msra.mxu0 0.0
        %2595 = vmatprep.subr.mxu0 0.0
        %2596 = vmatpush1.msra.mxu0 0.0
        %2597 = vmatprep.subr.mxu0 0.0
        %2598 = vmatpush1.msra.mxu0 0.0
        %2599 = vmatprep.subr.mxu0 0.0
        %2600 = vmatpush1.msra.mxu0 0.0
        %2601 = vmatprep.subr.mxu0 0.0
        %2602 = vmatpush1.msra.mxu0 0.0
        %2603 = vmatprep.subr.mxu0 0.0
        %2604 = vmatpush1.msra.mxu0 0.0
        %2605 = vmatprep.subr.mxu0 0.0
        %2606 = vmatpush1.msra.mxu0 0.0
        %2607 = vmatprep.subr.mxu0 0.0
        %2608 = vmatpush1.msra.mxu0 0.0
        %2609 = vmatprep.subr.mxu0 0.0
        %2610 = vmatpush1.msra.mxu0 0.0
        %2611 = vmatprep.subr.mxu0 0.0
        %2612 = vmatpush1.msra.mxu0 0.0
        %2613 = vmatprep.subr.mxu0 0.0
        %2614 = vmatpush1.msra.mxu0 0.0
        %2615 = vmatprep.subr.mxu0 0.0
        %2616 = vmatpush1.msra.mxu0 0.0
        %2617 = vmatprep.subr.mxu0 0.0
        %2618 = vmatpush1.msra.mxu0 0.0
        %2619 = vmatprep.subr.mxu0 0.0
        %2620 = vmatpush1.msra.mxu0 0.0
        %2621 = vmatprep.subr.mxu0 0.0
        %2622 = vmatpush1.msra.mxu0 0.0
        %2623 = vmatprep.mubr.f32.mxu0 0.0
        %2624 = vmatmul.mubr.f32.gmra.mrb[0].mxu0 %v2464
        %v2625 = vpop.f32.mrb[0].mxu0
        %v2626 = vadd.f32 0.0, %v2625
        %v2627 = vpop.f32.mrb[0].mxu0
        %2628 = vmatprep.mubr.f32.mxu0 0.0
        %2629 = vmatmul.mubr.f32.gmra.mrb[0].mxu0 %v2467
        %v2630 = vpop.f32.mrb[0].mxu0
        %v2631 = vadd.f32 0.0, %v2630
        %v2632 = vpop.f32.mrb[0].mxu0
        %2633 = vmatprep.mubr.f32.mxu0 0.0
        %2634 = vmatmul.mubr.f32.gmra.mrb[0].mxu0 %v2470
        %v2635 = vpop.f32.mrb[0].mxu0
        %v2636 = vadd.f32 0.0, %v2635
        %v2637 = vpop.f32.mrb[0].mxu0
        %2638 = vmatprep.mubr.f32.mxu0 0.0
        %2639 = vmatmul.mubr.f32.gmra.mrb[0].mxu0 %v2473
        %v2640 = vpop.f32.mrb[0].mxu0
        %v2641 = vadd.f32 0.0, %v2640
        %v2642 = vpop.f32.mrb[0].mxu0
        %2643 = vmatprep.mubr.f32.mxu0 0.0
        %2644 = vmatmul.mubr.f32.gmra.mrb[0].mxu0 %v2476
        %v2645 = vpop.f32.mrb[0].mxu0
        %v2646 = vadd.f32 0.0, %v2645
        %v2647 = vpop.f32.mrb[0].mxu0
        %2648 = vmatprep.mubr.f32.mxu0 0.0
        %2649 = vmatmul.mubr.f32.gmra.mrb[0].mxu0 %v2479
        %v2650 = vpop.f32.mrb[0].mxu0
        %v2651 = vadd.f32 0.0, %v2650
        %v2652 = vpop.f32.mrb[0].mxu0
        %2653 = vmatprep.mubr.f32.mxu0 0.0
        %2654 = vmatmul.mubr.f32.gmra.mrb[0].mxu0 %v2482
        %v2655 = vpop.f32.mrb[0].mxu0
        %v2656 = vadd.f32 0.0, %v2655
        %v2657 = vpop.f32.mrb[0].mxu0
        %2658 = vmatprep.mubr.f32.mxu0 0.0
        %2659 = vmatmul.mubr.f32.gmra.mrb[0].mxu0 %v2485
        %v2660 = vpop.f32.mrb[0].mxu0
        %v2661 = vadd.f32 0.0, %v2660
        %v2662 = vpop.f32.mrb[0].mxu0
        %2663 = vmatprep.mubr.f32.mxu0 0.0
        %2664 = vmatmul.mubr.f32.gmra.mrb[0].mxu0 %v2488
        %v2665 = vpop.f32.mrb[0].mxu0
        %v2666 = vadd.f32 0.0, %v2665
        %v2667 = vpop.f32.mrb[0].mxu0
        %2668 = vmatprep.mubr.f32.mxu0 0.0
        %2669 = vmatmul.mubr.f32.gmra.mrb[0].mxu0 %v2491
        %v2670 = vpop.f32.mrb[0].mxu0
        %v2671 = vadd.f32 0.0, %v2670
        %v2672 = vpop.f32.mrb[0].mxu0
        %2673 = vmatprep.mubr.f32.mxu0 0.0
        %2674 = vmatmul.mubr.f32.gmra.mrb[0].mxu0 %v2494
        %v2675 = vpop.f32.mrb[0].mxu0
        %v2676 = vadd.f32 0.0, %v2675
        %v2677 = vpop.f32.mrb[0].mxu0
        %2678 = vmatprep.mubr.f32.mxu0 0.0
        %2679 = vmatmul.mubr.f32.gmra.mrb[0].mxu0 %v2497
        %v2680 = vpop.f32.mrb[0].mxu0
        %v2681 = vadd.f32 0.0, %v2680
        %v2682 = vpop.f32.mrb[0].mxu0
        %2683 = vmatprep.mubr.f32.mxu0 0.0
        %2684 = vmatmul.mubr.f32.gmra.mrb[0].mxu0 %v2500
        %v2685 = vpop.f32.mrb[0].mxu0
        %v2686 = vadd.f32 0.0, %v2685
        %v2687 = vpop.f32.mrb[0].mxu0
        %2688 = vmatprep.mubr.f32.mxu0 0.0
        %2689 = vmatmul.mubr.f32.gmra.mrb[0].mxu0 %v2503
        %v2690 = vpop.f32.mrb[0].mxu0
        %v2691 = vadd.f32 0.0, %v2690
        %v2692 = vpop.f32.mrb[0].mxu0
        %2693 = vmatprep.mubr.f32.mxu0 0.0
        %2694 = vmatmul.mubr.f32.gmra.mrb[0].mxu0 %v2506
        %v2695 = vpop.f32.mrb[0].mxu0
        %v2696 = vadd.f32 0.0, %v2695
        %v2697 = vpop.f32.mrb[0].mxu0
        %2698 = vmatprep.mubr.f32.mxu0 0.0
        %2699 = vmatmul.mubr.f32.gmra.mrb[0].mxu0 %v2509
        %v2700 = vpop.f32.mrb[0].mxu0
        %v2701 = vadd.f32 0.0, %v2700
        %v2702 = vpop.f32.mrb[0].mxu0
        %2703 = vmatprep.mubr.f32.mxu0 0.0
        %2704 = vmatmul.mubr.f32.gmra.mrb[0].mxu0 %v2512
        %v2705 = vpop.f32.mrb[0].mxu0
        %v2706 = vadd.f32 0.0, %v2705
        %v2707 = vpop.f32.mrb[0].mxu0
        %2708 = vmatprep.mubr.f32.mxu0 0.0
        %2709 = vmatmul.mubr.f32.gmra.mrb[0].mxu0 %v2515
        %v2710 = vpop.f32.mrb[0].mxu0
        %v2711 = vadd.f32 0.0, %v2710
        %v2712 = vpop.f32.mrb[0].mxu0
        %2713 = vmatprep.mubr.f32.mxu0 0.0
        %2714 = vmatmul.mubr.f32.gmra.mrb[0].mxu0 %v2518
        %v2715 = vpop.f32.mrb[0].mxu0
        %v2716 = vadd.f32 0.0, %v2715
        %v2717 = vpop.f32.mrb[0].mxu0
        %2718 = vmatprep.mubr.f32.mxu0 0.0
        %2719 = vmatmul.mubr.f32.gmra.mrb[0].mxu0 %v2521
        %v2720 = vpop.f32.mrb[0].mxu0
        %v2721 = vadd.f32 0.0, %v2720
        %v2722 = vpop.f32.mrb[0].mxu0
        %2723 = vmatprep.mubr.f32.mxu0 0.0
        %2724 = vmatmul.mubr.f32.gmra.mrb[0].mxu0 %v2524
        %v2725 = vpop.f32.mrb[0].mxu0
        %v2726 = vadd.f32 0.0, %v2725
        %v2727 = vpop.f32.mrb[0].mxu0
        %2728 = vmatprep.mubr.f32.mxu0 0.0
        %2729 = vmatmul.mubr.f32.gmra.mrb[0].mxu0 %v2527
        %v2730 = vpop.f32.mrb[0].mxu0
        %v2731 = vadd.f32 0.0, %v2730
        %v2732 = vpop.f32.mrb[0].mxu0
        %2733 = vmatprep.mubr.f32.mxu0 0.0
        %2734 = vmatmul.mubr.f32.gmra.mrb[0].mxu0 %v2530
        %v2735 = vpop.f32.mrb[0].mxu0
        %v2736 = vadd.f32 0.0, %v2735
        %v2737 = vpop.f32.mrb[0].mxu0
        %2738 = vmatprep.mubr.f32.mxu0 0.0
        %2739 = vmatmul.mubr.f32.gmra.mrb[0].mxu0 %v2533
        %v2740 = vpop.f32.mrb[0].mxu0
        %v2741 = vadd.f32 0.0, %v2740
        %v2742 = vpop.f32.mrb[0].mxu0
        %2743 = vmatprep.mubr.f32.mxu0 0.0
        %2744 = vmatmul.mubr.f32.gmra.mrb[0].mxu0 %v2536
        %v2745 = vpop.f32.mrb[0].mxu0
        %v2746 = vadd.f32 0.0, %v2745
        %v2747 = vpop.f32.mrb[0].mxu0
        %2748 = vmatprep.mubr.f32.mxu0 0.0
        %2749 = vmatmul.mubr.f32.gmra.mrb[0].mxu0 %v2539
        %v2750 = vpop.f32.mrb[0].mxu0
        %v2751 = vadd.f32 0.0, %v2750
        %v2752 = vpop.f32.mrb[0].mxu0
        %2753 = vmatprep.mubr.f32.mxu0 0.0
        %2754 = vmatmul.mubr.f32.gmra.mrb[0].mxu0 %v2542
        %v2755 = vpop.f32.mrb[0].mxu0
        %v2756 = vadd.f32 0.0, %v2755
        %v2757 = vpop.f32.mrb[0].mxu0
        %2758 = vmatprep.mubr.f32.mxu0 0.0
        %2759 = vmatmul.mubr.f32.gmra.mrb[0].mxu0 %v2545
        %v2760 = vpop.f32.mrb[0].mxu0
        %v2761 = vadd.f32 0.0, %v2760
        %v2762 = vpop.f32.mrb[0].mxu0
        %2763 = vmatprep.mubr.f32.mxu0 0.0
        %2764 = vmatmul.mubr.f32.gmra.mrb[0].mxu0 %v2548
        %v2765 = vpop.f32.mrb[0].mxu0
        %v2766 = vadd.f32 0.0, %v2765
        %v2767 = vpop.f32.mrb[0].mxu0
        %2768 = vmatprep.mubr.f32.mxu0 0.0
        %2769 = vmatmul.mubr.f32.gmra.mrb[0].mxu0 %v2551
        %v2770 = vpop.f32.mrb[0].mxu0
        %v2771 = vadd.f32 0.0, %v2770
        %v2772 = vpop.f32.mrb[0].mxu0
        %2773 = vmatprep.mubr.f32.mxu0 0.0
        %2774 = vmatmul.mubr.f32.gmra.mrb[0].mxu0 %v2554
        %v2775 = vpop.f32.mrb[0].mxu0
        %v2776 = vadd.f32 0.0, %v2775
        %v2777 = vpop.f32.mrb[0].mxu0
        %2778 = vmatprep.mubr.f32.mxu0 0.0
        %2779 = vmatmul.mubr.f32.gmra.mrb[0].mxu0 %v2557
        %v2780 = vpop.f32.mrb[0].mxu0
        %v2781 = vadd.f32 0.0, %v2780
        %v2782 = vpop.f32.mrb[0].mxu0
        %2783 = vdwg.mxu0
        %v2784 = vadd.f32 %v2394, %v2626
        %v2785 = vadd.f32 %v2395, %v2631
        %v2786 = vadd.f32 %v2396, %v2636
        %v2787 = vadd.f32 %v2397, %v2641
        %v2788 = vadd.f32 %v2398, %v2646
        %v2789 = vadd.f32 %v2399, %v2651
        %v2790 = vadd.f32 %v2400, %v2656
        %v2791 = vadd.f32 %v2401, %v2661
        %v2792 = vadd.f32 %v2402, %v2666
        %v2793 = vadd.f32 %v2403, %v2671
        %v2794 = vadd.f32 %v2404, %v2676
        %v2795 = vadd.f32 %v2405, %v2681
        %v2796 = vadd.f32 %v2406, %v2686
        %v2797 = vadd.f32 %v2407, %v2691
        %v2798 = vadd.f32 %v2408, %v2696
        %v2799 = vadd.f32 %v2409, %v2701
        %v2800 = vadd.f32 %v2410, %v2706
        %v2801 = vadd.f32 %v2411, %v2711
        %v2802 = vadd.f32 %v2412, %v2716
        %v2803 = vadd.f32 %v2413, %v2721
        %v2804 = vadd.f32 %v2414, %v2726
        %v2805 = vadd.f32 %v2415, %v2731
        %v2806 = vadd.f32 %v2416, %v2736
        %v2807 = vadd.f32 %v2417, %v2741
        %v2808 = vadd.f32 %v2418, %v2746
        %v2809 = vadd.f32 %v2419, %v2751
        %v2810 = vadd.f32 %v2420, %v2756
        %v2811 = vadd.f32 %v2421, %v2761
        %v2812 = vadd.f32 %v2422, %v2766
        %v2813 = vadd.f32 %v2423, %v2771
        %v2814 = vadd.f32 %v2424, %v2776
        %v2815 = vadd.f32 %v2425, %v2781
        %s2816 = scalar_lea.vmem [#allocation2], 48
        %v2817 = vld [vmem:[%s2816] sm:$0xff]
        %v2818 = vld [vmem:[%s2816 + $0x8] sm:$0xff]
        %v2819 = vld [vmem:[%s2816 + $0x18] sm:$0xff]
        %v2820 = vld [vmem:[%s2816 + $0x20] sm:$0xff]
        %v2821 = vld [vmem:[%s2816 + $0x30] sm:$0xff]
        %v2822 = vld [vmem:[%s2816 + $0x38] sm:$0xff]
        %v2823 = vld [vmem:[%s2816 + $0x48] sm:$0xff]
        %v2824 = vld [vmem:[%s2816 + $0x50] sm:$0xff]
        %v2825 = vld [vmem:[%s2816 + $0x60] sm:$0xff]
        %v2826 = vld [vmem:[%s2816 + $0x68] sm:$0xff]
        %v2827 = vld [vmem:[%s2816 + $0x78] sm:$0xff]
        %v2828 = vld [vmem:[%s2816 + $0x80] sm:$0xff]
        %v2829 = vld [vmem:[%s2816 + $0x90] sm:$0xff]
        %v2830 = vld [vmem:[%s2816 + $0x98] sm:$0xff]
        %v2831 = vld [vmem:[%s2816 + $0xa8] sm:$0xff]
        %v2832 = vld [vmem:[%s2816 + $0xb0] sm:$0xff]
        %v2833 = vld [vmem:[%s2816 + $0xc0] sm:$0xff]
        %v2834 = vld [vmem:[%s2816 + $0xc8] sm:$0xff]
        %v2835 = vld [vmem:[%s2816 + $0xd8] sm:$0xff]
        %v2836 = vld [vmem:[%s2816 + $0xe0] sm:$0xff]
        %v2837 = vld [vmem:[%s2816 + $0xf0] sm:$0xff]
        %v2838 = vld [vmem:[%s2816 + $0xf8] sm:$0xff]
        %v2839 = vld [vmem:[%s2816 + $0x108] sm:$0xff]
        %v2840 = vld [vmem:[%s2816 + $0x110] sm:$0xff]
        %v2841 = vld [vmem:[%s2816 + $0x120] sm:$0xff]
        %v2842 = vld [vmem:[%s2816 + $0x128] sm:$0xff]
        %v2843 = vld [vmem:[%s2816 + $0x138] sm:$0xff]
        %v2844 = vld [vmem:[%s2816 + $0x140] sm:$0xff]
        %v2845 = vld [vmem:[%s2816 + $0x150] sm:$0xff]
        %v2846 = vld [vmem:[%s2816 + $0x158] sm:$0xff]
        %v2847 = vld [vmem:[%s2816 + $0x168] sm:$0xff]
        %v2848 = vld [vmem:[%s2816 + $0x170] sm:$0xff]
        %s2849 = scalar_lea.vmem %s3, 192
        %v2850 = vld [vmem:[%s2849] sm:$0xff]
        %v2851 = vld [vmem:[%s2849 + $0x8] sm:$0xff]
        %v2852 = vld [vmem:[%s2849 + $0x10] sm:$0xff]
        %v2853 = vld [vmem:[%s2849 + $0x18] sm:$0xff]
        %v2855 = vsel %vm452, %v2817, 0
        %v2858 = vsel %vm452, %v2818, 0
        %v2861 = vsel %vm452, %v2819, 0
        %v2864 = vsel %vm452, %v2820, 0
        %v2867 = vsel %vm452, %v2821, 0
        %v2870 = vsel %vm452, %v2822, 0
        %v2873 = vsel %vm452, %v2823, 0
        %v2876 = vsel %vm452, %v2824, 0
        %v2879 = vsel %vm452, %v2825, 0
        %v2882 = vsel %vm452, %v2826, 0
        %v2885 = vsel %vm452, %v2827, 0
        %v2888 = vsel %vm452, %v2828, 0
        %v2891 = vsel %vm452, %v2829, 0
        %v2894 = vsel %vm452, %v2830, 0
        %v2897 = vsel %vm452, %v2831, 0
        %v2900 = vsel %vm452, %v2832, 0
        %v2903 = vsel %vm452, %v2833, 0
        %v2906 = vsel %vm452, %v2834, 0
        %v2909 = vsel %vm452, %v2835, 0
        %v2912 = vsel %vm452, %v2836, 0
        %v2915 = vsel %vm452, %v2837, 0
        %v2918 = vsel %vm452, %v2838, 0
        %v2921 = vsel %vm452, %v2839, 0
        %v2924 = vsel %vm452, %v2840, 0
        %v2927 = vsel %vm452, %v2841, 0
        %v2930 = vsel %vm452, %v2842, 0
        %v2933 = vsel %vm452, %v2843, 0
        %v2936 = vsel %vm452, %v2844, 0
        %v2939 = vsel %vm452, %v2845, 0
        %v2942 = vsel %vm452, %v2846, 0
        %v2945 = vsel %vm452, %v2847, 0
        %v2948 = vsel %vm452, %v2848, 0
        %2950 = vmatprep.subr.mxu0 0.0
        %2951 = vmatpush1.msra.mxu0 %v2850
        %2952 = vmatprep.subr.mxu0 0.0
        %2953 = vmatpush1.msra.mxu0 %v2851
        %2954 = vmatprep.subr.mxu0 0.0
        %2955 = vmatpush1.msra.mxu0 %v2852
        %2956 = vmatprep.subr.mxu0 0.0
        %2957 = vmatpush1.msra.mxu0 %v2853
        %2958 = vmatprep.subr.mxu0 0.0
        %2959 = vmatpush1.msra.mxu0 0.0
        %2960 = vmatprep.subr.mxu0 0.0
        %2961 = vmatpush1.msra.mxu0 0.0
        %2962 = vmatprep.subr.mxu0 0.0
        %2963 = vmatpush1.msra.mxu0 0.0
        %2964 = vmatprep.subr.mxu0 0.0
        %2965 = vmatpush1.msra.mxu0 0.0
        %2966 = vmatprep.subr.mxu0 0.0
        %2967 = vmatpush1.msra.mxu0 0.0
        %2968 = vmatprep.subr.mxu0 0.0
        %2969 = vmatpush1.msra.mxu0 0.0
        %2970 = vmatprep.subr.mxu0 0.0
        %2971 = vmatpush1.msra.mxu0 0.0
        %2972 = vmatprep.subr.mxu0 0.0
        %2973 = vmatpush1.msra.mxu0 0.0
        %2974 = vmatprep.subr.mxu0 0.0
        %2975 = vmatpush1.msra.mxu0 0.0
        %2976 = vmatprep.subr.mxu0 0.0
        %2977 = vmatpush1.msra.mxu0 0.0
        %2978 = vmatprep.subr.mxu0 0.0
        %2979 = vmatpush1.msra.mxu0 0.0
        %2980 = vmatprep.subr.mxu0 0.0
        %2981 = vmatpush1.msra.mxu0 0.0
        %2982 = vmatprep.subr.mxu0 0.0
        %2983 = vmatpush1.msra.mxu0 0.0
        %2984 = vmatprep.subr.mxu0 0.0
        %2985 = vmatpush1.msra.mxu0 0.0
        %2986 = vmatprep.subr.mxu0 0.0
        %2987 = vmatpush1.msra.mxu0 0.0
        %2988 = vmatprep.subr.mxu0 0.0
        %2989 = vmatpush1.msra.mxu0 0.0
        %2990 = vmatprep.subr.mxu0 0.0
        %2991 = vmatpush1.msra.mxu0 0.0
        %2992 = vmatprep.subr.mxu0 0.0
        %2993 = vmatpush1.msra.mxu0 0.0
        %2994 = vmatprep.subr.mxu0 0.0
        %2995 = vmatpush1.msra.mxu0 0.0
        %2996 = vmatprep.subr.mxu0 0.0
        %2997 = vmatpush1.msra.mxu0 0.0
        %2998 = vmatprep.subr.mxu0 0.0
        %2999 = vmatpush1.msra.mxu0 0.0
        %3000 = vmatprep.subr.mxu0 0.0
        %3001 = vmatpush1.msra.mxu0 0.0
        %3002 = vmatprep.subr.mxu0 0.0
        %3003 = vmatpush1.msra.mxu0 0.0
        %3004 = vmatprep.subr.mxu0 0.0
        %3005 = vmatpush1.msra.mxu0 0.0
        %3006 = vmatprep.subr.mxu0 0.0
        %3007 = vmatpush1.msra.mxu0 0.0
        %3008 = vmatprep.subr.mxu0 0.0
        %3009 = vmatpush1.msra.mxu0 0.0
        %3010 = vmatprep.subr.mxu0 0.0
        %3011 = vmatpush1.msra.mxu0 0.0
        %3012 = vmatprep.subr.mxu0 0.0
        %3013 = vmatpush1.msra.mxu0 0.0
        %3014 = vmatprep.mubr.f32.mxu0 0.0
        %3015 = vmatmul.mubr.f32.gmra.mrb[0].mxu0 %v2855
        %v3016 = vpop.f32.mrb[0].mxu0
        %v3017 = vadd.f32 0.0, %v3016
        %v3018 = vpop.f32.mrb[0].mxu0
        %3019 = vmatprep.mubr.f32.mxu0 0.0
        %3020 = vmatmul.mubr.f32.gmra.mrb[0].mxu0 %v2858
        %v3021 = vpop.f32.mrb[0].mxu0
        %v3022 = vadd.f32 0.0, %v3021
        %v3023 = vpop.f32.mrb[0].mxu0
        %3024 = vmatprep.mubr.f32.mxu0 0.0
        %3025 = vmatmul.mubr.f32.gmra.mrb[0].mxu0 %v2861
        %v3026 = vpop.f32.mrb[0].mxu0
        %v3027 = vadd.f32 0.0, %v3026
        %v3028 = vpop.f32.mrb[0].mxu0
        %3029 = vmatprep.mubr.f32.mxu0 0.0
        %3030 = vmatmul.mubr.f32.gmra.mrb[0].mxu0 %v2864
        %v3031 = vpop.f32.mrb[0].mxu0
        %v3032 = vadd.f32 0.0, %v3031
        %v3033 = vpop.f32.mrb[0].mxu0
        %3034 = vmatprep.mubr.f32.mxu0 0.0
        %3035 = vmatmul.mubr.f32.gmra.mrb[0].mxu0 %v2867
        %v3036 = vpop.f32.mrb[0].mxu0
        %v3037 = vadd.f32 0.0, %v3036
        %v3038 = vpop.f32.mrb[0].mxu0
        %3039 = vmatprep.mubr.f32.mxu0 0.0
        %3040 = vmatmul.mubr.f32.gmra.mrb[0].mxu0 %v2870
        %v3041 = vpop.f32.mrb[0].mxu0
        %v3042 = vadd.f32 0.0, %v3041
        %v3043 = vpop.f32.mrb[0].mxu0
        %3044 = vmatprep.mubr.f32.mxu0 0.0
        %3045 = vmatmul.mubr.f32.gmra.mrb[0].mxu0 %v2873
        %v3046 = vpop.f32.mrb[0].mxu0
        %v3047 = vadd.f32 0.0, %v3046
        %v3048 = vpop.f32.mrb[0].mxu0
        %3049 = vmatprep.mubr.f32.mxu0 0.0
        %3050 = vmatmul.mubr.f32.gmra.mrb[0].mxu0 %v2876
        %v3051 = vpop.f32.mrb[0].mxu0
        %v3052 = vadd.f32 0.0, %v3051
        %v3053 = vpop.f32.mrb[0].mxu0
        %3054 = vmatprep.mubr.f32.mxu0 0.0
        %3055 = vmatmul.mubr.f32.gmra.mrb[0].mxu0 %v2879
        %v3056 = vpop.f32.mrb[0].mxu0
        %v3057 = vadd.f32 0.0, %v3056
        %v3058 = vpop.f32.mrb[0].mxu0
        %3059 = vmatprep.mubr.f32.mxu0 0.0
        %3060 = vmatmul.mubr.f32.gmra.mrb[0].mxu0 %v2882
        %v3061 = vpop.f32.mrb[0].mxu0
        %v3062 = vadd.f32 0.0, %v3061
        %v3063 = vpop.f32.mrb[0].mxu0
        %3064 = vmatprep.mubr.f32.mxu0 0.0
        %3065 = vmatmul.mubr.f32.gmra.mrb[0].mxu0 %v2885
        %v3066 = vpop.f32.mrb[0].mxu0
        %v3067 = vadd.f32 0.0, %v3066
        %v3068 = vpop.f32.mrb[0].mxu0
        %3069 = vmatprep.mubr.f32.mxu0 0.0
        %3070 = vmatmul.mubr.f32.gmra.mrb[0].mxu0 %v2888
        %v3071 = vpop.f32.mrb[0].mxu0
        %v3072 = vadd.f32 0.0, %v3071
        %v3073 = vpop.f32.mrb[0].mxu0
        %3074 = vmatprep.mubr.f32.mxu0 0.0
        %3075 = vmatmul.mubr.f32.gmra.mrb[0].mxu0 %v2891
        %v3076 = vpop.f32.mrb[0].mxu0
        %v3077 = vadd.f32 0.0, %v3076
        %v3078 = vpop.f32.mrb[0].mxu0
        %3079 = vmatprep.mubr.f32.mxu0 0.0
        %3080 = vmatmul.mubr.f32.gmra.mrb[0].mxu0 %v2894
        %v3081 = vpop.f32.mrb[0].mxu0
        %v3082 = vadd.f32 0.0, %v3081
        %v3083 = vpop.f32.mrb[0].mxu0
        %3084 = vmatprep.mubr.f32.mxu0 0.0
        %3085 = vmatmul.mubr.f32.gmra.mrb[0].mxu0 %v2897
        %v3086 = vpop.f32.mrb[0].mxu0
        %v3087 = vadd.f32 0.0, %v3086
        %v3088 = vpop.f32.mrb[0].mxu0
        %3089 = vmatprep.mubr.f32.mxu0 0.0
        %3090 = vmatmul.mubr.f32.gmra.mrb[0].mxu0 %v2900
        %v3091 = vpop.f32.mrb[0].mxu0
        %v3092 = vadd.f32 0.0, %v3091
        %v3093 = vpop.f32.mrb[0].mxu0
        %3094 = vmatprep.mubr.f32.mxu0 0.0
        %3095 = vmatmul.mubr.f32.gmra.mrb[0].mxu0 %v2903
        %v3096 = vpop.f32.mrb[0].mxu0
        %v3097 = vadd.f32 0.0, %v3096
        %v3098 = vpop.f32.mrb[0].mxu0
        %3099 = vmatprep.mubr.f32.mxu0 0.0
        %3100 = vmatmul.mubr.f32.gmra.mrb[0].mxu0 %v2906
        %v3101 = vpop.f32.mrb[0].mxu0
        %v3102 = vadd.f32 0.0, %v3101
        %v3103 = vpop.f32.mrb[0].mxu0
        %3104 = vmatprep.mubr.f32.mxu0 0.0
        %3105 = vmatmul.mubr.f32.gmra.mrb[0].mxu0 %v2909
        %v3106 = vpop.f32.mrb[0].mxu0
        %v3107 = vadd.f32 0.0, %v3106
        %v3108 = vpop.f32.mrb[0].mxu0
        %3109 = vmatprep.mubr.f32.mxu0 0.0
        %3110 = vmatmul.mubr.f32.gmra.mrb[0].mxu0 %v2912
        %v3111 = vpop.f32.mrb[0].mxu0
        %v3112 = vadd.f32 0.0, %v3111
        %v3113 = vpop.f32.mrb[0].mxu0
        %3114 = vmatprep.mubr.f32.mxu0 0.0
        %3115 = vmatmul.mubr.f32.gmra.mrb[0].mxu0 %v2915
        %v3116 = vpop.f32.mrb[0].mxu0
        %v3117 = vadd.f32 0.0, %v3116
        %v3118 = vpop.f32.mrb[0].mxu0
        %3119 = vmatprep.mubr.f32.mxu0 0.0
        %3120 = vmatmul.mubr.f32.gmra.mrb[0].mxu0 %v2918
        %v3121 = vpop.f32.mrb[0].mxu0
        %v3122 = vadd.f32 0.0, %v3121
        %v3123 = vpop.f32.mrb[0].mxu0
        %3124 = vmatprep.mubr.f32.mxu0 0.0
        %3125 = vmatmul.mubr.f32.gmra.mrb[0].mxu0 %v2921
        %v3126 = vpop.f32.mrb[0].mxu0
        %v3127 = vadd.f32 0.0, %v3126
        %v3128 = vpop.f32.mrb[0].mxu0
        %3129 = vmatprep.mubr.f32.mxu0 0.0
        %3130 = vmatmul.mubr.f32.gmra.mrb[0].mxu0 %v2924
        %v3131 = vpop.f32.mrb[0].mxu0
        %v3132 = vadd.f32 0.0, %v3131
        %v3133 = vpop.f32.mrb[0].mxu0
        %3134 = vmatprep.mubr.f32.mxu0 0.0
        %3135 = vmatmul.mubr.f32.gmra.mrb[0].mxu0 %v2927
        %v3136 = vpop.f32.mrb[0].mxu0
        %v3137 = vadd.f32 0.0, %v3136
        %v3138 = vpop.f32.mrb[0].mxu0
        %3139 = vmatprep.mubr.f32.mxu0 0.0
        %3140 = vmatmul.mubr.f32.gmra.mrb[0].mxu0 %v2930
        %v3141 = vpop.f32.mrb[0].mxu0
        %v3142 = vadd.f32 0.0, %v3141
        %v3143 = vpop.f32.mrb[0].mxu0
        %3144 = vmatprep.mubr.f32.mxu0 0.0
        %3145 = vmatmul.mubr.f32.gmra.mrb[0].mxu0 %v2933
        %v3146 = vpop.f32.mrb[0].mxu0
        %v3147 = vadd.f32 0.0, %v3146
        %v3148 = vpop.f32.mrb[0].mxu0
        %3149 = vmatprep.mubr.f32.mxu0 0.0
        %3150 = vmatmul.mubr.f32.gmra.mrb[0].mxu0 %v2936
        %v3151 = vpop.f32.mrb[0].mxu0
        %v3152 = vadd.f32 0.0, %v3151
        %v3153 = vpop.f32.mrb[0].mxu0
        %3154 = vmatprep.mubr.f32.mxu0 0.0
        %3155 = vmatmul.mubr.f32.gmra.mrb[0].mxu0 %v2939
        %v3156 = vpop.f32.mrb[0].mxu0
        %v3157 = vadd.f32 0.0, %v3156
        %v3158 = vpop.f32.mrb[0].mxu0
        %3159 = vmatprep.mubr.f32.mxu0 0.0
        %3160 = vmatmul.mubr.f32.gmra.mrb[0].mxu0 %v2942
        %v3161 = vpop.f32.mrb[0].mxu0
        %v3162 = vadd.f32 0.0, %v3161
        %v3163 = vpop.f32.mrb[0].mxu0
        %3164 = vmatprep.mubr.f32.mxu0 0.0
        %3165 = vmatmul.mubr.f32.gmra.mrb[0].mxu0 %v2945
        %v3166 = vpop.f32.mrb[0].mxu0
        %v3167 = vadd.f32 0.0, %v3166
        %v3168 = vpop.f32.mrb[0].mxu0
        %3169 = vmatprep.mubr.f32.mxu0 0.0
        %3170 = vmatmul.mubr.f32.gmra.mrb[0].mxu0 %v2948
        %v3171 = vpop.f32.mrb[0].mxu0
        %v3172 = vadd.f32 0.0, %v3171
        %v3173 = vpop.f32.mrb[0].mxu0
        %3174 = vdwg.mxu0
        %v3175 = vadd.f32 %v2784, %v3017
        %v3176 = vadd.f32 %v2785, %v3022
        %v3177 = vadd.f32 %v2786, %v3027
        %v3178 = vadd.f32 %v2787, %v3032
        %v3179 = vadd.f32 %v2788, %v3037
        %v3180 = vadd.f32 %v2789, %v3042
        %v3181 = vadd.f32 %v2790, %v3047
        %v3182 = vadd.f32 %v2791, %v3052
        %v3183 = vadd.f32 %v2792, %v3057
        %v3184 = vadd.f32 %v2793, %v3062
        %v3185 = vadd.f32 %v2794, %v3067
        %v3186 = vadd.f32 %v2795, %v3072
        %v3187 = vadd.f32 %v2796, %v3077
        %v3188 = vadd.f32 %v2797, %v3082
        %v3189 = vadd.f32 %v2798, %v3087
        %v3190 = vadd.f32 %v2799, %v3092
        %v3191 = vadd.f32 %v2800, %v3097
        %v3192 = vadd.f32 %v2801, %v3102
        %v3193 = vadd.f32 %v2802, %v3107
        %v3194 = vadd.f32 %v2803, %v3112
        %v3195 = vadd.f32 %v2804, %v3117
        %v3196 = vadd.f32 %v2805, %v3122
        %v3197 = vadd.f32 %v2806, %v3127
        %v3198 = vadd.f32 %v2807, %v3132
        %v3199 = vadd.f32 %v2808, %v3137
        %v3200 = vadd.f32 %v2809, %v3142
        %v3201 = vadd.f32 %v2810, %v3147
        %v3202 = vadd.f32 %v2811, %v3152
        %v3203 = vadd.f32 %v2812, %v3157
        %v3204 = vadd.f32 %v2813, %v3162
        %v3205 = vadd.f32 %v2814, %v3167
        %v3206 = vadd.f32 %v2815, %v3172
        %v3207 = vld [vmem:[%s2816 + $0x1] sm:$0xff]
        %v3208 = vld [vmem:[%s2816 + $0x9] sm:$0xff]
        %v3209 = vld [vmem:[%s2816 + $0x19] sm:$0xff]
        %v3210 = vld [vmem:[%s2816 + $0x21] sm:$0xff]
        %v3211 = vld [vmem:[%s2816 + $0x31] sm:$0xff]
        %v3212 = vld [vmem:[%s2816 + $0x39] sm:$0xff]
        %v3213 = vld [vmem:[%s2816 + $0x49] sm:$0xff]
        %v3214 = vld [vmem:[%s2816 + $0x51] sm:$0xff]
        %v3215 = vld [vmem:[%s2816 + $0x61] sm:$0xff]
        %v3216 = vld [vmem:[%s2816 + $0x69] sm:$0xff]
        %v3217 = vld [vmem:[%s2816 + $0x79] sm:$0xff]
        %v3218 = vld [vmem:[%s2816 + $0x81] sm:$0xff]
        %v3219 = vld [vmem:[%s2816 + $0x91] sm:$0xff]
        %v3220 = vld [vmem:[%s2816 + $0x99] sm:$0xff]
        %v3221 = vld [vmem:[%s2816 + $0xa9] sm:$0xff]
        %v3222 = vld [vmem:[%s2816 + $0xb1] sm:$0xff]
        %v3223 = vld [vmem:[%s2816 + $0xc1] sm:$0xff]
        %v3224 = vld [vmem:[%s2816 + $0xc9] sm:$0xff]
        %v3225 = vld [vmem:[%s2816 + $0xd9] sm:$0xff]
        %v3226 = vld [vmem:[%s2816 + $0xe1] sm:$0xff]
        %v3227 = vld [vmem:[%s2816 + $0xf1] sm:$0xff]
        %v3228 = vld [vmem:[%s2816 + $0xf9] sm:$0xff]
        %v3229 = vld [vmem:[%s2816 + $0x109] sm:$0xff]
        %v3230 = vld [vmem:[%s2816 + $0x111] sm:$0xff]
        %v3231 = vld [vmem:[%s2816 + $0x121] sm:$0xff]
        %v3232 = vld [vmem:[%s2816 + $0x129] sm:$0xff]
        %v3233 = vld [vmem:[%s2816 + $0x139] sm:$0xff]
        %v3234 = vld [vmem:[%s2816 + $0x141] sm:$0xff]
        %v3235 = vld [vmem:[%s2816 + $0x151] sm:$0xff]
        %v3236 = vld [vmem:[%s2816 + $0x159] sm:$0xff]
        %v3237 = vld [vmem:[%s2816 + $0x169] sm:$0xff]
        %v3238 = vld [vmem:[%s2816 + $0x171] sm:$0xff]
        %s3239 = scalar_lea.vmem %s3, 224
        %v3240 = vld [vmem:[%s3239] sm:$0xff]
        %v3241 = vld [vmem:[%s3239 + $0x8] sm:$0xff]
        %v3242 = vld [vmem:[%s3239 + $0x10] sm:$0xff]
        %v3243 = vld [vmem:[%s3239 + $0x18] sm:$0xff]
        %v3245 = vsel %vm452, %v3207, 0
        %v3248 = vsel %vm452, %v3208, 0
        %v3251 = vsel %vm452, %v3209, 0
        %v3254 = vsel %vm452, %v3210, 0
        %v3257 = vsel %vm452, %v3211, 0
        %v3260 = vsel %vm452, %v3212, 0
        %v3263 = vsel %vm452, %v3213, 0
        %v3266 = vsel %vm452, %v3214, 0
        %v3269 = vsel %vm452, %v3215, 0
        %v3272 = vsel %vm452, %v3216, 0
        %v3275 = vsel %vm452, %v3217, 0
        %v3278 = vsel %vm452, %v3218, 0
        %v3281 = vsel %vm452, %v3219, 0
        %v3284 = vsel %vm452, %v3220, 0
        %v3287 = vsel %vm452, %v3221, 0
        %v3290 = vsel %vm452, %v3222, 0
        %v3293 = vsel %vm452, %v3223, 0
        %v3296 = vsel %vm452, %v3224, 0
        %v3299 = vsel %vm452, %v3225, 0
        %v3302 = vsel %vm452, %v3226, 0
        %v3305 = vsel %vm452, %v3227, 0
        %v3308 = vsel %vm452, %v3228, 0
        %v3311 = vsel %vm452, %v3229, 0
        %v3314 = vsel %vm452, %v3230, 0
        %v3317 = vsel %vm452, %v3231, 0
        %v3320 = vsel %vm452, %v3232, 0
        %v3323 = vsel %vm452, %v3233, 0
        %v3326 = vsel %vm452, %v3234, 0
        %v3329 = vsel %vm452, %v3235, 0
        %v3332 = vsel %vm452, %v3236, 0
        %v3335 = vsel %vm452, %v3237, 0
        %v3338 = vsel %vm452, %v3238, 0
        %3340 = vmatprep.subr.mxu0 0.0
        %3341 = vmatpush1.msra.mxu0 %v3240
        %3342 = vmatprep.subr.mxu0 0.0
        %3343 = vmatpush1.msra.mxu0 %v3241
        %3344 = vmatprep.subr.mxu0 0.0
        %3345 = vmatpush1.msra.mxu0 %v3242
        %3346 = vmatprep.subr.mxu0 0.0
        %3347 = vmatpush1.msra.mxu0 %v3243
        %3348 = vmatprep.subr.mxu0 0.0
        %3349 = vmatpush1.msra.mxu0 0.0
        %3350 = vmatprep.subr.mxu0 0.0
        %3351 = vmatpush1.msra.mxu0 0.0
        %3352 = vmatprep.subr.mxu0 0.0
        %3353 = vmatpush1.msra.mxu0 0.0
        %3354 = vmatprep.subr.mxu0 0.0
        %3355 = vmatpush1.msra.mxu0 0.0
        %3356 = vmatprep.subr.mxu0 0.0
        %3357 = vmatpush1.msra.mxu0 0.0
        %3358 = vmatprep.subr.mxu0 0.0
        %3359 = vmatpush1.msra.mxu0 0.0
        %3360 = vmatprep.subr.mxu0 0.0
        %3361 = vmatpush1.msra.mxu0 0.0
        %3362 = vmatprep.subr.mxu0 0.0
        %3363 = vmatpush1.msra.mxu0 0.0
        %3364 = vmatprep.subr.mxu0 0.0
        %3365 = vmatpush1.msra.mxu0 0.0
        %3366 = vmatprep.subr.mxu0 0.0
        %3367 = vmatpush1.msra.mxu0 0.0
        %3368 = vmatprep.subr.mxu0 0.0
        %3369 = vmatpush1.msra.mxu0 0.0
        %3370 = vmatprep.subr.mxu0 0.0
        %3371 = vmatpush1.msra.mxu0 0.0
        %3372 = vmatprep.subr.mxu0 0.0
        %3373 = vmatpush1.msra.mxu0 0.0
        %3374 = vmatprep.subr.mxu0 0.0
        %3375 = vmatpush1.msra.mxu0 0.0
        %3376 = vmatprep.subr.mxu0 0.0
        %3377 = vmatpush1.msra.mxu0 0.0
        %3378 = vmatprep.subr.mxu0 0.0
        %3379 = vmatpush1.msra.mxu0 0.0
        %3380 = vmatprep.subr.mxu0 0.0
        %3381 = vmatpush1.msra.mxu0 0.0
        %3382 = vmatprep.subr.mxu0 0.0
        %3383 = vmatpush1.msra.mxu0 0.0
        %3384 = vmatprep.subr.mxu0 0.0
        %3385 = vmatpush1.msra.mxu0 0.0
        %3386 = vmatprep.subr.mxu0 0.0
        %3387 = vmatpush1.msra.mxu0 0.0
        %3388 = vmatprep.subr.mxu0 0.0
        %3389 = vmatpush1.msra.mxu0 0.0
        %3390 = vmatprep.subr.mxu0 0.0
        %3391 = vmatpush1.msra.mxu0 0.0
        %3392 = vmatprep.subr.mxu0 0.0
        %3393 = vmatpush1.msra.mxu0 0.0
        %3394 = vmatprep.subr.mxu0 0.0
        %3395 = vmatpush1.msra.mxu0 0.0
        %3396 = vmatprep.subr.mxu0 0.0
        %3397 = vmatpush1.msra.mxu0 0.0
        %3398 = vmatprep.subr.mxu0 0.0
        %3399 = vmatpush1.msra.mxu0 0.0
        %3400 = vmatprep.subr.mxu0 0.0
        %3401 = vmatpush1.msra.mxu0 0.0
        %3402 = vmatprep.subr.mxu0 0.0
        %3403 = vmatpush1.msra.mxu0 0.0
        %3404 = vmatprep.mubr.f32.mxu0 0.0
        %3405 = vmatmul.mubr.f32.gmra.mrb[0].mxu0 %v3245
        %v3406 = vpop.f32.mrb[0].mxu0
        %v3407 = vadd.f32 0.0, %v3406
        %v3408 = vpop.f32.mrb[0].mxu0
        %3409 = vmatprep.mubr.f32.mxu0 0.0
        %3410 = vmatmul.mubr.f32.gmra.mrb[0].mxu0 %v3248
        %v3411 = vpop.f32.mrb[0].mxu0
        %v3412 = vadd.f32 0.0, %v3411
        %v3413 = vpop.f32.mrb[0].mxu0
        %3414 = vmatprep.mubr.f32.mxu0 0.0
        %3415 = vmatmul.mubr.f32.gmra.mrb[0].mxu0 %v3251
        %v3416 = vpop.f32.mrb[0].mxu0
        %v3417 = vadd.f32 0.0, %v3416
        %v3418 = vpop.f32.mrb[0].mxu0
        %3419 = vmatprep.mubr.f32.mxu0 0.0
        %3420 = vmatmul.mubr.f32.gmra.mrb[0].mxu0 %v3254
        %v3421 = vpop.f32.mrb[0].mxu0
        %v3422 = vadd.f32 0.0, %v3421
        %v3423 = vpop.f32.mrb[0].mxu0
        %3424 = vmatprep.mubr.f32.mxu0 0.0
        %3425 = vmatmul.mubr.f32.gmra.mrb[0].mxu0 %v3257
        %v3426 = vpop.f32.mrb[0].mxu0
        %v3427 = vadd.f32 0.0, %v3426
        %v3428 = vpop.f32.mrb[0].mxu0
        %3429 = vmatprep.mubr.f32.mxu0 0.0
        %3430 = vmatmul.mubr.f32.gmra.mrb[0].mxu0 %v3260
        %v3431 = vpop.f32.mrb[0].mxu0
        %v3432 = vadd.f32 0.0, %v3431
        %v3433 = vpop.f32.mrb[0].mxu0
        %3434 = vmatprep.mubr.f32.mxu0 0.0
        %3435 = vmatmul.mubr.f32.gmra.mrb[0].mxu0 %v3263
        %v3436 = vpop.f32.mrb[0].mxu0
        %v3437 = vadd.f32 0.0, %v3436
        %v3438 = vpop.f32.mrb[0].mxu0
        %3439 = vmatprep.mubr.f32.mxu0 0.0
        %3440 = vmatmul.mubr.f32.gmra.mrb[0].mxu0 %v3266
        %v3441 = vpop.f32.mrb[0].mxu0
        %v3442 = vadd.f32 0.0, %v3441
        %v3443 = vpop.f32.mrb[0].mxu0
        %3444 = vmatprep.mubr.f32.mxu0 0.0
        %3445 = vmatmul.mubr.f32.gmra.mrb[0].mxu0 %v3269
        %v3446 = vpop.f32.mrb[0].mxu0
        %v3447 = vadd.f32 0.0, %v3446
        %v3448 = vpop.f32.mrb[0].mxu0
        %3449 = vmatprep.mubr.f32.mxu0 0.0
        %3450 = vmatmul.mubr.f32.gmra.mrb[0].mxu0 %v3272
        %v3451 = vpop.f32.mrb[0].mxu0
        %v3452 = vadd.f32 0.0, %v3451
        %v3453 = vpop.f32.mrb[0].mxu0
        %3454 = vmatprep.mubr.f32.mxu0 0.0
        %3455 = vmatmul.mubr.f32.gmra.mrb[0].mxu0 %v3275
        %v3456 = vpop.f32.mrb[0].mxu0
        %v3457 = vadd.f32 0.0, %v3456
        %v3458 = vpop.f32.mrb[0].mxu0
        %3459 = vmatprep.mubr.f32.mxu0 0.0
        %3460 = vmatmul.mubr.f32.gmra.mrb[0].mxu0 %v3278
        %v3461 = vpop.f32.mrb[0].mxu0
        %v3462 = vadd.f32 0.0, %v3461
        %v3463 = vpop.f32.mrb[0].mxu0
        %3464 = vmatprep.mubr.f32.mxu0 0.0
        %3465 = vmatmul.mubr.f32.gmra.mrb[0].mxu0 %v3281
        %v3466 = vpop.f32.mrb[0].mxu0
        %v3467 = vadd.f32 0.0, %v3466
        %v3468 = vpop.f32.mrb[0].mxu0
        %3469 = vmatprep.mubr.f32.mxu0 0.0
        %3470 = vmatmul.mubr.f32.gmra.mrb[0].mxu0 %v3284
        %v3471 = vpop.f32.mrb[0].mxu0
        %v3472 = vadd.f32 0.0, %v3471
        %v3473 = vpop.f32.mrb[0].mxu0
        %3474 = vmatprep.mubr.f32.mxu0 0.0
        %3475 = vmatmul.mubr.f32.gmra.mrb[0].mxu0 %v3287
        %v3476 = vpop.f32.mrb[0].mxu0
        %v3477 = vadd.f32 0.0, %v3476
        %v3478 = vpop.f32.mrb[0].mxu0
        %3479 = vmatprep.mubr.f32.mxu0 0.0
        %3480 = vmatmul.mubr.f32.gmra.mrb[0].mxu0 %v3290
        %v3481 = vpop.f32.mrb[0].mxu0
        %v3482 = vadd.f32 0.0, %v3481
        %v3483 = vpop.f32.mrb[0].mxu0
        %3484 = vmatprep.mubr.f32.mxu0 0.0
        %3485 = vmatmul.mubr.f32.gmra.mrb[0].mxu0 %v3293
        %v3486 = vpop.f32.mrb[0].mxu0
        %v3487 = vadd.f32 0.0, %v3486
        %v3488 = vpop.f32.mrb[0].mxu0
        %3489 = vmatprep.mubr.f32.mxu0 0.0
        %3490 = vmatmul.mubr.f32.gmra.mrb[0].mxu0 %v3296
        %v3491 = vpop.f32.mrb[0].mxu0
        %v3492 = vadd.f32 0.0, %v3491
        %v3493 = vpop.f32.mrb[0].mxu0
        %3494 = vmatprep.mubr.f32.mxu0 0.0
        %3495 = vmatmul.mubr.f32.gmra.mrb[0].mxu0 %v3299
        %v3496 = vpop.f32.mrb[0].mxu0
        %v3497 = vadd.f32 0.0, %v3496
        %v3498 = vpop.f32.mrb[0].mxu0
        %3499 = vmatprep.mubr.f32.mxu0 0.0
        %3500 = vmatmul.mubr.f32.gmra.mrb[0].mxu0 %v3302
        %v3501 = vpop.f32.mrb[0].mxu0
        %v3502 = vadd.f32 0.0, %v3501
        %v3503 = vpop.f32.mrb[0].mxu0
        %3504 = vmatprep.mubr.f32.mxu0 0.0
        %3505 = vmatmul.mubr.f32.gmra.mrb[0].mxu0 %v3305
        %v3506 = vpop.f32.mrb[0].mxu0
        %v3507 = vadd.f32 0.0, %v3506
        %v3508 = vpop.f32.mrb[0].mxu0
        %3509 = vmatprep.mubr.f32.mxu0 0.0
        %3510 = vmatmul.mubr.f32.gmra.mrb[0].mxu0 %v3308
        %v3511 = vpop.f32.mrb[0].mxu0
        %v3512 = vadd.f32 0.0, %v3511
        %v3513 = vpop.f32.mrb[0].mxu0
        %3514 = vmatprep.mubr.f32.mxu0 0.0
        %3515 = vmatmul.mubr.f32.gmra.mrb[0].mxu0 %v3311
        %v3516 = vpop.f32.mrb[0].mxu0
        %v3517 = vadd.f32 0.0, %v3516
        %v3518 = vpop.f32.mrb[0].mxu0
        %3519 = vmatprep.mubr.f32.mxu0 0.0
        %3520 = vmatmul.mubr.f32.gmra.mrb[0].mxu0 %v3314
        %v3521 = vpop.f32.mrb[0].mxu0
        %v3522 = vadd.f32 0.0, %v3521
        %v3523 = vpop.f32.mrb[0].mxu0
        %3524 = vmatprep.mubr.f32.mxu0 0.0
        %3525 = vmatmul.mubr.f32.gmra.mrb[0].mxu0 %v3317
        %v3526 = vpop.f32.mrb[0].mxu0
        %v3527 = vadd.f32 0.0, %v3526
        %v3528 = vpop.f32.mrb[0].mxu0
        %3529 = vmatprep.mubr.f32.mxu0 0.0
        %3530 = vmatmul.mubr.f32.gmra.mrb[0].mxu0 %v3320
        %v3531 = vpop.f32.mrb[0].mxu0
        %v3532 = vadd.f32 0.0, %v3531
        %v3533 = vpop.f32.mrb[0].mxu0
        %3534 = vmatprep.mubr.f32.mxu0 0.0
        %3535 = vmatmul.mubr.f32.gmra.mrb[0].mxu0 %v3323
        %v3536 = vpop.f32.mrb[0].mxu0
        %v3537 = vadd.f32 0.0, %v3536
        %v3538 = vpop.f32.mrb[0].mxu0
        %3539 = vmatprep.mubr.f32.mxu0 0.0
        %3540 = vmatmul.mubr.f32.gmra.mrb[0].mxu0 %v3326
        %v3541 = vpop.f32.mrb[0].mxu0
        %v3542 = vadd.f32 0.0, %v3541
        %v3543 = vpop.f32.mrb[0].mxu0
        %3544 = vmatprep.mubr.f32.mxu0 0.0
        %3545 = vmatmul.mubr.f32.gmra.mrb[0].mxu0 %v3329
        %v3546 = vpop.f32.mrb[0].mxu0
        %v3547 = vadd.f32 0.0, %v3546
        %v3548 = vpop.f32.mrb[0].mxu0
        %3549 = vmatprep.mubr.f32.mxu0 0.0
        %3550 = vmatmul.mubr.f32.gmra.mrb[0].mxu0 %v3332
        %v3551 = vpop.f32.mrb[0].mxu0
        %v3552 = vadd.f32 0.0, %v3551
        %v3553 = vpop.f32.mrb[0].mxu0
        %3554 = vmatprep.mubr.f32.mxu0 0.0
        %3555 = vmatmul.mubr.f32.gmra.mrb[0].mxu0 %v3335
        %v3556 = vpop.f32.mrb[0].mxu0
        %v3557 = vadd.f32 0.0, %v3556
        %v3558 = vpop.f32.mrb[0].mxu0
        %3559 = vmatprep.mubr.f32.mxu0 0.0
        %3560 = vmatmul.mubr.f32.gmra.mrb[0].mxu0 %v3338
        %v3561 = vpop.f32.mrb[0].mxu0
        %v3562 = vadd.f32 0.0, %v3561
        %v3563 = vpop.f32.mrb[0].mxu0
        %3564 = vdwg.mxu0
        %v3565 = vadd.f32 %v3175, %v3407
        %v3566 = vadd.f32 %v3176, %v3412
        %v3567 = vadd.f32 %v3177, %v3417
        %v3568 = vadd.f32 %v3178, %v3422
        %v3569 = vadd.f32 %v3179, %v3427
        %v3570 = vadd.f32 %v3180, %v3432
        %v3571 = vadd.f32 %v3181, %v3437
        %v3572 = vadd.f32 %v3182, %v3442
        %v3573 = vadd.f32 %v3183, %v3447
        %v3574 = vadd.f32 %v3184, %v3452
        %v3575 = vadd.f32 %v3185, %v3457
        %v3576 = vadd.f32 %v3186, %v3462
        %v3577 = vadd.f32 %v3187, %v3467
        %v3578 = vadd.f32 %v3188, %v3472
        %v3579 = vadd.f32 %v3189, %v3477
        %v3580 = vadd.f32 %v3190, %v3482
        %v3581 = vadd.f32 %v3191, %v3487
        %v3582 = vadd.f32 %v3192, %v3492
        %v3583 = vadd.f32 %v3193, %v3497
        %v3584 = vadd.f32 %v3194, %v3502
        %v3585 = vadd.f32 %v3195, %v3507
        %v3586 = vadd.f32 %v3196, %v3512
        %v3587 = vadd.f32 %v3197, %v3517
        %v3588 = vadd.f32 %v3198, %v3522
        %v3589 = vadd.f32 %v3199, %v3527
        %v3590 = vadd.f32 %v3200, %v3532
        %v3591 = vadd.f32 %v3201, %v3537
        %v3592 = vadd.f32 %v3202, %v3542
        %v3593 = vadd.f32 %v3203, %v3547
        %v3594 = vadd.f32 %v3204, %v3552
        %v3595 = vadd.f32 %v3205, %v3557
        %v3596 = vadd.f32 %v3206, %v3562
        %v3597 = vld [vmem:[%s2816 + $0x2] sm:$0xff]
        %v3598 = vld [vmem:[%s2816 + $0xa] sm:$0xff]
        %v3599 = vld [vmem:[%s2816 + $0x1a] sm:$0xff]
        %v3600 = vld [vmem:[%s2816 + $0x22] sm:$0xff]
        %v3601 = vld [vmem:[%s2816 + $0x32] sm:$0xff]
        %v3602 = vld [vmem:[%s2816 + $0x3a] sm:$0xff]
        %v3603 = vld [vmem:[%s2816 + $0x4a] sm:$0xff]
        %v3604 = vld [vmem:[%s2816 + $0x52] sm:$0xff]
        %v3605 = vld [vmem:[%s2816 + $0x62] sm:$0xff]
        %v3606 = vld [vmem:[%s2816 + $0x6a] sm:$0xff]
        %v3607 = vld [vmem:[%s2816 + $0x7a] sm:$0xff]
        %v3608 = vld [vmem:[%s2816 + $0x82] sm:$0xff]
        %v3609 = vld [vmem:[%s2816 + $0x92] sm:$0xff]
        %v3610 = vld [vmem:[%s2816 + $0x9a] sm:$0xff]
        %v3611 = vld [vmem:[%s2816 + $0xaa] sm:$0xff]
        %v3612 = vld [vmem:[%s2816 + $0xb2] sm:$0xff]
        %v3613 = vld [vmem:[%s2816 + $0xc2] sm:$0xff]
        %v3614 = vld [vmem:[%s2816 + $0xca] sm:$0xff]
        %v3615 = vld [vmem:[%s2816 + $0xda] sm:$0xff]
        %v3616 = vld [vmem:[%s2816 + $0xe2] sm:$0xff]
        %v3617 = vld [vmem:[%s2816 + $0xf2] sm:$0xff]
        %v3618 = vld [vmem:[%s2816 + $0xfa] sm:$0xff]
        %v3619 = vld [vmem:[%s2816 + $0x10a] sm:$0xff]
        %v3620 = vld [vmem:[%s2816 + $0x112] sm:$0xff]
        %v3621 = vld [vmem:[%s2816 + $0x122] sm:$0xff]
        %v3622 = vld [vmem:[%s2816 + $0x12a] sm:$0xff]
        %v3623 = vld [vmem:[%s2816 + $0x13a] sm:$0xff]
        %v3624 = vld [vmem:[%s2816 + $0x142] sm:$0xff]
        %v3625 = vld [vmem:[%s2816 + $0x152] sm:$0xff]
        %v3626 = vld [vmem:[%s2816 + $0x15a] sm:$0xff]
        %v3627 = vld [vmem:[%s2816 + $0x16a] sm:$0xff]
        %v3628 = vld [vmem:[%s2816 + $0x172] sm:$0xff]
        %s3629 = scalar_lea.vmem %s3, 256
        %v3630 = vld [vmem:[%s3629] sm:$0xff]
        %v3631 = vld [vmem:[%s3629 + $0x8] sm:$0xff]
        %v3632 = vld [vmem:[%s3629 + $0x10] sm:$0xff]
        %v3633 = vld [vmem:[%s3629 + $0x18] sm:$0xff]
        %v3635 = vsel %vm452, %v3597, 0
        %v3638 = vsel %vm452, %v3598, 0
        %v3641 = vsel %vm452, %v3599, 0
        %v3644 = vsel %vm452, %v3600, 0
        %v3647 = vsel %vm452, %v3601, 0
        %v3650 = vsel %vm452, %v3602, 0
        %v3653 = vsel %vm452, %v3603, 0
        %v3656 = vsel %vm452, %v3604, 0
        %v3659 = vsel %vm452, %v3605, 0
        %v3662 = vsel %vm452, %v3606, 0
        %v3665 = vsel %vm452, %v3607, 0
        %v3668 = vsel %vm452, %v3608, 0
        %v3671 = vsel %vm452, %v3609, 0
        %v3674 = vsel %vm452, %v3610, 0
        %v3677 = vsel %vm452, %v3611, 0
        %v3680 = vsel %vm452, %v3612, 0
        %v3683 = vsel %vm452, %v3613, 0
        %v3686 = vsel %vm452, %v3614, 0
        %v3689 = vsel %vm452, %v3615, 0
        %v3692 = vsel %vm452, %v3616, 0
        %v3695 = vsel %vm452, %v3617, 0
        %v3698 = vsel %vm452, %v3618, 0
        %v3701 = vsel %vm452, %v3619, 0
        %v3704 = vsel %vm452, %v3620, 0
        %v3707 = vsel %vm452, %v3621, 0
        %v3710 = vsel %vm452, %v3622, 0
        %v3713 = vsel %vm452, %v3623, 0
        %v3716 = vsel %vm452, %v3624, 0
        %v3719 = vsel %vm452, %v3625, 0
        %v3722 = vsel %vm452, %v3626, 0
        %v3725 = vsel %vm452, %v3627, 0
        %v3728 = vsel %vm452, %v3628, 0
        %3730 = vmatprep.subr.mxu0 0.0
        %3731 = vmatpush1.msra.mxu0 %v3630
        %3732 = vmatprep.subr.mxu0 0.0
        %3733 = vmatpush1.msra.mxu0 %v3631
        %3734 = vmatprep.subr.mxu0 0.0
        %3735 = vmatpush1.msra.mxu0 %v3632
        %3736 = vmatprep.subr.mxu0 0.0
        %3737 = vmatpush1.msra.mxu0 %v3633
        %3738 = vmatprep.subr.mxu0 0.0
        %3739 = vmatpush1.msra.mxu0 0.0
        %3740 = vmatprep.subr.mxu0 0.0
        %3741 = vmatpush1.msra.mxu0 0.0
        %3742 = vmatprep.subr.mxu0 0.0
        %3743 = vmatpush1.msra.mxu0 0.0
        %3744 = vmatprep.subr.mxu0 0.0
        %3745 = vmatpush1.msra.mxu0 0.0
        %3746 = vmatprep.subr.mxu0 0.0
        %3747 = vmatpush1.msra.mxu0 0.0
        %3748 = vmatprep.subr.mxu0 0.0
        %3749 = vmatpush1.msra.mxu0 0.0
        %3750 = vmatprep.subr.mxu0 0.0
        %3751 = vmatpush1.msra.mxu0 0.0
        %3752 = vmatprep.subr.mxu0 0.0
        %3753 = vmatpush1.msra.mxu0 0.0
        %3754 = vmatprep.subr.mxu0 0.0
        %3755 = vmatpush1.msra.mxu0 0.0
        %3756 = vmatprep.subr.mxu0 0.0
        %3757 = vmatpush1.msra.mxu0 0.0
        %3758 = vmatprep.subr.mxu0 0.0
        %3759 = vmatpush1.msra.mxu0 0.0
        %3760 = vmatprep.subr.mxu0 0.0
        %3761 = vmatpush1.msra.mxu0 0.0
        %3762 = vmatprep.subr.mxu0 0.0
        %3763 = vmatpush1.msra.mxu0 0.0
        %3764 = vmatprep.subr.mxu0 0.0
        %3765 = vmatpush1.msra.mxu0 0.0
        %3766 = vmatprep.subr.mxu0 0.0
        %3767 = vmatpush1.msra.mxu0 0.0
        %3768 = vmatprep.subr.mxu0 0.0
        %3769 = vmatpush1.msra.mxu0 0.0
        %3770 = vmatprep.subr.mxu0 0.0
        %3771 = vmatpush1.msra.mxu0 0.0
        %3772 = vmatprep.subr.mxu0 0.0
        %3773 = vmatpush1.msra.mxu0 0.0
        %3774 = vmatprep.subr.mxu0 0.0
        %3775 = vmatpush1.msra.mxu0 0.0
        %3776 = vmatprep.subr.mxu0 0.0
        %3777 = vmatpush1.msra.mxu0 0.0
        %3778 = vmatprep.subr.mxu0 0.0
        %3779 = vmatpush1.msra.mxu0 0.0
        %3780 = vmatprep.subr.mxu0 0.0
        %3781 = vmatpush1.msra.mxu0 0.0
        %3782 = vmatprep.subr.mxu0 0.0
        %3783 = vmatpush1.msra.mxu0 0.0
        %3784 = vmatprep.subr.mxu0 0.0
        %3785 = vmatpush1.msra.mxu0 0.0
        %3786 = vmatprep.subr.mxu0 0.0
        %3787 = vmatpush1.msra.mxu0 0.0
        %3788 = vmatprep.subr.mxu0 0.0
        %3789 = vmatpush1.msra.mxu0 0.0
        %3790 = vmatprep.subr.mxu0 0.0
        %3791 = vmatpush1.msra.mxu0 0.0
        %3792 = vmatprep.subr.mxu0 0.0
        %3793 = vmatpush1.msra.mxu0 0.0
        %3794 = vmatprep.mubr.f32.mxu0 0.0
        %3795 = vmatmul.mubr.f32.gmra.mrb[0].mxu0 %v3635
        %v3796 = vpop.f32.mrb[0].mxu0
        %v3797 = vadd.f32 0.0, %v3796
        %v3798 = vpop.f32.mrb[0].mxu0
        %3799 = vmatprep.mubr.f32.mxu0 0.0
        %3800 = vmatmul.mubr.f32.gmra.mrb[0].mxu0 %v3638
        %v3801 = vpop.f32.mrb[0].mxu0
        %v3802 = vadd.f32 0.0, %v3801
        %v3803 = vpop.f32.mrb[0].mxu0
        %3804 = vmatprep.mubr.f32.mxu0 0.0
        %3805 = vmatmul.mubr.f32.gmra.mrb[0].mxu0 %v3641
        %v3806 = vpop.f32.mrb[0].mxu0
        %v3807 = vadd.f32 0.0, %v3806
        %v3808 = vpop.f32.mrb[0].mxu0
        %3809 = vmatprep.mubr.f32.mxu0 0.0
        %3810 = vmatmul.mubr.f32.gmra.mrb[0].mxu0 %v3644
        %v3811 = vpop.f32.mrb[0].mxu0
        %v3812 = vadd.f32 0.0, %v3811
        %v3813 = vpop.f32.mrb[0].mxu0
        %3814 = vmatprep.mubr.f32.mxu0 0.0
        %3815 = vmatmul.mubr.f32.gmra.mrb[0].mxu0 %v3647
        %v3816 = vpop.f32.mrb[0].mxu0
        %v3817 = vadd.f32 0.0, %v3816
        %v3818 = vpop.f32.mrb[0].mxu0
        %3819 = vmatprep.mubr.f32.mxu0 0.0
        %3820 = vmatmul.mubr.f32.gmra.mrb[0].mxu0 %v3650
        %v3821 = vpop.f32.mrb[0].mxu0
        %v3822 = vadd.f32 0.0, %v3821
        %v3823 = vpop.f32.mrb[0].mxu0
        %3824 = vmatprep.mubr.f32.mxu0 0.0
        %3825 = vmatmul.mubr.f32.gmra.mrb[0].mxu0 %v3653
        %v3826 = vpop.f32.mrb[0].mxu0
        %v3827 = vadd.f32 0.0, %v3826
        %v3828 = vpop.f32.mrb[0].mxu0
        %3829 = vmatprep.mubr.f32.mxu0 0.0
        %3830 = vmatmul.mubr.f32.gmra.mrb[0].mxu0 %v3656
        %v3831 = vpop.f32.mrb[0].mxu0
        %v3832 = vadd.f32 0.0, %v3831
        %v3833 = vpop.f32.mrb[0].mxu0
        %3834 = vmatprep.mubr.f32.mxu0 0.0
        %3835 = vmatmul.mubr.f32.gmra.mrb[0].mxu0 %v3659
        %v3836 = vpop.f32.mrb[0].mxu0
        %v3837 = vadd.f32 0.0, %v3836
        %v3838 = vpop.f32.mrb[0].mxu0
        %3839 = vmatprep.mubr.f32.mxu0 0.0
        %3840 = vmatmul.mubr.f32.gmra.mrb[0].mxu0 %v3662
        %v3841 = vpop.f32.mrb[0].mxu0
        %v3842 = vadd.f32 0.0, %v3841
        %v3843 = vpop.f32.mrb[0].mxu0
        %3844 = vmatprep.mubr.f32.mxu0 0.0
        %3845 = vmatmul.mubr.f32.gmra.mrb[0].mxu0 %v3665
        %v3846 = vpop.f32.mrb[0].mxu0
        %v3847 = vadd.f32 0.0, %v3846
        %v3848 = vpop.f32.mrb[0].mxu0
        %3849 = vmatprep.mubr.f32.mxu0 0.0
        %3850 = vmatmul.mubr.f32.gmra.mrb[0].mxu0 %v3668
        %v3851 = vpop.f32.mrb[0].mxu0
        %v3852 = vadd.f32 0.0, %v3851
        %v3853 = vpop.f32.mrb[0].mxu0
        %3854 = vmatprep.mubr.f32.mxu0 0.0
        %3855 = vmatmul.mubr.f32.gmra.mrb[0].mxu0 %v3671
        %v3856 = vpop.f32.mrb[0].mxu0
        %v3857 = vadd.f32 0.0, %v3856
        %v3858 = vpop.f32.mrb[0].mxu0
        %3859 = vmatprep.mubr.f32.mxu0 0.0
        %3860 = vmatmul.mubr.f32.gmra.mrb[0].mxu0 %v3674
        %v3861 = vpop.f32.mrb[0].mxu0
        %v3862 = vadd.f32 0.0, %v3861
        %v3863 = vpop.f32.mrb[0].mxu0
        %3864 = vmatprep.mubr.f32.mxu0 0.0
        %3865 = vmatmul.mubr.f32.gmra.mrb[0].mxu0 %v3677
        %v3866 = vpop.f32.mrb[0].mxu0
        %v3867 = vadd.f32 0.0, %v3866
        %v3868 = vpop.f32.mrb[0].mxu0
        %3869 = vmatprep.mubr.f32.mxu0 0.0
        %3870 = vmatmul.mubr.f32.gmra.mrb[0].mxu0 %v3680
        %v3871 = vpop.f32.mrb[0].mxu0
        %v3872 = vadd.f32 0.0, %v3871
        %v3873 = vpop.f32.mrb[0].mxu0
        %3874 = vmatprep.mubr.f32.mxu0 0.0
        %3875 = vmatmul.mubr.f32.gmra.mrb[0].mxu0 %v3683
        %v3876 = vpop.f32.mrb[0].mxu0
        %v3877 = vadd.f32 0.0, %v3876
        %v3878 = vpop.f32.mrb[0].mxu0
        %3879 = vmatprep.mubr.f32.mxu0 0.0
        %3880 = vmatmul.mubr.f32.gmra.mrb[0].mxu0 %v3686
        %v3881 = vpop.f32.mrb[0].mxu0
        %v3882 = vadd.f32 0.0, %v3881
        %v3883 = vpop.f32.mrb[0].mxu0
        %3884 = vmatprep.mubr.f32.mxu0 0.0
        %3885 = vmatmul.mubr.f32.gmra.mrb[0].mxu0 %v3689
        %v3886 = vpop.f32.mrb[0].mxu0
        %v3887 = vadd.f32 0.0, %v3886
        %v3888 = vpop.f32.mrb[0].mxu0
        %3889 = vmatprep.mubr.f32.mxu0 0.0
        %3890 = vmatmul.mubr.f32.gmra.mrb[0].mxu0 %v3692
        %v3891 = vpop.f32.mrb[0].mxu0
        %v3892 = vadd.f32 0.0, %v3891
        %v3893 = vpop.f32.mrb[0].mxu0
        %3894 = vmatprep.mubr.f32.mxu0 0.0
        %3895 = vmatmul.mubr.f32.gmra.mrb[0].mxu0 %v3695
        %v3896 = vpop.f32.mrb[0].mxu0
        %v3897 = vadd.f32 0.0, %v3896
        %v3898 = vpop.f32.mrb[0].mxu0
        %3899 = vmatprep.mubr.f32.mxu0 0.0
        %3900 = vmatmul.mubr.f32.gmra.mrb[0].mxu0 %v3698
        %v3901 = vpop.f32.mrb[0].mxu0
        %v3902 = vadd.f32 0.0, %v3901
        %v3903 = vpop.f32.mrb[0].mxu0
        %3904 = vmatprep.mubr.f32.mxu0 0.0
        %3905 = vmatmul.mubr.f32.gmra.mrb[0].mxu0 %v3701
        %v3906 = vpop.f32.mrb[0].mxu0
        %v3907 = vadd.f32 0.0, %v3906
        %v3908 = vpop.f32.mrb[0].mxu0
        %3909 = vmatprep.mubr.f32.mxu0 0.0
        %3910 = vmatmul.mubr.f32.gmra.mrb[0].mxu0 %v3704
        %v3911 = vpop.f32.mrb[0].mxu0
        %v3912 = vadd.f32 0.0, %v3911
        %v3913 = vpop.f32.mrb[0].mxu0
        %3914 = vmatprep.mubr.f32.mxu0 0.0
        %3915 = vmatmul.mubr.f32.gmra.mrb[0].mxu0 %v3707
        %v3916 = vpop.f32.mrb[0].mxu0
        %v3917 = vadd.f32 0.0, %v3916
        %v3918 = vpop.f32.mrb[0].mxu0
        %3919 = vmatprep.mubr.f32.mxu0 0.0
        %3920 = vmatmul.mubr.f32.gmra.mrb[0].mxu0 %v3710
        %v3921 = vpop.f32.mrb[0].mxu0
        %v3922 = vadd.f32 0.0, %v3921
        %v3923 = vpop.f32.mrb[0].mxu0
        %3924 = vmatprep.mubr.f32.mxu0 0.0
        %3925 = vmatmul.mubr.f32.gmra.mrb[0].mxu0 %v3713
        %v3926 = vpop.f32.mrb[0].mxu0
        %v3927 = vadd.f32 0.0, %v3926
        %v3928 = vpop.f32.mrb[0].mxu0
        %3929 = vmatprep.mubr.f32.mxu0 0.0
        %3930 = vmatmul.mubr.f32.gmra.mrb[0].mxu0 %v3716
        %v3931 = vpop.f32.mrb[0].mxu0
        %v3932 = vadd.f32 0.0, %v3931
        %v3933 = vpop.f32.mrb[0].mxu0
        %3934 = vmatprep.mubr.f32.mxu0 0.0
        %3935 = vmatmul.mubr.f32.gmra.mrb[0].mxu0 %v3719
        %v3936 = vpop.f32.mrb[0].mxu0
        %v3937 = vadd.f32 0.0, %v3936
        %v3938 = vpop.f32.mrb[0].mxu0
        %3939 = vmatprep.mubr.f32.mxu0 0.0
        %3940 = vmatmul.mubr.f32.gmra.mrb[0].mxu0 %v3722
        %v3941 = vpop.f32.mrb[0].mxu0
        %v3942 = vadd.f32 0.0, %v3941
        %v3943 = vpop.f32.mrb[0].mxu0
        %3944 = vmatprep.mubr.f32.mxu0 0.0
        %3945 = vmatmul.mubr.f32.gmra.mrb[0].mxu0 %v3725
        %v3946 = vpop.f32.mrb[0].mxu0
        %v3947 = vadd.f32 0.0, %v3946
        %v3948 = vpop.f32.mrb[0].mxu0
        %3949 = vmatprep.mubr.f32.mxu0 0.0
        %3950 = vmatmul.mubr.f32.gmra.mrb[0].mxu0 %v3728
        %v3951 = vpop.f32.mrb[0].mxu0
        %v3952 = vadd.f32 0.0, %v3951
        %v3953 = vpop.f32.mrb[0].mxu0
        %3954 = vdwg.mxu0
        %v3955 = vadd.f32 %v3565, %v3797
        %v3956 = vadd.f32 %v3566, %v3802
        %v3957 = vadd.f32 %v3567, %v3807
        %v3958 = vadd.f32 %v3568, %v3812
        %v3959 = vadd.f32 %v3569, %v3817
        %v3960 = vadd.f32 %v3570, %v3822
        %v3961 = vadd.f32 %v3571, %v3827
        %v3962 = vadd.f32 %v3572, %v3832
        %v3963 = vadd.f32 %v3573, %v3837
        %v3964 = vadd.f32 %v3574, %v3842
        %v3965 = vadd.f32 %v3575, %v3847
        %v3966 = vadd.f32 %v3576, %v3852
        %v3967 = vadd.f32 %v3577, %v3857
        %v3968 = vadd.f32 %v3578, %v3862
        %v3969 = vadd.f32 %v3579, %v3867
        %v3970 = vadd.f32 %v3580, %v3872
        %v3971 = vadd.f32 %v3581, %v3877
        %v3972 = vadd.f32 %v3582, %v3882
        %v3973 = vadd.f32 %v3583, %v3887
        %v3974 = vadd.f32 %v3584, %v3892
        %v3975 = vadd.f32 %v3585, %v3897
        %v3976 = vadd.f32 %v3586, %v3902
        %v3977 = vadd.f32 %v3587, %v3907
        %v3978 = vadd.f32 %v3588, %v3912
        %v3979 = vadd.f32 %v3589, %v3917
        %v3980 = vadd.f32 %v3590, %v3922
        %v3981 = vadd.f32 %v3591, %v3927
        %v3982 = vadd.f32 %v3592, %v3932
        %v3983 = vadd.f32 %v3593, %v3937
        %v3984 = vadd.f32 %v3594, %v3942
        %v3985 = vadd.f32 %v3595, %v3947
        %v3986 = vadd.f32 %v3596, %v3952
        %v3987 = vld [vmem:[%s4] sm:$0x1]
        %v3989 = vlaneseq
        %v3990 = vshrl.u32 %v3989, 7
        %v3991 = vsub.s32 0, %v3990
        %v3992 = vrot.slane %v3987, %v3991
        %v3994 = vmul.f32 %v3955, %v3992
        %v3995 = vmul.f32 %v3956, %v3992
        %v3996 = vmul.f32 %v3957, %v3992
        %v3997 = vmul.f32 %v3958, %v3992
        %v3998 = vmul.f32 %v3959, %v3992
        %v3999 = vmul.f32 %v3960, %v3992
        %v4000 = vmul.f32 %v3961, %v3992
        %v4001 = vmul.f32 %v3962, %v3992
        %v4002 = vmul.f32 %v3963, %v3992
        %v4003 = vmul.f32 %v3964, %v3992
        %v4004 = vmul.f32 %v3965, %v3992
        %v4005 = vmul.f32 %v3966, %v3992
        %v4006 = vmul.f32 %v3967, %v3992
        %v4007 = vmul.f32 %v3968, %v3992
        %v4008 = vmul.f32 %v3969, %v3992
        %v4009 = vmul.f32 %v3970, %v3992
        %v4010 = vmul.f32 %v3971, %v3992
        %v4011 = vmul.f32 %v3972, %v3992
        %v4012 = vmul.f32 %v3973, %v3992
        %v4013 = vmul.f32 %v3974, %v3992
        %v4014 = vmul.f32 %v3975, %v3992
        %v4015 = vmul.f32 %v3976, %v3992
        %v4016 = vmul.f32 %v3977, %v3992
        %v4017 = vmul.f32 %v3978, %v3992
        %v4018 = vmul.f32 %v3979, %v3992
        %v4019 = vmul.f32 %v3980, %v3992
        %v4020 = vmul.f32 %v3981, %v3992
        %v4021 = vmul.f32 %v3982, %v3992
        %v4022 = vmul.f32 %v3983, %v3992
        %v4023 = vmul.f32 %v3984, %v3992
        %v4024 = vmul.f32 %v3985, %v3992
        %v4025 = vmul.f32 %v3986, %v3992
        %v4026 = vld [vmem:[%s5] sm:$0x1]
        %v4028 = vlaneseq
        %v4029 = vshrl.u32 %v4028, 7
        %v4030 = vsub.s32 0, %v4029
        %v4031 = vrot.slane %v4026, %v4030
        %v4033 = vadd.f32 %v3994, %v4031
        %v4034 = vadd.f32 %v3995, %v4031
        %v4035 = vadd.f32 %v3996, %v4031
        %v4036 = vadd.f32 %v3997, %v4031
        %v4037 = vadd.f32 %v3998, %v4031
        %v4038 = vadd.f32 %v3999, %v4031
        %v4039 = vadd.f32 %v4000, %v4031
        %v4040 = vadd.f32 %v4001, %v4031
        %v4041 = vadd.f32 %v4002, %v4031
        %v4042 = vadd.f32 %v4003, %v4031
        %v4043 = vadd.f32 %v4004, %v4031
        %v4044 = vadd.f32 %v4005, %v4031
        %v4045 = vadd.f32 %v4006, %v4031
        %v4046 = vadd.f32 %v4007, %v4031
        %v4047 = vadd.f32 %v4008, %v4031
        %v4048 = vadd.f32 %v4009, %v4031
        %v4049 = vadd.f32 %v4010, %v4031
        %v4050 = vadd.f32 %v4011, %v4031
        %v4051 = vadd.f32 %v4012, %v4031
        %v4052 = vadd.f32 %v4013, %v4031
        %v4053 = vadd.f32 %v4014, %v4031
        %v4054 = vadd.f32 %v4015, %v4031
        %v4055 = vadd.f32 %v4016, %v4031
        %v4056 = vadd.f32 %v4017, %v4031
        %v4057 = vadd.f32 %v4018, %v4031
        %v4058 = vadd.f32 %v4019, %v4031
        %v4059 = vadd.f32 %v4020, %v4031
        %v4060 = vadd.f32 %v4021, %v4031
        %v4061 = vadd.f32 %v4022, %v4031
        %v4062 = vadd.f32 %v4023, %v4031
        %v4063 = vadd.f32 %v4024, %v4031
        %v4064 = vadd.f32 %v4025, %v4031
        %v4065 = vmax.f32 %v4033, 0.0
        %v4066 = vmax.f32 %v4034, 0.0
        %v4067 = vmax.f32 %v4035, 0.0
        %v4068 = vmax.f32 %v4036, 0.0
        %v4069 = vmax.f32 %v4037, 0.0
        %v4070 = vmax.f32 %v4038, 0.0
        %v4071 = vmax.f32 %v4039, 0.0
        %v4072 = vmax.f32 %v4040, 0.0
        %v4073 = vmax.f32 %v4041, 0.0
        %v4074 = vmax.f32 %v4042, 0.0
        %v4075 = vmax.f32 %v4043, 0.0
        %v4076 = vmax.f32 %v4044, 0.0
        %v4077 = vmax.f32 %v4045, 0.0
        %v4078 = vmax.f32 %v4046, 0.0
        %v4079 = vmax.f32 %v4047, 0.0
        %v4080 = vmax.f32 %v4048, 0.0
        %v4081 = vmax.f32 %v4049, 0.0
        %v4082 = vmax.f32 %v4050, 0.0
        %v4083 = vmax.f32 %v4051, 0.0
        %v4084 = vmax.f32 %v4052, 0.0
        %v4085 = vmax.f32 %v4053, 0.0
        %v4086 = vmax.f32 %v4054, 0.0
        %v4087 = vmax.f32 %v4055, 0.0
        %v4088 = vmax.f32 %v4056, 0.0
        %v4089 = vmax.f32 %v4057, 0.0
        %v4090 = vmax.f32 %v4058, 0.0
        %v4091 = vmax.f32 %v4059, 0.0
        %v4092 = vmax.f32 %v4060, 0.0
        %v4093 = vmax.f32 %v4061, 0.0
        %v4094 = vmax.f32 %v4062, 0.0
        %v4095 = vmax.f32 %v4063, 0.0
        %v4096 = vmax.f32 %v4064, 0.0
        %v4097 = vld [vmem:[%s409] sm:$0xff]
        %v4098 = vld [vmem:[%s409 + $0x8] sm:$0xff]
        %v4099 = vld [vmem:[%s409 + $0x10] sm:$0xff]
        %v4100 = vld [vmem:[%s409 + $0x18] sm:$0xff]
        %v4101 = vld [vmem:[%s409 + $0x20] sm:$0xff]
        %v4102 = vld [vmem:[%s409 + $0x28] sm:$0xff]
        %v4103 = vld [vmem:[%s409 + $0x30] sm:$0xff]
        %v4104 = vld [vmem:[%s409 + $0x38] sm:$0xff]
        %4105 = vst.msk [vmem:[#allocation3] sm:$0xff] %vm452, 0.0
        %4106 = vst.msk [vmem:[#allocation3 + $0x8] sm:$0x3] %vm455, 0.0
        %4107 = vst.msk [vmem:[#allocation3 + $0x10] sm:$0xff] %vm452, 0.0
        %4108 = vst.msk [vmem:[#allocation3 + $0x18] sm:$0x3] %vm455, 0.0
        %4109 = vst.msk [vmem:[#allocation3 + $0x20] sm:$0xff] %vm452, 0.0
        %4110 = vst.msk [vmem:[#allocation3 + $0x28] sm:$0x3] %vm455, 0.0
        %4111 = vst.msk [vmem:[#allocation3 + $0x30] sm:$0xff] %vm452, 0.0
        %4112 = vst.msk [vmem:[#allocation3 + $0x38] sm:$0x3] %vm455, 0.0
        %4113 = vst.msk [vmem:[#allocation3 + $0x40] sm:$0xff] %vm452, 0.0
        %4114 = vst.msk [vmem:[#allocation3 + $0x48] sm:$0x3] %vm455, 0.0
        %4115 = vst.msk [vmem:[#allocation3 + $0x50] sm:$0xff] %vm452, 0.0
        %4116 = vst.msk [vmem:[#allocation3 + $0x58] sm:$0x3] %vm455, 0.0
        %4117 = vst.msk [vmem:[#allocation3 + $0x60] sm:$0xff] %vm452, 0.0
        %4118 = vst.msk [vmem:[#allocation3 + $0x68] sm:$0x3] %vm455, 0.0
        %4119 = vst.msk [vmem:[#allocation3 + $0x70] sm:$0xff] %vm452, 0.0
        %4120 = vst.msk [vmem:[#allocation3 + $0x78] sm:$0x3] %vm455, 0.0
        %4121 = vst.msk [vmem:[#allocation3 + $0x80] sm:$0xff] %vm452, 0.0
        %4122 = vst.msk [vmem:[#allocation3 + $0x88] sm:$0x3] %vm455, 0.0
        %4123 = vst.msk [vmem:[#allocation3 + $0x90] sm:$0xff] %vm452, 0.0
        %4124 = vst.msk [vmem:[#allocation3 + $0x98] sm:$0x3] %vm455, 0.0
        %s4125 = scalar_lea.vmem [#allocation3], 16
        %4126 = vst.msk [vmem:[%s4125 + $0x1] sm:$0xff] %vm452, %v4097
        %4127 = vst.msk [vmem:[%s4125 + $0x11] sm:$0xff] %vm452, %v4098
        %4128 = vst.msk [vmem:[%s4125 + $0x21] sm:$0xff] %vm452, %v4099
        %4129 = vst.msk [vmem:[%s4125 + $0x31] sm:$0xff] %vm452, %v4100
        %4130 = vst.msk [vmem:[%s4125 + $0x41] sm:$0xff] %vm452, %v4101
        %4131 = vst.msk [vmem:[%s4125 + $0x51] sm:$0xff] %vm452, %v4102
        %4132 = vst.msk [vmem:[%s4125 + $0x61] sm:$0xff] %vm452, %v4103
        %4133 = vst.msk [vmem:[%s4125 + $0x71] sm:$0xff] %vm452, %v4104
        %v4134 = vld [vmem:[#allocation3] sm:$0xff]
        %v4135 = vld [vmem:[#allocation3 + $0x10] sm:$0xff]
        %v4136 = vld [vmem:[#allocation3 + $0x20] sm:$0xff]
        %v4137 = vld [vmem:[#allocation3 + $0x30] sm:$0xff]
        %v4138 = vld [vmem:[#allocation3 + $0x40] sm:$0xff]
        %v4139 = vld [vmem:[#allocation3 + $0x50] sm:$0xff]
        %v4140 = vld [vmem:[#allocation3 + $0x60] sm:$0xff]
        %v4141 = vld [vmem:[#allocation3 + $0x70] sm:$0xff]
        %s4142 = scalar_lea.vmem %s3, 288
        %v4143 = vld [vmem:[%s4142] sm:$0xff]
        %v4144 = vld [vmem:[%s4142 + $0x8] sm:$0xff]
        %v4145 = vld [vmem:[%s4142 + $0x10] sm:$0xff]
        %v4146 = vld [vmem:[%s4142 + $0x18] sm:$0xff]
        %v4147 = vld [vmem:[#allocation3 + $0x1] sm:$0xff]
        %v4148 = vld [vmem:[#allocation3 + $0x11] sm:$0xff]
        %v4149 = vld [vmem:[#allocation3 + $0x21] sm:$0xff]
        %v4150 = vld [vmem:[#allocation3 + $0x31] sm:$0xff]
        %v4151 = vld [vmem:[#allocation3 + $0x41] sm:$0xff]
        %v4152 = vld [vmem:[#allocation3 + $0x51] sm:$0xff]
        %v4153 = vld [vmem:[#allocation3 + $0x61] sm:$0xff]
        %v4154 = vld [vmem:[#allocation3 + $0x71] sm:$0xff]
        %s4155 = scalar_lea.vmem %s3, 320
        %v4156 = vld [vmem:[%s4155] sm:$0xff]
        %v4157 = vld [vmem:[%s4155 + $0x8] sm:$0xff]
        %v4158 = vld [vmem:[%s4155 + $0x10] sm:$0xff]
        %v4159 = vld [vmem:[%s4155 + $0x18] sm:$0xff]
        %v4161 = vsel %vm452, %v4147, 0
        %v4164 = vsel %vm452, %v4148, 0
        %v4167 = vsel %vm452, %v4149, 0
        %v4170 = vsel %vm452, %v4150, 0
        %v4173 = vsel %vm452, %v4151, 0
        %v4176 = vsel %vm452, %v4152, 0
        %v4179 = vsel %vm452, %v4153, 0
        %v4182 = vsel %vm452, %v4154, 0
        %4184 = vmatprep.subr.mxu0 0.0
        %4185 = vmatpush1.msra.mxu0 %v4156
        %4186 = vmatprep.subr.mxu0 0.0
        %4187 = vmatpush1.msra.mxu0 %v4157
        %4188 = vmatprep.subr.mxu0 0.0
        %4189 = vmatpush1.msra.mxu0 %v4158
        %4190 = vmatprep.subr.mxu0 0.0
        %4191 = vmatpush1.msra.mxu0 %v4159
        %4192 = vmatprep.subr.mxu0 0.0
        %4193 = vmatpush1.msra.mxu0 0.0
        %4194 = vmatprep.subr.mxu0 0.0
        %4195 = vmatpush1.msra.mxu0 0.0
        %4196 = vmatprep.subr.mxu0 0.0
        %4197 = vmatpush1.msra.mxu0 0.0
        %4198 = vmatprep.subr.mxu0 0.0
        %4199 = vmatpush1.msra.mxu0 0.0
        %4200 = vmatprep.subr.mxu0 0.0
        %4201 = vmatpush1.msra.mxu0 0.0
        %4202 = vmatprep.subr.mxu0 0.0
        %4203 = vmatpush1.msra.mxu0 0.0
        %4204 = vmatprep.subr.mxu0 0.0
        %4205 = vmatpush1.msra.mxu0 0.0
        %4206 = vmatprep.subr.mxu0 0.0
        %4207 = vmatpush1.msra.mxu0 0.0
        %4208 = vmatprep.subr.mxu0 0.0
        %4209 = vmatpush1.msra.mxu0 0.0
        %4210 = vmatprep.subr.mxu0 0.0
        %4211 = vmatpush1.msra.mxu0 0.0
        %4212 = vmatprep.subr.mxu0 0.0
        %4213 = vmatpush1.msra.mxu0 0.0
        %4214 = vmatprep.subr.mxu0 0.0
        %4215 = vmatpush1.msra.mxu0 0.0
        %4216 = vmatprep.subr.mxu0 0.0
        %4217 = vmatpush1.msra.mxu0 0.0
        %4218 = vmatprep.subr.mxu0 0.0
        %4219 = vmatpush1.msra.mxu0 0.0
        %4220 = vmatprep.subr.mxu0 0.0
        %4221 = vmatpush1.msra.mxu0 0.0
        %4222 = vmatprep.subr.mxu0 0.0
        %4223 = vmatpush1.msra.mxu0 0.0
        %4224 = vmatprep.subr.mxu0 0.0
        %4225 = vmatpush1.msra.mxu0 0.0
        %4226 = vmatprep.subr.mxu0 0.0
        %4227 = vmatpush1.msra.mxu0 0.0
        %4228 = vmatprep.subr.mxu0 0.0
        %4229 = vmatpush1.msra.mxu0 0.0
        %4230 = vmatprep.subr.mxu0 0.0
        %4231 = vmatpush1.msra.mxu0 0.0
        %4232 = vmatprep.subr.mxu0 0.0
        %4233 = vmatpush1.msra.mxu0 0.0
        %4234 = vmatprep.subr.mxu0 0.0
        %4235 = vmatpush1.msra.mxu0 0.0
        %4236 = vmatprep.subr.mxu0 0.0
        %4237 = vmatpush1.msra.mxu0 0.0
        %4238 = vmatprep.subr.mxu0 0.0
        %4239 = vmatpush1.msra.mxu0 0.0
        %4240 = vmatprep.subr.mxu0 0.0
        %4241 = vmatpush1.msra.mxu0 0.0
        %4242 = vmatprep.subr.mxu0 0.0
        %4243 = vmatpush1.msra.mxu0 0.0
        %4244 = vmatprep.subr.mxu0 0.0
        %4245 = vmatpush1.msra.mxu0 0.0
        %4246 = vmatprep.subr.mxu0 0.0
        %4247 = vmatpush1.msra.mxu0 0.0
        %4248 = vmatprep.mubr.f32.mxu0 0.0
        %4249 = vmatmul.mubr.f32.gmra.mrb[0].mxu0 %v4161
        %v4250 = vpop.f32.mrb[0].mxu0
        %v4251 = vadd.f32 0.0, %v4250
        %v4252 = vpop.f32.mrb[0].mxu0
        %4253 = vmatprep.mubr.f32.mxu0 0.0
        %4254 = vmatmul.mubr.f32.gmra.mrb[0].mxu0 %v4164
        %v4255 = vpop.f32.mrb[0].mxu0
        %v4256 = vadd.f32 0.0, %v4255
        %v4257 = vpop.f32.mrb[0].mxu0
        %4258 = vmatprep.mubr.f32.mxu0 0.0
        %4259 = vmatmul.mubr.f32.gmra.mrb[0].mxu0 %v4167
        %v4260 = vpop.f32.mrb[0].mxu0
        %v4261 = vadd.f32 0.0, %v4260
        %v4262 = vpop.f32.mrb[0].mxu0
        %4263 = vmatprep.mubr.f32.mxu0 0.0
        %4264 = vmatmul.mubr.f32.gmra.mrb[0].mxu0 %v4170
        %v4265 = vpop.f32.mrb[0].mxu0
        %v4266 = vadd.f32 0.0, %v4265
        %v4267 = vpop.f32.mrb[0].mxu0
        %4268 = vmatprep.mubr.f32.mxu0 0.0
        %4269 = vmatmul.mubr.f32.gmra.mrb[0].mxu0 %v4173
        %v4270 = vpop.f32.mrb[0].mxu0
        %v4271 = vadd.f32 0.0, %v4270
        %v4272 = vpop.f32.mrb[0].mxu0
        %4273 = vmatprep.mubr.f32.mxu0 0.0
        %4274 = vmatmul.mubr.f32.gmra.mrb[0].mxu0 %v4176
        %v4275 = vpop.f32.mrb[0].mxu0
        %v4276 = vadd.f32 0.0, %v4275
        %v4277 = vpop.f32.mrb[0].mxu0
        %4278 = vmatprep.mubr.f32.mxu0 0.0
        %4279 = vmatmul.mubr.f32.gmra.mrb[0].mxu0 %v4179
        %v4280 = vpop.f32.mrb[0].mxu0
        %v4281 = vadd.f32 0.0, %v4280
        %v4282 = vpop.f32.mrb[0].mxu0
        %4283 = vmatprep.mubr.f32.mxu0 0.0
        %4284 = vmatmul.mubr.f32.gmra.mrb[0].mxu0 %v4182
        %v4285 = vpop.f32.mrb[0].mxu0
        %v4286 = vadd.f32 0.0, %v4285
        %v4287 = vpop.f32.mrb[0].mxu0
        %4288 = vdwg.mxu0
        %v4290 = vsel %vm452, %v4134, 0
        %v4293 = vsel %vm452, %v4135, 0
        %v4296 = vsel %vm452, %v4136, 0
        %v4299 = vsel %vm452, %v4137, 0
        %v4302 = vsel %vm452, %v4138, 0
        %v4305 = vsel %vm452, %v4139, 0
        %v4308 = vsel %vm452, %v4140, 0
        %v4311 = vsel %vm452, %v4141, 0
        %4313 = vmatprep.subr.mxu0 0.0
        %4314 = vmatpush1.msra.mxu0 %v4143
        %4315 = vmatprep.subr.mxu0 0.0
        %4316 = vmatpush1.msra.mxu0 %v4144
        %4317 = vmatprep.subr.mxu0 0.0
        %4318 = vmatpush1.msra.mxu0 %v4145
        %4319 = vmatprep.subr.mxu0 0.0
        %4320 = vmatpush1.msra.mxu0 %v4146
        %4321 = vmatprep.subr.mxu0 0.0
        %4322 = vmatpush1.msra.mxu0 0.0
        %4323 = vmatprep.subr.mxu0 0.0
        %4324 = vmatpush1.msra.mxu0 0.0
        %4325 = vmatprep.subr.mxu0 0.0
        %4326 = vmatpush1.msra.mxu0 0.0
        %4327 = vmatprep.subr.mxu0 0.0
        %4328 = vmatpush1.msra.mxu0 0.0
        %4329 = vmatprep.subr.mxu0 0.0
        %4330 = vmatpush1.msra.mxu0 0.0
        %4331 = vmatprep.subr.mxu0 0.0
        %4332 = vmatpush1.msra.mxu0 0.0
        %4333 = vmatprep.subr.mxu0 0.0
        %4334 = vmatpush1.msra.mxu0 0.0
        %4335 = vmatprep.subr.mxu0 0.0
        %4336 = vmatpush1.msra.mxu0 0.0
        %4337 = vmatprep.subr.mxu0 0.0
        %4338 = vmatpush1.msra.mxu0 0.0
        %4339 = vmatprep.subr.mxu0 0.0
        %4340 = vmatpush1.msra.mxu0 0.0
        %4341 = vmatprep.subr.mxu0 0.0
        %4342 = vmatpush1.msra.mxu0 0.0
        %4343 = vmatprep.subr.mxu0 0.0
        %4344 = vmatpush1.msra.mxu0 0.0
        %4345 = vmatprep.subr.mxu0 0.0
        %4346 = vmatpush1.msra.mxu0 0.0
        %4347 = vmatprep.subr.mxu0 0.0
        %4348 = vmatpush1.msra.mxu0 0.0
        %4349 = vmatprep.subr.mxu0 0.0
        %4350 = vmatpush1.msra.mxu0 0.0
        %4351 = vmatprep.subr.mxu0 0.0
        %4352 = vmatpush1.msra.mxu0 0.0
        %4353 = vmatprep.subr.mxu0 0.0
        %4354 = vmatpush1.msra.mxu0 0.0
        %4355 = vmatprep.subr.mxu0 0.0
        %4356 = vmatpush1.msra.mxu0 0.0
        %4357 = vmatprep.subr.mxu0 0.0
        %4358 = vmatpush1.msra.mxu0 0.0
        %4359 = vmatprep.subr.mxu0 0.0
        %4360 = vmatpush1.msra.mxu0 0.0
        %4361 = vmatprep.subr.mxu0 0.0
        %4362 = vmatpush1.msra.mxu0 0.0
        %4363 = vmatprep.subr.mxu0 0.0
        %4364 = vmatpush1.msra.mxu0 0.0
        %4365 = vmatprep.subr.mxu0 0.0
        %4366 = vmatpush1.msra.mxu0 0.0
        %4367 = vmatprep.subr.mxu0 0.0
        %4368 = vmatpush1.msra.mxu0 0.0
        %4369 = vmatprep.subr.mxu0 0.0
        %4370 = vmatpush1.msra.mxu0 0.0
        %4371 = vmatprep.subr.mxu0 0.0
        %4372 = vmatpush1.msra.mxu0 0.0
        %4373 = vmatprep.subr.mxu0 0.0
        %4374 = vmatpush1.msra.mxu0 0.0
        %4375 = vmatprep.subr.mxu0 0.0
        %4376 = vmatpush1.msra.mxu0 0.0
        %4377 = vmatprep.mubr.f32.mxu0 0.0
        %4378 = vmatmul.mubr.f32.gmra.mrb[0].mxu0 %v4290
        %v4379 = vpop.f32.mrb[0].mxu0
        %v4380 = vadd.f32 %v4251, %v4379
        %v4381 = vpop.f32.mrb[0].mxu0
        %4382 = vmatprep.mubr.f32.mxu0 0.0
        %4383 = vmatmul.mubr.f32.gmra.mrb[0].mxu0 %v4293
        %v4384 = vpop.f32.mrb[0].mxu0
        %v4385 = vadd.f32 %v4256, %v4384
        %v4386 = vpop.f32.mrb[0].mxu0
        %4387 = vmatprep.mubr.f32.mxu0 0.0
        %4388 = vmatmul.mubr.f32.gmra.mrb[0].mxu0 %v4296
        %v4389 = vpop.f32.mrb[0].mxu0
        %v4390 = vadd.f32 %v4261, %v4389
        %v4391 = vpop.f32.mrb[0].mxu0
        %4392 = vmatprep.mubr.f32.mxu0 0.0
        %4393 = vmatmul.mubr.f32.gmra.mrb[0].mxu0 %v4299
        %v4394 = vpop.f32.mrb[0].mxu0
        %v4395 = vadd.f32 %v4266, %v4394
        %v4396 = vpop.f32.mrb[0].mxu0
        %4397 = vmatprep.mubr.f32.mxu0 0.0
        %4398 = vmatmul.mubr.f32.gmra.mrb[0].mxu0 %v4302
        %v4399 = vpop.f32.mrb[0].mxu0
        %v4400 = vadd.f32 %v4271, %v4399
        %v4401 = vpop.f32.mrb[0].mxu0
        %4402 = vmatprep.mubr.f32.mxu0 0.0
        %4403 = vmatmul.mubr.f32.gmra.mrb[0].mxu0 %v4305
        %v4404 = vpop.f32.mrb[0].mxu0
        %v4405 = vadd.f32 %v4276, %v4404
        %v4406 = vpop.f32.mrb[0].mxu0
        %4407 = vmatprep.mubr.f32.mxu0 0.0
        %4408 = vmatmul.mubr.f32.gmra.mrb[0].mxu0 %v4308
        %v4409 = vpop.f32.mrb[0].mxu0
        %v4410 = vadd.f32 %v4281, %v4409
        %v4411 = vpop.f32.mrb[0].mxu0
        %4412 = vmatprep.mubr.f32.mxu0 0.0
        %4413 = vmatmul.mubr.f32.gmra.mrb[0].mxu0 %v4311
        %v4414 = vpop.f32.mrb[0].mxu0
        %v4415 = vadd.f32 %v4286, %v4414
        %v4416 = vpop.f32.mrb[0].mxu0
        %4417 = vdwg.mxu0
        %v4418 = vld [vmem:[#allocation3 + $0x2] sm:$0xff]
        %v4419 = vld [vmem:[#allocation3 + $0x12] sm:$0xff]
        %v4420 = vld [vmem:[#allocation3 + $0x22] sm:$0xff]
        %v4421 = vld [vmem:[#allocation3 + $0x32] sm:$0xff]
        %v4422 = vld [vmem:[#allocation3 + $0x42] sm:$0xff]
        %v4423 = vld [vmem:[#allocation3 + $0x52] sm:$0xff]
        %v4424 = vld [vmem:[#allocation3 + $0x62] sm:$0xff]
        %v4425 = vld [vmem:[#allocation3 + $0x72] sm:$0xff]
        %s4426 = scalar_lea.vmem %s3, 352
        %v4427 = vld [vmem:[%s4426] sm:$0xff]
        %v4428 = vld [vmem:[%s4426 + $0x8] sm:$0xff]
        %v4429 = vld [vmem:[%s4426 + $0x10] sm:$0xff]
        %v4430 = vld [vmem:[%s4426 + $0x18] sm:$0xff]
        %v4432 = vsel %vm452, %v4418, 0
        %v4435 = vsel %vm452, %v4419, 0
        %v4438 = vsel %vm452, %v4420, 0
        %v4441 = vsel %vm452, %v4421, 0
        %v4444 = vsel %vm452, %v4422, 0
        %v4447 = vsel %vm452, %v4423, 0
        %v4450 = vsel %vm452, %v4424, 0
        %v4453 = vsel %vm452, %v4425, 0
        %4455 = vmatprep.subr.mxu0 0.0
        %4456 = vmatpush1.msra.mxu0 %v4427
        %4457 = vmatprep.subr.mxu0 0.0
        %4458 = vmatpush1.msra.mxu0 %v4428
        %4459 = vmatprep.subr.mxu0 0.0
        %4460 = vmatpush1.msra.mxu0 %v4429
        %4461 = vmatprep.subr.mxu0 0.0
        %4462 = vmatpush1.msra.mxu0 %v4430
        %4463 = vmatprep.subr.mxu0 0.0
        %4464 = vmatpush1.msra.mxu0 0.0
        %4465 = vmatprep.subr.mxu0 0.0
        %4466 = vmatpush1.msra.mxu0 0.0
        %4467 = vmatprep.subr.mxu0 0.0
        %4468 = vmatpush1.msra.mxu0 0.0
        %4469 = vmatprep.subr.mxu0 0.0
        %4470 = vmatpush1.msra.mxu0 0.0
        %4471 = vmatprep.subr.mxu0 0.0
        %4472 = vmatpush1.msra.mxu0 0.0
        %4473 = vmatprep.subr.mxu0 0.0
        %4474 = vmatpush1.msra.mxu0 0.0
        %4475 = vmatprep.subr.mxu0 0.0
        %4476 = vmatpush1.msra.mxu0 0.0
        %4477 = vmatprep.subr.mxu0 0.0
        %4478 = vmatpush1.msra.mxu0 0.0
        %4479 = vmatprep.subr.mxu0 0.0
        %4480 = vmatpush1.msra.mxu0 0.0
        %4481 = vmatprep.subr.mxu0 0.0
        %4482 = vmatpush1.msra.mxu0 0.0
        %4483 = vmatprep.subr.mxu0 0.0
        %4484 = vmatpush1.msra.mxu0 0.0
        %4485 = vmatprep.subr.mxu0 0.0
        %4486 = vmatpush1.msra.mxu0 0.0
        %4487 = vmatprep.subr.mxu0 0.0
        %4488 = vmatpush1.msra.mxu0 0.0
        %4489 = vmatprep.subr.mxu0 0.0
        %4490 = vmatpush1.msra.mxu0 0.0
        %4491 = vmatprep.subr.mxu0 0.0
        %4492 = vmatpush1.msra.mxu0 0.0
        %4493 = vmatprep.subr.mxu0 0.0
        %4494 = vmatpush1.msra.mxu0 0.0
        %4495 = vmatprep.subr.mxu0 0.0
        %4496 = vmatpush1.msra.mxu0 0.0
        %4497 = vmatprep.subr.mxu0 0.0
        %4498 = vmatpush1.msra.mxu0 0.0
        %4499 = vmatprep.subr.mxu0 0.0
        %4500 = vmatpush1.msra.mxu0 0.0
        %4501 = vmatprep.subr.mxu0 0.0
        %4502 = vmatpush1.msra.mxu0 0.0
        %4503 = vmatprep.subr.mxu0 0.0
        %4504 = vmatpush1.msra.mxu0 0.0
        %4505 = vmatprep.subr.mxu0 0.0
        %4506 = vmatpush1.msra.mxu0 0.0
        %4507 = vmatprep.subr.mxu0 0.0
        %4508 = vmatpush1.msra.mxu0 0.0
        %4509 = vmatprep.subr.mxu0 0.0
        %4510 = vmatpush1.msra.mxu0 0.0
        %4511 = vmatprep.subr.mxu0 0.0
        %4512 = vmatpush1.msra.mxu0 0.0
        %4513 = vmatprep.subr.mxu0 0.0
        %4514 = vmatpush1.msra.mxu0 0.0
        %4515 = vmatprep.subr.mxu0 0.0
        %4516 = vmatpush1.msra.mxu0 0.0
        %4517 = vmatprep.subr.mxu0 0.0
        %4518 = vmatpush1.msra.mxu0 0.0
        %4519 = vmatprep.mubr.f32.mxu0 0.0
        %4520 = vmatmul.mubr.f32.gmra.mrb[0].mxu0 %v4432
        %v4521 = vpop.f32.mrb[0].mxu0
        %v4522 = vadd.f32 0.0, %v4521
        %v4523 = vpop.f32.mrb[0].mxu0
        %4524 = vmatprep.mubr.f32.mxu0 0.0
        %4525 = vmatmul.mubr.f32.gmra.mrb[0].mxu0 %v4435
        %v4526 = vpop.f32.mrb[0].mxu0
        %v4527 = vadd.f32 0.0, %v4526
        %v4528 = vpop.f32.mrb[0].mxu0
        %4529 = vmatprep.mubr.f32.mxu0 0.0
        %4530 = vmatmul.mubr.f32.gmra.mrb[0].mxu0 %v4438
        %v4531 = vpop.f32.mrb[0].mxu0
        %v4532 = vadd.f32 0.0, %v4531
        %v4533 = vpop.f32.mrb[0].mxu0
        %4534 = vmatprep.mubr.f32.mxu0 0.0
        %4535 = vmatmul.mubr.f32.gmra.mrb[0].mxu0 %v4441
        %v4536 = vpop.f32.mrb[0].mxu0
        %v4537 = vadd.f32 0.0, %v4536
        %v4538 = vpop.f32.mrb[0].mxu0
        %4539 = vmatprep.mubr.f32.mxu0 0.0
        %4540 = vmatmul.mubr.f32.gmra.mrb[0].mxu0 %v4444
        %v4541 = vpop.f32.mrb[0].mxu0
        %v4542 = vadd.f32 0.0, %v4541
        %v4543 = vpop.f32.mrb[0].mxu0
        %4544 = vmatprep.mubr.f32.mxu0 0.0
        %4545 = vmatmul.mubr.f32.gmra.mrb[0].mxu0 %v4447
        %v4546 = vpop.f32.mrb[0].mxu0
        %v4547 = vadd.f32 0.0, %v4546
        %v4548 = vpop.f32.mrb[0].mxu0
        %4549 = vmatprep.mubr.f32.mxu0 0.0
        %4550 = vmatmul.mubr.f32.gmra.mrb[0].mxu0 %v4450
        %v4551 = vpop.f32.mrb[0].mxu0
        %v4552 = vadd.f32 0.0, %v4551
        %v4553 = vpop.f32.mrb[0].mxu0
        %4554 = vmatprep.mubr.f32.mxu0 0.0
        %4555 = vmatmul.mubr.f32.gmra.mrb[0].mxu0 %v4453
        %v4556 = vpop.f32.mrb[0].mxu0
        %v4557 = vadd.f32 0.0, %v4556
        %v4558 = vpop.f32.mrb[0].mxu0
        %4559 = vdwg.mxu0
        %v4560 = vadd.f32 %v4380, %v4522
        %v4561 = vadd.f32 %v4385, %v4527
        %v4562 = vadd.f32 %v4390, %v4532
        %v4563 = vadd.f32 %v4395, %v4537
        %v4564 = vadd.f32 %v4400, %v4542
        %v4565 = vadd.f32 %v4405, %v4547
        %v4566 = vadd.f32 %v4410, %v4552
        %v4567 = vadd.f32 %v4415, %v4557
        %v4568 = vld [vmem:[%s4125] sm:$0xff]
        %v4569 = vld [vmem:[%s4125 + $0x10] sm:$0xff]
        %v4570 = vld [vmem:[%s4125 + $0x20] sm:$0xff]
        %v4571 = vld [vmem:[%s4125 + $0x30] sm:$0xff]
        %v4572 = vld [vmem:[%s4125 + $0x40] sm:$0xff]
        %v4573 = vld [vmem:[%s4125 + $0x50] sm:$0xff]
        %v4574 = vld [vmem:[%s4125 + $0x60] sm:$0xff]
        %v4575 = vld [vmem:[%s4125 + $0x70] sm:$0xff]
        %s4576 = scalar_lea.vmem %s3, 384
        %v4577 = vld [vmem:[%s4576] sm:$0xff]
        %v4578 = vld [vmem:[%s4576 + $0x8] sm:$0xff]
        %v4579 = vld [vmem:[%s4576 + $0x10] sm:$0xff]
        %v4580 = vld [vmem:[%s4576 + $0x18] sm:$0xff]
        %v4582 = vsel %vm452, %v4568, 0
        %v4585 = vsel %vm452, %v4569, 0
        %v4588 = vsel %vm452, %v4570, 0
        %v4591 = vsel %vm452, %v4571, 0
        %v4594 = vsel %vm452, %v4572, 0
        %v4597 = vsel %vm452, %v4573, 0
        %v4600 = vsel %vm452, %v4574, 0
        %v4603 = vsel %vm452, %v4575, 0
        %4605 = vmatprep.subr.mxu0 0.0
        %4606 = vmatpush1.msra.mxu0 %v4577
        %4607 = vmatprep.subr.mxu0 0.0
        %4608 = vmatpush1.msra.mxu0 %v4578
        %4609 = vmatprep.subr.mxu0 0.0
        %4610 = vmatpush1.msra.mxu0 %v4579
        %4611 = vmatprep.subr.mxu0 0.0
        %4612 = vmatpush1.msra.mxu0 %v4580
        %4613 = vmatprep.subr.mxu0 0.0
        %4614 = vmatpush1.msra.mxu0 0.0
        %4615 = vmatprep.subr.mxu0 0.0
        %4616 = vmatpush1.msra.mxu0 0.0
        %4617 = vmatprep.subr.mxu0 0.0
        %4618 = vmatpush1.msra.mxu0 0.0
        %4619 = vmatprep.subr.mxu0 0.0
        %4620 = vmatpush1.msra.mxu0 0.0
        %4621 = vmatprep.subr.mxu0 0.0
        %4622 = vmatpush1.msra.mxu0 0.0
        %4623 = vmatprep.subr.mxu0 0.0
        %4624 = vmatpush1.msra.mxu0 0.0
        %4625 = vmatprep.subr.mxu0 0.0
        %4626 = vmatpush1.msra.mxu0 0.0
        %4627 = vmatprep.subr.mxu0 0.0
        %4628 = vmatpush1.msra.mxu0 0.0
        %4629 = vmatprep.subr.mxu0 0.0
        %4630 = vmatpush1.msra.mxu0 0.0
        %4631 = vmatprep.subr.mxu0 0.0
        %4632 = vmatpush1.msra.mxu0 0.0
        %4633 = vmatprep.subr.mxu0 0.0
        %4634 = vmatpush1.msra.mxu0 0.0
        %4635 = vmatprep.subr.mxu0 0.0
        %4636 = vmatpush1.msra.mxu0 0.0
        %4637 = vmatprep.subr.mxu0 0.0
        %4638 = vmatpush1.msra.mxu0 0.0
        %4639 = vmatprep.subr.mxu0 0.0
        %4640 = vmatpush1.msra.mxu0 0.0
        %4641 = vmatprep.subr.mxu0 0.0
        %4642 = vmatpush1.msra.mxu0 0.0
        %4643 = vmatprep.subr.mxu0 0.0
        %4644 = vmatpush1.msra.mxu0 0.0
        %4645 = vmatprep.subr.mxu0 0.0
        %4646 = vmatpush1.msra.mxu0 0.0
        %4647 = vmatprep.subr.mxu0 0.0
        %4648 = vmatpush1.msra.mxu0 0.0
        %4649 = vmatprep.subr.mxu0 0.0
        %4650 = vmatpush1.msra.mxu0 0.0
        %4651 = vmatprep.subr.mxu0 0.0
        %4652 = vmatpush1.msra.mxu0 0.0
        %4653 = vmatprep.subr.mxu0 0.0
        %4654 = vmatpush1.msra.mxu0 0.0
        %4655 = vmatprep.subr.mxu0 0.0
        %4656 = vmatpush1.msra.mxu0 0.0
        %4657 = vmatprep.subr.mxu0 0.0
        %4658 = vmatpush1.msra.mxu0 0.0
        %4659 = vmatprep.subr.mxu0 0.0
        %4660 = vmatpush1.msra.mxu0 0.0
        %4661 = vmatprep.subr.mxu0 0.0
        %4662 = vmatpush1.msra.mxu0 0.0
        %4663 = vmatprep.subr.mxu0 0.0
        %4664 = vmatpush1.msra.mxu0 0.0
        %4665 = vmatprep.subr.mxu0 0.0
        %4666 = vmatpush1.msra.mxu0 0.0
        %4667 = vmatprep.subr.mxu0 0.0
        %4668 = vmatpush1.msra.mxu0 0.0
        %4669 = vmatprep.mubr.f32.mxu0 0.0
        %4670 = vmatmul.mubr.f32.gmra.mrb[0].mxu0 %v4582
        %v4671 = vpop.f32.mrb[0].mxu0
        %v4672 = vadd.f32 0.0, %v4671
        %v4673 = vpop.f32.mrb[0].mxu0
        %4674 = vmatprep.mubr.f32.mxu0 0.0
        %4675 = vmatmul.mubr.f32.gmra.mrb[0].mxu0 %v4585
        %v4676 = vpop.f32.mrb[0].mxu0
        %v4677 = vadd.f32 0.0, %v4676
        %v4678 = vpop.f32.mrb[0].mxu0
        %4679 = vmatprep.mubr.f32.mxu0 0.0
        %4680 = vmatmul.mubr.f32.gmra.mrb[0].mxu0 %v4588
        %v4681 = vpop.f32.mrb[0].mxu0
        %v4682 = vadd.f32 0.0, %v4681
        %v4683 = vpop.f32.mrb[0].mxu0
        %4684 = vmatprep.mubr.f32.mxu0 0.0
        %4685 = vmatmul.mubr.f32.gmra.mrb[0].mxu0 %v4591
        %v4686 = vpop.f32.mrb[0].mxu0
        %v4687 = vadd.f32 0.0, %v4686
        %v4688 = vpop.f32.mrb[0].mxu0
        %4689 = vmatprep.mubr.f32.mxu0 0.0
        %4690 = vmatmul.mubr.f32.gmra.mrb[0].mxu0 %v4594
        %v4691 = vpop.f32.mrb[0].mxu0
        %v4692 = vadd.f32 0.0, %v4691
        %v4693 = vpop.f32.mrb[0].mxu0
        %4694 = vmatprep.mubr.f32.mxu0 0.0
        %4695 = vmatmul.mubr.f32.gmra.mrb[0].mxu0 %v4597
        %v4696 = vpop.f32.mrb[0].mxu0
        %v4697 = vadd.f32 0.0, %v4696
        %v4698 = vpop.f32.mrb[0].mxu0
        %4699 = vmatprep.mubr.f32.mxu0 0.0
        %4700 = vmatmul.mubr.f32.gmra.mrb[0].mxu0 %v4600
        %v4701 = vpop.f32.mrb[0].mxu0
        %v4702 = vadd.f32 0.0, %v4701
        %v4703 = vpop.f32.mrb[0].mxu0
        %4704 = vmatprep.mubr.f32.mxu0 0.0
        %4705 = vmatmul.mubr.f32.gmra.mrb[0].mxu0 %v4603
        %v4706 = vpop.f32.mrb[0].mxu0
        %v4707 = vadd.f32 0.0, %v4706
        %v4708 = vpop.f32.mrb[0].mxu0
        %4709 = vdwg.mxu0
        %v4710 = vadd.f32 %v4560, %v4672
        %v4711 = vadd.f32 %v4561, %v4677
        %v4712 = vadd.f32 %v4562, %v4682
        %v4713 = vadd.f32 %v4563, %v4687
        %v4714 = vadd.f32 %v4564, %v4692
        %v4715 = vadd.f32 %v4565, %v4697
        %v4716 = vadd.f32 %v4566, %v4702
        %v4717 = vadd.f32 %v4567, %v4707
        %v4718 = vld [vmem:[%s4125 + $0x1] sm:$0xff]
        %v4719 = vld [vmem:[%s4125 + $0x11] sm:$0xff]
        %v4720 = vld [vmem:[%s4125 + $0x21] sm:$0xff]
        %v4721 = vld [vmem:[%s4125 + $0x31] sm:$0xff]
        %v4722 = vld [vmem:[%s4125 + $0x41] sm:$0xff]
        %v4723 = vld [vmem:[%s4125 + $0x51] sm:$0xff]
        %v4724 = vld [vmem:[%s4125 + $0x61] sm:$0xff]
        %v4725 = vld [vmem:[%s4125 + $0x71] sm:$0xff]
        %s4726 = scalar_lea.vmem %s3, 416
        %v4727 = vld [vmem:[%s4726] sm:$0xff]
        %v4728 = vld [vmem:[%s4726 + $0x8] sm:$0xff]
        %v4729 = vld [vmem:[%s4726 + $0x10] sm:$0xff]
        %v4730 = vld [vmem:[%s4726 + $0x18] sm:$0xff]
        %v4732 = vsel %vm452, %v4718, 0
        %v4735 = vsel %vm452, %v4719, 0
        %v4738 = vsel %vm452, %v4720, 0
        %v4741 = vsel %vm452, %v4721, 0
        %v4744 = vsel %vm452, %v4722, 0
        %v4747 = vsel %vm452, %v4723, 0
        %v4750 = vsel %vm452, %v4724, 0
        %v4753 = vsel %vm452, %v4725, 0
        %4755 = vmatprep.subr.mxu0 0.0
        %4756 = vmatpush1.msra.mxu0 %v4727
        %4757 = vmatprep.subr.mxu0 0.0
        %4758 = vmatpush1.msra.mxu0 %v4728
        %4759 = vmatprep.subr.mxu0 0.0
        %4760 = vmatpush1.msra.mxu0 %v4729
        %4761 = vmatprep.subr.mxu0 0.0
        %4762 = vmatpush1.msra.mxu0 %v4730
        %4763 = vmatprep.subr.mxu0 0.0
        %4764 = vmatpush1.msra.mxu0 0.0
        %4765 = vmatprep.subr.mxu0 0.0
        %4766 = vmatpush1.msra.mxu0 0.0
        %4767 = vmatprep.subr.mxu0 0.0
        %4768 = vmatpush1.msra.mxu0 0.0
        %4769 = vmatprep.subr.mxu0 0.0
        %4770 = vmatpush1.msra.mxu0 0.0
        %4771 = vmatprep.subr.mxu0 0.0
        %4772 = vmatpush1.msra.mxu0 0.0
        %4773 = vmatprep.subr.mxu0 0.0
        %4774 = vmatpush1.msra.mxu0 0.0
        %4775 = vmatprep.subr.mxu0 0.0
        %4776 = vmatpush1.msra.mxu0 0.0
        %4777 = vmatprep.subr.mxu0 0.0
        %4778 = vmatpush1.msra.mxu0 0.0
        %4779 = vmatprep.subr.mxu0 0.0
        %4780 = vmatpush1.msra.mxu0 0.0
        %4781 = vmatprep.subr.mxu0 0.0
        %4782 = vmatpush1.msra.mxu0 0.0
        %4783 = vmatprep.subr.mxu0 0.0
        %4784 = vmatpush1.msra.mxu0 0.0
        %4785 = vmatprep.subr.mxu0 0.0
        %4786 = vmatpush1.msra.mxu0 0.0
        %4787 = vmatprep.subr.mxu0 0.0
        %4788 = vmatpush1.msra.mxu0 0.0
        %4789 = vmatprep.subr.mxu0 0.0
        %4790 = vmatpush1.msra.mxu0 0.0
        %4791 = vmatprep.subr.mxu0 0.0
        %4792 = vmatpush1.msra.mxu0 0.0
        %4793 = vmatprep.subr.mxu0 0.0
        %4794 = vmatpush1.msra.mxu0 0.0
        %4795 = vmatprep.subr.mxu0 0.0
        %4796 = vmatpush1.msra.mxu0 0.0
        %4797 = vmatprep.subr.mxu0 0.0
        %4798 = vmatpush1.msra.mxu0 0.0
        %4799 = vmatprep.subr.mxu0 0.0
        %4800 = vmatpush1.msra.mxu0 0.0
        %4801 = vmatprep.subr.mxu0 0.0
        %4802 = vmatpush1.msra.mxu0 0.0
        %4803 = vmatprep.subr.mxu0 0.0
        %4804 = vmatpush1.msra.mxu0 0.0
        %4805 = vmatprep.subr.mxu0 0.0
        %4806 = vmatpush1.msra.mxu0 0.0
        %4807 = vmatprep.subr.mxu0 0.0
        %4808 = vmatpush1.msra.mxu0 0.0
        %4809 = vmatprep.subr.mxu0 0.0
        %4810 = vmatpush1.msra.mxu0 0.0
        %4811 = vmatprep.subr.mxu0 0.0
        %4812 = vmatpush1.msra.mxu0 0.0
        %4813 = vmatprep.subr.mxu0 0.0
        %4814 = vmatpush1.msra.mxu0 0.0
        %4815 = vmatprep.subr.mxu0 0.0
        %4816 = vmatpush1.msra.mxu0 0.0
        %4817 = vmatprep.subr.mxu0 0.0
        %4818 = vmatpush1.msra.mxu0 0.0
        %4819 = vmatprep.mubr.f32.mxu0 0.0
        %4820 = vmatmul.mubr.f32.gmra.mrb[0].mxu0 %v4732
        %v4821 = vpop.f32.mrb[0].mxu0
        %v4822 = vadd.f32 0.0, %v4821
        %v4823 = vpop.f32.mrb[0].mxu0
        %4824 = vmatprep.mubr.f32.mxu0 0.0
        %4825 = vmatmul.mubr.f32.gmra.mrb[0].mxu0 %v4735
        %v4826 = vpop.f32.mrb[0].mxu0
        %v4827 = vadd.f32 0.0, %v4826
        %v4828 = vpop.f32.mrb[0].mxu0
        %4829 = vmatprep.mubr.f32.mxu0 0.0
        %4830 = vmatmul.mubr.f32.gmra.mrb[0].mxu0 %v4738
        %v4831 = vpop.f32.mrb[0].mxu0
        %v4832 = vadd.f32 0.0, %v4831
        %v4833 = vpop.f32.mrb[0].mxu0
        %4834 = vmatprep.mubr.f32.mxu0 0.0
        %4835 = vmatmul.mubr.f32.gmra.mrb[0].mxu0 %v4741
        %v4836 = vpop.f32.mrb[0].mxu0
        %v4837 = vadd.f32 0.0, %v4836
        %v4838 = vpop.f32.mrb[0].mxu0
        %4839 = vmatprep.mubr.f32.mxu0 0.0
        %4840 = vmatmul.mubr.f32.gmra.mrb[0].mxu0 %v4744
        %v4841 = vpop.f32.mrb[0].mxu0
        %v4842 = vadd.f32 0.0, %v4841
        %v4843 = vpop.f32.mrb[0].mxu0
        %4844 = vmatprep.mubr.f32.mxu0 0.0
        %4845 = vmatmul.mubr.f32.gmra.mrb[0].mxu0 %v4747
        %v4846 = vpop.f32.mrb[0].mxu0
        %v4847 = vadd.f32 0.0, %v4846
        %v4848 = vpop.f32.mrb[0].mxu0
        %4849 = vmatprep.mubr.f32.mxu0 0.0
        %4850 = vmatmul.mubr.f32.gmra.mrb[0].mxu0 %v4750
        %v4851 = vpop.f32.mrb[0].mxu0
        %v4852 = vadd.f32 0.0, %v4851
        %v4853 = vpop.f32.mrb[0].mxu0
        %4854 = vmatprep.mubr.f32.mxu0 0.0
        %4855 = vmatmul.mubr.f32.gmra.mrb[0].mxu0 %v4753
        %v4856 = vpop.f32.mrb[0].mxu0
        %v4857 = vadd.f32 0.0, %v4856
        %v4858 = vpop.f32.mrb[0].mxu0
        %4859 = vdwg.mxu0
        %v4860 = vadd.f32 %v4710, %v4822
        %v4861 = vadd.f32 %v4711, %v4827
        %v4862 = vadd.f32 %v4712, %v4832
        %v4863 = vadd.f32 %v4713, %v4837
        %v4864 = vadd.f32 %v4714, %v4842
        %v4865 = vadd.f32 %v4715, %v4847
        %v4866 = vadd.f32 %v4716, %v4852
        %v4867 = vadd.f32 %v4717, %v4857
        %v4868 = vld [vmem:[%s4125 + $0x2] sm:$0xff]
        %v4869 = vld [vmem:[%s4125 + $0x12] sm:$0xff]
        %v4870 = vld [vmem:[%s4125 + $0x22] sm:$0xff]
        %v4871 = vld [vmem:[%s4125 + $0x32] sm:$0xff]
        %v4872 = vld [vmem:[%s4125 + $0x42] sm:$0xff]
        %v4873 = vld [vmem:[%s4125 + $0x52] sm:$0xff]
        %v4874 = vld [vmem:[%s4125 + $0x62] sm:$0xff]
        %v4875 = vld [vmem:[%s4125 + $0x72] sm:$0xff]
        %s4876 = scalar_lea.vmem %s3, 448
        %v4877 = vld [vmem:[%s4876] sm:$0xff]
        %v4878 = vld [vmem:[%s4876 + $0x8] sm:$0xff]
        %v4879 = vld [vmem:[%s4876 + $0x10] sm:$0xff]
        %v4880 = vld [vmem:[%s4876 + $0x18] sm:$0xff]
        %v4882 = vsel %vm452, %v4868, 0
        %v4885 = vsel %vm452, %v4869, 0
        %v4888 = vsel %vm452, %v4870, 0
        %v4891 = vsel %vm452, %v4871, 0
        %v4894 = vsel %vm452, %v4872, 0
        %v4897 = vsel %vm452, %v4873, 0
        %v4900 = vsel %vm452, %v4874, 0
        %v4903 = vsel %vm452, %v4875, 0
        %4905 = vmatprep.subr.mxu0 0.0
        %4906 = vmatpush1.msra.mxu0 %v4877
        %4907 = vmatprep.subr.mxu0 0.0
        %4908 = vmatpush1.msra.mxu0 %v4878
        %4909 = vmatprep.subr.mxu0 0.0
        %4910 = vmatpush1.msra.mxu0 %v4879
        %4911 = vmatprep.subr.mxu0 0.0
        %4912 = vmatpush1.msra.mxu0 %v4880
        %4913 = vmatprep.subr.mxu0 0.0
        %4914 = vmatpush1.msra.mxu0 0.0
        %4915 = vmatprep.subr.mxu0 0.0
        %4916 = vmatpush1.msra.mxu0 0.0
        %4917 = vmatprep.subr.mxu0 0.0
        %4918 = vmatpush1.msra.mxu0 0.0
        %4919 = vmatprep.subr.mxu0 0.0
        %4920 = vmatpush1.msra.mxu0 0.0
        %4921 = vmatprep.subr.mxu0 0.0
        %4922 = vmatpush1.msra.mxu0 0.0
        %4923 = vmatprep.subr.mxu0 0.0
        %4924 = vmatpush1.msra.mxu0 0.0
        %4925 = vmatprep.subr.mxu0 0.0
        %4926 = vmatpush1.msra.mxu0 0.0
        %4927 = vmatprep.subr.mxu0 0.0
        %4928 = vmatpush1.msra.mxu0 0.0
        %4929 = vmatprep.subr.mxu0 0.0
        %4930 = vmatpush1.msra.mxu0 0.0
        %4931 = vmatprep.subr.mxu0 0.0
        %4932 = vmatpush1.msra.mxu0 0.0
        %4933 = vmatprep.subr.mxu0 0.0
        %4934 = vmatpush1.msra.mxu0 0.0
        %4935 = vmatprep.subr.mxu0 0.0
        %4936 = vmatpush1.msra.mxu0 0.0
        %4937 = vmatprep.subr.mxu0 0.0
        %4938 = vmatpush1.msra.mxu0 0.0
        %4939 = vmatprep.subr.mxu0 0.0
        %4940 = vmatpush1.msra.mxu0 0.0
        %4941 = vmatprep.subr.mxu0 0.0
        %4942 = vmatpush1.msra.mxu0 0.0
        %4943 = vmatprep.subr.mxu0 0.0
        %4944 = vmatpush1.msra.mxu0 0.0
        %4945 = vmatprep.subr.mxu0 0.0
        %4946 = vmatpush1.msra.mxu0 0.0
        %4947 = vmatprep.subr.mxu0 0.0
        %4948 = vmatpush1.msra.mxu0 0.0
        %4949 = vmatprep.subr.mxu0 0.0
        %4950 = vmatpush1.msra.mxu0 0.0
        %4951 = vmatprep.subr.mxu0 0.0
        %4952 = vmatpush1.msra.mxu0 0.0
        %4953 = vmatprep.subr.mxu0 0.0
        %4954 = vmatpush1.msra.mxu0 0.0
        %4955 = vmatprep.subr.mxu0 0.0
        %4956 = vmatpush1.msra.mxu0 0.0
        %4957 = vmatprep.subr.mxu0 0.0
        %4958 = vmatpush1.msra.mxu0 0.0
        %4959 = vmatprep.subr.mxu0 0.0
        %4960 = vmatpush1.msra.mxu0 0.0
        %4961 = vmatprep.subr.mxu0 0.0
        %4962 = vmatpush1.msra.mxu0 0.0
        %4963 = vmatprep.subr.mxu0 0.0
        %4964 = vmatpush1.msra.mxu0 0.0
        %4965 = vmatprep.subr.mxu0 0.0
        %4966 = vmatpush1.msra.mxu0 0.0
        %4967 = vmatprep.subr.mxu0 0.0
        %4968 = vmatpush1.msra.mxu0 0.0
        %4969 = vmatprep.mubr.f32.mxu0 0.0
        %4970 = vmatmul.mubr.f32.gmra.mrb[0].mxu0 %v4882
        %v4971 = vpop.f32.mrb[0].mxu0
        %v4972 = vadd.f32 0.0, %v4971
        %v4973 = vpop.f32.mrb[0].mxu0
        %4974 = vmatprep.mubr.f32.mxu0 0.0
        %4975 = vmatmul.mubr.f32.gmra.mrb[0].mxu0 %v4885
        %v4976 = vpop.f32.mrb[0].mxu0
        %v4977 = vadd.f32 0.0, %v4976
        %v4978 = vpop.f32.mrb[0].mxu0
        %4979 = vmatprep.mubr.f32.mxu0 0.0
        %4980 = vmatmul.mubr.f32.gmra.mrb[0].mxu0 %v4888
        %v4981 = vpop.f32.mrb[0].mxu0
        %v4982 = vadd.f32 0.0, %v4981
        %v4983 = vpop.f32.mrb[0].mxu0
        %4984 = vmatprep.mubr.f32.mxu0 0.0
        %4985 = vmatmul.mubr.f32.gmra.mrb[0].mxu0 %v4891
        %v4986 = vpop.f32.mrb[0].mxu0
        %v4987 = vadd.f32 0.0, %v4986
        %v4988 = vpop.f32.mrb[0].mxu0
        %4989 = vmatprep.mubr.f32.mxu0 0.0
        %4990 = vmatmul.mubr.f32.gmra.mrb[0].mxu0 %v4894
        %v4991 = vpop.f32.mrb[0].mxu0
        %v4992 = vadd.f32 0.0, %v4991
        %v4993 = vpop.f32.mrb[0].mxu0
        %4994 = vmatprep.mubr.f32.mxu0 0.0
        %4995 = vmatmul.mubr.f32.gmra.mrb[0].mxu0 %v4897
        %v4996 = vpop.f32.mrb[0].mxu0
        %v4997 = vadd.f32 0.0, %v4996
        %v4998 = vpop.f32.mrb[0].mxu0
        %4999 = vmatprep.mubr.f32.mxu0 0.0
        %5000 = vmatmul.mubr.f32.gmra.mrb[0].mxu0 %v4900
        %v5001 = vpop.f32.mrb[0].mxu0
        %v5002 = vadd.f32 0.0, %v5001
        %v5003 = vpop.f32.mrb[0].mxu0
        %5004 = vmatprep.mubr.f32.mxu0 0.0
        %5005 = vmatmul.mubr.f32.gmra.mrb[0].mxu0 %v4903
        %v5006 = vpop.f32.mrb[0].mxu0
        %v5007 = vadd.f32 0.0, %v5006
        %v5008 = vpop.f32.mrb[0].mxu0
        %5009 = vdwg.mxu0
        %v5010 = vadd.f32 %v4860, %v4972
        %v5011 = vadd.f32 %v4861, %v4977
        %v5012 = vadd.f32 %v4862, %v4982
        %v5013 = vadd.f32 %v4863, %v4987
        %v5014 = vadd.f32 %v4864, %v4992
        %v5015 = vadd.f32 %v4865, %v4997
        %v5016 = vadd.f32 %v4866, %v5002
        %v5017 = vadd.f32 %v4867, %v5007
        %s5018 = scalar_lea.vmem [#allocation3], 32
        %v5019 = vld [vmem:[%s5018] sm:$0xff]
        %v5020 = vld [vmem:[%s5018 + $0x10] sm:$0xff]
        %v5021 = vld [vmem:[%s5018 + $0x20] sm:$0xff]
        %v5022 = vld [vmem:[%s5018 + $0x30] sm:$0xff]
        %v5023 = vld [vmem:[%s5018 + $0x40] sm:$0xff]
        %v5024 = vld [vmem:[%s5018 + $0x50] sm:$0xff]
        %v5025 = vld [vmem:[%s5018 + $0x60] sm:$0xff]
        %v5026 = vld [vmem:[%s5018 + $0x70] sm:$0xff]
        %s5027 = scalar_lea.vmem %s3, 480
        %v5028 = vld [vmem:[%s5027] sm:$0xff]
        %v5029 = vld [vmem:[%s5027 + $0x8] sm:$0xff]
        %v5030 = vld [vmem:[%s5027 + $0x10] sm:$0xff]
        %v5031 = vld [vmem:[%s5027 + $0x18] sm:$0xff]
        %v5033 = vsel %vm452, %v5019, 0
        %v5036 = vsel %vm452, %v5020, 0
        %v5039 = vsel %vm452, %v5021, 0
        %v5042 = vsel %vm452, %v5022, 0
        %v5045 = vsel %vm452, %v5023, 0
        %v5048 = vsel %vm452, %v5024, 0
        %v5051 = vsel %vm452, %v5025, 0
        %v5054 = vsel %vm452, %v5026, 0
        %5056 = vmatprep.subr.mxu0 0.0
        %5057 = vmatpush1.msra.mxu0 %v5028
        %5058 = vmatprep.subr.mxu0 0.0
        %5059 = vmatpush1.msra.mxu0 %v5029
        %5060 = vmatprep.subr.mxu0 0.0
        %5061 = vmatpush1.msra.mxu0 %v5030
        %5062 = vmatprep.subr.mxu0 0.0
        %5063 = vmatpush1.msra.mxu0 %v5031
        %5064 = vmatprep.subr.mxu0 0.0
        %5065 = vmatpush1.msra.mxu0 0.0
        %5066 = vmatprep.subr.mxu0 0.0
        %5067 = vmatpush1.msra.mxu0 0.0
        %5068 = vmatprep.subr.mxu0 0.0
        %5069 = vmatpush1.msra.mxu0 0.0
        %5070 = vmatprep.subr.mxu0 0.0
        %5071 = vmatpush1.msra.mxu0 0.0
        %5072 = vmatprep.subr.mxu0 0.0
        %5073 = vmatpush1.msra.mxu0 0.0
        %5074 = vmatprep.subr.mxu0 0.0
        %5075 = vmatpush1.msra.mxu0 0.0
        %5076 = vmatprep.subr.mxu0 0.0
        %5077 = vmatpush1.msra.mxu0 0.0
        %5078 = vmatprep.subr.mxu0 0.0
        %5079 = vmatpush1.msra.mxu0 0.0
        %5080 = vmatprep.subr.mxu0 0.0
        %5081 = vmatpush1.msra.mxu0 0.0
        %5082 = vmatprep.subr.mxu0 0.0
        %5083 = vmatpush1.msra.mxu0 0.0
        %5084 = vmatprep.subr.mxu0 0.0
        %5085 = vmatpush1.msra.mxu0 0.0
        %5086 = vmatprep.subr.mxu0 0.0
        %5087 = vmatpush1.msra.mxu0 0.0
        %5088 = vmatprep.subr.mxu0 0.0
        %5089 = vmatpush1.msra.mxu0 0.0
        %5090 = vmatprep.subr.mxu0 0.0
        %5091 = vmatpush1.msra.mxu0 0.0
        %5092 = vmatprep.subr.mxu0 0.0
        %5093 = vmatpush1.msra.mxu0 0.0
        %5094 = vmatprep.subr.mxu0 0.0
        %5095 = vmatpush1.msra.mxu0 0.0
        %5096 = vmatprep.subr.mxu0 0.0
        %5097 = vmatpush1.msra.mxu0 0.0
        %5098 = vmatprep.subr.mxu0 0.0
        %5099 = vmatpush1.msra.mxu0 0.0
        %5100 = vmatprep.subr.mxu0 0.0
        %5101 = vmatpush1.msra.mxu0 0.0
        %5102 = vmatprep.subr.mxu0 0.0
        %5103 = vmatpush1.msra.mxu0 0.0
        %5104 = vmatprep.subr.mxu0 0.0
        %5105 = vmatpush1.msra.mxu0 0.0
        %5106 = vmatprep.subr.mxu0 0.0
        %5107 = vmatpush1.msra.mxu0 0.0
        %5108 = vmatprep.subr.mxu0 0.0
        %5109 = vmatpush1.msra.mxu0 0.0
        %5110 = vmatprep.subr.mxu0 0.0
        %5111 = vmatpush1.msra.mxu0 0.0
        %5112 = vmatprep.subr.mxu0 0.0
        %5113 = vmatpush1.msra.mxu0 0.0
        %5114 = vmatprep.subr.mxu0 0.0
        %5115 = vmatpush1.msra.mxu0 0.0
        %5116 = vmatprep.subr.mxu0 0.0
        %5117 = vmatpush1.msra.mxu0 0.0
        %5118 = vmatprep.subr.mxu0 0.0
        %5119 = vmatpush1.msra.mxu0 0.0
        %5120 = vmatprep.mubr.f32.mxu0 0.0
        %5121 = vmatmul.mubr.f32.gmra.mrb[0].mxu0 %v5033
        %v5122 = vpop.f32.mrb[0].mxu0
        %v5123 = vadd.f32 0.0, %v5122
        %v5124 = vpop.f32.mrb[0].mxu0
        %5125 = vmatprep.mubr.f32.mxu0 0.0
        %5126 = vmatmul.mubr.f32.gmra.mrb[0].mxu0 %v5036
        %v5127 = vpop.f32.mrb[0].mxu0
        %v5128 = vadd.f32 0.0, %v5127
        %v5129 = vpop.f32.mrb[0].mxu0
        %5130 = vmatprep.mubr.f32.mxu0 0.0
        %5131 = vmatmul.mubr.f32.gmra.mrb[0].mxu0 %v5039
        %v5132 = vpop.f32.mrb[0].mxu0
        %v5133 = vadd.f32 0.0, %v5132
        %v5134 = vpop.f32.mrb[0].mxu0
        %5135 = vmatprep.mubr.f32.mxu0 0.0
        %5136 = vmatmul.mubr.f32.gmra.mrb[0].mxu0 %v5042
        %v5137 = vpop.f32.mrb[0].mxu0
        %v5138 = vadd.f32 0.0, %v5137
        %v5139 = vpop.f32.mrb[0].mxu0
        %5140 = vmatprep.mubr.f32.mxu0 0.0
        %5141 = vmatmul.mubr.f32.gmra.mrb[0].mxu0 %v5045
        %v5142 = vpop.f32.mrb[0].mxu0
        %v5143 = vadd.f32 0.0, %v5142
        %v5144 = vpop.f32.mrb[0].mxu0
        %5145 = vmatprep.mubr.f32.mxu0 0.0
        %5146 = vmatmul.mubr.f32.gmra.mrb[0].mxu0 %v5048
        %v5147 = vpop.f32.mrb[0].mxu0
        %v5148 = vadd.f32 0.0, %v5147
        %v5149 = vpop.f32.mrb[0].mxu0
        %5150 = vmatprep.mubr.f32.mxu0 0.0
        %5151 = vmatmul.mubr.f32.gmra.mrb[0].mxu0 %v5051
        %v5152 = vpop.f32.mrb[0].mxu0
        %v5153 = vadd.f32 0.0, %v5152
        %v5154 = vpop.f32.mrb[0].mxu0
        %5155 = vmatprep.mubr.f32.mxu0 0.0
        %5156 = vmatmul.mubr.f32.gmra.mrb[0].mxu0 %v5054
        %v5157 = vpop.f32.mrb[0].mxu0
        %v5158 = vadd.f32 0.0, %v5157
        %v5159 = vpop.f32.mrb[0].mxu0
        %5160 = vdwg.mxu0
        %v5161 = vadd.f32 %v5010, %v5123
        %v5162 = vadd.f32 %v5011, %v5128
        %v5163 = vadd.f32 %v5012, %v5133
        %v5164 = vadd.f32 %v5013, %v5138
        %v5165 = vadd.f32 %v5014, %v5143
        %v5166 = vadd.f32 %v5015, %v5148
        %v5167 = vadd.f32 %v5016, %v5153
        %v5168 = vadd.f32 %v5017, %v5158
        %v5169 = vld [vmem:[%s5018 + $0x1] sm:$0xff]
        %v5170 = vld [vmem:[%s5018 + $0x11] sm:$0xff]
        %v5171 = vld [vmem:[%s5018 + $0x21] sm:$0xff]
        %v5172 = vld [vmem:[%s5018 + $0x31] sm:$0xff]
        %v5173 = vld [vmem:[%s5018 + $0x41] sm:$0xff]
        %v5174 = vld [vmem:[%s5018 + $0x51] sm:$0xff]
        %v5175 = vld [vmem:[%s5018 + $0x61] sm:$0xff]
        %v5176 = vld [vmem:[%s5018 + $0x71] sm:$0xff]
        %s5177 = scalar_lea.vmem %s3, 512
        %v5178 = vld [vmem:[%s5177] sm:$0xff]
        %v5179 = vld [vmem:[%s5177 + $0x8] sm:$0xff]
        %v5180 = vld [vmem:[%s5177 + $0x10] sm:$0xff]
        %v5181 = vld [vmem:[%s5177 + $0x18] sm:$0xff]
        %v5183 = vsel %vm452, %v5169, 0
        %v5186 = vsel %vm452, %v5170, 0
        %v5189 = vsel %vm452, %v5171, 0
        %v5192 = vsel %vm452, %v5172, 0
        %v5195 = vsel %vm452, %v5173, 0
        %v5198 = vsel %vm452, %v5174, 0
        %v5201 = vsel %vm452, %v5175, 0
        %v5204 = vsel %vm452, %v5176, 0
        %5206 = vmatprep.subr.mxu0 0.0
        %5207 = vmatpush1.msra.mxu0 %v5178
        %5208 = vmatprep.subr.mxu0 0.0
        %5209 = vmatpush1.msra.mxu0 %v5179
        %5210 = vmatprep.subr.mxu0 0.0
        %5211 = vmatpush1.msra.mxu0 %v5180
        %5212 = vmatprep.subr.mxu0 0.0
        %5213 = vmatpush1.msra.mxu0 %v5181
        %5214 = vmatprep.subr.mxu0 0.0
        %5215 = vmatpush1.msra.mxu0 0.0
        %5216 = vmatprep.subr.mxu0 0.0
        %5217 = vmatpush1.msra.mxu0 0.0
        %5218 = vmatprep.subr.mxu0 0.0
        %5219 = vmatpush1.msra.mxu0 0.0
        %5220 = vmatprep.subr.mxu0 0.0
        %5221 = vmatpush1.msra.mxu0 0.0
        %5222 = vmatprep.subr.mxu0 0.0
        %5223 = vmatpush1.msra.mxu0 0.0
        %5224 = vmatprep.subr.mxu0 0.0
        %5225 = vmatpush1.msra.mxu0 0.0
        %5226 = vmatprep.subr.mxu0 0.0
        %5227 = vmatpush1.msra.mxu0 0.0
        %5228 = vmatprep.subr.mxu0 0.0
        %5229 = vmatpush1.msra.mxu0 0.0
        %5230 = vmatprep.subr.mxu0 0.0
        %5231 = vmatpush1.msra.mxu0 0.0
        %5232 = vmatprep.subr.mxu0 0.0
        %5233 = vmatpush1.msra.mxu0 0.0
        %5234 = vmatprep.subr.mxu0 0.0
        %5235 = vmatpush1.msra.mxu0 0.0
        %5236 = vmatprep.subr.mxu0 0.0
        %5237 = vmatpush1.msra.mxu0 0.0
        %5238 = vmatprep.subr.mxu0 0.0
        %5239 = vmatpush1.msra.mxu0 0.0
        %5240 = vmatprep.subr.mxu0 0.0
        %5241 = vmatpush1.msra.mxu0 0.0
        %5242 = vmatprep.subr.mxu0 0.0
        %5243 = vmatpush1.msra.mxu0 0.0
        %5244 = vmatprep.subr.mxu0 0.0
        %5245 = vmatpush1.msra.mxu0 0.0
        %5246 = vmatprep.subr.mxu0 0.0
        %5247 = vmatpush1.msra.mxu0 0.0
        %5248 = vmatprep.subr.mxu0 0.0
        %5249 = vmatpush1.msra.mxu0 0.0
        %5250 = vmatprep.subr.mxu0 0.0
        %5251 = vmatpush1.msra.mxu0 0.0
        %5252 = vmatprep.subr.mxu0 0.0
        %5253 = vmatpush1.msra.mxu0 0.0
        %5254 = vmatprep.subr.mxu0 0.0
        %5255 = vmatpush1.msra.mxu0 0.0
        %5256 = vmatprep.subr.mxu0 0.0
        %5257 = vmatpush1.msra.mxu0 0.0
        %5258 = vmatprep.subr.mxu0 0.0
        %5259 = vmatpush1.msra.mxu0 0.0
        %5260 = vmatprep.subr.mxu0 0.0
        %5261 = vmatpush1.msra.mxu0 0.0
        %5262 = vmatprep.subr.mxu0 0.0
        %5263 = vmatpush1.msra.mxu0 0.0
        %5264 = vmatprep.subr.mxu0 0.0
        %5265 = vmatpush1.msra.mxu0 0.0
        %5266 = vmatprep.subr.mxu0 0.0
        %5267 = vmatpush1.msra.mxu0 0.0
        %5268 = vmatprep.subr.mxu0 0.0
        %5269 = vmatpush1.msra.mxu0 0.0
        %5270 = vmatprep.mubr.f32.mxu0 0.0
        %5271 = vmatmul.mubr.f32.gmra.mrb[0].mxu0 %v5183
        %v5272 = vpop.f32.mrb[0].mxu0
        %v5273 = vadd.f32 0.0, %v5272
        %v5274 = vpop.f32.mrb[0].mxu0
        %5275 = vmatprep.mubr.f32.mxu0 0.0
        %5276 = vmatmul.mubr.f32.gmra.mrb[0].mxu0 %v5186
        %v5277 = vpop.f32.mrb[0].mxu0
        %v5278 = vadd.f32 0.0, %v5277
        %v5279 = vpop.f32.mrb[0].mxu0
        %5280 = vmatprep.mubr.f32.mxu0 0.0
        %5281 = vmatmul.mubr.f32.gmra.mrb[0].mxu0 %v5189
        %v5282 = vpop.f32.mrb[0].mxu0
        %v5283 = vadd.f32 0.0, %v5282
        %v5284 = vpop.f32.mrb[0].mxu0
        %5285 = vmatprep.mubr.f32.mxu0 0.0
        %5286 = vmatmul.mubr.f32.gmra.mrb[0].mxu0 %v5192
        %v5287 = vpop.f32.mrb[0].mxu0
        %v5288 = vadd.f32 0.0, %v5287
        %v5289 = vpop.f32.mrb[0].mxu0
        %5290 = vmatprep.mubr.f32.mxu0 0.0
        %5291 = vmatmul.mubr.f32.gmra.mrb[0].mxu0 %v5195
        %v5292 = vpop.f32.mrb[0].mxu0
        %v5293 = vadd.f32 0.0, %v5292
        %v5294 = vpop.f32.mrb[0].mxu0
        %5295 = vmatprep.mubr.f32.mxu0 0.0
        %5296 = vmatmul.mubr.f32.gmra.mrb[0].mxu0 %v5198
        %v5297 = vpop.f32.mrb[0].mxu0
        %v5298 = vadd.f32 0.0, %v5297
        %v5299 = vpop.f32.mrb[0].mxu0
        %5300 = vmatprep.mubr.f32.mxu0 0.0
        %5301 = vmatmul.mubr.f32.gmra.mrb[0].mxu0 %v5201
        %v5302 = vpop.f32.mrb[0].mxu0
        %v5303 = vadd.f32 0.0, %v5302
        %v5304 = vpop.f32.mrb[0].mxu0
        %5305 = vmatprep.mubr.f32.mxu0 0.0
        %5306 = vmatmul.mubr.f32.gmra.mrb[0].mxu0 %v5204
        %v5307 = vpop.f32.mrb[0].mxu0
        %v5308 = vadd.f32 0.0, %v5307
        %v5309 = vpop.f32.mrb[0].mxu0
        %5310 = vdwg.mxu0
        %v5311 = vadd.f32 %v5161, %v5273
        %v5312 = vadd.f32 %v5162, %v5278
        %v5313 = vadd.f32 %v5163, %v5283
        %v5314 = vadd.f32 %v5164, %v5288
        %v5315 = vadd.f32 %v5165, %v5293
        %v5316 = vadd.f32 %v5166, %v5298
        %v5317 = vadd.f32 %v5167, %v5303
        %v5318 = vadd.f32 %v5168, %v5308
        %v5319 = vld [vmem:[%s5018 + $0x2] sm:$0xff]
        %v5320 = vld [vmem:[%s5018 + $0x12] sm:$0xff]
        %v5321 = vld [vmem:[%s5018 + $0x22] sm:$0xff]
        %v5322 = vld [vmem:[%s5018 + $0x32] sm:$0xff]
        %v5323 = vld [vmem:[%s5018 + $0x42] sm:$0xff]
        %v5324 = vld [vmem:[%s5018 + $0x52] sm:$0xff]
        %v5325 = vld [vmem:[%s5018 + $0x62] sm:$0xff]
        %v5326 = vld [vmem:[%s5018 + $0x72] sm:$0xff]
        %s5327 = scalar_lea.vmem %s3, 544
        %v5328 = vld [vmem:[%s5327] sm:$0xff]
        %v5329 = vld [vmem:[%s5327 + $0x8] sm:$0xff]
        %v5330 = vld [vmem:[%s5327 + $0x10] sm:$0xff]
        %v5331 = vld [vmem:[%s5327 + $0x18] sm:$0xff]
        %v5333 = vsel %vm452, %v5319, 0
        %v5336 = vsel %vm452, %v5320, 0
        %v5339 = vsel %vm452, %v5321, 0
        %v5342 = vsel %vm452, %v5322, 0
        %v5345 = vsel %vm452, %v5323, 0
        %v5348 = vsel %vm452, %v5324, 0
        %v5351 = vsel %vm452, %v5325, 0
        %v5354 = vsel %vm452, %v5326, 0
        %5356 = vmatprep.subr.mxu0 0.0
        %5357 = vmatpush1.msra.mxu0 %v5328
        %5358 = vmatprep.subr.mxu0 0.0
        %5359 = vmatpush1.msra.mxu0 %v5329
        %5360 = vmatprep.subr.mxu0 0.0
        %5361 = vmatpush1.msra.mxu0 %v5330
        %5362 = vmatprep.subr.mxu0 0.0
        %5363 = vmatpush1.msra.mxu0 %v5331
        %5364 = vmatprep.subr.mxu0 0.0
        %5365 = vmatpush1.msra.mxu0 0.0
        %5366 = vmatprep.subr.mxu0 0.0
        %5367 = vmatpush1.msra.mxu0 0.0
        %5368 = vmatprep.subr.mxu0 0.0
        %5369 = vmatpush1.msra.mxu0 0.0
        %5370 = vmatprep.subr.mxu0 0.0
        %5371 = vmatpush1.msra.mxu0 0.0
        %5372 = vmatprep.subr.mxu0 0.0
        %5373 = vmatpush1.msra.mxu0 0.0
        %5374 = vmatprep.subr.mxu0 0.0
        %5375 = vmatpush1.msra.mxu0 0.0
        %5376 = vmatprep.subr.mxu0 0.0
        %5377 = vmatpush1.msra.mxu0 0.0
        %5378 = vmatprep.subr.mxu0 0.0
        %5379 = vmatpush1.msra.mxu0 0.0
        %5380 = vmatprep.subr.mxu0 0.0
        %5381 = vmatpush1.msra.mxu0 0.0
        %5382 = vmatprep.subr.mxu0 0.0
        %5383 = vmatpush1.msra.mxu0 0.0
        %5384 = vmatprep.subr.mxu0 0.0
        %5385 = vmatpush1.msra.mxu0 0.0
        %5386 = vmatprep.subr.mxu0 0.0
        %5387 = vmatpush1.msra.mxu0 0.0
        %5388 = vmatprep.subr.mxu0 0.0
        %5389 = vmatpush1.msra.mxu0 0.0
        %5390 = vmatprep.subr.mxu0 0.0
        %5391 = vmatpush1.msra.mxu0 0.0
        %5392 = vmatprep.subr.mxu0 0.0
        %5393 = vmatpush1.msra.mxu0 0.0
        %5394 = vmatprep.subr.mxu0 0.0
        %5395 = vmatpush1.msra.mxu0 0.0
        %5396 = vmatprep.subr.mxu0 0.0
        %5397 = vmatpush1.msra.mxu0 0.0
        %5398 = vmatprep.subr.mxu0 0.0
        %5399 = vmatpush1.msra.mxu0 0.0
        %5400 = vmatprep.subr.mxu0 0.0
        %5401 = vmatpush1.msra.mxu0 0.0
        %5402 = vmatprep.subr.mxu0 0.0
        %5403 = vmatpush1.msra.mxu0 0.0
        %5404 = vmatprep.subr.mxu0 0.0
        %5405 = vmatpush1.msra.mxu0 0.0
        %5406 = vmatprep.subr.mxu0 0.0
        %5407 = vmatpush1.msra.mxu0 0.0
        %5408 = vmatprep.subr.mxu0 0.0
        %5409 = vmatpush1.msra.mxu0 0.0
        %5410 = vmatprep.subr.mxu0 0.0
        %5411 = vmatpush1.msra.mxu0 0.0
        %5412 = vmatprep.subr.mxu0 0.0
        %5413 = vmatpush1.msra.mxu0 0.0
        %5414 = vmatprep.subr.mxu0 0.0
        %5415 = vmatpush1.msra.mxu0 0.0
        %5416 = vmatprep.subr.mxu0 0.0
        %5417 = vmatpush1.msra.mxu0 0.0
        %5418 = vmatprep.subr.mxu0 0.0
        %5419 = vmatpush1.msra.mxu0 0.0
        %5420 = vmatprep.mubr.f32.mxu0 0.0
        %5421 = vmatmul.mubr.f32.gmra.mrb[0].mxu0 %v5333
        %v5422 = vpop.f32.mrb[0].mxu0
        %v5423 = vadd.f32 0.0, %v5422
        %v5424 = vpop.f32.mrb[0].mxu0
        %5425 = vmatprep.mubr.f32.mxu0 0.0
        %5426 = vmatmul.mubr.f32.gmra.mrb[0].mxu0 %v5336
        %v5427 = vpop.f32.mrb[0].mxu0
        %v5428 = vadd.f32 0.0, %v5427
        %v5429 = vpop.f32.mrb[0].mxu0
        %5430 = vmatprep.mubr.f32.mxu0 0.0
        %5431 = vmatmul.mubr.f32.gmra.mrb[0].mxu0 %v5339
        %v5432 = vpop.f32.mrb[0].mxu0
        %v5433 = vadd.f32 0.0, %v5432
        %v5434 = vpop.f32.mrb[0].mxu0
        %5435 = vmatprep.mubr.f32.mxu0 0.0
        %5436 = vmatmul.mubr.f32.gmra.mrb[0].mxu0 %v5342
        %v5437 = vpop.f32.mrb[0].mxu0
        %v5438 = vadd.f32 0.0, %v5437
        %v5439 = vpop.f32.mrb[0].mxu0
        %5440 = vmatprep.mubr.f32.mxu0 0.0
        %5441 = vmatmul.mubr.f32.gmra.mrb[0].mxu0 %v5345
        %v5442 = vpop.f32.mrb[0].mxu0
        %v5443 = vadd.f32 0.0, %v5442
        %v5444 = vpop.f32.mrb[0].mxu0
        %5445 = vmatprep.mubr.f32.mxu0 0.0
        %5446 = vmatmul.mubr.f32.gmra.mrb[0].mxu0 %v5348
        %v5447 = vpop.f32.mrb[0].mxu0
        %v5448 = vadd.f32 0.0, %v5447
        %v5449 = vpop.f32.mrb[0].mxu0
        %5450 = vmatprep.mubr.f32.mxu0 0.0
        %5451 = vmatmul.mubr.f32.gmra.mrb[0].mxu0 %v5351
        %v5452 = vpop.f32.mrb[0].mxu0
        %v5453 = vadd.f32 0.0, %v5452
        %v5454 = vpop.f32.mrb[0].mxu0
        %5455 = vmatprep.mubr.f32.mxu0 0.0
        %5456 = vmatmul.mubr.f32.gmra.mrb[0].mxu0 %v5354
        %v5457 = vpop.f32.mrb[0].mxu0
        %v5458 = vadd.f32 0.0, %v5457
        %v5459 = vpop.f32.mrb[0].mxu0
        %5460 = vdwg.mxu0
        %v5461 = vadd.f32 %v5311, %v5423
        %v5462 = vadd.f32 %v5312, %v5428
        %v5463 = vadd.f32 %v5313, %v5433
        %v5464 = vadd.f32 %v5314, %v5438
        %v5465 = vadd.f32 %v5315, %v5443
        %v5466 = vadd.f32 %v5316, %v5448
        %v5467 = vadd.f32 %v5317, %v5453
        %v5468 = vadd.f32 %v5318, %v5458
        %s5469 = scalar_lea.vmem %s4, 1
        %v5470 = vld [vmem:[%s5469] sm:$0x1]
        %v5472 = vlaneseq
        %v5473 = vshrl.u32 %v5472, 7
        %v5474 = vsub.s32 0, %v5473
        %v5475 = vrot.slane %v5470, %v5474
        %v5477 = vmul.f32 %v5461, %v5475
        %v5478 = vmul.f32 %v5462, %v5475
        %v5479 = vmul.f32 %v5463, %v5475
        %v5480 = vmul.f32 %v5464, %v5475
        %v5481 = vmul.f32 %v5465, %v5475
        %v5482 = vmul.f32 %v5466, %v5475
        %v5483 = vmul.f32 %v5467, %v5475
        %v5484 = vmul.f32 %v5468, %v5475
        %s5485 = scalar_lea.vmem %s5, 1
        %v5486 = vld [vmem:[%s5485] sm:$0x1]
        %v5488 = vlaneseq
        %v5489 = vshrl.u32 %v5488, 7
        %v5490 = vsub.s32 0, %v5489
        %v5491 = vrot.slane %v5486, %v5490
        %v5493 = vadd.f32 %v5477, %v5491
        %v5494 = vadd.f32 %v5478, %v5491
        %v5495 = vadd.f32 %v5479, %v5491
        %v5496 = vadd.f32 %v5480, %v5491
        %v5497 = vadd.f32 %v5481, %v5491
        %v5498 = vadd.f32 %v5482, %v5491
        %v5499 = vadd.f32 %v5483, %v5491
        %v5500 = vadd.f32 %v5484, %v5491
        %v5501 = vmax.f32 %v5493, 0.0
        %v5502 = vmax.f32 %v5494, 0.0
        %v5503 = vmax.f32 %v5495, 0.0
        %v5504 = vmax.f32 %v5496, 0.0
        %v5505 = vmax.f32 %v5497, 0.0
        %v5506 = vmax.f32 %v5498, 0.0
        %v5507 = vmax.f32 %v5499, 0.0
        %v5508 = vmax.f32 %v5500, 0.0
        %v5509 = vld [vmem:[%s414] sm:$0xf]
        %v5510 = vld [vmem:[%s414 + $0x4] sm:$0xf]
        %v5511 = vld [vmem:[%s414 + $0x8] sm:$0xf]
        %v5512 = vld [vmem:[%s414 + $0xc] sm:$0xf]
        %vm5513 = vcmask 259072
        %5514 = vst.msk [vmem:[#allocation4] sm:$0x3f] %vm5513, 0.0
        %5515 = vst.msk [vmem:[#allocation4 + $0x8] sm:$0x3f] %vm5513, 0.0
        %5516 = vst.msk [vmem:[#allocation4 + $0x10] sm:$0x3f] %vm5513, 0.0
        %5517 = vst.msk [vmem:[#allocation4 + $0x18] sm:$0x3f] %vm5513, 0.0
        %5518 = vst.msk [vmem:[#allocation4 + $0x20] sm:$0x3f] %vm5513, 0.0
        %5519 = vst.msk [vmem:[#allocation4 + $0x28] sm:$0x3f] %vm5513, 0.0
        %s5520 = scalar_lea.vmem [#allocation4], 8
        %vm5521 = vcmask 257024
        %5522 = vst.msk [vmem:[%s5520 + $0x1] sm:$0xf] %vm5521, %v5509
        %5523 = vst.msk [vmem:[%s5520 + $0x9] sm:$0xf] %vm5521, %v5510
        %5524 = vst.msk [vmem:[%s5520 + $0x11] sm:$0xf] %vm5521, %v5511
        %5525 = vst.msk [vmem:[%s5520 + $0x19] sm:$0xf] %vm5521, %v5512
        %v5526 = vld [vmem:[#allocation4] sm:$0xf]
        %v5527 = vld [vmem:[#allocation4 + $0x8] sm:$0xf]
        %v5528 = vld [vmem:[#allocation4 + $0x10] sm:$0xf]
        %v5529 = vld [vmem:[#allocation4 + $0x18] sm:$0xf]
        %s5530 = scalar_lea.vmem %s3, 576
        %v5531 = vld [vmem:[%s5530] sm:$0xff]
        %v5532 = vld [vmem:[%s5530 + $0x8] sm:$0xff]
        %v5533 = vld [vmem:[%s5530 + $0x10] sm:$0xff]
        %v5534 = vld [vmem:[%s5530 + $0x18] sm:$0xff]
        %v5535 = vld [vmem:[#allocation4 + $0x1] sm:$0xf]
        %v5536 = vld [vmem:[#allocation4 + $0x9] sm:$0xf]
        %v5537 = vld [vmem:[#allocation4 + $0x11] sm:$0xf]
        %v5538 = vld [vmem:[#allocation4 + $0x19] sm:$0xf]
        %s5539 = scalar_lea.vmem %s3, 608
        %v5540 = vld [vmem:[%s5539] sm:$0xff]
        %v5541 = vld [vmem:[%s5539 + $0x8] sm:$0xff]
        %v5542 = vld [vmem:[%s5539 + $0x10] sm:$0xff]
        %v5543 = vld [vmem:[%s5539 + $0x18] sm:$0xff]
        %v5548 = vcombine.low %v5535, %v5536
        %v5549 = vcombine.low %v5537, %v5538
        %v5550 = vsel %vm452, %v5548, 0
        %v5552 = vsel %vm452, %v5549, 0
        %5554 = vmatprep.subr.mxu0 0.0
        %5555 = vmatpush1.msra.mxu0 %v5540
        %5556 = vmatprep.subr.mxu0 0.0
        %5557 = vmatpush1.msra.mxu0 %v5541
        %5558 = vmatprep.subr.mxu0 0.0
        %5559 = vmatpush1.msra.mxu0 %v5542
        %5560 = vmatprep.subr.mxu0 0.0
        %5561 = vmatpush1.msra.mxu0 %v5543
        %5562 = vmatprep.subr.mxu0 0.0
        %5563 = vmatpush1.msra.mxu0 0.0
        %5564 = vmatprep.subr.mxu0 0.0
        %5565 = vmatpush1.msra.mxu0 0.0
        %5566 = vmatprep.subr.mxu0 0.0
        %5567 = vmatpush1.msra.mxu0 0.0
        %5568 = vmatprep.subr.mxu0 0.0
        %5569 = vmatpush1.msra.mxu0 0.0
        %5570 = vmatprep.subr.mxu0 0.0
        %5571 = vmatpush1.msra.mxu0 0.0
        %5572 = vmatprep.subr.mxu0 0.0
        %5573 = vmatpush1.msra.mxu0 0.0
        %5574 = vmatprep.subr.mxu0 0.0
        %5575 = vmatpush1.msra.mxu0 0.0
        %5576 = vmatprep.subr.mxu0 0.0
        %5577 = vmatpush1.msra.mxu0 0.0
        %5578 = vmatprep.subr.mxu0 0.0
        %5579 = vmatpush1.msra.mxu0 0.0
        %5580 = vmatprep.subr.mxu0 0.0
        %5581 = vmatpush1.msra.mxu0 0.0
        %5582 = vmatprep.subr.mxu0 0.0
        %5583 = vmatpush1.msra.mxu0 0.0
        %5584 = vmatprep.subr.mxu0 0.0
        %5585 = vmatpush1.msra.mxu0 0.0
        %5586 = vmatprep.subr.mxu0 0.0
        %5587 = vmatpush1.msra.mxu0 0.0
        %5588 = vmatprep.subr.mxu0 0.0
        %5589 = vmatpush1.msra.mxu0 0.0
        %5590 = vmatprep.subr.mxu0 0.0
        %5591 = vmatpush1.msra.mxu0 0.0
        %5592 = vmatprep.subr.mxu0 0.0
        %5593 = vmatpush1.msra.mxu0 0.0
        %5594 = vmatprep.subr.mxu0 0.0
        %5595 = vmatpush1.msra.mxu0 0.0
        %5596 = vmatprep.subr.mxu0 0.0
        %5597 = vmatpush1.msra.mxu0 0.0
        %5598 = vmatprep.subr.mxu0 0.0
        %5599 = vmatpush1.msra.mxu0 0.0
        %5600 = vmatprep.subr.mxu0 0.0
        %5601 = vmatpush1.msra.mxu0 0.0
        %5602 = vmatprep.subr.mxu0 0.0
        %5603 = vmatpush1.msra.mxu0 0.0
        %5604 = vmatprep.subr.mxu0 0.0
        %5605 = vmatpush1.msra.mxu0 0.0
        %5606 = vmatprep.subr.mxu0 0.0
        %5607 = vmatpush1.msra.mxu0 0.0
        %5608 = vmatprep.subr.mxu0 0.0
        %5609 = vmatpush1.msra.mxu0 0.0
        %5610 = vmatprep.subr.mxu0 0.0
        %5611 = vmatpush1.msra.mxu0 0.0
        %5612 = vmatprep.subr.mxu0 0.0
        %5613 = vmatpush1.msra.mxu0 0.0
        %5614 = vmatprep.subr.mxu0 0.0
        %5615 = vmatpush1.msra.mxu0 0.0
        %5616 = vmatprep.subr.mxu0 0.0
        %5617 = vmatpush1.msra.mxu0 0.0
        %5618 = vmatprep.mubr.f32.mxu0 0.0
        %5619 = vmatmul.mubr.f32.gmra.mrb[0].mxu0 %v5550
        %v5620 = vpop.f32.mrb[0].mxu0
        %v5621 = vadd.f32 0.0, %v5620
        %v5622 = vpop.f32.mrb[0].mxu0
        %5623 = vmatprep.mubr.f32.mxu0 0.0
        %5624 = vmatmul.mubr.f32.gmra.mrb[0].mxu0 %v5552
        %v5625 = vpop.f32.mrb[0].mxu0
        %v5626 = vadd.f32 0.0, %v5625
        %v5627 = vpop.f32.mrb[0].mxu0
        %5628 = vdwg.mxu0
        %v5633 = vcombine.low %v5526, %v5527
        %v5634 = vcombine.low %v5528, %v5529
        %v5635 = vsel %vm452, %v5633, 0
        %v5637 = vsel %vm452, %v5634, 0
        %5639 = vmatprep.subr.mxu0 0.0
        %5640 = vmatpush1.msra.mxu0 %v5531
        %5641 = vmatprep.subr.mxu0 0.0
        %5642 = vmatpush1.msra.mxu0 %v5532
        %5643 = vmatprep.subr.mxu0 0.0
        %5644 = vmatpush1.msra.mxu0 %v5533
        %5645 = vmatprep.subr.mxu0 0.0
        %5646 = vmatpush1.msra.mxu0 %v5534
        %5647 = vmatprep.subr.mxu0 0.0
        %5648 = vmatpush1.msra.mxu0 0.0
        %5649 = vmatprep.subr.mxu0 0.0
        %5650 = vmatpush1.msra.mxu0 0.0
        %5651 = vmatprep.subr.mxu0 0.0
        %5652 = vmatpush1.msra.mxu0 0.0
        %5653 = vmatprep.subr.mxu0 0.0
        %5654 = vmatpush1.msra.mxu0 0.0
        %5655 = vmatprep.subr.mxu0 0.0
        %5656 = vmatpush1.msra.mxu0 0.0
        %5657 = vmatprep.subr.mxu0 0.0
        %5658 = vmatpush1.msra.mxu0 0.0
        %5659 = vmatprep.subr.mxu0 0.0
        %5660 = vmatpush1.msra.mxu0 0.0
        %5661 = vmatprep.subr.mxu0 0.0
        %5662 = vmatpush1.msra.mxu0 0.0
        %5663 = vmatprep.subr.mxu0 0.0
        %5664 = vmatpush1.msra.mxu0 0.0
        %5665 = vmatprep.subr.mxu0 0.0
        %5666 = vmatpush1.msra.mxu0 0.0
        %5667 = vmatprep.subr.mxu0 0.0
        %5668 = vmatpush1.msra.mxu0 0.0
        %5669 = vmatprep.subr.mxu0 0.0
        %5670 = vmatpush1.msra.mxu0 0.0
        %5671 = vmatprep.subr.mxu0 0.0
        %5672 = vmatpush1.msra.mxu0 0.0
        %5673 = vmatprep.subr.mxu0 0.0
        %5674 = vmatpush1.msra.mxu0 0.0
        %5675 = vmatprep.subr.mxu0 0.0
        %5676 = vmatpush1.msra.mxu0 0.0
        %5677 = vmatprep.subr.mxu0 0.0
        %5678 = vmatpush1.msra.mxu0 0.0
        %5679 = vmatprep.subr.mxu0 0.0
        %5680 = vmatpush1.msra.mxu0 0.0
        %5681 = vmatprep.subr.mxu0 0.0
        %5682 = vmatpush1.msra.mxu0 0.0
        %5683 = vmatprep.subr.mxu0 0.0
        %5684 = vmatpush1.msra.mxu0 0.0
        %5685 = vmatprep.subr.mxu0 0.0
        %5686 = vmatpush1.msra.mxu0 0.0
        %5687 = vmatprep.subr.mxu0 0.0
        %5688 = vmatpush1.msra.mxu0 0.0
        %5689 = vmatprep.subr.mxu0 0.0
        %5690 = vmatpush1.msra.mxu0 0.0
        %5691 = vmatprep.subr.mxu0 0.0
        %5692 = vmatpush1.msra.mxu0 0.0
        %5693 = vmatprep.subr.mxu0 0.0
        %5694 = vmatpush1.msra.mxu0 0.0
        %5695 = vmatprep.subr.mxu0 0.0
        %5696 = vmatpush1.msra.mxu0 0.0
        %5697 = vmatprep.subr.mxu0 0.0
        %5698 = vmatpush1.msra.mxu0 0.0
        %5699 = vmatprep.subr.mxu0 0.0
        %5700 = vmatpush1.msra.mxu0 0.0
        %5701 = vmatprep.subr.mxu0 0.0
        %5702 = vmatpush1.msra.mxu0 0.0
        %5703 = vmatprep.mubr.f32.mxu0 0.0
        %5704 = vmatmul.mubr.f32.gmra.mrb[0].mxu0 %v5635
        %v5705 = vpop.f32.mrb[0].mxu0
        %v5706 = vadd.f32 %v5621, %v5705
        %v5707 = vpop.f32.mrb[0].mxu0
        %5708 = vmatprep.mubr.f32.mxu0 0.0
        %5709 = vmatmul.mubr.f32.gmra.mrb[0].mxu0 %v5637
        %v5710 = vpop.f32.mrb[0].mxu0
        %v5711 = vadd.f32 %v5626, %v5710
        %v5712 = vpop.f32.mrb[0].mxu0
        %5713 = vdwg.mxu0
        %v5714 = vld [vmem:[#allocation4 + $0x2] sm:$0xf]
        %v5715 = vld [vmem:[#allocation4 + $0xa] sm:$0xf]
        %v5716 = vld [vmem:[#allocation4 + $0x12] sm:$0xf]
        %v5717 = vld [vmem:[#allocation4 + $0x1a] sm:$0xf]
        %s5718 = scalar_lea.vmem %s3, 640
        %v5719 = vld [vmem:[%s5718] sm:$0xff]
        %v5720 = vld [vmem:[%s5718 + $0x8] sm:$0xff]
        %v5721 = vld [vmem:[%s5718 + $0x10] sm:$0xff]
        %v5722 = vld [vmem:[%s5718 + $0x18] sm:$0xff]
        %v5727 = vcombine.low %v5714, %v5715
        %v5728 = vcombine.low %v5716, %v5717
        %v5729 = vsel %vm452, %v5727, 0
        %v5731 = vsel %vm452, %v5728, 0
        %5733 = vmatprep.subr.mxu0 0.0
        %5734 = vmatpush1.msra.mxu0 %v5719
        %5735 = vmatprep.subr.mxu0 0.0
        %5736 = vmatpush1.msra.mxu0 %v5720
        %5737 = vmatprep.subr.mxu0 0.0
        %5738 = vmatpush1.msra.mxu0 %v5721
        %5739 = vmatprep.subr.mxu0 0.0
        %5740 = vmatpush1.msra.mxu0 %v5722
        %5741 = vmatprep.subr.mxu0 0.0
        %5742 = vmatpush1.msra.mxu0 0.0
        %5743 = vmatprep.subr.mxu0 0.0
        %5744 = vmatpush1.msra.mxu0 0.0
        %5745 = vmatprep.subr.mxu0 0.0
        %5746 = vmatpush1.msra.mxu0 0.0
        %5747 = vmatprep.subr.mxu0 0.0
        %5748 = vmatpush1.msra.mxu0 0.0
        %5749 = vmatprep.subr.mxu0 0.0
        %5750 = vmatpush1.msra.mxu0 0.0
        %5751 = vmatprep.subr.mxu0 0.0
        %5752 = vmatpush1.msra.mxu0 0.0
        %5753 = vmatprep.subr.mxu0 0.0
        %5754 = vmatpush1.msra.mxu0 0.0
        %5755 = vmatprep.subr.mxu0 0.0
        %5756 = vmatpush1.msra.mxu0 0.0
        %5757 = vmatprep.subr.mxu0 0.0
        %5758 = vmatpush1.msra.mxu0 0.0
        %5759 = vmatprep.subr.mxu0 0.0
        %5760 = vmatpush1.msra.mxu0 0.0
        %5761 = vmatprep.subr.mxu0 0.0
        %5762 = vmatpush1.msra.mxu0 0.0
        %5763 = vmatprep.subr.mxu0 0.0
        %5764 = vmatpush1.msra.mxu0 0.0
        %5765 = vmatprep.subr.mxu0 0.0
        %5766 = vmatpush1.msra.mxu0 0.0
        %5767 = vmatprep.subr.mxu0 0.0
        %5768 = vmatpush1.msra.mxu0 0.0
        %5769 = vmatprep.subr.mxu0 0.0
        %5770 = vmatpush1.msra.mxu0 0.0
        %5771 = vmatprep.subr.mxu0 0.0
        %5772 = vmatpush1.msra.mxu0 0.0
        %5773 = vmatprep.subr.mxu0 0.0
        %5774 = vmatpush1.msra.mxu0 0.0
        %5775 = vmatprep.subr.mxu0 0.0
        %5776 = vmatpush1.msra.mxu0 0.0
        %5777 = vmatprep.subr.mxu0 0.0
        %5778 = vmatpush1.msra.mxu0 0.0
        %5779 = vmatprep.subr.mxu0 0.0
        %5780 = vmatpush1.msra.mxu0 0.0
        %5781 = vmatprep.subr.mxu0 0.0
        %5782 = vmatpush1.msra.mxu0 0.0
        %5783 = vmatprep.subr.mxu0 0.0
        %5784 = vmatpush1.msra.mxu0 0.0
        %5785 = vmatprep.subr.mxu0 0.0
        %5786 = vmatpush1.msra.mxu0 0.0
        %5787 = vmatprep.subr.mxu0 0.0
        %5788 = vmatpush1.msra.mxu0 0.0
        %5789 = vmatprep.subr.mxu0 0.0
        %5790 = vmatpush1.msra.mxu0 0.0
        %5791 = vmatprep.subr.mxu0 0.0
        %5792 = vmatpush1.msra.mxu0 0.0
        %5793 = vmatprep.subr.mxu0 0.0
        %5794 = vmatpush1.msra.mxu0 0.0
        %5795 = vmatprep.subr.mxu0 0.0
        %5796 = vmatpush1.msra.mxu0 0.0
        %5797 = vmatprep.mubr.f32.mxu0 0.0
        %5798 = vmatmul.mubr.f32.gmra.mrb[0].mxu0 %v5729
        %v5799 = vpop.f32.mrb[0].mxu0
        %v5800 = vadd.f32 0.0, %v5799
        %v5801 = vpop.f32.mrb[0].mxu0
        %5802 = vmatprep.mubr.f32.mxu0 0.0
        %5803 = vmatmul.mubr.f32.gmra.mrb[0].mxu0 %v5731
        %v5804 = vpop.f32.mrb[0].mxu0
        %v5805 = vadd.f32 0.0, %v5804
        %v5806 = vpop.f32.mrb[0].mxu0
        %5807 = vdwg.mxu0
        %v5808 = vadd.f32 %v5706, %v5800
        %v5809 = vadd.f32 %v5711, %v5805
        %v5810 = vld [vmem:[%s5520] sm:$0xf]
        %v5811 = vld [vmem:[%s5520 + $0x8] sm:$0xf]
        %v5812 = vld [vmem:[%s5520 + $0x10] sm:$0xf]
        %v5813 = vld [vmem:[%s5520 + $0x18] sm:$0xf]
        %s5814 = scalar_lea.vmem %s3, 672
        %v5815 = vld [vmem:[%s5814] sm:$0xff]
        %v5816 = vld [vmem:[%s5814 + $0x8] sm:$0xff]
        %v5817 = vld [vmem:[%s5814 + $0x10] sm:$0xff]
        %v5818 = vld [vmem:[%s5814 + $0x18] sm:$0xff]
        %v5823 = vcombine.low %v5810, %v5811
        %v5824 = vcombine.low %v5812, %v5813
        %v5825 = vsel %vm452, %v5823, 0
        %v5827 = vsel %vm452, %v5824, 0
        %5829 = vmatprep.subr.mxu0 0.0
        %5830 = vmatpush1.msra.mxu0 %v5815
        %5831 = vmatprep.subr.mxu0 0.0
        %5832 = vmatpush1.msra.mxu0 %v5816
        %5833 = vmatprep.subr.mxu0 0.0
        %5834 = vmatpush1.msra.mxu0 %v5817
        %5835 = vmatprep.subr.mxu0 0.0
        %5836 = vmatpush1.msra.mxu0 %v5818
        %5837 = vmatprep.subr.mxu0 0.0
        %5838 = vmatpush1.msra.mxu0 0.0
        %5839 = vmatprep.subr.mxu0 0.0
        %5840 = vmatpush1.msra.mxu0 0.0
        %5841 = vmatprep.subr.mxu0 0.0
        %5842 = vmatpush1.msra.mxu0 0.0
        %5843 = vmatprep.subr.mxu0 0.0
        %5844 = vmatpush1.msra.mxu0 0.0
        %5845 = vmatprep.subr.mxu0 0.0
        %5846 = vmatpush1.msra.mxu0 0.0
        %5847 = vmatprep.subr.mxu0 0.0
        %5848 = vmatpush1.msra.mxu0 0.0
        %5849 = vmatprep.subr.mxu0 0.0
        %5850 = vmatpush1.msra.mxu0 0.0
        %5851 = vmatprep.subr.mxu0 0.0
        %5852 = vmatpush1.msra.mxu0 0.0
        %5853 = vmatprep.subr.mxu0 0.0
        %5854 = vmatpush1.msra.mxu0 0.0
        %5855 = vmatprep.subr.mxu0 0.0
        %5856 = vmatpush1.msra.mxu0 0.0
        %5857 = vmatprep.subr.mxu0 0.0
        %5858 = vmatpush1.msra.mxu0 0.0
        %5859 = vmatprep.subr.mxu0 0.0
        %5860 = vmatpush1.msra.mxu0 0.0
        %5861 = vmatprep.subr.mxu0 0.0
        %5862 = vmatpush1.msra.mxu0 0.0
        %5863 = vmatprep.subr.mxu0 0.0
        %5864 = vmatpush1.msra.mxu0 0.0
        %5865 = vmatprep.subr.mxu0 0.0
        %5866 = vmatpush1.msra.mxu0 0.0
        %5867 = vmatprep.subr.mxu0 0.0
        %5868 = vmatpush1.msra.mxu0 0.0
        %5869 = vmatprep.subr.mxu0 0.0
        %5870 = vmatpush1.msra.mxu0 0.0
        %5871 = vmatprep.subr.mxu0 0.0
        %5872 = vmatpush1.msra.mxu0 0.0
        %5873 = vmatprep.subr.mxu0 0.0
        %5874 = vmatpush1.msra.mxu0 0.0
        %5875 = vmatprep.subr.mxu0 0.0
        %5876 = vmatpush1.msra.mxu0 0.0
        %5877 = vmatprep.subr.mxu0 0.0
        %5878 = vmatpush1.msra.mxu0 0.0
        %5879 = vmatprep.subr.mxu0 0.0
        %5880 = vmatpush1.msra.mxu0 0.0
        %5881 = vmatprep.subr.mxu0 0.0
        %5882 = vmatpush1.msra.mxu0 0.0
        %5883 = vmatprep.subr.mxu0 0.0
        %5884 = vmatpush1.msra.mxu0 0.0
        %5885 = vmatprep.subr.mxu0 0.0
        %5886 = vmatpush1.msra.mxu0 0.0
        %5887 = vmatprep.subr.mxu0 0.0
        %5888 = vmatpush1.msra.mxu0 0.0
        %5889 = vmatprep.subr.mxu0 0.0
        %5890 = vmatpush1.msra.mxu0 0.0
        %5891 = vmatprep.subr.mxu0 0.0
        %5892 = vmatpush1.msra.mxu0 0.0
        %5893 = vmatprep.mubr.f32.mxu0 0.0
        %5894 = vmatmul.mubr.f32.gmra.mrb[0].mxu0 %v5825
        %v5895 = vpop.f32.mrb[0].mxu0
        %v5896 = vadd.f32 0.0, %v5895
        %v5897 = vpop.f32.mrb[0].mxu0
        %5898 = vmatprep.mubr.f32.mxu0 0.0
        %5899 = vmatmul.mubr.f32.gmra.mrb[0].mxu0 %v5827
        %v5900 = vpop.f32.mrb[0].mxu0
        %v5901 = vadd.f32 0.0, %v5900
        %v5902 = vpop.f32.mrb[0].mxu0
        %5903 = vdwg.mxu0
        %v5904 = vadd.f32 %v5808, %v5896
        %v5905 = vadd.f32 %v5809, %v5901
        %v5906 = vld [vmem:[%s5520 + $0x1] sm:$0xf]
        %v5907 = vld [vmem:[%s5520 + $0x9] sm:$0xf]
        %v5908 = vld [vmem:[%s5520 + $0x11] sm:$0xf]
        %v5909 = vld [vmem:[%s5520 + $0x19] sm:$0xf]
        %s5910 = scalar_lea.vmem %s3, 704
        %v5911 = vld [vmem:[%s5910] sm:$0xff]
        %v5912 = vld [vmem:[%s5910 + $0x8] sm:$0xff]
        %v5913 = vld [vmem:[%s5910 + $0x10] sm:$0xff]
        %v5914 = vld [vmem:[%s5910 + $0x18] sm:$0xff]
        %v5919 = vcombine.low %v5906, %v5907
        %v5920 = vcombine.low %v5908, %v5909
        %v5921 = vsel %vm452, %v5919, 0
        %v5923 = vsel %vm452, %v5920, 0
        %5925 = vmatprep.subr.mxu0 0.0
        %5926 = vmatpush1.msra.mxu0 %v5911
        %5927 = vmatprep.subr.mxu0 0.0
        %5928 = vmatpush1.msra.mxu0 %v5912
        %5929 = vmatprep.subr.mxu0 0.0
        %5930 = vmatpush1.msra.mxu0 %v5913
        %5931 = vmatprep.subr.mxu0 0.0
        %5932 = vmatpush1.msra.mxu0 %v5914
        %5933 = vmatprep.subr.mxu0 0.0
        %5934 = vmatpush1.msra.mxu0 0.0
        %5935 = vmatprep.subr.mxu0 0.0
        %5936 = vmatpush1.msra.mxu0 0.0
        %5937 = vmatprep.subr.mxu0 0.0
        %5938 = vmatpush1.msra.mxu0 0.0
        %5939 = vmatprep.subr.mxu0 0.0
        %5940 = vmatpush1.msra.mxu0 0.0
        %5941 = vmatprep.subr.mxu0 0.0
        %5942 = vmatpush1.msra.mxu0 0.0
        %5943 = vmatprep.subr.mxu0 0.0
        %5944 = vmatpush1.msra.mxu0 0.0
        %5945 = vmatprep.subr.mxu0 0.0
        %5946 = vmatpush1.msra.mxu0 0.0
        %5947 = vmatprep.subr.mxu0 0.0
        %5948 = vmatpush1.msra.mxu0 0.0
        %5949 = vmatprep.subr.mxu0 0.0
        %5950 = vmatpush1.msra.mxu0 0.0
        %5951 = vmatprep.subr.mxu0 0.0
        %5952 = vmatpush1.msra.mxu0 0.0
        %5953 = vmatprep.subr.mxu0 0.0
        %5954 = vmatpush1.msra.mxu0 0.0
        %5955 = vmatprep.subr.mxu0 0.0
        %5956 = vmatpush1.msra.mxu0 0.0
        %5957 = vmatprep.subr.mxu0 0.0
        %5958 = vmatpush1.msra.mxu0 0.0
        %5959 = vmatprep.subr.mxu0 0.0
        %5960 = vmatpush1.msra.mxu0 0.0
        %5961 = vmatprep.subr.mxu0 0.0
        %5962 = vmatpush1.msra.mxu0 0.0
        %5963 = vmatprep.subr.mxu0 0.0
        %5964 = vmatpush1.msra.mxu0 0.0
        %5965 = vmatprep.subr.mxu0 0.0
        %5966 = vmatpush1.msra.mxu0 0.0
        %5967 = vmatprep.subr.mxu0 0.0
        %5968 = vmatpush1.msra.mxu0 0.0
        %5969 = vmatprep.subr.mxu0 0.0
        %5970 = vmatpush1.msra.mxu0 0.0
        %5971 = vmatprep.subr.mxu0 0.0
        %5972 = vmatpush1.msra.mxu0 0.0
        %5973 = vmatprep.subr.mxu0 0.0
        %5974 = vmatpush1.msra.mxu0 0.0
        %5975 = vmatprep.subr.mxu0 0.0
        %5976 = vmatpush1.msra.mxu0 0.0
        %5977 = vmatprep.subr.mxu0 0.0
        %5978 = vmatpush1.msra.mxu0 0.0
        %5979 = vmatprep.subr.mxu0 0.0
        %5980 = vmatpush1.msra.mxu0 0.0
        %5981 = vmatprep.subr.mxu0 0.0
        %5982 = vmatpush1.msra.mxu0 0.0
        %5983 = vmatprep.subr.mxu0 0.0
        %5984 = vmatpush1.msra.mxu0 0.0
        %5985 = vmatprep.subr.mxu0 0.0
        %5986 = vmatpush1.msra.mxu0 0.0
        %5987 = vmatprep.subr.mxu0 0.0
        %5988 = vmatpush1.msra.mxu0 0.0
        %5989 = vmatprep.mubr.f32.mxu0 0.0
        %5990 = vmatmul.mubr.f32.gmra.mrb[0].mxu0 %v5921
        %v5991 = vpop.f32.mrb[0].mxu0
        %v5992 = vadd.f32 0.0, %v5991
        %v5993 = vpop.f32.mrb[0].mxu0
        %5994 = vmatprep.mubr.f32.mxu0 0.0
        %5995 = vmatmul.mubr.f32.gmra.mrb[0].mxu0 %v5923
        %v5996 = vpop.f32.mrb[0].mxu0
        %v5997 = vadd.f32 0.0, %v5996
        %v5998 = vpop.f32.mrb[0].mxu0
        %5999 = vdwg.mxu0
        %v6000 = vadd.f32 %v5904, %v5992
        %v6001 = vadd.f32 %v5905, %v5997
        %v6002 = vld [vmem:[%s5520 + $0x2] sm:$0xf]
        %v6003 = vld [vmem:[%s5520 + $0xa] sm:$0xf]
        %v6004 = vld [vmem:[%s5520 + $0x12] sm:$0xf]
        %v6005 = vld [vmem:[%s5520 + $0x1a] sm:$0xf]
        %s6006 = scalar_lea.vmem %s3, 736
        %v6007 = vld [vmem:[%s6006] sm:$0xff]
        %v6008 = vld [vmem:[%s6006 + $0x8] sm:$0xff]
        %v6009 = vld [vmem:[%s6006 + $0x10] sm:$0xff]
        %v6010 = vld [vmem:[%s6006 + $0x18] sm:$0xff]
        %v6015 = vcombine.low %v6002, %v6003
        %v6016 = vcombine.low %v6004, %v6005
        %v6017 = vsel %vm452, %v6015, 0
        %v6019 = vsel %vm452, %v6016, 0
        %6021 = vmatprep.subr.mxu0 0.0
        %6022 = vmatpush1.msra.mxu0 %v6007
        %6023 = vmatprep.subr.mxu0 0.0
        %6024 = vmatpush1.msra.mxu0 %v6008
        %6025 = vmatprep.subr.mxu0 0.0
        %6026 = vmatpush1.msra.mxu0 %v6009
        %6027 = vmatprep.subr.mxu0 0.0
        %6028 = vmatpush1.msra.mxu0 %v6010
        %6029 = vmatprep.subr.mxu0 0.0
        %6030 = vmatpush1.msra.mxu0 0.0
        %6031 = vmatprep.subr.mxu0 0.0
        %6032 = vmatpush1.msra.mxu0 0.0
        %6033 = vmatprep.subr.mxu0 0.0
        %6034 = vmatpush1.msra.mxu0 0.0
        %6035 = vmatprep.subr.mxu0 0.0
        %6036 = vmatpush1.msra.mxu0 0.0
        %6037 = vmatprep.subr.mxu0 0.0
        %6038 = vmatpush1.msra.mxu0 0.0
        %6039 = vmatprep.subr.mxu0 0.0
        %6040 = vmatpush1.msra.mxu0 0.0
        %6041 = vmatprep.subr.mxu0 0.0
        %6042 = vmatpush1.msra.mxu0 0.0
        %6043 = vmatprep.subr.mxu0 0.0
        %6044 = vmatpush1.msra.mxu0 0.0
        %6045 = vmatprep.subr.mxu0 0.0
        %6046 = vmatpush1.msra.mxu0 0.0
        %6047 = vmatprep.subr.mxu0 0.0
        %6048 = vmatpush1.msra.mxu0 0.0
        %6049 = vmatprep.subr.mxu0 0.0
        %6050 = vmatpush1.msra.mxu0 0.0
        %6051 = vmatprep.subr.mxu0 0.0
        %6052 = vmatpush1.msra.mxu0 0.0
        %6053 = vmatprep.subr.mxu0 0.0
        %6054 = vmatpush1.msra.mxu0 0.0
        %6055 = vmatprep.subr.mxu0 0.0
        %6056 = vmatpush1.msra.mxu0 0.0
        %6057 = vmatprep.subr.mxu0 0.0
        %6058 = vmatpush1.msra.mxu0 0.0
        %6059 = vmatprep.subr.mxu0 0.0
        %6060 = vmatpush1.msra.mxu0 0.0
        %6061 = vmatprep.subr.mxu0 0.0
        %6062 = vmatpush1.msra.mxu0 0.0
        %6063 = vmatprep.subr.mxu0 0.0
        %6064 = vmatpush1.msra.mxu0 0.0
        %6065 = vmatprep.subr.mxu0 0.0
        %6066 = vmatpush1.msra.mxu0 0.0
        %6067 = vmatprep.subr.mxu0 0.0
        %6068 = vmatpush1.msra.mxu0 0.0
        %6069 = vmatprep.subr.mxu0 0.0
        %6070 = vmatpush1.msra.mxu0 0.0
        %6071 = vmatprep.subr.mxu0 0.0
        %6072 = vmatpush1.msra.mxu0 0.0
        %6073 = vmatprep.subr.mxu0 0.0
        %6074 = vmatpush1.msra.mxu0 0.0
        %6075 = vmatprep.subr.mxu0 0.0
        %6076 = vmatpush1.msra.mxu0 0.0
        %6077 = vmatprep.subr.mxu0 0.0
        %6078 = vmatpush1.msra.mxu0 0.0
        %6079 = vmatprep.subr.mxu0 0.0
        %6080 = vmatpush1.msra.mxu0 0.0
        %6081 = vmatprep.subr.mxu0 0.0
        %6082 = vmatpush1.msra.mxu0 0.0
        %6083 = vmatprep.subr.mxu0 0.0
        %6084 = vmatpush1.msra.mxu0 0.0
        %6085 = vmatprep.mubr.f32.mxu0 0.0
        %6086 = vmatmul.mubr.f32.gmra.mrb[0].mxu0 %v6017
        %v6087 = vpop.f32.mrb[0].mxu0
        %v6088 = vadd.f32 0.0, %v6087
        %v6089 = vpop.f32.mrb[0].mxu0
        %6090 = vmatprep.mubr.f32.mxu0 0.0
        %6091 = vmatmul.mubr.f32.gmra.mrb[0].mxu0 %v6019
        %v6092 = vpop.f32.mrb[0].mxu0
        %v6093 = vadd.f32 0.0, %v6092
        %v6094 = vpop.f32.mrb[0].mxu0
        %6095 = vdwg.mxu0
        %v6096 = vadd.f32 %v6000, %v6088
        %v6097 = vadd.f32 %v6001, %v6093
        %s6098 = scalar_lea.vmem [#allocation4], 16
        %v6099 = vld [vmem:[%s6098] sm:$0xf]
        %v6100 = vld [vmem:[%s6098 + $0x8] sm:$0xf]
        %v6101 = vld [vmem:[%s6098 + $0x10] sm:$0xf]
        %v6102 = vld [vmem:[%s6098 + $0x18] sm:$0xf]
        %s6103 = scalar_lea.vmem %s3, 768
        %v6104 = vld [vmem:[%s6103] sm:$0xff]
        %v6105 = vld [vmem:[%s6103 + $0x8] sm:$0xff]
        %v6106 = vld [vmem:[%s6103 + $0x10] sm:$0xff]
        %v6107 = vld [vmem:[%s6103 + $0x18] sm:$0xff]
        %v6112 = vcombine.low %v6099, %v6100
        %v6113 = vcombine.low %v6101, %v6102
        %v6114 = vsel %vm452, %v6112, 0
        %v6116 = vsel %vm452, %v6113, 0
        %6118 = vmatprep.subr.mxu0 0.0
        %6119 = vmatpush1.msra.mxu0 %v6104
        %6120 = vmatprep.subr.mxu0 0.0
        %6121 = vmatpush1.msra.mxu0 %v6105
        %6122 = vmatprep.subr.mxu0 0.0
        %6123 = vmatpush1.msra.mxu0 %v6106
        %6124 = vmatprep.subr.mxu0 0.0
        %6125 = vmatpush1.msra.mxu0 %v6107
        %6126 = vmatprep.subr.mxu0 0.0
        %6127 = vmatpush1.msra.mxu0 0.0
        %6128 = vmatprep.subr.mxu0 0.0
        %6129 = vmatpush1.msra.mxu0 0.0
        %6130 = vmatprep.subr.mxu0 0.0
        %6131 = vmatpush1.msra.mxu0 0.0
        %6132 = vmatprep.subr.mxu0 0.0
        %6133 = vmatpush1.msra.mxu0 0.0
        %6134 = vmatprep.subr.mxu0 0.0
        %6135 = vmatpush1.msra.mxu0 0.0
        %6136 = vmatprep.subr.mxu0 0.0
        %6137 = vmatpush1.msra.mxu0 0.0
        %6138 = vmatprep.subr.mxu0 0.0
        %6139 = vmatpush1.msra.mxu0 0.0
        %6140 = vmatprep.subr.mxu0 0.0
        %6141 = vmatpush1.msra.mxu0 0.0
        %6142 = vmatprep.subr.mxu0 0.0
        %6143 = vmatpush1.msra.mxu0 0.0
        %6144 = vmatprep.subr.mxu0 0.0
        %6145 = vmatpush1.msra.mxu0 0.0
        %6146 = vmatprep.subr.mxu0 0.0
        %6147 = vmatpush1.msra.mxu0 0.0
        %6148 = vmatprep.subr.mxu0 0.0
        %6149 = vmatpush1.msra.mxu0 0.0
        %6150 = vmatprep.subr.mxu0 0.0
        %6151 = vmatpush1.msra.mxu0 0.0
        %6152 = vmatprep.subr.mxu0 0.0
        %6153 = vmatpush1.msra.mxu0 0.0
        %6154 = vmatprep.subr.mxu0 0.0
        %6155 = vmatpush1.msra.mxu0 0.0
        %6156 = vmatprep.subr.mxu0 0.0
        %6157 = vmatpush1.msra.mxu0 0.0
        %6158 = vmatprep.subr.mxu0 0.0
        %6159 = vmatpush1.msra.mxu0 0.0
        %6160 = vmatprep.subr.mxu0 0.0
        %6161 = vmatpush1.msra.mxu0 0.0
        %6162 = vmatprep.subr.mxu0 0.0
        %6163 = vmatpush1.msra.mxu0 0.0
        %6164 = vmatprep.subr.mxu0 0.0
        %6165 = vmatpush1.msra.mxu0 0.0
        %6166 = vmatprep.subr.mxu0 0.0
        %6167 = vmatpush1.msra.mxu0 0.0
        %6168 = vmatprep.subr.mxu0 0.0
        %6169 = vmatpush1.msra.mxu0 0.0
        %6170 = vmatprep.subr.mxu0 0.0
        %6171 = vmatpush1.msra.mxu0 0.0
        %6172 = vmatprep.subr.mxu0 0.0
        %6173 = vmatpush1.msra.mxu0 0.0
        %6174 = vmatprep.subr.mxu0 0.0
        %6175 = vmatpush1.msra.mxu0 0.0
        %6176 = vmatprep.subr.mxu0 0.0
        %6177 = vmatpush1.msra.mxu0 0.0
        %6178 = vmatprep.subr.mxu0 0.0
        %6179 = vmatpush1.msra.mxu0 0.0
        %6180 = vmatprep.subr.mxu0 0.0
        %6181 = vmatpush1.msra.mxu0 0.0
        %6182 = vmatprep.mubr.f32.mxu0 0.0
        %6183 = vmatmul.mubr.f32.gmra.mrb[0].mxu0 %v6114
        %v6184 = vpop.f32.mrb[0].mxu0
        %v6185 = vadd.f32 0.0, %v6184
        %v6186 = vpop.f32.mrb[0].mxu0
        %6187 = vmatprep.mubr.f32.mxu0 0.0
        %6188 = vmatmul.mubr.f32.gmra.mrb[0].mxu0 %v6116
        %v6189 = vpop.f32.mrb[0].mxu0
        %v6190 = vadd.f32 0.0, %v6189
        %v6191 = vpop.f32.mrb[0].mxu0
        %6192 = vdwg.mxu0
        %v6193 = vadd.f32 %v6096, %v6185
        %v6194 = vadd.f32 %v6097, %v6190
        %v6195 = vld [vmem:[%s6098 + $0x1] sm:$0xf]
        %v6196 = vld [vmem:[%s6098 + $0x9] sm:$0xf]
        %v6197 = vld [vmem:[%s6098 + $0x11] sm:$0xf]
        %v6198 = vld [vmem:[%s6098 + $0x19] sm:$0xf]
        %s6199 = scalar_lea.vmem %s3, 800
        %v6200 = vld [vmem:[%s6199] sm:$0xff]
        %v6201 = vld [vmem:[%s6199 + $0x8] sm:$0xff]
        %v6202 = vld [vmem:[%s6199 + $0x10] sm:$0xff]
        %v6203 = vld [vmem:[%s6199 + $0x18] sm:$0xff]
        %v6208 = vcombine.low %v6195, %v6196
        %v6209 = vcombine.low %v6197, %v6198
        %v6210 = vsel %vm452, %v6208, 0
        %v6212 = vsel %vm452, %v6209, 0
        %6214 = vmatprep.subr.mxu0 0.0
        %6215 = vmatpush1.msra.mxu0 %v6200
        %6216 = vmatprep.subr.mxu0 0.0
        %6217 = vmatpush1.msra.mxu0 %v6201
        %6218 = vmatprep.subr.mxu0 0.0
        %6219 = vmatpush1.msra.mxu0 %v6202
        %6220 = vmatprep.subr.mxu0 0.0
        %6221 = vmatpush1.msra.mxu0 %v6203
        %6222 = vmatprep.subr.mxu0 0.0
        %6223 = vmatpush1.msra.mxu0 0.0
        %6224 = vmatprep.subr.mxu0 0.0
        %6225 = vmatpush1.msra.mxu0 0.0
        %6226 = vmatprep.subr.mxu0 0.0
        %6227 = vmatpush1.msra.mxu0 0.0
        %6228 = vmatprep.subr.mxu0 0.0
        %6229 = vmatpush1.msra.mxu0 0.0
        %6230 = vmatprep.subr.mxu0 0.0
        %6231 = vmatpush1.msra.mxu0 0.0
        %6232 = vmatprep.subr.mxu0 0.0
        %6233 = vmatpush1.msra.mxu0 0.0
        %6234 = vmatprep.subr.mxu0 0.0
        %6235 = vmatpush1.msra.mxu0 0.0
        %6236 = vmatprep.subr.mxu0 0.0
        %6237 = vmatpush1.msra.mxu0 0.0
        %6238 = vmatprep.subr.mxu0 0.0
        %6239 = vmatpush1.msra.mxu0 0.0
        %6240 = vmatprep.subr.mxu0 0.0
        %6241 = vmatpush1.msra.mxu0 0.0
        %6242 = vmatprep.subr.mxu0 0.0
        %6243 = vmatpush1.msra.mxu0 0.0
        %6244 = vmatprep.subr.mxu0 0.0
        %6245 = vmatpush1.msra.mxu0 0.0
        %6246 = vmatprep.subr.mxu0 0.0
        %6247 = vmatpush1.msra.mxu0 0.0
        %6248 = vmatprep.subr.mxu0 0.0
        %6249 = vmatpush1.msra.mxu0 0.0
        %6250 = vmatprep.subr.mxu0 0.0
        %6251 = vmatpush1.msra.mxu0 0.0
        %6252 = vmatprep.subr.mxu0 0.0
        %6253 = vmatpush1.msra.mxu0 0.0
        %6254 = vmatprep.subr.mxu0 0.0
        %6255 = vmatpush1.msra.mxu0 0.0
        %6256 = vmatprep.subr.mxu0 0.0
        %6257 = vmatpush1.msra.mxu0 0.0
        %6258 = vmatprep.subr.mxu0 0.0
        %6259 = vmatpush1.msra.mxu0 0.0
        %6260 = vmatprep.subr.mxu0 0.0
        %6261 = vmatpush1.msra.mxu0 0.0
        %6262 = vmatprep.subr.mxu0 0.0
        %6263 = vmatpush1.msra.mxu0 0.0
        %6264 = vmatprep.subr.mxu0 0.0
        %6265 = vmatpush1.msra.mxu0 0.0
        %6266 = vmatprep.subr.mxu0 0.0
        %6267 = vmatpush1.msra.mxu0 0.0
        %6268 = vmatprep.subr.mxu0 0.0
        %6269 = vmatpush1.msra.mxu0 0.0
        %6270 = vmatprep.subr.mxu0 0.0
        %6271 = vmatpush1.msra.mxu0 0.0
        %6272 = vmatprep.subr.mxu0 0.0
        %6273 = vmatpush1.msra.mxu0 0.0
        %6274 = vmatprep.subr.mxu0 0.0
        %6275 = vmatpush1.msra.mxu0 0.0
        %6276 = vmatprep.subr.mxu0 0.0
        %6277 = vmatpush1.msra.mxu0 0.0
        %6278 = vmatprep.mubr.f32.mxu0 0.0
        %6279 = vmatmul.mubr.f32.gmra.mrb[0].mxu0 %v6210
        %v6280 = vpop.f32.mrb[0].mxu0
        %v6281 = vadd.f32 0.0, %v6280
        %v6282 = vpop.f32.mrb[0].mxu0
        %6283 = vmatprep.mubr.f32.mxu0 0.0
        %6284 = vmatmul.mubr.f32.gmra.mrb[0].mxu0 %v6212
        %v6285 = vpop.f32.mrb[0].mxu0
        %v6286 = vadd.f32 0.0, %v6285
        %v6287 = vpop.f32.mrb[0].mxu0
        %6288 = vdwg.mxu0
        %v6289 = vadd.f32 %v6193, %v6281
        %v6290 = vadd.f32 %v6194, %v6286
        %v6291 = vld [vmem:[%s6098 + $0x2] sm:$0xf]
        %v6292 = vld [vmem:[%s6098 + $0xa] sm:$0xf]
        %v6293 = vld [vmem:[%s6098 + $0x12] sm:$0xf]
        %v6294 = vld [vmem:[%s6098 + $0x1a] sm:$0xf]
        %s6295 = scalar_lea.vmem %s3, 832
        %v6296 = vld [vmem:[%s6295] sm:$0xff]
        %v6297 = vld [vmem:[%s6295 + $0x8] sm:$0xff]
        %v6298 = vld [vmem:[%s6295 + $0x10] sm:$0xff]
        %v6299 = vld [vmem:[%s6295 + $0x18] sm:$0xff]
        %v6304 = vcombine.low %v6291, %v6292
        %v6305 = vcombine.low %v6293, %v6294
        %v6306 = vsel %vm452, %v6304, 0
        %v6308 = vsel %vm452, %v6305, 0
        %6310 = vmatprep.subr.mxu0 0.0
        %6311 = vmatpush1.msra.mxu0 %v6296
        %6312 = vmatprep.subr.mxu0 0.0
        %6313 = vmatpush1.msra.mxu0 %v6297
        %6314 = vmatprep.subr.mxu0 0.0
        %6315 = vmatpush1.msra.mxu0 %v6298
        %6316 = vmatprep.subr.mxu0 0.0
        %6317 = vmatpush1.msra.mxu0 %v6299
        %6318 = vmatprep.subr.mxu0 0.0
        %6319 = vmatpush1.msra.mxu0 0.0
        %6320 = vmatprep.subr.mxu0 0.0
        %6321 = vmatpush1.msra.mxu0 0.0
        %6322 = vmatprep.subr.mxu0 0.0
        %6323 = vmatpush1.msra.mxu0 0.0
        %6324 = vmatprep.subr.mxu0 0.0
        %6325 = vmatpush1.msra.mxu0 0.0
        %6326 = vmatprep.subr.mxu0 0.0
        %6327 = vmatpush1.msra.mxu0 0.0
        %6328 = vmatprep.subr.mxu0 0.0
        %6329 = vmatpush1.msra.mxu0 0.0
        %6330 = vmatprep.subr.mxu0 0.0
        %6331 = vmatpush1.msra.mxu0 0.0
        %6332 = vmatprep.subr.mxu0 0.0
        %6333 = vmatpush1.msra.mxu0 0.0
        %6334 = vmatprep.subr.mxu0 0.0
        %6335 = vmatpush1.msra.mxu0 0.0
        %6336 = vmatprep.subr.mxu0 0.0
        %6337 = vmatpush1.msra.mxu0 0.0
        %6338 = vmatprep.subr.mxu0 0.0
        %6339 = vmatpush1.msra.mxu0 0.0
        %6340 = vmatprep.subr.mxu0 0.0
        %6341 = vmatpush1.msra.mxu0 0.0
        %6342 = vmatprep.subr.mxu0 0.0
        %6343 = vmatpush1.msra.mxu0 0.0
        %6344 = vmatprep.subr.mxu0 0.0
        %6345 = vmatpush1.msra.mxu0 0.0
        %6346 = vmatprep.subr.mxu0 0.0
        %6347 = vmatpush1.msra.mxu0 0.0
        %6348 = vmatprep.subr.mxu0 0.0
        %6349 = vmatpush1.msra.mxu0 0.0
        %6350 = vmatprep.subr.mxu0 0.0
        %6351 = vmatpush1.msra.mxu0 0.0
        %6352 = vmatprep.subr.mxu0 0.0
        %6353 = vmatpush1.msra.mxu0 0.0
        %6354 = vmatprep.subr.mxu0 0.0
        %6355 = vmatpush1.msra.mxu0 0.0
        %6356 = vmatprep.subr.mxu0 0.0
        %6357 = vmatpush1.msra.mxu0 0.0
        %6358 = vmatprep.subr.mxu0 0.0
        %6359 = vmatpush1.msra.mxu0 0.0
        %6360 = vmatprep.subr.mxu0 0.0
        %6361 = vmatpush1.msra.mxu0 0.0
        %6362 = vmatprep.subr.mxu0 0.0
        %6363 = vmatpush1.msra.mxu0 0.0
        %6364 = vmatprep.subr.mxu0 0.0
        %6365 = vmatpush1.msra.mxu0 0.0
        %6366 = vmatprep.subr.mxu0 0.0
        %6367 = vmatpush1.msra.mxu0 0.0
        %6368 = vmatprep.subr.mxu0 0.0
        %6369 = vmatpush1.msra.mxu0 0.0
        %6370 = vmatprep.subr.mxu0 0.0
        %6371 = vmatpush1.msra.mxu0 0.0
        %6372 = vmatprep.subr.mxu0 0.0
        %6373 = vmatpush1.msra.mxu0 0.0
        %6374 = vmatprep.mubr.f32.mxu0 0.0
        %6375 = vmatmul.mubr.f32.gmra.mrb[0].mxu0 %v6306
        %v6376 = vpop.f32.mrb[0].mxu0
        %v6377 = vadd.f32 0.0, %v6376
        %v6378 = vpop.f32.mrb[0].mxu0
        %6379 = vmatprep.mubr.f32.mxu0 0.0
        %6380 = vmatmul.mubr.f32.gmra.mrb[0].mxu0 %v6308
        %v6381 = vpop.f32.mrb[0].mxu0
        %v6382 = vadd.f32 0.0, %v6381
        %v6383 = vpop.f32.mrb[0].mxu0
        %6384 = vdwg.mxu0
        %v6385 = vadd.f32 %v6289, %v6377
        %v6386 = vadd.f32 %v6290, %v6382
        %s6387 = scalar_lea.vmem %s4, 2
        %v6388 = vld [vmem:[%s6387] sm:$0x1]
        %v6390 = vlaneseq
        %v6391 = vshrl.u32 %v6390, 7
        %v6392 = vsub.s32 0, %v6391
        %v6393 = vrot.slane %v6388, %v6392
        %v6395 = vmul.f32 %v6385, %v6393
        %v6396 = vmul.f32 %v6386, %v6393
        %s6397 = scalar_lea.vmem %s5, 2
        %v6398 = vld [vmem:[%s6397] sm:$0x1]
        %v6400 = vlaneseq
        %v6401 = vshrl.u32 %v6400, 7
        %v6402 = vsub.s32 0, %v6401
        %v6403 = vrot.slane %v6398, %v6402
        %v6405 = vadd.f32 %v6395, %v6403
        %v6406 = vadd.f32 %v6396, %v6403
        %v6407 = vmax.f32 %v6405, 0.0
        %v6408 = vmax.f32 %v6406, 0.0
        %v6409 = vld [vmem:[%s6] sm:$0xff]
        %v6410 = vld [vmem:[%s6 + $0x8] sm:$0xff]
        %v6411 = vld [vmem:[%s6 + $0x10] sm:$0xff]
        %v6412 = vld [vmem:[%s6 + $0x18] sm:$0xff]
        %v6413 = vld [vmem:[%s6 + $0x20] sm:$0xff]
        %v6414 = vld [vmem:[%s6 + $0x28] sm:$0xff]
        %v6415 = vld [vmem:[%s6 + $0x30] sm:$0xff]
        %v6416 = vld [vmem:[%s6 + $0x38] sm:$0xff]
        %v6417 = vld [vmem:[%s6 + $0x40] sm:$0xff]
        %v6418 = vld [vmem:[%s6 + $0x48] sm:$0xff]
        %v6419 = vld [vmem:[%s6 + $0x50] sm:$0xff]
        %v6420 = vld [vmem:[%s6 + $0x58] sm:$0xff]
        %v6421 = vld [vmem:[%s6 + $0x60] sm:$0xff]
        %v6422 = vld [vmem:[%s6 + $0x68] sm:$0xff]
        %v6423 = vld [vmem:[%s6 + $0x70] sm:$0xff]
        %v6424 = vld [vmem:[%s6 + $0x78] sm:$0xff]
        %v6425 = vld [vmem:[%s6 + $0x80] sm:$0xff]
        %v6426 = vld [vmem:[%s6 + $0x88] sm:$0xff]
        %v6427 = vld [vmem:[%s6 + $0x90] sm:$0xff]
        %v6428 = vld [vmem:[%s6 + $0x98] sm:$0xff]
        %v6429 = vld [vmem:[%s6 + $0xa0] sm:$0xff]
        %v6430 = vld [vmem:[%s6 + $0xa8] sm:$0xff]
        %v6431 = vld [vmem:[%s6 + $0xb0] sm:$0xff]
        %v6432 = vld [vmem:[%s6 + $0xb8] sm:$0xff]
        %v6433 = vld [vmem:[%s6 + $0xc0] sm:$0xff]
        %v6434 = vld [vmem:[%s6 + $0xc8] sm:$0xff]
        %v6435 = vld [vmem:[%s6 + $0xd0] sm:$0xff]
        %v6436 = vld [vmem:[%s6 + $0xd8] sm:$0xff]
        %v6437 = vld [vmem:[%s6 + $0xe0] sm:$0xff]
        %v6438 = vld [vmem:[%s6 + $0xe8] sm:$0xff]
        %v6439 = vld [vmem:[%s6 + $0xf0] sm:$0xff]
        %v6440 = vld [vmem:[%s6 + $0xf8] sm:$0xff]
        %vm6441 = vcmask 523264
        %v6443 = vsel %vm6441, %v6409, 0
        %v6446 = vsel %vm6441, %v6410, 0
        %v6449 = vsel %vm6441, %v6411, 0
        %v6452 = vsel %vm6441, %v6412, 0
        %v6455 = vsel %vm6441, %v6413, 0
        %v6458 = vsel %vm6441, %v6414, 0
        %v6461 = vsel %vm6441, %v6415, 0
        %v6464 = vsel %vm6441, %v6416, 0
        %v6467 = vsel %vm6441, %v6417, 0
        %v6470 = vsel %vm6441, %v6418, 0
        %v6473 = vsel %vm6441, %v6419, 0
        %v6476 = vsel %vm6441, %v6420, 0
        %v6479 = vsel %vm6441, %v6421, 0
        %v6482 = vsel %vm6441, %v6422, 0
        %v6485 = vsel %vm6441, %v6423, 0
        %v6488 = vsel %vm6441, %v6424, 0
        %v6491 = vsel %vm6441, %v6425, 0
        %v6494 = vsel %vm6441, %v6426, 0
        %v6497 = vsel %vm6441, %v6427, 0
        %v6500 = vsel %vm6441, %v6428, 0
        %v6503 = vsel %vm6441, %v6429, 0
        %v6506 = vsel %vm6441, %v6430, 0
        %v6509 = vsel %vm6441, %v6431, 0
        %v6512 = vsel %vm6441, %v6432, 0
        %v6515 = vsel %vm6441, %v6433, 0
        %v6518 = vsel %vm6441, %v6434, 0
        %v6521 = vsel %vm6441, %v6435, 0
        %v6524 = vsel %vm6441, %v6436, 0
        %v6527 = vsel %vm6441, %v6437, 0
        %v6530 = vsel %vm6441, %v6438, 0
        %v6533 = vsel %vm6441, %v6439, 0
        %v6536 = vsel %vm6441, %v6440, 0
        %6538 = vmatprep.subr.mxu0 0.0
        %6539 = vmatpush1.msra.mxu0 %v5501
        %6540 = vmatprep.subr.mxu0 0.0
        %6541 = vmatpush1.msra.mxu0 %v5502
        %6542 = vmatprep.subr.mxu0 0.0
        %6543 = vmatpush1.msra.mxu0 %v5503
        %6544 = vmatprep.subr.mxu0 0.0
        %6545 = vmatpush1.msra.mxu0 %v5504
        %6546 = vmatprep.subr.mxu0 0.0
        %6547 = vmatpush1.msra.mxu0 %v5505
        %6548 = vmatprep.subr.mxu0 0.0
        %6549 = vmatpush1.msra.mxu0 %v5506
        %6550 = vmatprep.subr.mxu0 0.0
        %6551 = vmatpush1.msra.mxu0 %v5507
        %6552 = vmatprep.subr.mxu0 0.0
        %6553 = vmatpush1.msra.mxu0 %v5508
        %6554 = vmatprep.subr.mxu0 0.0
        %6555 = vmatpush1.msra.mxu0 0.0
        %6556 = vmatprep.subr.mxu0 0.0
        %6557 = vmatpush1.msra.mxu0 0.0
        %6558 = vmatprep.subr.mxu0 0.0
        %6559 = vmatpush1.msra.mxu0 0.0
        %6560 = vmatprep.subr.mxu0 0.0
        %6561 = vmatpush1.msra.mxu0 0.0
        %6562 = vmatprep.subr.mxu0 0.0
        %6563 = vmatpush1.msra.mxu0 0.0
        %6564 = vmatprep.subr.mxu0 0.0
        %6565 = vmatpush1.msra.mxu0 0.0
        %6566 = vmatprep.subr.mxu0 0.0
        %6567 = vmatpush1.msra.mxu0 0.0
        %6568 = vmatprep.subr.mxu0 0.0
        %6569 = vmatpush1.msra.mxu0 0.0
        %6570 = vmatprep.subr.mxu0 0.0
        %6571 = vmatpush1.msra.mxu0 0.0
        %6572 = vmatprep.subr.mxu0 0.0
        %6573 = vmatpush1.msra.mxu0 0.0
        %6574 = vmatprep.subr.mxu0 0.0
        %6575 = vmatpush1.msra.mxu0 0.0
        %6576 = vmatprep.subr.mxu0 0.0
        %6577 = vmatpush1.msra.mxu0 0.0
        %6578 = vmatprep.subr.mxu0 0.0
        %6579 = vmatpush1.msra.mxu0 0.0
        %6580 = vmatprep.subr.mxu0 0.0
        %6581 = vmatpush1.msra.mxu0 0.0
        %6582 = vmatprep.subr.mxu0 0.0
        %6583 = vmatpush1.msra.mxu0 0.0
        %6584 = vmatprep.subr.mxu0 0.0
        %6585 = vmatpush1.msra.mxu0 0.0
        %6586 = vmatprep.subr.mxu0 0.0
        %6587 = vmatpush1.msra.mxu0 0.0
        %6588 = vmatprep.subr.mxu0 0.0
        %6589 = vmatpush1.msra.mxu0 0.0
        %6590 = vmatprep.subr.mxu0 0.0
        %6591 = vmatpush1.msra.mxu0 0.0
        %6592 = vmatprep.subr.mxu0 0.0
        %6593 = vmatpush1.msra.mxu0 0.0
        %6594 = vmatprep.subr.mxu0 0.0
        %6595 = vmatpush1.msra.mxu0 0.0
        %6596 = vmatprep.subr.mxu0 0.0
        %6597 = vmatpush1.msra.mxu0 0.0
        %6598 = vmatprep.subr.mxu0 0.0
        %6599 = vmatpush1.msra.mxu0 0.0
        %6600 = vmatprep.subr.mxu0 0.0
        %6601 = vmatpush1.msra.mxu0 0.0
        %6602 = vmatprep.mubr.f32.mxu0 0.0
        %6603 = vmatmul.mubr.f32.gmra.mrb[0].mxu0 %v6443
        %v6604 = vpop.f32.mrb[0].mxu0
        %v6605 = vadd.f32 0.0, %v6604
        %v6606 = vpop.f32.mrb[0].mxu0
        %6607 = vmatprep.mubr.f32.mxu0 0.0
        %6608 = vmatmul.mubr.f32.gmra.mrb[0].mxu0 %v6446
        %v6609 = vpop.f32.mrb[0].mxu0
        %v6610 = vadd.f32 0.0, %v6609
        %v6611 = vpop.f32.mrb[0].mxu0
        %6612 = vmatprep.mubr.f32.mxu0 0.0
        %6613 = vmatmul.mubr.f32.gmra.mrb[0].mxu0 %v6449
        %v6614 = vpop.f32.mrb[0].mxu0
        %v6615 = vadd.f32 0.0, %v6614
        %v6616 = vpop.f32.mrb[0].mxu0
        %6617 = vmatprep.mubr.f32.mxu0 0.0
        %6618 = vmatmul.mubr.f32.gmra.mrb[0].mxu0 %v6452
        %v6619 = vpop.f32.mrb[0].mxu0
        %v6620 = vadd.f32 0.0, %v6619
        %v6621 = vpop.f32.mrb[0].mxu0
        %6622 = vmatprep.mubr.f32.mxu0 0.0
        %6623 = vmatmul.mubr.f32.gmra.mrb[0].mxu0 %v6455
        %v6624 = vpop.f32.mrb[0].mxu0
        %v6625 = vadd.f32 0.0, %v6624
        %v6626 = vpop.f32.mrb[0].mxu0
        %6627 = vmatprep.mubr.f32.mxu0 0.0
        %6628 = vmatmul.mubr.f32.gmra.mrb[0].mxu0 %v6458
        %v6629 = vpop.f32.mrb[0].mxu0
        %v6630 = vadd.f32 0.0, %v6629
        %v6631 = vpop.f32.mrb[0].mxu0
        %6632 = vmatprep.mubr.f32.mxu0 0.0
        %6633 = vmatmul.mubr.f32.gmra.mrb[0].mxu0 %v6461
        %v6634 = vpop.f32.mrb[0].mxu0
        %v6635 = vadd.f32 0.0, %v6634
        %v6636 = vpop.f32.mrb[0].mxu0
        %6637 = vmatprep.mubr.f32.mxu0 0.0
        %6638 = vmatmul.mubr.f32.gmra.mrb[0].mxu0 %v6464
        %v6639 = vpop.f32.mrb[0].mxu0
        %v6640 = vadd.f32 0.0, %v6639
        %v6641 = vpop.f32.mrb[0].mxu0
        %6642 = vmatprep.mubr.f32.mxu0 0.0
        %6643 = vmatmul.mubr.f32.gmra.mrb[0].mxu0 %v6467
        %v6644 = vpop.f32.mrb[0].mxu0
        %v6645 = vadd.f32 0.0, %v6644
        %v6646 = vpop.f32.mrb[0].mxu0
        %6647 = vmatprep.mubr.f32.mxu0 0.0
        %6648 = vmatmul.mubr.f32.gmra.mrb[0].mxu0 %v6470
        %v6649 = vpop.f32.mrb[0].mxu0
        %v6650 = vadd.f32 0.0, %v6649
        %v6651 = vpop.f32.mrb[0].mxu0
        %6652 = vmatprep.mubr.f32.mxu0 0.0
        %6653 = vmatmul.mubr.f32.gmra.mrb[0].mxu0 %v6473
        %v6654 = vpop.f32.mrb[0].mxu0
        %v6655 = vadd.f32 0.0, %v6654
        %v6656 = vpop.f32.mrb[0].mxu0
        %6657 = vmatprep.mubr.f32.mxu0 0.0
        %6658 = vmatmul.mubr.f32.gmra.mrb[0].mxu0 %v6476
        %v6659 = vpop.f32.mrb[0].mxu0
        %v6660 = vadd.f32 0.0, %v6659
        %v6661 = vpop.f32.mrb[0].mxu0
        %6662 = vmatprep.mubr.f32.mxu0 0.0
        %6663 = vmatmul.mubr.f32.gmra.mrb[0].mxu0 %v6479
        %v6664 = vpop.f32.mrb[0].mxu0
        %v6665 = vadd.f32 0.0, %v6664
        %v6666 = vpop.f32.mrb[0].mxu0
        %6667 = vmatprep.mubr.f32.mxu0 0.0
        %6668 = vmatmul.mubr.f32.gmra.mrb[0].mxu0 %v6482
        %v6669 = vpop.f32.mrb[0].mxu0
        %v6670 = vadd.f32 0.0, %v6669
        %v6671 = vpop.f32.mrb[0].mxu0
        %6672 = vmatprep.mubr.f32.mxu0 0.0
        %6673 = vmatmul.mubr.f32.gmra.mrb[0].mxu0 %v6485
        %v6674 = vpop.f32.mrb[0].mxu0
        %v6675 = vadd.f32 0.0, %v6674
        %v6676 = vpop.f32.mrb[0].mxu0
        %6677 = vmatprep.mubr.f32.mxu0 0.0
        %6678 = vmatmul.mubr.f32.gmra.mrb[0].mxu0 %v6488
        %v6679 = vpop.f32.mrb[0].mxu0
        %v6680 = vadd.f32 0.0, %v6679
        %v6681 = vpop.f32.mrb[0].mxu0
        %6682 = vmatprep.mubr.f32.mxu0 0.0
        %6683 = vmatmul.mubr.f32.gmra.mrb[0].mxu0 %v6491
        %v6684 = vpop.f32.mrb[0].mxu0
        %v6685 = vadd.f32 0.0, %v6684
        %v6686 = vpop.f32.mrb[0].mxu0
        %6687 = vmatprep.mubr.f32.mxu0 0.0
        %6688 = vmatmul.mubr.f32.gmra.mrb[0].mxu0 %v6494
        %v6689 = vpop.f32.mrb[0].mxu0
        %v6690 = vadd.f32 0.0, %v6689
        %v6691 = vpop.f32.mrb[0].mxu0
        %6692 = vmatprep.mubr.f32.mxu0 0.0
        %6693 = vmatmul.mubr.f32.gmra.mrb[0].mxu0 %v6497
        %v6694 = vpop.f32.mrb[0].mxu0
        %v6695 = vadd.f32 0.0, %v6694
        %v6696 = vpop.f32.mrb[0].mxu0
        %6697 = vmatprep.mubr.f32.mxu0 0.0
        %6698 = vmatmul.mubr.f32.gmra.mrb[0].mxu0 %v6500
        %v6699 = vpop.f32.mrb[0].mxu0
        %v6700 = vadd.f32 0.0, %v6699
        %v6701 = vpop.f32.mrb[0].mxu0
        %6702 = vmatprep.mubr.f32.mxu0 0.0
        %6703 = vmatmul.mubr.f32.gmra.mrb[0].mxu0 %v6503
        %v6704 = vpop.f32.mrb[0].mxu0
        %v6705 = vadd.f32 0.0, %v6704
        %v6706 = vpop.f32.mrb[0].mxu0
        %6707 = vmatprep.mubr.f32.mxu0 0.0
        %6708 = vmatmul.mubr.f32.gmra.mrb[0].mxu0 %v6506
        %v6709 = vpop.f32.mrb[0].mxu0
        %v6710 = vadd.f32 0.0, %v6709
        %v6711 = vpop.f32.mrb[0].mxu0
        %6712 = vmatprep.mubr.f32.mxu0 0.0
        %6713 = vmatmul.mubr.f32.gmra.mrb[0].mxu0 %v6509
        %v6714 = vpop.f32.mrb[0].mxu0
        %v6715 = vadd.f32 0.0, %v6714
        %v6716 = vpop.f32.mrb[0].mxu0
        %6717 = vmatprep.mubr.f32.mxu0 0.0
        %6718 = vmatmul.mubr.f32.gmra.mrb[0].mxu0 %v6512
        %v6719 = vpop.f32.mrb[0].mxu0
        %v6720 = vadd.f32 0.0, %v6719
        %v6721 = vpop.f32.mrb[0].mxu0
        %6722 = vmatprep.mubr.f32.mxu0 0.0
        %6723 = vmatmul.mubr.f32.gmra.mrb[0].mxu0 %v6515
        %v6724 = vpop.f32.mrb[0].mxu0
        %v6725 = vadd.f32 0.0, %v6724
        %v6726 = vpop.f32.mrb[0].mxu0
        %6727 = vmatprep.mubr.f32.mxu0 0.0
        %6728 = vmatmul.mubr.f32.gmra.mrb[0].mxu0 %v6518
        %v6729 = vpop.f32.mrb[0].mxu0
        %v6730 = vadd.f32 0.0, %v6729
        %v6731 = vpop.f32.mrb[0].mxu0
        %6732 = vmatprep.mubr.f32.mxu0 0.0
        %6733 = vmatmul.mubr.f32.gmra.mrb[0].mxu0 %v6521
        %v6734 = vpop.f32.mrb[0].mxu0
        %v6735 = vadd.f32 0.0, %v6734
        %v6736 = vpop.f32.mrb[0].mxu0
        %6737 = vmatprep.mubr.f32.mxu0 0.0
        %6738 = vmatmul.mubr.f32.gmra.mrb[0].mxu0 %v6524
        %v6739 = vpop.f32.mrb[0].mxu0
        %v6740 = vadd.f32 0.0, %v6739
        %v6741 = vpop.f32.mrb[0].mxu0
        %6742 = vmatprep.mubr.f32.mxu0 0.0
        %6743 = vmatmul.mubr.f32.gmra.mrb[0].mxu0 %v6527
        %v6744 = vpop.f32.mrb[0].mxu0
        %v6745 = vadd.f32 0.0, %v6744
        %v6746 = vpop.f32.mrb[0].mxu0
        %6747 = vmatprep.mubr.f32.mxu0 0.0
        %6748 = vmatmul.mubr.f32.gmra.mrb[0].mxu0 %v6530
        %v6749 = vpop.f32.mrb[0].mxu0
        %v6750 = vadd.f32 0.0, %v6749
        %v6751 = vpop.f32.mrb[0].mxu0
        %6752 = vmatprep.mubr.f32.mxu0 0.0
        %6753 = vmatmul.mubr.f32.gmra.mrb[0].mxu0 %v6533
        %v6754 = vpop.f32.mrb[0].mxu0
        %v6755 = vadd.f32 0.0, %v6754
        %v6756 = vpop.f32.mrb[0].mxu0
        %6757 = vmatprep.mubr.f32.mxu0 0.0
        %6758 = vmatmul.mubr.f32.gmra.mrb[0].mxu0 %v6536
        %v6759 = vpop.f32.mrb[0].mxu0
        %v6760 = vadd.f32 0.0, %v6759
        %v6761 = vpop.f32.mrb[0].mxu0
        %6762 = vdwg.mxu0
        %v6763 = vld [vmem:[%s7] sm:$0xff]
        %v6764 = vld [vmem:[%s7 + $0x8] sm:$0xff]
        %v6765 = vld [vmem:[%s7 + $0x10] sm:$0xff]
        %v6766 = vld [vmem:[%s7 + $0x18] sm:$0xff]
        %v6767 = vld [vmem:[%s7 + $0x20] sm:$0xff]
        %v6768 = vld [vmem:[%s7 + $0x28] sm:$0xff]
        %v6769 = vld [vmem:[%s7 + $0x30] sm:$0xff]
        %v6770 = vld [vmem:[%s7 + $0x38] sm:$0xff]
        %v6771 = vld [vmem:[%s7 + $0x40] sm:$0xff]
        %v6772 = vld [vmem:[%s7 + $0x48] sm:$0xff]
        %v6773 = vld [vmem:[%s7 + $0x50] sm:$0xff]
        %v6774 = vld [vmem:[%s7 + $0x58] sm:$0xff]
        %v6775 = vld [vmem:[%s7 + $0x60] sm:$0xff]
        %v6776 = vld [vmem:[%s7 + $0x68] sm:$0xff]
        %v6777 = vld [vmem:[%s7 + $0x70] sm:$0xff]
        %v6778 = vld [vmem:[%s7 + $0x78] sm:$0xff]
        %v6779 = vld [vmem:[%s7 + $0x80] sm:$0xff]
        %v6780 = vld [vmem:[%s7 + $0x88] sm:$0xff]
        %v6781 = vld [vmem:[%s7 + $0x90] sm:$0xff]
        %v6782 = vld [vmem:[%s7 + $0x98] sm:$0xff]
        %v6783 = vld [vmem:[%s7 + $0xa0] sm:$0xff]
        %v6784 = vld [vmem:[%s7 + $0xa8] sm:$0xff]
        %v6785 = vld [vmem:[%s7 + $0xb0] sm:$0xff]
        %v6786 = vld [vmem:[%s7 + $0xb8] sm:$0xff]
        %v6787 = vld [vmem:[%s7 + $0xc0] sm:$0xff]
        %v6788 = vld [vmem:[%s7 + $0xc8] sm:$0xff]
        %v6789 = vld [vmem:[%s7 + $0xd0] sm:$0xff]
        %v6790 = vld [vmem:[%s7 + $0xd8] sm:$0xff]
        %v6791 = vld [vmem:[%s7 + $0xe0] sm:$0xff]
        %v6792 = vld [vmem:[%s7 + $0xe8] sm:$0xff]
        %v6793 = vld [vmem:[%s7 + $0xf0] sm:$0xff]
        %v6794 = vld [vmem:[%s7 + $0xf8] sm:$0xff]
        %vm6795 = vcmask 130048
        %v6797 = vsel %vm6795, %v6763, 0
        %v6800 = vsel %vm6795, %v6764, 0
        %v6803 = vsel %vm6795, %v6765, 0
        %v6806 = vsel %vm6795, %v6766, 0
        %v6809 = vsel %vm6795, %v6767, 0
        %v6812 = vsel %vm6795, %v6768, 0
        %v6815 = vsel %vm6795, %v6769, 0
        %v6818 = vsel %vm6795, %v6770, 0
        %v6821 = vsel %vm6795, %v6771, 0
        %v6824 = vsel %vm6795, %v6772, 0
        %v6827 = vsel %vm6795, %v6773, 0
        %v6830 = vsel %vm6795, %v6774, 0
        %v6833 = vsel %vm6795, %v6775, 0
        %v6836 = vsel %vm6795, %v6776, 0
        %v6839 = vsel %vm6795, %v6777, 0
        %v6842 = vsel %vm6795, %v6778, 0
        %v6845 = vsel %vm6795, %v6779, 0
        %v6848 = vsel %vm6795, %v6780, 0
        %v6851 = vsel %vm6795, %v6781, 0
        %v6854 = vsel %vm6795, %v6782, 0
        %v6857 = vsel %vm6795, %v6783, 0
        %v6860 = vsel %vm6795, %v6784, 0
        %v6863 = vsel %vm6795, %v6785, 0
        %v6866 = vsel %vm6795, %v6786, 0
        %v6869 = vsel %vm6795, %v6787, 0
        %v6872 = vsel %vm6795, %v6788, 0
        %v6875 = vsel %vm6795, %v6789, 0
        %v6878 = vsel %vm6795, %v6790, 0
        %v6881 = vsel %vm6795, %v6791, 0
        %v6884 = vsel %vm6795, %v6792, 0
        %v6887 = vsel %vm6795, %v6793, 0
        %v6890 = vsel %vm6795, %v6794, 0
        %6892 = vmatprep.subr.mxu0 0.0
        %6893 = vmatpush1.msra.mxu0 %v6407
        %6894 = vmatprep.subr.mxu0 0.0
        %6895 = vmatpush1.msra.mxu0 %v6408
        %6896 = vmatprep.subr.mxu0 0.0
        %6897 = vmatpush1.msra.mxu0 0.0
        %6898 = vmatprep.subr.mxu0 0.0
        %6899 = vmatpush1.msra.mxu0 0.0
        %6900 = vmatprep.subr.mxu0 0.0
        %6901 = vmatpush1.msra.mxu0 0.0
        %6902 = vmatprep.subr.mxu0 0.0
        %6903 = vmatpush1.msra.mxu0 0.0
        %6904 = vmatprep.subr.mxu0 0.0
        %6905 = vmatpush1.msra.mxu0 0.0
        %6906 = vmatprep.subr.mxu0 0.0
        %6907 = vmatpush1.msra.mxu0 0.0
        %6908 = vmatprep.subr.mxu0 0.0
        %6909 = vmatpush1.msra.mxu0 0.0
        %6910 = vmatprep.subr.mxu0 0.0
        %6911 = vmatpush1.msra.mxu0 0.0
        %6912 = vmatprep.subr.mxu0 0.0
        %6913 = vmatpush1.msra.mxu0 0.0
        %6914 = vmatprep.subr.mxu0 0.0
        %6915 = vmatpush1.msra.mxu0 0.0
        %6916 = vmatprep.subr.mxu0 0.0
        %6917 = vmatpush1.msra.mxu0 0.0
        %6918 = vmatprep.subr.mxu0 0.0
        %6919 = vmatpush1.msra.mxu0 0.0
        %6920 = vmatprep.subr.mxu0 0.0
        %6921 = vmatpush1.msra.mxu0 0.0
        %6922 = vmatprep.subr.mxu0 0.0
        %6923 = vmatpush1.msra.mxu0 0.0
        %6924 = vmatprep.subr.mxu0 0.0
        %6925 = vmatpush1.msra.mxu0 0.0
        %6926 = vmatprep.subr.mxu0 0.0
        %6927 = vmatpush1.msra.mxu0 0.0
        %6928 = vmatprep.subr.mxu0 0.0
        %6929 = vmatpush1.msra.mxu0 0.0
        %6930 = vmatprep.subr.mxu0 0.0
        %6931 = vmatpush1.msra.mxu0 0.0
        %6932 = vmatprep.subr.mxu0 0.0
        %6933 = vmatpush1.msra.mxu0 0.0
        %6934 = vmatprep.subr.mxu0 0.0
        %6935 = vmatpush1.msra.mxu0 0.0
        %6936 = vmatprep.subr.mxu0 0.0
        %6937 = vmatpush1.msra.mxu0 0.0
        %6938 = vmatprep.subr.mxu0 0.0
        %6939 = vmatpush1.msra.mxu0 0.0
        %6940 = vmatprep.subr.mxu0 0.0
        %6941 = vmatpush1.msra.mxu0 0.0
        %6942 = vmatprep.subr.mxu0 0.0
        %6943 = vmatpush1.msra.mxu0 0.0
        %6944 = vmatprep.subr.mxu0 0.0
        %6945 = vmatpush1.msra.mxu0 0.0
        %6946 = vmatprep.subr.mxu0 0.0
        %6947 = vmatpush1.msra.mxu0 0.0
        %6948 = vmatprep.subr.mxu0 0.0
        %6949 = vmatpush1.msra.mxu0 0.0
        %6950 = vmatprep.subr.mxu0 0.0
        %6951 = vmatpush1.msra.mxu0 0.0
        %6952 = vmatprep.subr.mxu0 0.0
        %6953 = vmatpush1.msra.mxu0 0.0
        %6954 = vmatprep.subr.mxu0 0.0
        %6955 = vmatpush1.msra.mxu0 0.0
        %6956 = vmatprep.mubr.f32.mxu0 0.0
        %6957 = vmatmul.mubr.f32.gmra.mrb[0].mxu0 %v6797
        %v6958 = vpop.f32.mrb[0].mxu0
        %v6959 = vadd.f32 0.0, %v6958
        %v6960 = vpop.f32.mrb[0].mxu0
        %6961 = vmatprep.mubr.f32.mxu0 0.0
        %6962 = vmatmul.mubr.f32.gmra.mrb[0].mxu0 %v6800
        %v6963 = vpop.f32.mrb[0].mxu0
        %v6964 = vadd.f32 0.0, %v6963
        %v6965 = vpop.f32.mrb[0].mxu0
        %6966 = vmatprep.mubr.f32.mxu0 0.0
        %6967 = vmatmul.mubr.f32.gmra.mrb[0].mxu0 %v6803
        %v6968 = vpop.f32.mrb[0].mxu0
        %v6969 = vadd.f32 0.0, %v6968
        %v6970 = vpop.f32.mrb[0].mxu0
        %6971 = vmatprep.mubr.f32.mxu0 0.0
        %6972 = vmatmul.mubr.f32.gmra.mrb[0].mxu0 %v6806
        %v6973 = vpop.f32.mrb[0].mxu0
        %v6974 = vadd.f32 0.0, %v6973
        %v6975 = vpop.f32.mrb[0].mxu0
        %6976 = vmatprep.mubr.f32.mxu0 0.0
        %6977 = vmatmul.mubr.f32.gmra.mrb[0].mxu0 %v6809
        %v6978 = vpop.f32.mrb[0].mxu0
        %v6979 = vadd.f32 0.0, %v6978
        %v6980 = vpop.f32.mrb[0].mxu0
        %6981 = vmatprep.mubr.f32.mxu0 0.0
        %6982 = vmatmul.mubr.f32.gmra.mrb[0].mxu0 %v6812
        %v6983 = vpop.f32.mrb[0].mxu0
        %v6984 = vadd.f32 0.0, %v6983
        %v6985 = vpop.f32.mrb[0].mxu0
        %6986 = vmatprep.mubr.f32.mxu0 0.0
        %6987 = vmatmul.mubr.f32.gmra.mrb[0].mxu0 %v6815
        %v6988 = vpop.f32.mrb[0].mxu0
        %v6989 = vadd.f32 0.0, %v6988
        %v6990 = vpop.f32.mrb[0].mxu0
        %6991 = vmatprep.mubr.f32.mxu0 0.0
        %6992 = vmatmul.mubr.f32.gmra.mrb[0].mxu0 %v6818
        %v6993 = vpop.f32.mrb[0].mxu0
        %v6994 = vadd.f32 0.0, %v6993
        %v6995 = vpop.f32.mrb[0].mxu0
        %6996 = vmatprep.mubr.f32.mxu0 0.0
        %6997 = vmatmul.mubr.f32.gmra.mrb[0].mxu0 %v6821
        %v6998 = vpop.f32.mrb[0].mxu0
        %v6999 = vadd.f32 0.0, %v6998
        %v7000 = vpop.f32.mrb[0].mxu0
        %7001 = vmatprep.mubr.f32.mxu0 0.0
        %7002 = vmatmul.mubr.f32.gmra.mrb[0].mxu0 %v6824
        %v7003 = vpop.f32.mrb[0].mxu0
        %v7004 = vadd.f32 0.0, %v7003
        %v7005 = vpop.f32.mrb[0].mxu0
        %7006 = vmatprep.mubr.f32.mxu0 0.0
        %7007 = vmatmul.mubr.f32.gmra.mrb[0].mxu0 %v6827
        %v7008 = vpop.f32.mrb[0].mxu0
        %v7009 = vadd.f32 0.0, %v7008
        %v7010 = vpop.f32.mrb[0].mxu0
        %7011 = vmatprep.mubr.f32.mxu0 0.0
        %7012 = vmatmul.mubr.f32.gmra.mrb[0].mxu0 %v6830
        %v7013 = vpop.f32.mrb[0].mxu0
        %v7014 = vadd.f32 0.0, %v7013
        %v7015 = vpop.f32.mrb[0].mxu0
        %7016 = vmatprep.mubr.f32.mxu0 0.0
        %7017 = vmatmul.mubr.f32.gmra.mrb[0].mxu0 %v6833
        %v7018 = vpop.f32.mrb[0].mxu0
        %v7019 = vadd.f32 0.0, %v7018
        %v7020 = vpop.f32.mrb[0].mxu0
        %7021 = vmatprep.mubr.f32.mxu0 0.0
        %7022 = vmatmul.mubr.f32.gmra.mrb[0].mxu0 %v6836
        %v7023 = vpop.f32.mrb[0].mxu0
        %v7024 = vadd.f32 0.0, %v7023
        %v7025 = vpop.f32.mrb[0].mxu0
        %7026 = vmatprep.mubr.f32.mxu0 0.0
        %7027 = vmatmul.mubr.f32.gmra.mrb[0].mxu0 %v6839
        %v7028 = vpop.f32.mrb[0].mxu0
        %v7029 = vadd.f32 0.0, %v7028
        %v7030 = vpop.f32.mrb[0].mxu0
        %7031 = vmatprep.mubr.f32.mxu0 0.0
        %7032 = vmatmul.mubr.f32.gmra.mrb[0].mxu0 %v6842
        %v7033 = vpop.f32.mrb[0].mxu0
        %v7034 = vadd.f32 0.0, %v7033
        %v7035 = vpop.f32.mrb[0].mxu0
        %7036 = vmatprep.mubr.f32.mxu0 0.0
        %7037 = vmatmul.mubr.f32.gmra.mrb[0].mxu0 %v6845
        %v7038 = vpop.f32.mrb[0].mxu0
        %v7039 = vadd.f32 0.0, %v7038
        %v7040 = vpop.f32.mrb[0].mxu0
        %7041 = vmatprep.mubr.f32.mxu0 0.0
        %7042 = vmatmul.mubr.f32.gmra.mrb[0].mxu0 %v6848
        %v7043 = vpop.f32.mrb[0].mxu0
        %v7044 = vadd.f32 0.0, %v7043
        %v7045 = vpop.f32.mrb[0].mxu0
        %7046 = vmatprep.mubr.f32.mxu0 0.0
        %7047 = vmatmul.mubr.f32.gmra.mrb[0].mxu0 %v6851
        %v7048 = vpop.f32.mrb[0].mxu0
        %v7049 = vadd.f32 0.0, %v7048
        %v7050 = vpop.f32.mrb[0].mxu0
        %7051 = vmatprep.mubr.f32.mxu0 0.0
        %7052 = vmatmul.mubr.f32.gmra.mrb[0].mxu0 %v6854
        %v7053 = vpop.f32.mrb[0].mxu0
        %v7054 = vadd.f32 0.0, %v7053
        %v7055 = vpop.f32.mrb[0].mxu0
        %7056 = vmatprep.mubr.f32.mxu0 0.0
        %7057 = vmatmul.mubr.f32.gmra.mrb[0].mxu0 %v6857
        %v7058 = vpop.f32.mrb[0].mxu0
        %v7059 = vadd.f32 0.0, %v7058
        %v7060 = vpop.f32.mrb[0].mxu0
        %7061 = vmatprep.mubr.f32.mxu0 0.0
        %7062 = vmatmul.mubr.f32.gmra.mrb[0].mxu0 %v6860
        %v7063 = vpop.f32.mrb[0].mxu0
        %v7064 = vadd.f32 0.0, %v7063
        %v7065 = vpop.f32.mrb[0].mxu0
        %7066 = vmatprep.mubr.f32.mxu0 0.0
        %7067 = vmatmul.mubr.f32.gmra.mrb[0].mxu0 %v6863
        %v7068 = vpop.f32.mrb[0].mxu0
        %v7069 = vadd.f32 0.0, %v7068
        %v7070 = vpop.f32.mrb[0].mxu0
        %7071 = vmatprep.mubr.f32.mxu0 0.0
        %7072 = vmatmul.mubr.f32.gmra.mrb[0].mxu0 %v6866
        %v7073 = vpop.f32.mrb[0].mxu0
        %v7074 = vadd.f32 0.0, %v7073
        %v7075 = vpop.f32.mrb[0].mxu0
        %7076 = vmatprep.mubr.f32.mxu0 0.0
        %7077 = vmatmul.mubr.f32.gmra.mrb[0].mxu0 %v6869
        %v7078 = vpop.f32.mrb[0].mxu0
        %v7079 = vadd.f32 0.0, %v7078
        %v7080 = vpop.f32.mrb[0].mxu0
        %7081 = vmatprep.mubr.f32.mxu0 0.0
        %7082 = vmatmul.mubr.f32.gmra.mrb[0].mxu0 %v6872
        %v7083 = vpop.f32.mrb[0].mxu0
        %v7084 = vadd.f32 0.0, %v7083
        %v7085 = vpop.f32.mrb[0].mxu0
        %7086 = vmatprep.mubr.f32.mxu0 0.0
        %7087 = vmatmul.mubr.f32.gmra.mrb[0].mxu0 %v6875
        %v7088 = vpop.f32.mrb[0].mxu0
        %v7089 = vadd.f32 0.0, %v7088
        %v7090 = vpop.f32.mrb[0].mxu0
        %7091 = vmatprep.mubr.f32.mxu0 0.0
        %7092 = vmatmul.mubr.f32.gmra.mrb[0].mxu0 %v6878
        %v7093 = vpop.f32.mrb[0].mxu0
        %v7094 = vadd.f32 0.0, %v7093
        %v7095 = vpop.f32.mrb[0].mxu0
        %7096 = vmatprep.mubr.f32.mxu0 0.0
        %7097 = vmatmul.mubr.f32.gmra.mrb[0].mxu0 %v6881
        %v7098 = vpop.f32.mrb[0].mxu0
        %v7099 = vadd.f32 0.0, %v7098
        %v7100 = vpop.f32.mrb[0].mxu0
        %7101 = vmatprep.mubr.f32.mxu0 0.0
        %7102 = vmatmul.mubr.f32.gmra.mrb[0].mxu0 %v6884
        %v7103 = vpop.f32.mrb[0].mxu0
        %v7104 = vadd.f32 0.0, %v7103
        %v7105 = vpop.f32.mrb[0].mxu0
        %7106 = vmatprep.mubr.f32.mxu0 0.0
        %7107 = vmatmul.mubr.f32.gmra.mrb[0].mxu0 %v6887
        %v7108 = vpop.f32.mrb[0].mxu0
        %v7109 = vadd.f32 0.0, %v7108
        %v7110 = vpop.f32.mrb[0].mxu0
        %7111 = vmatprep.mubr.f32.mxu0 0.0
        %7112 = vmatmul.mubr.f32.gmra.mrb[0].mxu0 %v6890
        %v7113 = vpop.f32.mrb[0].mxu0
        %v7114 = vadd.f32 0.0, %v7113
        %v7115 = vpop.f32.mrb[0].mxu0
        %7116 = vdwg.mxu0
        %v7117 = vld [vmem:[%s8] sm:$0xff]
        %v7118 = vld [vmem:[%s8 + $0x8] sm:$0xff]
        %v7119 = vld [vmem:[%s8 + $0x10] sm:$0xff]
        %v7120 = vld [vmem:[%s8 + $0x18] sm:$0xff]
        %v7121 = vld [vmem:[%s8 + $0x20] sm:$0xff]
        %v7122 = vld [vmem:[%s8 + $0x28] sm:$0xff]
        %v7123 = vld [vmem:[%s8 + $0x30] sm:$0xff]
        %v7124 = vld [vmem:[%s8 + $0x38] sm:$0xff]
        %v7125 = vld [vmem:[%s8 + $0x40] sm:$0xff]
        %v7126 = vld [vmem:[%s8 + $0x48] sm:$0xff]
        %v7127 = vld [vmem:[%s8 + $0x50] sm:$0xff]
        %v7128 = vld [vmem:[%s8 + $0x58] sm:$0xff]
        %v7129 = vld [vmem:[%s8 + $0x60] sm:$0xff]
        %v7130 = vld [vmem:[%s8 + $0x68] sm:$0xff]
        %v7131 = vld [vmem:[%s8 + $0x70] sm:$0xff]
        %v7132 = vld [vmem:[%s8 + $0x78] sm:$0xff]
        %s7133 = scalar_lea.vmem %s8, 128
        %v7134 = vld [vmem:[%s7133] sm:$0xff]
        %v7135 = vld [vmem:[%s7133 + $0x8] sm:$0xff]
        %v7136 = vld [vmem:[%s7133 + $0x10] sm:$0xff]
        %v7137 = vld [vmem:[%s7133 + $0x18] sm:$0xff]
        %v7138 = vld [vmem:[%s7133 + $0x20] sm:$0xff]
        %v7139 = vld [vmem:[%s7133 + $0x28] sm:$0xff]
        %v7140 = vld [vmem:[%s7133 + $0x30] sm:$0xff]
        %v7141 = vld [vmem:[%s7133 + $0x38] sm:$0xff]
        %v7142 = vld [vmem:[%s7133 + $0x40] sm:$0xff]
        %v7143 = vld [vmem:[%s7133 + $0x48] sm:$0xff]
        %v7144 = vld [vmem:[%s7133 + $0x50] sm:$0xff]
        %v7145 = vld [vmem:[%s7133 + $0x58] sm:$0xff]
        %v7146 = vld [vmem:[%s7133 + $0x60] sm:$0xff]
        %v7147 = vld [vmem:[%s7133 + $0x68] sm:$0xff]
        %v7148 = vld [vmem:[%s7133 + $0x70] sm:$0xff]
        %v7149 = vld [vmem:[%s7133 + $0x78] sm:$0xff]
        %7150 = vmatprep.subr.mxu0 0.0
        %7151 = vmatpush1.msra.mxu0 %v7134
        %7152 = vmatprep.subr.mxu0 0.0
        %7153 = vmatpush1.msra.mxu0 %v7135
        %7154 = vmatprep.subr.mxu0 0.0
        %7155 = vmatpush1.msra.mxu0 %v7136
        %7156 = vmatprep.subr.mxu0 0.0
        %7157 = vmatpush1.msra.mxu0 %v7137
        %7158 = vmatprep.subr.mxu0 0.0
        %7159 = vmatpush1.msra.mxu0 %v7138
        %7160 = vmatprep.subr.mxu0 0.0
        %7161 = vmatpush1.msra.mxu0 %v7139
        %7162 = vmatprep.subr.mxu0 0.0
        %7163 = vmatpush1.msra.mxu0 %v7140
        %7164 = vmatprep.subr.mxu0 0.0
        %7165 = vmatpush1.msra.mxu0 %v7141
        %7166 = vmatprep.subr.mxu0 0.0
        %7167 = vmatpush1.msra.mxu0 %v7142
        %7168 = vmatprep.subr.mxu0 0.0
        %7169 = vmatpush1.msra.mxu0 %v7143
        %7170 = vmatprep.subr.mxu0 0.0
        %7171 = vmatpush1.msra.mxu0 %v7144
        %7172 = vmatprep.subr.mxu0 0.0
        %7173 = vmatpush1.msra.mxu0 %v7145
        %7174 = vmatprep.subr.mxu0 0.0
        %7175 = vmatpush1.msra.mxu0 %v7146
        %7176 = vmatprep.subr.mxu0 0.0
        %7177 = vmatpush1.msra.mxu0 %v7147
        %7178 = vmatprep.subr.mxu0 0.0
        %7179 = vmatpush1.msra.mxu0 %v7148
        %7180 = vmatprep.subr.mxu0 0.0
        %7181 = vmatpush1.msra.mxu0 %v7149
        %7182 = vmatprep.subr.mxu0 0.0
        %7183 = vmatpush1.msra.mxu0 0.0
        %7184 = vmatprep.subr.mxu0 0.0
        %7185 = vmatpush1.msra.mxu0 0.0
        %7186 = vmatprep.subr.mxu0 0.0
        %7187 = vmatpush1.msra.mxu0 0.0
        %7188 = vmatprep.subr.mxu0 0.0
        %7189 = vmatpush1.msra.mxu0 0.0
        %7190 = vmatprep.subr.mxu0 0.0
        %7191 = vmatpush1.msra.mxu0 0.0
        %7192 = vmatprep.subr.mxu0 0.0
        %7193 = vmatpush1.msra.mxu0 0.0
        %7194 = vmatprep.subr.mxu0 0.0
        %7195 = vmatpush1.msra.mxu0 0.0
        %7196 = vmatprep.subr.mxu0 0.0
        %7197 = vmatpush1.msra.mxu0 0.0
        %7198 = vmatprep.subr.mxu0 0.0
        %7199 = vmatpush1.msra.mxu0 0.0
        %7200 = vmatprep.subr.mxu0 0.0
        %7201 = vmatpush1.msra.mxu0 0.0
        %7202 = vmatprep.subr.mxu0 0.0
        %7203 = vmatpush1.msra.mxu0 0.0
        %7204 = vmatprep.subr.mxu0 0.0
        %7205 = vmatpush1.msra.mxu0 0.0
        %7206 = vmatprep.subr.mxu0 0.0
        %7207 = vmatpush1.msra.mxu0 0.0
        %7208 = vmatprep.subr.mxu0 0.0
        %7209 = vmatpush1.msra.mxu0 0.0
        %7210 = vmatprep.subr.mxu0 0.0
        %7211 = vmatpush1.msra.mxu0 0.0
        %7212 = vmatprep.subr.mxu0 0.0
        %7213 = vmatpush1.msra.mxu0 0.0
        %7214 = vmatprep.mubr.f32.mxu0 0.0
        %7215 = vmatmul.mubr.f32.gmra.mrb[0].mxu0 %v6605
        %v7216 = vpop.f32.mrb[0].mxu0
        %v7217 = vadd.f32 0.0, %v7216
        %v7218 = vpop.f32.mrb[0].mxu0
        %7219 = vmatprep.mubr.f32.mxu0 0.0
        %7220 = vmatmul.mubr.f32.gmra.mrb[0].mxu0 %v6610
        %v7221 = vpop.f32.mrb[0].mxu0
        %v7222 = vadd.f32 0.0, %v7221
        %v7223 = vpop.f32.mrb[0].mxu0
        %7224 = vmatprep.mubr.f32.mxu0 0.0
        %7225 = vmatmul.mubr.f32.gmra.mrb[0].mxu0 %v6615
        %v7226 = vpop.f32.mrb[0].mxu0
        %v7227 = vadd.f32 0.0, %v7226
        %v7228 = vpop.f32.mrb[0].mxu0
        %7229 = vmatprep.mubr.f32.mxu0 0.0
        %7230 = vmatmul.mubr.f32.gmra.mrb[0].mxu0 %v6620
        %v7231 = vpop.f32.mrb[0].mxu0
        %v7232 = vadd.f32 0.0, %v7231
        %v7233 = vpop.f32.mrb[0].mxu0
        %7234 = vmatprep.mubr.f32.mxu0 0.0
        %7235 = vmatmul.mubr.f32.gmra.mrb[0].mxu0 %v6625
        %v7236 = vpop.f32.mrb[0].mxu0
        %v7237 = vadd.f32 0.0, %v7236
        %v7238 = vpop.f32.mrb[0].mxu0
        %7239 = vmatprep.mubr.f32.mxu0 0.0
        %7240 = vmatmul.mubr.f32.gmra.mrb[0].mxu0 %v6630
        %v7241 = vpop.f32.mrb[0].mxu0
        %v7242 = vadd.f32 0.0, %v7241
        %v7243 = vpop.f32.mrb[0].mxu0
        %7244 = vmatprep.mubr.f32.mxu0 0.0
        %7245 = vmatmul.mubr.f32.gmra.mrb[0].mxu0 %v6635
        %v7246 = vpop.f32.mrb[0].mxu0
        %v7247 = vadd.f32 0.0, %v7246
        %v7248 = vpop.f32.mrb[0].mxu0
        %7249 = vmatprep.mubr.f32.mxu0 0.0
        %7250 = vmatmul.mubr.f32.gmra.mrb[0].mxu0 %v6640
        %v7251 = vpop.f32.mrb[0].mxu0
        %v7252 = vadd.f32 0.0, %v7251
        %v7253 = vpop.f32.mrb[0].mxu0
        %7254 = vmatprep.mubr.f32.mxu0 0.0
        %7255 = vmatmul.mubr.f32.gmra.mrb[0].mxu0 %v6645
        %v7256 = vpop.f32.mrb[0].mxu0
        %v7257 = vadd.f32 0.0, %v7256
        %v7258 = vpop.f32.mrb[0].mxu0
        %7259 = vmatprep.mubr.f32.mxu0 0.0
        %7260 = vmatmul.mubr.f32.gmra.mrb[0].mxu0 %v6650
        %v7261 = vpop.f32.mrb[0].mxu0
        %v7262 = vadd.f32 0.0, %v7261
        %v7263 = vpop.f32.mrb[0].mxu0
        %7264 = vmatprep.mubr.f32.mxu0 0.0
        %7265 = vmatmul.mubr.f32.gmra.mrb[0].mxu0 %v6655
        %v7266 = vpop.f32.mrb[0].mxu0
        %v7267 = vadd.f32 0.0, %v7266
        %v7268 = vpop.f32.mrb[0].mxu0
        %7269 = vmatprep.mubr.f32.mxu0 0.0
        %7270 = vmatmul.mubr.f32.gmra.mrb[0].mxu0 %v6660
        %v7271 = vpop.f32.mrb[0].mxu0
        %v7272 = vadd.f32 0.0, %v7271
        %v7273 = vpop.f32.mrb[0].mxu0
        %7274 = vmatprep.mubr.f32.mxu0 0.0
        %7275 = vmatmul.mubr.f32.gmra.mrb[0].mxu0 %v6665
        %v7276 = vpop.f32.mrb[0].mxu0
        %v7277 = vadd.f32 0.0, %v7276
        %v7278 = vpop.f32.mrb[0].mxu0
        %7279 = vmatprep.mubr.f32.mxu0 0.0
        %7280 = vmatmul.mubr.f32.gmra.mrb[0].mxu0 %v6670
        %v7281 = vpop.f32.mrb[0].mxu0
        %v7282 = vadd.f32 0.0, %v7281
        %v7283 = vpop.f32.mrb[0].mxu0
        %7284 = vmatprep.mubr.f32.mxu0 0.0
        %7285 = vmatmul.mubr.f32.gmra.mrb[0].mxu0 %v6675
        %v7286 = vpop.f32.mrb[0].mxu0
        %v7287 = vadd.f32 0.0, %v7286
        %v7288 = vpop.f32.mrb[0].mxu0
        %7289 = vmatprep.mubr.f32.mxu0 0.0
        %7290 = vmatmul.mubr.f32.gmra.mrb[0].mxu0 %v6680
        %v7291 = vpop.f32.mrb[0].mxu0
        %v7292 = vadd.f32 0.0, %v7291
        %v7293 = vpop.f32.mrb[0].mxu0
        %7294 = vmatprep.mubr.f32.mxu0 0.0
        %7295 = vmatmul.mubr.f32.gmra.mrb[0].mxu0 %v6685
        %v7296 = vpop.f32.mrb[0].mxu0
        %v7297 = vadd.f32 0.0, %v7296
        %v7298 = vpop.f32.mrb[0].mxu0
        %7299 = vmatprep.mubr.f32.mxu0 0.0
        %7300 = vmatmul.mubr.f32.gmra.mrb[0].mxu0 %v6690
        %v7301 = vpop.f32.mrb[0].mxu0
        %v7302 = vadd.f32 0.0, %v7301
        %v7303 = vpop.f32.mrb[0].mxu0
        %7304 = vmatprep.mubr.f32.mxu0 0.0
        %7305 = vmatmul.mubr.f32.gmra.mrb[0].mxu0 %v6695
        %v7306 = vpop.f32.mrb[0].mxu0
        %v7307 = vadd.f32 0.0, %v7306
        %v7308 = vpop.f32.mrb[0].mxu0
        %7309 = vmatprep.mubr.f32.mxu0 0.0
        %7310 = vmatmul.mubr.f32.gmra.mrb[0].mxu0 %v6700
        %v7311 = vpop.f32.mrb[0].mxu0
        %v7312 = vadd.f32 0.0, %v7311
        %v7313 = vpop.f32.mrb[0].mxu0
        %7314 = vmatprep.mubr.f32.mxu0 0.0
        %7315 = vmatmul.mubr.f32.gmra.mrb[0].mxu0 %v6705
        %v7316 = vpop.f32.mrb[0].mxu0
        %v7317 = vadd.f32 0.0, %v7316
        %v7318 = vpop.f32.mrb[0].mxu0
        %7319 = vmatprep.mubr.f32.mxu0 0.0
        %7320 = vmatmul.mubr.f32.gmra.mrb[0].mxu0 %v6710
        %v7321 = vpop.f32.mrb[0].mxu0
        %v7322 = vadd.f32 0.0, %v7321
        %v7323 = vpop.f32.mrb[0].mxu0
        %7324 = vmatprep.mubr.f32.mxu0 0.0
        %7325 = vmatmul.mubr.f32.gmra.mrb[0].mxu0 %v6715
        %v7326 = vpop.f32.mrb[0].mxu0
        %v7327 = vadd.f32 0.0, %v7326
        %v7328 = vpop.f32.mrb[0].mxu0
        %7329 = vmatprep.mubr.f32.mxu0 0.0
        %7330 = vmatmul.mubr.f32.gmra.mrb[0].mxu0 %v6720
        %v7331 = vpop.f32.mrb[0].mxu0
        %v7332 = vadd.f32 0.0, %v7331
        %v7333 = vpop.f32.mrb[0].mxu0
        %7334 = vmatprep.mubr.f32.mxu0 0.0
        %7335 = vmatmul.mubr.f32.gmra.mrb[0].mxu0 %v6725
        %v7336 = vpop.f32.mrb[0].mxu0
        %v7337 = vadd.f32 0.0, %v7336
        %v7338 = vpop.f32.mrb[0].mxu0
        %7339 = vmatprep.mubr.f32.mxu0 0.0
        %7340 = vmatmul.mubr.f32.gmra.mrb[0].mxu0 %v6730
        %v7341 = vpop.f32.mrb[0].mxu0
        %v7342 = vadd.f32 0.0, %v7341
        %v7343 = vpop.f32.mrb[0].mxu0
        %7344 = vmatprep.mubr.f32.mxu0 0.0
        %7345 = vmatmul.mubr.f32.gmra.mrb[0].mxu0 %v6735
        %v7346 = vpop.f32.mrb[0].mxu0
        %v7347 = vadd.f32 0.0, %v7346
        %v7348 = vpop.f32.mrb[0].mxu0
        %7349 = vmatprep.mubr.f32.mxu0 0.0
        %7350 = vmatmul.mubr.f32.gmra.mrb[0].mxu0 %v6740
        %v7351 = vpop.f32.mrb[0].mxu0
        %v7352 = vadd.f32 0.0, %v7351
        %v7353 = vpop.f32.mrb[0].mxu0
        %7354 = vmatprep.mubr.f32.mxu0 0.0
        %7355 = vmatmul.mubr.f32.gmra.mrb[0].mxu0 %v6745
        %v7356 = vpop.f32.mrb[0].mxu0
        %v7357 = vadd.f32 0.0, %v7356
        %v7358 = vpop.f32.mrb[0].mxu0
        %7359 = vmatprep.mubr.f32.mxu0 0.0
        %7360 = vmatmul.mubr.f32.gmra.mrb[0].mxu0 %v6750
        %v7361 = vpop.f32.mrb[0].mxu0
        %v7362 = vadd.f32 0.0, %v7361
        %v7363 = vpop.f32.mrb[0].mxu0
        %7364 = vmatprep.mubr.f32.mxu0 0.0
        %7365 = vmatmul.mubr.f32.gmra.mrb[0].mxu0 %v6755
        %v7366 = vpop.f32.mrb[0].mxu0
        %v7367 = vadd.f32 0.0, %v7366
        %v7368 = vpop.f32.mrb[0].mxu0
        %7369 = vmatprep.mubr.f32.mxu0 0.0
        %7370 = vmatmul.mubr.f32.gmra.mrb[0].mxu0 %v6760
        %v7371 = vpop.f32.mrb[0].mxu0
        %v7372 = vadd.f32 0.0, %v7371
        %v7373 = vpop.f32.mrb[0].mxu0
        %7374 = vdwg.mxu0
        %7375 = vmatprep.subr.mxu0 0.0
        %7376 = vmatpush1.msra.mxu0 %v7117
        %7377 = vmatprep.subr.mxu0 0.0
        %7378 = vmatpush1.msra.mxu0 %v7118
        %7379 = vmatprep.subr.mxu0 0.0
        %7380 = vmatpush1.msra.mxu0 %v7119
        %7381 = vmatprep.subr.mxu0 0.0
        %7382 = vmatpush1.msra.mxu0 %v7120
        %7383 = vmatprep.subr.mxu0 0.0
        %7384 = vmatpush1.msra.mxu0 %v7121
        %7385 = vmatprep.subr.mxu0 0.0
        %7386 = vmatpush1.msra.mxu0 %v7122
        %7387 = vmatprep.subr.mxu0 0.0
        %7388 = vmatpush1.msra.mxu0 %v7123
        %7389 = vmatprep.subr.mxu0 0.0
        %7390 = vmatpush1.msra.mxu0 %v7124
        %7391 = vmatprep.subr.mxu0 0.0
        %7392 = vmatpush1.msra.mxu0 %v7125
        %7393 = vmatprep.subr.mxu0 0.0
        %7394 = vmatpush1.msra.mxu0 %v7126
        %7395 = vmatprep.subr.mxu0 0.0
        %7396 = vmatpush1.msra.mxu0 %v7127
        %7397 = vmatprep.subr.mxu0 0.0
        %7398 = vmatpush1.msra.mxu0 %v7128
        %7399 = vmatprep.subr.mxu0 0.0
        %7400 = vmatpush1.msra.mxu0 %v7129
        %7401 = vmatprep.subr.mxu0 0.0
        %7402 = vmatpush1.msra.mxu0 %v7130
        %7403 = vmatprep.subr.mxu0 0.0
        %7404 = vmatpush1.msra.mxu0 %v7131
        %7405 = vmatprep.subr.mxu0 0.0
        %7406 = vmatpush1.msra.mxu0 %v7132
        %7407 = vmatprep.subr.mxu0 0.0
        %7408 = vmatpush1.msra.mxu0 0.0
        %7409 = vmatprep.subr.mxu0 0.0
        %7410 = vmatpush1.msra.mxu0 0.0
        %7411 = vmatprep.subr.mxu0 0.0
        %7412 = vmatpush1.msra.mxu0 0.0
        %7413 = vmatprep.subr.mxu0 0.0
        %7414 = vmatpush1.msra.mxu0 0.0
        %7415 = vmatprep.subr.mxu0 0.0
        %7416 = vmatpush1.msra.mxu0 0.0
        %7417 = vmatprep.subr.mxu0 0.0
        %7418 = vmatpush1.msra.mxu0 0.0
        %7419 = vmatprep.subr.mxu0 0.0
        %7420 = vmatpush1.msra.mxu0 0.0
        %7421 = vmatprep.subr.mxu0 0.0
        %7422 = vmatpush1.msra.mxu0 0.0
        %7423 = vmatprep.subr.mxu0 0.0
        %7424 = vmatpush1.msra.mxu0 0.0
        %7425 = vmatprep.subr.mxu0 0.0
        %7426 = vmatpush1.msra.mxu0 0.0
        %7427 = vmatprep.subr.mxu0 0.0
        %7428 = vmatpush1.msra.mxu0 0.0
        %7429 = vmatprep.subr.mxu0 0.0
        %7430 = vmatpush1.msra.mxu0 0.0
        %7431 = vmatprep.subr.mxu0 0.0
        %7432 = vmatpush1.msra.mxu0 0.0
        %7433 = vmatprep.subr.mxu0 0.0
        %7434 = vmatpush1.msra.mxu0 0.0
        %7435 = vmatprep.subr.mxu0 0.0
        %7436 = vmatpush1.msra.mxu0 0.0
        %7437 = vmatprep.subr.mxu0 0.0
        %7438 = vmatpush1.msra.mxu0 0.0
        %7439 = vmatprep.mubr.f32.mxu0 0.0
        %7440 = vmatmul.mubr.f32.gmra.mrb[0].mxu0 %v4065
        %v7441 = vpop.f32.mrb[0].mxu0
        %v7442 = vadd.f32 %v7217, %v7441
        %v7443 = vpop.f32.mrb[0].mxu0
        %7444 = vmatprep.mubr.f32.mxu0 0.0
        %7445 = vmatmul.mubr.f32.gmra.mrb[0].mxu0 %v4066
        %v7446 = vpop.f32.mrb[0].mxu0
        %v7447 = vadd.f32 %v7222, %v7446
        %v7448 = vpop.f32.mrb[0].mxu0
        %7449 = vmatprep.mubr.f32.mxu0 0.0
        %7450 = vmatmul.mubr.f32.gmra.mrb[0].mxu0 %v4067
        %v7451 = vpop.f32.mrb[0].mxu0
        %v7452 = vadd.f32 %v7227, %v7451
        %v7453 = vpop.f32.mrb[0].mxu0
        %7454 = vmatprep.mubr.f32.mxu0 0.0
        %7455 = vmatmul.mubr.f32.gmra.mrb[0].mxu0 %v4068
        %v7456 = vpop.f32.mrb[0].mxu0
        %v7457 = vadd.f32 %v7232, %v7456
        %v7458 = vpop.f32.mrb[0].mxu0
        %7459 = vmatprep.mubr.f32.mxu0 0.0
        %7460 = vmatmul.mubr.f32.gmra.mrb[0].mxu0 %v4069
        %v7461 = vpop.f32.mrb[0].mxu0
        %v7462 = vadd.f32 %v7237, %v7461
        %v7463 = vpop.f32.mrb[0].mxu0
        %7464 = vmatprep.mubr.f32.mxu0 0.0
        %7465 = vmatmul.mubr.f32.gmra.mrb[0].mxu0 %v4070
        %v7466 = vpop.f32.mrb[0].mxu0
        %v7467 = vadd.f32 %v7242, %v7466
        %v7468 = vpop.f32.mrb[0].mxu0
        %7469 = vmatprep.mubr.f32.mxu0 0.0
        %7470 = vmatmul.mubr.f32.gmra.mrb[0].mxu0 %v4071
        %v7471 = vpop.f32.mrb[0].mxu0
        %v7472 = vadd.f32 %v7247, %v7471
        %v7473 = vpop.f32.mrb[0].mxu0
        %7474 = vmatprep.mubr.f32.mxu0 0.0
        %7475 = vmatmul.mubr.f32.gmra.mrb[0].mxu0 %v4072
        %v7476 = vpop.f32.mrb[0].mxu0
        %v7477 = vadd.f32 %v7252, %v7476
        %v7478 = vpop.f32.mrb[0].mxu0
        %7479 = vmatprep.mubr.f32.mxu0 0.0
        %7480 = vmatmul.mubr.f32.gmra.mrb[0].mxu0 %v4073
        %v7481 = vpop.f32.mrb[0].mxu0
        %v7482 = vadd.f32 %v7257, %v7481
        %v7483 = vpop.f32.mrb[0].mxu0
        %7484 = vmatprep.mubr.f32.mxu0 0.0
        %7485 = vmatmul.mubr.f32.gmra.mrb[0].mxu0 %v4074
        %v7486 = vpop.f32.mrb[0].mxu0
        %v7487 = vadd.f32 %v7262, %v7486
        %v7488 = vpop.f32.mrb[0].mxu0
        %7489 = vmatprep.mubr.f32.mxu0 0.0
        %7490 = vmatmul.mubr.f32.gmra.mrb[0].mxu0 %v4075
        %v7491 = vpop.f32.mrb[0].mxu0
        %v7492 = vadd.f32 %v7267, %v7491
        %v7493 = vpop.f32.mrb[0].mxu0
        %7494 = vmatprep.mubr.f32.mxu0 0.0
        %7495 = vmatmul.mubr.f32.gmra.mrb[0].mxu0 %v4076
        %v7496 = vpop.f32.mrb[0].mxu0
        %v7497 = vadd.f32 %v7272, %v7496
        %v7498 = vpop.f32.mrb[0].mxu0
        %7499 = vmatprep.mubr.f32.mxu0 0.0
        %7500 = vmatmul.mubr.f32.gmra.mrb[0].mxu0 %v4077
        %v7501 = vpop.f32.mrb[0].mxu0
        %v7502 = vadd.f32 %v7277, %v7501
        %v7503 = vpop.f32.mrb[0].mxu0
        %7504 = vmatprep.mubr.f32.mxu0 0.0
        %7505 = vmatmul.mubr.f32.gmra.mrb[0].mxu0 %v4078
        %v7506 = vpop.f32.mrb[0].mxu0
        %v7507 = vadd.f32 %v7282, %v7506
        %v7508 = vpop.f32.mrb[0].mxu0
        %7509 = vmatprep.mubr.f32.mxu0 0.0
        %7510 = vmatmul.mubr.f32.gmra.mrb[0].mxu0 %v4079
        %v7511 = vpop.f32.mrb[0].mxu0
        %v7512 = vadd.f32 %v7287, %v7511
        %v7513 = vpop.f32.mrb[0].mxu0
        %7514 = vmatprep.mubr.f32.mxu0 0.0
        %7515 = vmatmul.mubr.f32.gmra.mrb[0].mxu0 %v4080
        %v7516 = vpop.f32.mrb[0].mxu0
        %v7517 = vadd.f32 %v7292, %v7516
        %v7518 = vpop.f32.mrb[0].mxu0
        %7519 = vmatprep.mubr.f32.mxu0 0.0
        %7520 = vmatmul.mubr.f32.gmra.mrb[0].mxu0 %v4081
        %v7521 = vpop.f32.mrb[0].mxu0
        %v7522 = vadd.f32 %v7297, %v7521
        %v7523 = vpop.f32.mrb[0].mxu0
        %7524 = vmatprep.mubr.f32.mxu0 0.0
        %7525 = vmatmul.mubr.f32.gmra.mrb[0].mxu0 %v4082
        %v7526 = vpop.f32.mrb[0].mxu0
        %v7527 = vadd.f32 %v7302, %v7526
        %v7528 = vpop.f32.mrb[0].mxu0
        %7529 = vmatprep.mubr.f32.mxu0 0.0
        %7530 = vmatmul.mubr.f32.gmra.mrb[0].mxu0 %v4083
        %v7531 = vpop.f32.mrb[0].mxu0
        %v7532 = vadd.f32 %v7307, %v7531
        %v7533 = vpop.f32.mrb[0].mxu0
        %7534 = vmatprep.mubr.f32.mxu0 0.0
        %7535 = vmatmul.mubr.f32.gmra.mrb[0].mxu0 %v4084
        %v7536 = vpop.f32.mrb[0].mxu0
        %v7537 = vadd.f32 %v7312, %v7536
        %v7538 = vpop.f32.mrb[0].mxu0
        %7539 = vmatprep.mubr.f32.mxu0 0.0
        %7540 = vmatmul.mubr.f32.gmra.mrb[0].mxu0 %v4085
        %v7541 = vpop.f32.mrb[0].mxu0
        %v7542 = vadd.f32 %v7317, %v7541
        %v7543 = vpop.f32.mrb[0].mxu0
        %7544 = vmatprep.mubr.f32.mxu0 0.0
        %7545 = vmatmul.mubr.f32.gmra.mrb[0].mxu0 %v4086
        %v7546 = vpop.f32.mrb[0].mxu0
        %v7547 = vadd.f32 %v7322, %v7546
        %v7548 = vpop.f32.mrb[0].mxu0
        %7549 = vmatprep.mubr.f32.mxu0 0.0
        %7550 = vmatmul.mubr.f32.gmra.mrb[0].mxu0 %v4087
        %v7551 = vpop.f32.mrb[0].mxu0
        %v7552 = vadd.f32 %v7327, %v7551
        %v7553 = vpop.f32.mrb[0].mxu0
        %7554 = vmatprep.mubr.f32.mxu0 0.0
        %7555 = vmatmul.mubr.f32.gmra.mrb[0].mxu0 %v4088
        %v7556 = vpop.f32.mrb[0].mxu0
        %v7557 = vadd.f32 %v7332, %v7556
        %v7558 = vpop.f32.mrb[0].mxu0
        %7559 = vmatprep.mubr.f32.mxu0 0.0
        %7560 = vmatmul.mubr.f32.gmra.mrb[0].mxu0 %v4089
        %v7561 = vpop.f32.mrb[0].mxu0
        %v7562 = vadd.f32 %v7337, %v7561
        %v7563 = vpop.f32.mrb[0].mxu0
        %7564 = vmatprep.mubr.f32.mxu0 0.0
        %7565 = vmatmul.mubr.f32.gmra.mrb[0].mxu0 %v4090
        %v7566 = vpop.f32.mrb[0].mxu0
        %v7567 = vadd.f32 %v7342, %v7566
        %v7568 = vpop.f32.mrb[0].mxu0
        %7569 = vmatprep.mubr.f32.mxu0 0.0
        %7570 = vmatmul.mubr.f32.gmra.mrb[0].mxu0 %v4091
        %v7571 = vpop.f32.mrb[0].mxu0
        %v7572 = vadd.f32 %v7347, %v7571
        %v7573 = vpop.f32.mrb[0].mxu0
        %7574 = vmatprep.mubr.f32.mxu0 0.0
        %7575 = vmatmul.mubr.f32.gmra.mrb[0].mxu0 %v4092
        %v7576 = vpop.f32.mrb[0].mxu0
        %v7577 = vadd.f32 %v7352, %v7576
        %v7578 = vpop.f32.mrb[0].mxu0
        %7579 = vmatprep.mubr.f32.mxu0 0.0
        %7580 = vmatmul.mubr.f32.gmra.mrb[0].mxu0 %v4093
        %v7581 = vpop.f32.mrb[0].mxu0
        %v7582 = vadd.f32 %v7357, %v7581
        %v7583 = vpop.f32.mrb[0].mxu0
        %7584 = vmatprep.mubr.f32.mxu0 0.0
        %7585 = vmatmul.mubr.f32.gmra.mrb[0].mxu0 %v4094
        %v7586 = vpop.f32.mrb[0].mxu0
        %v7587 = vadd.f32 %v7362, %v7586
        %v7588 = vpop.f32.mrb[0].mxu0
        %7589 = vmatprep.mubr.f32.mxu0 0.0
        %7590 = vmatmul.mubr.f32.gmra.mrb[0].mxu0 %v4095
        %v7591 = vpop.f32.mrb[0].mxu0
        %v7592 = vadd.f32 %v7367, %v7591
        %v7593 = vpop.f32.mrb[0].mxu0
        %7594 = vmatprep.mubr.f32.mxu0 0.0
        %7595 = vmatmul.mubr.f32.gmra.mrb[0].mxu0 %v4096
        %v7596 = vpop.f32.mrb[0].mxu0
        %v7597 = vadd.f32 %v7372, %v7596
        %v7598 = vpop.f32.mrb[0].mxu0
        %7599 = vdwg.mxu0
        %s7600 = scalar_lea.vmem %s8, 256
        %v7601 = vld [vmem:[%s7600] sm:$0xff]
        %v7602 = vld [vmem:[%s7600 + $0x8] sm:$0xff]
        %v7603 = vld [vmem:[%s7600 + $0x10] sm:$0xff]
        %v7604 = vld [vmem:[%s7600 + $0x18] sm:$0xff]
        %v7605 = vld [vmem:[%s7600 + $0x20] sm:$0xff]
        %v7606 = vld [vmem:[%s7600 + $0x28] sm:$0xff]
        %v7607 = vld [vmem:[%s7600 + $0x30] sm:$0xff]
        %v7608 = vld [vmem:[%s7600 + $0x38] sm:$0xff]
        %v7609 = vld [vmem:[%s7600 + $0x40] sm:$0xff]
        %v7610 = vld [vmem:[%s7600 + $0x48] sm:$0xff]
        %v7611 = vld [vmem:[%s7600 + $0x50] sm:$0xff]
        %v7612 = vld [vmem:[%s7600 + $0x58] sm:$0xff]
        %v7613 = vld [vmem:[%s7600 + $0x60] sm:$0xff]
        %v7614 = vld [vmem:[%s7600 + $0x68] sm:$0xff]
        %v7615 = vld [vmem:[%s7600 + $0x70] sm:$0xff]
        %v7616 = vld [vmem:[%s7600 + $0x78] sm:$0xff]
        %7617 = vmatprep.subr.mxu0 0.0
        %7618 = vmatpush1.msra.mxu0 %v7601
        %7619 = vmatprep.subr.mxu0 0.0
        %7620 = vmatpush1.msra.mxu0 %v7602
        %7621 = vmatprep.subr.mxu0 0.0
        %7622 = vmatpush1.msra.mxu0 %v7603
        %7623 = vmatprep.subr.mxu0 0.0
        %7624 = vmatpush1.msra.mxu0 %v7604
        %7625 = vmatprep.subr.mxu0 0.0
        %7626 = vmatpush1.msra.mxu0 %v7605
        %7627 = vmatprep.subr.mxu0 0.0
        %7628 = vmatpush1.msra.mxu0 %v7606
        %7629 = vmatprep.subr.mxu0 0.0
        %7630 = vmatpush1.msra.mxu0 %v7607
        %7631 = vmatprep.subr.mxu0 0.0
        %7632 = vmatpush1.msra.mxu0 %v7608
        %7633 = vmatprep.subr.mxu0 0.0
        %7634 = vmatpush1.msra.mxu0 %v7609
        %7635 = vmatprep.subr.mxu0 0.0
        %7636 = vmatpush1.msra.mxu0 %v7610
        %7637 = vmatprep.subr.mxu0 0.0
        %7638 = vmatpush1.msra.mxu0 %v7611
        %7639 = vmatprep.subr.mxu0 0.0
        %7640 = vmatpush1.msra.mxu0 %v7612
        %7641 = vmatprep.subr.mxu0 0.0
        %7642 = vmatpush1.msra.mxu0 %v7613
        %7643 = vmatprep.subr.mxu0 0.0
        %7644 = vmatpush1.msra.mxu0 %v7614
        %7645 = vmatprep.subr.mxu0 0.0
        %7646 = vmatpush1.msra.mxu0 %v7615
        %7647 = vmatprep.subr.mxu0 0.0
        %7648 = vmatpush1.msra.mxu0 %v7616
        %7649 = vmatprep.subr.mxu0 0.0
        %7650 = vmatpush1.msra.mxu0 0.0
        %7651 = vmatprep.subr.mxu0 0.0
        %7652 = vmatpush1.msra.mxu0 0.0
        %7653 = vmatprep.subr.mxu0 0.0
        %7654 = vmatpush1.msra.mxu0 0.0
        %7655 = vmatprep.subr.mxu0 0.0
        %7656 = vmatpush1.msra.mxu0 0.0
        %7657 = vmatprep.subr.mxu0 0.0
        %7658 = vmatpush1.msra.mxu0 0.0
        %7659 = vmatprep.subr.mxu0 0.0
        %7660 = vmatpush1.msra.mxu0 0.0
        %7661 = vmatprep.subr.mxu0 0.0
        %7662 = vmatpush1.msra.mxu0 0.0
        %7663 = vmatprep.subr.mxu0 0.0
        %7664 = vmatpush1.msra.mxu0 0.0
        %7665 = vmatprep.subr.mxu0 0.0
        %7666 = vmatpush1.msra.mxu0 0.0
        %7667 = vmatprep.subr.mxu0 0.0
        %7668 = vmatpush1.msra.mxu0 0.0
        %7669 = vmatprep.subr.mxu0 0.0
        %7670 = vmatpush1.msra.mxu0 0.0
        %7671 = vmatprep.subr.mxu0 0.0
        %7672 = vmatpush1.msra.mxu0 0.0
        %7673 = vmatprep.subr.mxu0 0.0
        %7674 = vmatpush1.msra.mxu0 0.0
        %7675 = vmatprep.subr.mxu0 0.0
        %7676 = vmatpush1.msra.mxu0 0.0
        %7677 = vmatprep.subr.mxu0 0.0
        %7678 = vmatpush1.msra.mxu0 0.0
        %7679 = vmatprep.subr.mxu0 0.0
        %7680 = vmatpush1.msra.mxu0 0.0
        %7681 = vmatprep.mubr.f32.mxu0 0.0
        %7682 = vmatmul.mubr.f32.gmra.mrb[0].mxu0 %v6959
        %v7683 = vpop.f32.mrb[0].mxu0
        %v7684 = vadd.f32 0.0, %v7683
        %v7685 = vpop.f32.mrb[0].mxu0
        %7686 = vmatprep.mubr.f32.mxu0 0.0
        %7687 = vmatmul.mubr.f32.gmra.mrb[0].mxu0 %v6964
        %v7688 = vpop.f32.mrb[0].mxu0
        %v7689 = vadd.f32 0.0, %v7688
        %v7690 = vpop.f32.mrb[0].mxu0
        %7691 = vmatprep.mubr.f32.mxu0 0.0
        %7692 = vmatmul.mubr.f32.gmra.mrb[0].mxu0 %v6969
        %v7693 = vpop.f32.mrb[0].mxu0
        %v7694 = vadd.f32 0.0, %v7693
        %v7695 = vpop.f32.mrb[0].mxu0
        %7696 = vmatprep.mubr.f32.mxu0 0.0
        %7697 = vmatmul.mubr.f32.gmra.mrb[0].mxu0 %v6974
        %v7698 = vpop.f32.mrb[0].mxu0
        %v7699 = vadd.f32 0.0, %v7698
        %v7700 = vpop.f32.mrb[0].mxu0
        %7701 = vmatprep.mubr.f32.mxu0 0.0
        %7702 = vmatmul.mubr.f32.gmra.mrb[0].mxu0 %v6979
        %v7703 = vpop.f32.mrb[0].mxu0
        %v7704 = vadd.f32 0.0, %v7703
        %v7705 = vpop.f32.mrb[0].mxu0
        %7706 = vmatprep.mubr.f32.mxu0 0.0
        %7707 = vmatmul.mubr.f32.gmra.mrb[0].mxu0 %v6984
        %v7708 = vpop.f32.mrb[0].mxu0
        %v7709 = vadd.f32 0.0, %v7708
        %v7710 = vpop.f32.mrb[0].mxu0
        %7711 = vmatprep.mubr.f32.mxu0 0.0
        %7712 = vmatmul.mubr.f32.gmra.mrb[0].mxu0 %v6989
        %v7713 = vpop.f32.mrb[0].mxu0
        %v7714 = vadd.f32 0.0, %v7713
        %v7715 = vpop.f32.mrb[0].mxu0
        %7716 = vmatprep.mubr.f32.mxu0 0.0
        %7717 = vmatmul.mubr.f32.gmra.mrb[0].mxu0 %v6994
        %v7718 = vpop.f32.mrb[0].mxu0
        %v7719 = vadd.f32 0.0, %v7718
        %v7720 = vpop.f32.mrb[0].mxu0
        %7721 = vmatprep.mubr.f32.mxu0 0.0
        %7722 = vmatmul.mubr.f32.gmra.mrb[0].mxu0 %v6999
        %v7723 = vpop.f32.mrb[0].mxu0
        %v7724 = vadd.f32 0.0, %v7723
        %v7725 = vpop.f32.mrb[0].mxu0
        %7726 = vmatprep.mubr.f32.mxu0 0.0
        %7727 = vmatmul.mubr.f32.gmra.mrb[0].mxu0 %v7004
        %v7728 = vpop.f32.mrb[0].mxu0
        %v7729 = vadd.f32 0.0, %v7728
        %v7730 = vpop.f32.mrb[0].mxu0
        %7731 = vmatprep.mubr.f32.mxu0 0.0
        %7732 = vmatmul.mubr.f32.gmra.mrb[0].mxu0 %v7009
        %v7733 = vpop.f32.mrb[0].mxu0
        %v7734 = vadd.f32 0.0, %v7733
        %v7735 = vpop.f32.mrb[0].mxu0
        %7736 = vmatprep.mubr.f32.mxu0 0.0
        %7737 = vmatmul.mubr.f32.gmra.mrb[0].mxu0 %v7014
        %v7738 = vpop.f32.mrb[0].mxu0
        %v7739 = vadd.f32 0.0, %v7738
        %v7740 = vpop.f32.mrb[0].mxu0
        %7741 = vmatprep.mubr.f32.mxu0 0.0
        %7742 = vmatmul.mubr.f32.gmra.mrb[0].mxu0 %v7019
        %v7743 = vpop.f32.mrb[0].mxu0
        %v7744 = vadd.f32 0.0, %v7743
        %v7745 = vpop.f32.mrb[0].mxu0
        %7746 = vmatprep.mubr.f32.mxu0 0.0
        %7747 = vmatmul.mubr.f32.gmra.mrb[0].mxu0 %v7024
        %v7748 = vpop.f32.mrb[0].mxu0
        %v7749 = vadd.f32 0.0, %v7748
        %v7750 = vpop.f32.mrb[0].mxu0
        %7751 = vmatprep.mubr.f32.mxu0 0.0
        %7752 = vmatmul.mubr.f32.gmra.mrb[0].mxu0 %v7029
        %v7753 = vpop.f32.mrb[0].mxu0
        %v7754 = vadd.f32 0.0, %v7753
        %v7755 = vpop.f32.mrb[0].mxu0
        %7756 = vmatprep.mubr.f32.mxu0 0.0
        %7757 = vmatmul.mubr.f32.gmra.mrb[0].mxu0 %v7034
        %v7758 = vpop.f32.mrb[0].mxu0
        %v7759 = vadd.f32 0.0, %v7758
        %v7760 = vpop.f32.mrb[0].mxu0
        %7761 = vmatprep.mubr.f32.mxu0 0.0
        %7762 = vmatmul.mubr.f32.gmra.mrb[0].mxu0 %v7039
        %v7763 = vpop.f32.mrb[0].mxu0
        %v7764 = vadd.f32 0.0, %v7763
        %v7765 = vpop.f32.mrb[0].mxu0
        %7766 = vmatprep.mubr.f32.mxu0 0.0
        %7767 = vmatmul.mubr.f32.gmra.mrb[0].mxu0 %v7044
        %v7768 = vpop.f32.mrb[0].mxu0
        %v7769 = vadd.f32 0.0, %v7768
        %v7770 = vpop.f32.mrb[0].mxu0
        %7771 = vmatprep.mubr.f32.mxu0 0.0
        %7772 = vmatmul.mubr.f32.gmra.mrb[0].mxu0 %v7049
        %v7773 = vpop.f32.mrb[0].mxu0
        %v7774 = vadd.f32 0.0, %v7773
        %v7775 = vpop.f32.mrb[0].mxu0
        %7776 = vmatprep.mubr.f32.mxu0 0.0
        %7777 = vmatmul.mubr.f32.gmra.mrb[0].mxu0 %v7054
        %v7778 = vpop.f32.mrb[0].mxu0
        %v7779 = vadd.f32 0.0, %v7778
        %v7780 = vpop.f32.mrb[0].mxu0
        %7781 = vmatprep.mubr.f32.mxu0 0.0
        %7782 = vmatmul.mubr.f32.gmra.mrb[0].mxu0 %v7059
        %v7783 = vpop.f32.mrb[0].mxu0
        %v7784 = vadd.f32 0.0, %v7783
        %v7785 = vpop.f32.mrb[0].mxu0
        %7786 = vmatprep.mubr.f32.mxu0 0.0
        %7787 = vmatmul.mubr.f32.gmra.mrb[0].mxu0 %v7064
        %v7788 = vpop.f32.mrb[0].mxu0
        %v7789 = vadd.f32 0.0, %v7788
        %v7790 = vpop.f32.mrb[0].mxu0
        %7791 = vmatprep.mubr.f32.mxu0 0.0
        %7792 = vmatmul.mubr.f32.gmra.mrb[0].mxu0 %v7069
        %v7793 = vpop.f32.mrb[0].mxu0
        %v7794 = vadd.f32 0.0, %v7793
        %v7795 = vpop.f32.mrb[0].mxu0
        %7796 = vmatprep.mubr.f32.mxu0 0.0
        %7797 = vmatmul.mubr.f32.gmra.mrb[0].mxu0 %v7074
        %v7798 = vpop.f32.mrb[0].mxu0
        %v7799 = vadd.f32 0.0, %v7798
        %v7800 = vpop.f32.mrb[0].mxu0
        %7801 = vmatprep.mubr.f32.mxu0 0.0
        %7802 = vmatmul.mubr.f32.gmra.mrb[0].mxu0 %v7079
        %v7803 = vpop.f32.mrb[0].mxu0
        %v7804 = vadd.f32 0.0, %v7803
        %v7805 = vpop.f32.mrb[0].mxu0
        %7806 = vmatprep.mubr.f32.mxu0 0.0
        %7807 = vmatmul.mubr.f32.gmra.mrb[0].mxu0 %v7084
        %v7808 = vpop.f32.mrb[0].mxu0
        %v7809 = vadd.f32 0.0, %v7808
        %v7810 = vpop.f32.mrb[0].mxu0
        %7811 = vmatprep.mubr.f32.mxu0 0.0
        %7812 = vmatmul.mubr.f32.gmra.mrb[0].mxu0 %v7089
        %v7813 = vpop.f32.mrb[0].mxu0
        %v7814 = vadd.f32 0.0, %v7813
        %v7815 = vpop.f32.mrb[0].mxu0
        %7816 = vmatprep.mubr.f32.mxu0 0.0
        %7817 = vmatmul.mubr.f32.gmra.mrb[0].mxu0 %v7094
        %v7818 = vpop.f32.mrb[0].mxu0
        %v7819 = vadd.f32 0.0, %v7818
        %v7820 = vpop.f32.mrb[0].mxu0
        %7821 = vmatprep.mubr.f32.mxu0 0.0
        %7822 = vmatmul.mubr.f32.gmra.mrb[0].mxu0 %v7099
        %v7823 = vpop.f32.mrb[0].mxu0
        %v7824 = vadd.f32 0.0, %v7823
        %v7825 = vpop.f32.mrb[0].mxu0
        %7826 = vmatprep.mubr.f32.mxu0 0.0
        %7827 = vmatmul.mubr.f32.gmra.mrb[0].mxu0 %v7104
        %v7828 = vpop.f32.mrb[0].mxu0
        %v7829 = vadd.f32 0.0, %v7828
        %v7830 = vpop.f32.mrb[0].mxu0
        %7831 = vmatprep.mubr.f32.mxu0 0.0
        %7832 = vmatmul.mubr.f32.gmra.mrb[0].mxu0 %v7109
        %v7833 = vpop.f32.mrb[0].mxu0
        %v7834 = vadd.f32 0.0, %v7833
        %v7835 = vpop.f32.mrb[0].mxu0
        %7836 = vmatprep.mubr.f32.mxu0 0.0
        %7837 = vmatmul.mubr.f32.gmra.mrb[0].mxu0 %v7114
        %v7838 = vpop.f32.mrb[0].mxu0
        %v7839 = vadd.f32 0.0, %v7838
        %v7840 = vpop.f32.mrb[0].mxu0
        %7841 = vdwg.mxu0
        %v7842 = vadd.f32 %v7442, %v7684
        %v7843 = vadd.f32 %v7447, %v7689
        %v7844 = vadd.f32 %v7452, %v7694
        %v7845 = vadd.f32 %v7457, %v7699
        %v7846 = vadd.f32 %v7462, %v7704
        %v7847 = vadd.f32 %v7467, %v7709
        %v7848 = vadd.f32 %v7472, %v7714
        %v7849 = vadd.f32 %v7477, %v7719
        %v7850 = vadd.f32 %v7482, %v7724
        %v7851 = vadd.f32 %v7487, %v7729
        %v7852 = vadd.f32 %v7492, %v7734
        %v7853 = vadd.f32 %v7497, %v7739
        %v7854 = vadd.f32 %v7502, %v7744
        %v7855 = vadd.f32 %v7507, %v7749
        %v7856 = vadd.f32 %v7512, %v7754
        %v7857 = vadd.f32 %v7517, %v7759
        %v7858 = vadd.f32 %v7522, %v7764
        %v7859 = vadd.f32 %v7527, %v7769
        %v7860 = vadd.f32 %v7532, %v7774
        %v7861 = vadd.f32 %v7537, %v7779
        %v7862 = vadd.f32 %v7542, %v7784
        %v7863 = vadd.f32 %v7547, %v7789
        %v7864 = vadd.f32 %v7552, %v7794
        %v7865 = vadd.f32 %v7557, %v7799
        %v7866 = vadd.f32 %v7562, %v7804
        %v7867 = vadd.f32 %v7567, %v7809
        %v7868 = vadd.f32 %v7572, %v7814
        %v7869 = vadd.f32 %v7577, %v7819
        %v7870 = vadd.f32 %v7582, %v7824
        %v7871 = vadd.f32 %v7587, %v7829
        %v7872 = vadd.f32 %v7592, %v7834
        %v7873 = vadd.f32 %v7597, %v7839
        %v7874 = vld [vmem:[%s9] sm:$0x1]
        %v7876 = vlaneseq
        %v7877 = vshrl.u32 %v7876, 7
        %v7878 = vsub.s32 0, %v7877
        %v7879 = vrot.slane %v7874, %v7878
        %v7881 = vadd.f32 %v7842, %v7879
        %v7882 = vadd.f32 %v7843, %v7879
        %v7883 = vadd.f32 %v7844, %v7879
        %v7884 = vadd.f32 %v7845, %v7879
        %v7885 = vadd.f32 %v7846, %v7879
        %v7886 = vadd.f32 %v7847, %v7879
        %v7887 = vadd.f32 %v7848, %v7879
        %v7888 = vadd.f32 %v7849, %v7879
        %v7889 = vadd.f32 %v7850, %v7879
        %v7890 = vadd.f32 %v7851, %v7879
        %v7891 = vadd.f32 %v7852, %v7879
        %v7892 = vadd.f32 %v7853, %v7879
        %v7893 = vadd.f32 %v7854, %v7879
        %v7894 = vadd.f32 %v7855, %v7879
        %v7895 = vadd.f32 %v7856, %v7879
        %v7896 = vadd.f32 %v7857, %v7879
        %v7897 = vadd.f32 %v7858, %v7879
        %v7898 = vadd.f32 %v7859, %v7879
        %v7899 = vadd.f32 %v7860, %v7879
        %v7900 = vadd.f32 %v7861, %v7879
        %v7901 = vadd.f32 %v7862, %v7879
        %v7902 = vadd.f32 %v7863, %v7879
        %v7903 = vadd.f32 %v7864, %v7879
        %v7904 = vadd.f32 %v7865, %v7879
        %v7905 = vadd.f32 %v7866, %v7879
        %v7906 = vadd.f32 %v7867, %v7879
        %v7907 = vadd.f32 %v7868, %v7879
        %v7908 = vadd.f32 %v7869, %v7879
        %v7909 = vadd.f32 %v7870, %v7879
        %v7910 = vadd.f32 %v7871, %v7879
        %v7911 = vadd.f32 %v7872, %v7879
        %v7912 = vadd.f32 %v7873, %v7879
        %vm7913 = vcmask 64512
        %7914 = vst.msk [vmem:[%s419] sm:$0xff] %vm7913, %v7881
        %7915 = vst.msk [vmem:[%s419 + $0x8] sm:$0xff] %vm7913, %v7882
        %7916 = vst.msk [vmem:[%s419 + $0x10] sm:$0xff] %vm7913, %v7883
        %7917 = vst.msk [vmem:[%s419 + $0x18] sm:$0xff] %vm7913, %v7884
        %7918 = vst.msk [vmem:[%s419 + $0x20] sm:$0xff] %vm7913, %v7885
        %7919 = vst.msk [vmem:[%s419 + $0x28] sm:$0xff] %vm7913, %v7886
        %7920 = vst.msk [vmem:[%s419 + $0x30] sm:$0xff] %vm7913, %v7887
        %7921 = vst.msk [vmem:[%s419 + $0x38] sm:$0xff] %vm7913, %v7888
        %7922 = vst.msk [vmem:[%s419 + $0x40] sm:$0xff] %vm7913, %v7889
        %7923 = vst.msk [vmem:[%s419 + $0x48] sm:$0xff] %vm7913, %v7890
        %7924 = vst.msk [vmem:[%s419 + $0x50] sm:$0xff] %vm7913, %v7891
        %7925 = vst.msk [vmem:[%s419 + $0x58] sm:$0xff] %vm7913, %v7892
        %7926 = vst.msk [vmem:[%s419 + $0x60] sm:$0xff] %vm7913, %v7893
        %7927 = vst.msk [vmem:[%s419 + $0x68] sm:$0xff] %vm7913, %v7894
        %7928 = vst.msk [vmem:[%s419 + $0x70] sm:$0xff] %vm7913, %v7895
        %7929 = vst.msk [vmem:[%s419 + $0x78] sm:$0xff] %vm7913, %v7896
        %7930 = vst.msk [vmem:[%s419 + $0x80] sm:$0xff] %vm7913, %v7897
        %7931 = vst.msk [vmem:[%s419 + $0x88] sm:$0xff] %vm7913, %v7898
        %7932 = vst.msk [vmem:[%s419 + $0x90] sm:$0xff] %vm7913, %v7899
        %7933 = vst.msk [vmem:[%s419 + $0x98] sm:$0xff] %vm7913, %v7900
        %7934 = vst.msk [vmem:[%s419 + $0xa0] sm:$0xff] %vm7913, %v7901
        %7935 = vst.msk [vmem:[%s419 + $0xa8] sm:$0xff] %vm7913, %v7902
        %7936 = vst.msk [vmem:[%s419 + $0xb0] sm:$0xff] %vm7913, %v7903
        %7937 = vst.msk [vmem:[%s419 + $0xb8] sm:$0xff] %vm7913, %v7904
        %7938 = vst.msk [vmem:[%s419 + $0xc0] sm:$0xff] %vm7913, %v7905
        %7939 = vst.msk [vmem:[%s419 + $0xc8] sm:$0xff] %vm7913, %v7906
        %7940 = vst.msk [vmem:[%s419 + $0xd0] sm:$0xff] %vm7913, %v7907
        %7941 = vst.msk [vmem:[%s419 + $0xd8] sm:$0xff] %vm7913, %v7908
        %7942 = vst.msk [vmem:[%s419 + $0xe0] sm:$0xff] %vm7913, %v7909
        %7943 = vst.msk [vmem:[%s419 + $0xe8] sm:$0xff] %vm7913, %v7910
        %7944 = vst.msk [vmem:[%s419 + $0xf0] sm:$0xff] %vm7913, %v7911
        %7945 = vst.msk [vmem:[%s419 + $0xf8] sm:$0xff] %vm7913, %v7912
        %p7946 = scmp.lt.s32.totalorder %s24, 1
        %s7947 = scalar_select %p7946, %s24, 1
        %s7948 = smul.addr %s7947, 32
        %s7949 = smul.addr %s7948, 8
        %s7950 = scalar_lea.vmem %s10, %s7949
        // Predicated region
        $region65: #{tpu_custom_call.1} parent=59 // pred_check
          %p7951 = pneg %p267
        $region66: #{tpu_custom_call.1} parent=59 // pred_check_branch
          %7953 = sbr.rel (%p7951) target = $region68
        $region67: #{tpu_custom_call.1} parent=59 // pred_region
          _
        $region68: #{tpu_custom_call.1} parent=59 // pred_fallthru
          _
      $region60: #{tpu_custom_call.1} parent=5 // pred_fallthru
        _
      %p7954 = scmp.le.s32.totalorder 2, %s19
      // Predicated region
      $region69: #{tpu_custom_call.1} parent=5 // pred_check
        %p7955 = pneg %p7954
      $region70: #{tpu_custom_call.1} parent=5 // pred_check_branch
        %7957 = sbr.rel (%p7955) target = $region72
      $region71: #{tpu_custom_call.1} parent=5 // pred_region
        %s7958 = ssub.s32 %s19, 2
        // Predicated region
        $region73: #{tpu_custom_call.1} parent=71 // pred_check
          %p7959 = pneg %p273
        $region74: #{tpu_custom_call.1} parent=71 // pred_check_branch
          %7961 = sbr.rel (%p7959) target = $region76
        $region75: #{tpu_custom_call.1} parent=71 // pred_region
          %p7962 = scmp.lt.s32.totalorder %s25, 1
          %s7963 = scalar_select %p7962, %s25, 1
          %s7964 = smul.addr %s7963, 32
          %s7965 = smul.addr %s7964, 8
          %s7966 = scalar_lea.vmem %s10, %s7965
        $region76: #{tpu_custom_call.1} parent=71 // pred_fallthru
          _
      $region72: #{tpu_custom_call.1} parent=5 // pred_fallthru
        _
    $region6: #{tpu_custom_call.1} parent=1 // loop_footer
      %s23 = sadd.s32 1, %s19
    $region7: #{tpu_custom_call.1} parent=1 // loop_footer_branch
      %18 = sbr.rel target = $region3
    $region8: #{tpu_custom_call.1} parent=1 // loop_exit
      _
    %7967 = vsyncpa [#allocation6], 1
    %s7968 = scalar_lea.sflag [#allocation6], 1
    %7969 = vsyncpa %s7968, 1

</llo_original>
